<compile_context>
chip_gen: v7x
topology: tpu7x:2x2x1
jax: 0.10.0
libtpu: 0.0.40
codegen_flags: <defaults>
</compile_context>

<pallas_src>
import math

import jax
import jax.numpy as jnp
from jax.experimental import pallas as pl
from jax.experimental.pallas import tpu as pltpu

# ---- problem sizes (small, consistent with the module) ----
B, N, NV, C, H, K = 2, 8, 8, 32, 8, 8          # batch, #query pts, #value pts, dim, heads, knn-k
D = C // H                                      # head dim
MLP_HIDDEN = 4 * C                              # mlp_ratio = 4.0
SCALE = D ** (-0.5)
EPS = 1e-5                                      # nn.LayerNorm default eps

# ---- packed-parameter slab layouts ----
# vecs slab rows (all length-C vectors: LN gammas/betas + biases), f32 (15, C)
(N1_G, N1_B, NQ_G, NQ_B, NVG, NVB, N2_G, N2_B,
 B_SPROJ, B_KNN, B_MERGE, B_CPROJ, B_KNNC, B_MERGEC, B_FC2) = range(15)
NUM_VECS = 15
# w_hcd slab (6, H, C, D) bf16: per-head "input-side" projection weights
WQ_S, WK_S, WV_S, WQ_C, WK_C, WV_C = range(6)
# w_hdc slab (2, H, D, C) bf16: per-head output-projection weights
WP_S, WP_C = range(2)
# w_cc slab (8, C, C) bf16: knn/merge weight splits
KNN_A, KNN_D, MRG_A, MRG_B, KNNC_A, KNNC_D, MRGC_A, MRGC_B = range(8)


# ----------------------------------------------------------------------------- kernel math
def _bf(x):
    return x.astype(jnp.bfloat16)


def _layernorm(x, g, b):
    mu = jnp.mean(x, axis=-1, keepdims=True)
    var = jnp.mean(jnp.square(x - mu), axis=-1, keepdims=True)
    return (x - mu) * jax.lax.rsqrt(var + EPS) * g + b


def _softmax_lastdim(s):
    m = jnp.max(s, axis=-1, keepdims=True)
    e = jnp.exp(s - m)
    denom = jnp.sum(e, axis=-1, keepdims=True)
    return e * pl.reciprocal(denom, approx=True)


def _gelu_tanh(x):
    c = math.sqrt(2.0 / math.pi)
    return 0.5 * x * (1.0 + jnp.tanh(c * (x + 0.044715 * x * x * x)))


def _mh_attention(xq, xkv, wq_h, wk_h, wv_h, wp_h, b_proj):
    """Multi-head attention with the head dim batched on a leading (major) axis.

    xq: (Nq, C) f32, xkv: (Nk, C) f32.
    wq_h/wk_h/wv_h: (H, C, D) bf16, wp_h: (H, D, C) bf16, b_proj: (1, C) f32.
    """
    nq, nk = xq.shape[0], xkv.shape[0]
    xq_b = jnp.broadcast_to(_bf(xq)[None], (H, nq, C))
    xkv_b = jnp.broadcast_to(_bf(xkv)[None], (H, nk, C))

    qh = jnp.einsum("hnc,hcd->hnd", xq_b, wq_h, preferred_element_type=jnp.float32)
    kh = jnp.einsum("hmc,hcd->hmd", xkv_b, wk_h, preferred_element_type=jnp.float32)
    vh = jnp.einsum("hmc,hcd->hmd", xkv_b, wv_h, preferred_element_type=jnp.float32)

    s = jnp.einsum("hnd,hmd->hnm", _bf(qh), _bf(kh),
                   preferred_element_type=jnp.float32) * SCALE
    a = _softmax_lastdim(s)
    o = jnp.einsum("hnm,hmd->hnd", _bf(a), _bf(vh),
                   preferred_element_type=jnp.float32)

    # per-head output projection summed over heads == concat(heads, lanes) @ W_proj
    p = jnp.einsum("hnd,hdc->hnc", _bf(o), wp_h, preferred_element_type=jnp.float32)
    acc = p[0]
    for h in range(1, H):
        acc = acc + p[h]
    return acc + b_proj                                           # (Nq, C) f32


def _knn_branch(g_onehot, src, xq, w_a, w_d, b_knn):
    """knn_map(get_graph_feature(src, idx, xq)).max(dim=k), concat eliminated.

    g_onehot: (K*Nq, Nsrc) bf16 one-hot gather operator (per-batch).
    linear(cat([gather(src)-xq, xq]), [W_a; W_b]) = gather(src)@W_a + xq@(W_b-W_a) + b.
    """
    nq = xq.shape[0]
    src_wa = jnp.dot(_bf(src), w_a, preferred_element_type=jnp.float32)       # (Nsrc, C)
    feat = jnp.dot(g_onehot, _bf(src_wa), preferred_element_type=jnp.float32)  # (K*Nq, C)
    xq_term = jnp.dot(_bf(xq), w_d, preferred_element_type=jnp.float32) + b_knn

    pre = feat.reshape(K, nq, C) + xq_term[None]
    act = jnp.maximum(pre, 0.2 * pre)                              # LeakyReLU(0.2)
    m = act[0]
    for k in range(1, K):                                          # max over k (static unroll)
        m = jnp.maximum(m, act[k])
    return m                                                       # (Nq, C) f32


# ----------------------------------------------------------------------------- the kernel
def decoder_kernel(q_ref, v_ref, gs_ref, gc_ref,
                   w_hcd_ref, w_hdc_ref, w_cc_ref,
                   w_fc1_ref, w_fc2_ref, vecs_ref, b_fc1_ref,
                   out_ref):
    q = q_ref[0]                 # (N, C)  f32
    v = v_ref[0]                 # (NV, C) f32
    g_self = gs_ref[0]           # (K*N, N)  bf16
    g_cross = gc_ref[0]          # (K*N, NV) bf16

    vecs = vecs_ref[...]         # (15, C) f32

    def vec(i):
        return vecs[i:i + 1]     # (1, C)

    # ---- self-attention branch + self-knn branch ----
    norm_q1 = _layernorm(q, vec(N1_G), vec(N1_B))
    attn1 = _mh_attention(norm_q1, norm_q1,
                          w_hcd_ref[WQ_S], w_hcd_ref[WK_S], w_hcd_ref[WV_S],
                          w_hdc_ref[WP_S], vec(B_SPROJ))
    knn1 = _knn_branch(g_self, norm_q1, norm_q1,
                       w_cc_ref[KNN_A], w_cc_ref[KNN_D], vec(B_KNN))
    q1 = (jnp.dot(_bf(attn1), w_cc_ref[MRG_A], preferred_element_type=jnp.float32)
          + jnp.dot(_bf(knn1), w_cc_ref[MRG_B], preferred_element_type=jnp.float32)
          + vec(B_MERGE))
    q = q + q1

    # ---- cross-attention branch + cross-knn branch ----
    norm_q2 = _layernorm(q, vec(NQ_G), vec(NQ_B))
    norm_v = _layernorm(v, vec(NVG), vec(NVB))
    attn2 = _mh_attention(norm_q2, norm_v,
                          w_hcd_ref[WQ_C], w_hcd_ref[WK_C], w_hcd_ref[WV_C],
                          w_hdc_ref[WP_C], vec(B_CPROJ))
    knn2 = _knn_branch(g_cross, norm_v, norm_q2,
                       w_cc_ref[KNNC_A], w_cc_ref[KNNC_D], vec(B_KNNC))
    q2 = (jnp.dot(_bf(attn2), w_cc_ref[MRGC_A], preferred_element_type=jnp.float32)
          + jnp.dot(_bf(knn2), w_cc_ref[MRGC_B], preferred_element_type=jnp.float32)
          + vec(B_MERGEC))
    q = q + q2

    # ---- MLP ----
    x = _layernorm(q, vec(N2_G), vec(N2_B))
    h1 = jnp.dot(_bf(x), w_fc1_ref[...], preferred_element_type=jnp.float32) + b_fc1_ref[...]
    h1 = _gelu_tanh(h1)
    h2 = jnp.dot(_bf(h1), w_fc2_ref[...], preferred_element_type=jnp.float32) + vec(B_FC2)

    out_ref[...] = (q + h2)[None]


# ----------------------------------------------------------------------------- wrapper
def _batch_spec(shape):
    nrest = len(shape) - 1
    return pl.BlockSpec((1,) + tuple(shape[1:]),
                        lambda b, _n=nrest: (b,) + (0,) * _n)


def _full_spec(arr):
    nd = arr.ndim
    return pl.BlockSpec(tuple(arr.shape), lambda b, _n=nd: (0,) * _n)


def decoder_forward(q, v, g_self, g_cross, packed):
    w_hcd, w_hdc, w_cc, w_fc1, w_fc2, vecs, b_fc1 = packed
    in_specs = [
        _batch_spec(q.shape), _batch_spec(v.shape),
        _batch_spec(g_self.shape), _batch_spec(g_cross.shape),
        _full_spec(w_hcd), _full_spec(w_hdc), _full_spec(w_cc),
        _full_spec(w_fc1), _full_spec(w_fc2), _full_spec(vecs), _full_spec(b_fc1),
    ]
    return pl.pallas_call(
        decoder_kernel,
        out_shape=jax.ShapeDtypeStruct((B, N, C), jnp.float32),
        grid=(B,),
        in_specs=in_specs,
        out_specs=pl.BlockSpec((1, N, C), lambda b: (b, 0, 0)),
        compiler_params=pltpu.CompilerParams(
            dimension_semantics=("parallel",)),    # v7x: shard batch across both TCs
    )(q, v, g_self, g_cross, w_hcd, w_hdc, w_cc, w_fc1, w_fc2, vecs, b_fc1)


# ----------------------------------------------------------------------------- params (deterministic)
def init_params(key):
    ks = jax.random.split(key, 32)
    it = iter(ks)

    def unif(shape, fan_in):
        bound = 1.0 / math.sqrt(fan_in)
        return jax.random.uniform(next(it), shape, jnp.float32, -bound, bound)

    def lin(out_f, in_f, bias=True):          # PyTorch nn.Linear layout (out, in)
        w = unif((out_f, in_f), in_f)
        b = unif((out_f,), in_f) if bias else None
        return w, b

    def ln_p():
        g = 1.0 + 0.05 * jax.random.normal(next(it), (C,), jnp.float32)
        b = 0.05 * jax.random.normal(next(it), (C,), jnp.float32)
        return g, b

    P = {}
    g, b = ln_p(); P["n1_g"], P["n1_b"] = g[None], b[None]
    w, _ = lin(3 * C, C, bias=False); P["w_qkv"] = w.T
    w, b = lin(C, C); P["w_sproj"], P["b_sproj"] = w.T, b[None]
    w, b = lin(C, 2 * C); P["w_knn"], P["b_knn"] = w.T, b[None]
    w, b = lin(C, 2 * C); P["w_merge"], P["b_merge"] = w.T, b[None]
    g, b = ln_p(); P["nq_g"], P["nq_b"] = g[None], b[None]
    g, b = ln_p(); P["nv_g"], P["nv_b"] = g[None], b[None]
    w, _ = lin(C, C, bias=False); P["w_qm"] = w.T
    w, _ = lin(C, C, bias=False); P["w_km"] = w.T
    w, _ = lin(C, C, bias=False); P["w_vm"] = w.T
    w, b = lin(C, C); P["w_cproj"], P["b_cproj"] = w.T, b[None]
    w, b = lin(C, 2 * C); P["w_knnc"], P["b_knnc"] = w.T, b[None]
    w, b = lin(C, 2 * C); P["w_mergec"], P["b_mergec"] = w.T, b[None]
    g, b = ln_p(); P["n2_g"], P["n2_b"] = g[None], b[None]
    w, b = lin(MLP_HIDDEN, C); P["w_fc1"], P["b_fc1"] = w.T, b[None]
    w, b = lin(C, MLP_HIDDEN); P["w_fc2"], P["b_fc2"] = w.T, b[None]
    return P


def pack_params(P):
    """Pack the 27 small tensors into a few bf16/f32 slabs (fewer tiny VMEM DMAs)."""
    def heads_cd(w):          # (C, C_out=C) -> (H, C, D): per-head output columns
        return jnp.transpose(w.reshape(C, H, D), (1, 0, 2))

    def heads_dc(w):          # (C_in=C, C) -> (H, D, C): per-head input rows
        return w.reshape(H, D, C)

    w_hcd = jnp.stack([
        heads_cd(P["w_qkv"][:, :C]), heads_cd(P["w_qkv"][:, C:2 * C]),
        heads_cd(P["w_qkv"][:, 2 * C:]),
        heads_cd(P["w_qm"]), heads_cd(P["w_km"]), heads_cd(P["w_vm"]),
    ], axis=0).astype(jnp.bfloat16)                               # (6, H, C, D)

    w_hdc = jnp.stack([heads_dc(P["w_sproj"]), heads_dc(P["w_cproj"])],
                      axis=0).astype(jnp.bfloat16)                # (2, H, D, C)

    knn_a, knn_b = P["w_knn"][:C], P["w_knn"][C:]
    knnc_a, knnc_b = P["w_knnc"][:C], P["w_knnc"][C:]
    w_cc = jnp.stack([
        knn_a, knn_b - knn_a,
        P["w_merge"][:C], P["w_merge"][C:],
        knnc_a, knnc_b - knnc_a,
        P["w_mergec"][:C], P["w_mergec"][C:],
    ], axis=0).astype(jnp.bfloat16)                               # (8, C, C)

    vecs = jnp.concatenate([
        P["n1_g"], P["n1_b"], P["nq_g"], P["nq_b"], P["nv_g"], P["nv_b"],
        P["n2_g"], P["n2_b"],
        P["b_sproj"], P["b_knn"], P["b_merge"], P["b_cproj"],
        P["b_knnc"], P["b_mergec"], P["b_fc2"],
    ], axis=0)                                                    # (15, C) f32

    w_fc1 = P["w_fc1"].astype(jnp.bfloat16)                       # (C, 4C)
    w_fc2 = P["w_fc2"].astype(jnp.bfloat16)                       # (4C, C)
    b_fc1 = P["b_fc1"]                                            # (1, 4C) f32
    return (w_hcd, w_hdc, w_cc, w_fc1, w_fc2, vecs, b_fc1)


# ----------------------------------------------------------------------------- plain-JAX reference
def ref_forward(q, v, self_idx, cross_idx, P):
    def ln(x, g, b):
        mu = x.mean(-1, keepdims=True)
        var = ((x - mu) ** 2).mean(-1, keepdims=True)
        return (x - mu) / jnp.sqrt(var + EPS) * g + b

    def linear(x, w, b=None):
        y = jnp.einsum("...i,io->...o", x, w)
        return y + b if b is not None else y

    def mha(qx, kx, vx):
        nq, nk = qx.shape[1], kx.shape[1]
        qh = qx.reshape(B, nq, H, D).transpose(0, 2, 1, 3)
        kh = kx.reshape(B, nk, H, D).transpose(0, 2, 1, 3)
        vh = vx.reshape(B, nk, H, D).transpose(0, 2, 1, 3)
        at = jax.nn.softmax(jnp.einsum("bhnd,bhmd->bhnm", qh, kh) * SCALE, axis=-1)
        o = jnp.einsum("bhnm,bhmd->bhnd", at, vh)
        return o.transpose(0, 2, 1, 3).reshape(B, nq, C)

    def graph_feat(x, idx_flat, xq):
        npt, nq = x.shape[1], xq.shape[1]
        f = x.reshape(B * npt, C)[idx_flat].reshape(B, K, nq, C)
        xe = jnp.broadcast_to(xq[:, None], (B, K, nq, C))
        return jnp.concatenate([f - xe, xe], -1)

    def leaky(x):
        return jnp.where(x >= 0, x, 0.2 * x)

    norm_q = ln(q, P["n1_g"], P["n1_b"])
    qkv = linear(norm_q, P["w_qkv"])
    q_1 = mha(qkv[..., :C], qkv[..., C:2 * C], qkv[..., 2 * C:])
    q_1 = linear(q_1, P["w_sproj"], P["b_sproj"])
    kf = leaky(linear(graph_feat(norm_q, self_idx, norm_q), P["w_knn"], P["b_knn"])).max(axis=1)
    q_1 = linear(jnp.concatenate([q_1, kf], -1), P["w_merge"], P["b_merge"])
    q = q + q_1

    norm_q = ln(q, P["nq_g"], P["nq_b"])
    norm_v = ln(v, P["nv_g"], P["nv_b"])
    q_2 = mha(linear(norm_q, P["w_qm"]), linear(norm_v, P["w_km"]), linear(norm_v, P["w_vm"]))
    q_2 = linear(q_2, P["w_cproj"], P["b_cproj"])
    kf = leaky(linear(graph_feat(norm_v, cross_idx, norm_q), P["w_knnc"], P["b_knnc"])).max(axis=1)
    q_2 = linear(jnp.concatenate([q_2, kf], -1), P["w_mergec"], P["b_mergec"])
    q = q + q_2

    x = ln(q, P["n2_g"], P["n2_b"])
    x = linear(x, P["w_fc1"], P["b_fc1"])
    x = 0.5 * x * (1.0 + jax.lax.erf(x / jnp.sqrt(2.0)))
    x = linear(x, P["w_fc2"], P["b_fc2"])
    return q + x


# ----------------------------------------------------------------------------- main
if __name__ == "__main__":
    key = jax.random.PRNGKey(0)
    kq, kv, ks, kc, kp = jax.random.split(key, 5)

    q = jax.random.normal(kq, (B, N, C), jnp.float32)
    v = jax.random.normal(kv, (B, NV, C), jnp.float32)

    # knn indices (within-batch, as produced by the model's knn); flat row-space
    # indices for the reference, per-batch one-hot gather operators for the kernel.
    self_local = jax.random.randint(ks, (B, K, N), 0, N)
    cross_local = jax.random.randint(kc, (B, K, N), 0, NV)
    self_idx = (self_local + jnp.arange(B)[:, None, None] * N).reshape(-1)
    cross_idx = (cross_local + jnp.arange(B)[:, None, None] * NV).reshape(-1)
    g_self = jax.nn.one_hot(self_local, N, dtype=jnp.float32) \
        .reshape(B, K * N, N).astype(jnp.bfloat16)
    g_cross = jax.nn.one_hot(cross_local, NV, dtype=jnp.float32) \
        .reshape(B, K * N, NV).astype(jnp.bfloat16)

    P = init_params(kp)
    packed = pack_params(P)

    out = decoder_forward(q, v, g_self, g_cross, packed)
    out = jax.block_until_ready(out)

    ref = ref_forward(q, v, self_idx, cross_idx, P)
    assert out.shape == (B, N, C)
    assert bool(jnp.all(jnp.isfinite(out)))
    max_err = float(jnp.max(jnp.abs(out - ref)))
    # bf16 matmul operands + approx reciprocal / tanh-GELU vs. the exact f32 reference
    assert bool(jnp.allclose(out, ref, atol=7.5e-2, rtol=7.5e-2)), \
        f"max abs err = {max_err}"
    print("KERNEL_OK")
</pallas_src>

<mosaic_0001>
module attributes {stable_mosaic.version = 11 : i64} {
  func.func @decoder_kernel(%arg0: i32, %arg1: memref<1x8x32xf32, #tpu.memory_space<vmem>>, %arg2: memref<1x8x32xf32, #tpu.memory_space<vmem>>, %arg3: memref<1x64x8xbf16, #tpu.memory_space<vmem>>, %arg4: memref<1x64x8xbf16, #tpu.memory_space<vmem>>, %arg5: memref<6x8x32x4xbf16, #tpu.memory_space<vmem>>, %arg6: memref<2x8x4x32xbf16, #tpu.memory_space<vmem>>, %arg7: memref<8x32x32xbf16, #tpu.memory_space<vmem>>, %arg8: memref<32x128xbf16, #tpu.memory_space<vmem>>, %arg9: memref<128x32xbf16, #tpu.memory_space<vmem>>, %arg10: memref<15x32xf32, #tpu.memory_space<vmem>>, %arg11: memref<1x128xf32, #tpu.memory_space<vmem>>, %arg12: memref<1x8x32xf32, #tpu.memory_space<vmem>>) attributes {dimension_semantics = [#tpu.dimension_semantics<parallel>], iteration_bounds = array<i64: 2>, scalar_prefetch = 0 : i64, scratch_operands = 0 : i64, tpu.core_type = #tpu.core_type<tc>, window_params = [{transform_indices = @transform_0, window_bounds = array<i64: 1, 8, 32>}, {transform_indices = @transform_1, window_bounds = array<i64: 1, 8, 32>}, {transform_indices = @transform_2, window_bounds = array<i64: 1, 64, 8>}, {transform_indices = @transform_3, window_bounds = array<i64: 1, 64, 8>}, {pipeline_mode = #tpu.pipeline_mode<synchronous>, transform_indices = @transform_4, window_bounds = array<i64: 6, 8, 32, 4>}, {pipeline_mode = #tpu.pipeline_mode<synchronous>, transform_indices = @transform_5, window_bounds = array<i64: 2, 8, 4, 32>}, {pipeline_mode = #tpu.pipeline_mode<synchronous>, transform_indices = @transform_6, window_bounds = array<i64: 8, 32, 32>}, {pipeline_mode = #tpu.pipeline_mode<synchronous>, transform_indices = @transform_7, window_bounds = array<i64: 32, 128>}, {pipeline_mode = #tpu.pipeline_mode<synchronous>, transform_indices = @transform_8, window_bounds = array<i64: 128, 32>}, {pipeline_mode = #tpu.pipeline_mode<synchronous>, transform_indices = @transform_9, window_bounds = array<i64: 15, 32>}, {pipeline_mode = #tpu.pipeline_mode<synchronous>, transform_indices = @transform_10, window_bounds = array<i64: 1, 128>}, {transform_indices = @transform_11, window_bounds = array<i64: 1, 8, 32>}]} {
    %c0 = arith.constant 0 : index
    %c0_0 = arith.constant 0 : index
    %c0_1 = arith.constant 0 : index
    %0 = vector.load %arg1[%c0, %c0_0, %c0_1] : memref<1x8x32xf32, #tpu.memory_space<vmem>>, vector<1x8x32xf32>
    %1 = vector.shape_cast %0 : vector<1x8x32xf32> to vector<8x32xf32>
    %c0_2 = arith.constant 0 : index
    %c0_3 = arith.constant 0 : index
    %c0_4 = arith.constant 0 : index
    %2 = vector.load %arg2[%c0_2, %c0_3, %c0_4] : memref<1x8x32xf32, #tpu.memory_space<vmem>>, vector<1x8x32xf32>
    %3 = vector.shape_cast %2 : vector<1x8x32xf32> to vector<8x32xf32>
    %c0_5 = arith.constant 0 : index
    %c0_6 = arith.constant 0 : index
    %c0_7 = arith.constant 0 : index
    %4 = vector.load %arg3[%c0_5, %c0_6, %c0_7] : memref<1x64x8xbf16, #tpu.memory_space<vmem>>, vector<1x64x8xbf16>
    %5 = vector.shape_cast %4 : vector<1x64x8xbf16> to vector<64x8xbf16>
    %c0_8 = arith.constant 0 : index
    %c0_9 = arith.constant 0 : index
    %c0_10 = arith.constant 0 : index
    %6 = vector.load %arg4[%c0_8, %c0_9, %c0_10] : memref<1x64x8xbf16, #tpu.memory_space<vmem>>, vector<1x64x8xbf16>
    %7 = vector.shape_cast %6 : vector<1x64x8xbf16> to vector<64x8xbf16>
    %c0_11 = arith.constant 0 : index
    %c0_12 = arith.constant 0 : index
    %8 = vector.load %arg10[%c0_11, %c0_12] : memref<15x32xf32, #tpu.memory_space<vmem>>, vector<15x32xf32>
    %9 = vector.extract_strided_slice %8 {offsets = [0, 0], sizes = [1, 32], strides = [1, 1]} : vector<15x32xf32> to vector<1x32xf32>
    %10 = vector.extract_strided_slice %8 {offsets = [1, 0], sizes = [1, 32], strides = [1, 1]} : vector<15x32xf32> to vector<1x32xf32>
    %cst = arith.constant dense<0.000000e+00> : vector<8xf32>
    %11 = vector.multi_reduction <add>, %1, %cst [1] : vector<8x32xf32> to vector<8xf32>
    %12 = vector.shape_cast %11 : vector<8xf32> to vector<8x1xf32>
    %cst_13 = arith.constant 3.200000e+01 : f32
    %13 = vector.broadcast %cst_13 : f32 to vector<8x1xf32>
    %14 = arith.divf %12, %13 : vector<8x1xf32>
    %15 = vector.broadcast %14 : vector<8x1xf32> to vector<8x32xf32>
    %16 = arith.subf %1, %15 : vector<8x32xf32>
    %17 = arith.mulf %16, %16 : vector<8x32xf32>
    %cst_14 = arith.constant dense<0.000000e+00> : vector<8xf32>
    %18 = vector.multi_reduction <add>, %17, %cst_14 [1] : vector<8x32xf32> to vector<8xf32>
    %19 = vector.shape_cast %18 : vector<8xf32> to vector<8x1xf32>
    %cst_15 = arith.constant 3.200000e+01 : f32
    %20 = vector.broadcast %cst_15 : f32 to vector<8x1xf32>
    %21 = arith.divf %19, %20 : vector<8x1xf32>
    %22 = vector.broadcast %14 : vector<8x1xf32> to vector<8x32xf32>
    %23 = arith.subf %1, %22 : vector<8x32xf32>
    %cst_16 = arith.constant 9.99999974E-6 : f32
    %24 = vector.broadcast %cst_16 : f32 to vector<8x1xf32>
    %25 = arith.addf %21, %24 : vector<8x1xf32>
    %26 = math.rsqrt %25 : vector<8x1xf32>
    %27 = vector.broadcast %26 : vector<8x1xf32> to vector<8x32xf32>
    %28 = arith.mulf %23, %27 : vector<8x32xf32>
    %29 = vector.broadcast %9 : vector<1x32xf32> to vector<8x32xf32>
    %30 = arith.mulf %28, %29 : vector<8x32xf32>
    %31 = vector.broadcast %10 : vector<1x32xf32> to vector<8x32xf32>
    %32 = arith.addf %30, %31 : vector<8x32xf32>
    %c0_17 = arith.constant 0 : index
    %c0_18 = arith.constant 0 : index
    %c0_19 = arith.constant 0 : index
    %c0_20 = arith.constant 0 : index
    %33 = vector.load %arg5[%c0_17, %c0_18, %c0_19, %c0_20] : memref<6x8x32x4xbf16, #tpu.memory_space<vmem>>, vector<1x8x32x4xbf16>
    %34 = vector.shape_cast %33 : vector<1x8x32x4xbf16> to vector<8x32x4xbf16>
    %c1 = arith.constant 1 : index
    %c0_21 = arith.constant 0 : index
    %c0_22 = arith.constant 0 : index
    %c0_23 = arith.constant 0 : index
    %35 = vector.load %arg5[%c1, %c0_21, %c0_22, %c0_23] : memref<6x8x32x4xbf16, #tpu.memory_space<vmem>>, vector<1x8x32x4xbf16>
    %36 = vector.shape_cast %35 : vector<1x8x32x4xbf16> to vector<8x32x4xbf16>
    %c2 = arith.constant 2 : index
    %c0_24 = arith.constant 0 : index
    %c0_25 = arith.constant 0 : index
    %c0_26 = arith.constant 0 : index
    %37 = vector.load %arg5[%c2, %c0_24, %c0_25, %c0_26] : memref<6x8x32x4xbf16, #tpu.memory_space<vmem>>, vector<1x8x32x4xbf16>
    %38 = vector.shape_cast %37 : vector<1x8x32x4xbf16> to vector<8x32x4xbf16>
    %c0_27 = arith.constant 0 : index
    %c0_28 = arith.constant 0 : index
    %c0_29 = arith.constant 0 : index
    %c0_30 = arith.constant 0 : index
    %39 = vector.load %arg6[%c0_27, %c0_28, %c0_29, %c0_30] : memref<2x8x4x32xbf16, #tpu.memory_space<vmem>>, vector<1x8x4x32xbf16>
    %40 = vector.shape_cast %39 : vector<1x8x4x32xbf16> to vector<8x4x32xbf16>
    %41 = vector.extract_strided_slice %8 {offsets = [8, 0], sizes = [1, 32], strides = [1, 1]} : vector<15x32xf32> to vector<1x32xf32>
    %42 = arith.truncf %32 : vector<8x32xf32> to vector<8x32xbf16>
    %43 = vector.shape_cast %42 : vector<8x32xbf16> to vector<1x8x32xbf16>
    %44 = vector.shape_cast %43 : vector<1x8x32xbf16> to vector<1x8x32xbf16>
    %45 = vector.broadcast %44 : vector<1x8x32xbf16> to vector<8x8x32xbf16>
    %46 = arith.truncf %32 : vector<8x32xf32> to vector<8x32xbf16>
    %47 = vector.shape_cast %46 : vector<8x32xbf16> to vector<1x8x32xbf16>
    %48 = vector.shape_cast %47 : vector<1x8x32xbf16> to vector<1x8x32xbf16>
    %49 = vector.broadcast %48 : vector<1x8x32xbf16> to vector<8x8x32xbf16>
    "tpu.trace_start"() <{level = 10 : i32, message = "hnc,hcd->hnd"}> : () -> ()
    %cst_31 = arith.constant dense<0.000000e+00> : vector<8x8x4xf32>
    %50 = tpu.matmul %45, %34, %cst_31 {dimension_numbers = #tpu.dot_dimension_numbers<[2], [1], [1], [2], [0, 0, 0, 1, 1, 2], [0], [0]>} : vector<8x8x32xbf16>, vector<8x32x4xbf16>, vector<8x8x4xf32> -> vector<8x8x4xf32>
    "tpu.trace_stop"() : () -> ()
    "tpu.trace_start"() <{level = 10 : i32, message = "hmc,hcd->hmd"}> : () -> ()
    %cst_32 = arith.constant dense<0.000000e+00> : vector<8x8x4xf32>
    %51 = tpu.matmul %49, %36, %cst_32 {dimension_numbers = #tpu.dot_dimension_numbers<[2], [1], [1], [2], [0, 0, 0, 1, 1, 2], [0], [0]>} : vector<8x8x32xbf16>, vector<8x32x4xbf16>, vector<8x8x4xf32> -> vector<8x8x4xf32>
    %cst_33 = arith.constant dense<0.000000e+00> : vector<8x8x4xf32>
    %52 = tpu.matmul %49, %38, %cst_33 {dimension_numbers = #tpu.dot_dimension_numbers<[2], [1], [1], [2], [0, 0, 0, 1, 1, 2], [0], [0]>} : vector<8x8x32xbf16>, vector<8x32x4xbf16>, vector<8x8x4xf32> -> vector<8x8x4xf32>
    "tpu.trace_stop"() : () -> ()
    %53 = arith.truncf %50 : vector<8x8x4xf32> to vector<8x8x4xbf16>
    %54 = arith.truncf %51 : vector<8x8x4xf32> to vector<8x8x4xbf16>
    "tpu.trace_start"() <{level = 10 : i32, message = "hnd,hmd->hnm"}> : () -> ()
    %cst_34 = arith.constant dense<0.000000e+00> : vector<8x8x8xf32>
    %55 = tpu.matmul %53, %54, %cst_34 {dimension_numbers = #tpu.dot_dimension_numbers<[2], [2], [1], [1], [0, 0, 0, 1, 1, 1], [0], [0]>} : vector<8x8x4xbf16>, vector<8x8x4xbf16>, vector<8x8x8xf32> -> vector<8x8x8xf32>
    "tpu.trace_stop"() : () -> ()
    %cst_35 = arith.constant 5.000000e-01 : f32
    %56 = vector.broadcast %cst_35 : f32 to vector<8x8x8xf32>
    %57 = arith.mulf %55, %56 : vector<8x8x8xf32>
    %cst_36 = arith.constant dense<0xFF800000> : vector<8x8xf32>
    %58 = vector.multi_reduction <maximumf>, %57, %cst_36 [2] : vector<8x8x8xf32> to vector<8x8xf32>
    %59 = vector.shape_cast %58 : vector<8x8xf32> to vector<8x8x1xf32>
    %60 = vector.broadcast %59 : vector<8x8x1xf32> to vector<8x8x8xf32>
    %61 = arith.subf %57, %60 : vector<8x8x8xf32>
    %62 = math.exp %61 : vector<8x8x8xf32>
    %cst_37 = arith.constant dense<0.000000e+00> : vector<8x8xf32>
    %63 = vector.multi_reduction <add>, %62, %cst_37 [2] : vector<8x8x8xf32> to vector<8x8xf32>
    %64 = vector.shape_cast %63 : vector<8x8xf32> to vector<8x8x1xf32>
    %65 = tpu.reciprocal %64 {approx = true} : vector<8x8x1xf32> -> vector<8x8x1xf32>
    %66 = vector.broadcast %65 : vector<8x8x1xf32> to vector<8x8x8xf32>
    %67 = arith.mulf %62, %66 : vector<8x8x8xf32>
    %68 = arith.truncf %67 : vector<8x8x8xf32> to vector<8x8x8xbf16>
    %69 = arith.truncf %52 : vector<8x8x4xf32> to vector<8x8x4xbf16>
    "tpu.trace_start"() <{level = 10 : i32, message = "hnm,hmd->hnd"}> : () -> ()
    %cst_38 = arith.constant dense<0.000000e+00> : vector<8x8x4xf32>
    %70 = tpu.matmul %68, %69, %cst_38 {dimension_numbers = #tpu.dot_dimension_numbers<[2], [1], [1], [2], [0, 0, 0, 1, 1, 2], [0], [0]>} : vector<8x8x8xbf16>, vector<8x8x4xbf16>, vector<8x8x4xf32> -> vector<8x8x4xf32>
    "tpu.trace_stop"() : () -> ()
    %71 = arith.truncf %70 : vector<8x8x4xf32> to vector<8x8x4xbf16>
    "tpu.trace_start"() <{level = 10 : i32, message = "hnd,hdc->hnc"}> : () -> ()
    %cst_39 = arith.constant dense<0.000000e+00> : vector<8x8x32xf32>
    %72 = tpu.matmul %71, %40, %cst_39 {dimension_numbers = #tpu.dot_dimension_numbers<[2], [1], [1], [2], [0, 0, 0, 1, 1, 2], [0], [0]>} : vector<8x8x4xbf16>, vector<8x4x32xbf16>, vector<8x8x32xf32> -> vector<8x8x32xf32>
    "tpu.trace_stop"() : () -> ()
    %73 = vector.extract_strided_slice %72 {offsets = [0, 0, 0], sizes = [1, 8, 32], strides = [1, 1, 1]} : vector<8x8x32xf32> to vector<1x8x32xf32>
    %74 = vector.shape_cast %73 : vector<1x8x32xf32> to vector<8x32xf32>
    %75 = vector.extract_strided_slice %72 {offsets = [1, 0, 0], sizes = [1, 8, 32], strides = [1, 1, 1]} : vector<8x8x32xf32> to vector<1x8x32xf32>
    %76 = vector.shape_cast %75 : vector<1x8x32xf32> to vector<8x32xf32>
    %77 = arith.addf %74, %76 : vector<8x32xf32>
    %78 = vector.extract_strided_slice %72 {offsets = [2, 0, 0], sizes = [1, 8, 32], strides = [1, 1, 1]} : vector<8x8x32xf32> to vector<1x8x32xf32>
    %79 = vector.shape_cast %78 : vector<1x8x32xf32> to vector<8x32xf32>
    %80 = arith.addf %77, %79 : vector<8x32xf32>
    %81 = vector.extract_strided_slice %72 {offsets = [3, 0, 0], sizes = [1, 8, 32], strides = [1, 1, 1]} : vector<8x8x32xf32> to vector<1x8x32xf32>
    %82 = vector.shape_cast %81 : vector<1x8x32xf32> to vector<8x32xf32>
    %83 = arith.addf %80, %82 : vector<8x32xf32>
    %84 = vector.extract_strided_slice %72 {offsets = [4, 0, 0], sizes = [1, 8, 32], strides = [1, 1, 1]} : vector<8x8x32xf32> to vector<1x8x32xf32>
    %85 = vector.shape_cast %84 : vector<1x8x32xf32> to vector<8x32xf32>
    %86 = arith.addf %83, %85 : vector<8x32xf32>
    %87 = vector.extract_strided_slice %72 {offsets = [5, 0, 0], sizes = [1, 8, 32], strides = [1, 1, 1]} : vector<8x8x32xf32> to vector<1x8x32xf32>
    %88 = vector.shape_cast %87 : vector<1x8x32xf32> to vector<8x32xf32>
    %89 = arith.addf %86, %88 : vector<8x32xf32>
    %90 = vector.extract_strided_slice %72 {offsets = [6, 0, 0], sizes = [1, 8, 32], strides = [1, 1, 1]} : vector<8x8x32xf32> to vector<1x8x32xf32>
    %91 = vector.shape_cast %90 : vector<1x8x32xf32> to vector<8x32xf32>
    %92 = arith.addf %89, %91 : vector<8x32xf32>
    %93 = vector.extract_strided_slice %72 {offsets = [7, 0, 0], sizes = [1, 8, 32], strides = [1, 1, 1]} : vector<8x8x32xf32> to vector<1x8x32xf32>
    %94 = vector.shape_cast %93 : vector<1x8x32xf32> to vector<8x32xf32>
    %95 = arith.addf %92, %94 : vector<8x32xf32>
    %96 = vector.broadcast %41 : vector<1x32xf32> to vector<8x32xf32>
    %97 = arith.addf %95, %96 : vector<8x32xf32>
    %c0_40 = arith.constant 0 : index
    %c0_41 = arith.constant 0 : index
    %c0_42 = arith.constant 0 : index
    %98 = vector.load %arg7[%c0_40, %c0_41, %c0_42] : memref<8x32x32xbf16, #tpu.memory_space<vmem>>, vector<1x32x32xbf16>
    %99 = vector.shape_cast %98 : vector<1x32x32xbf16> to vector<32x32xbf16>
    %c1_43 = arith.constant 1 : index
    %c0_44 = arith.constant 0 : index
    %c0_45 = arith.constant 0 : index
    %100 = vector.load %arg7[%c1_43, %c0_44, %c0_45] : memref<8x32x32xbf16, #tpu.memory_space<vmem>>, vector<1x32x32xbf16>
    %101 = vector.shape_cast %100 : vector<1x32x32xbf16> to vector<32x32xbf16>
    %102 = vector.extract_strided_slice %8 {offsets = [9, 0], sizes = [1, 32], strides = [1, 1]} : vector<15x32xf32> to vector<1x32xf32>
    %103 = arith.truncf %32 : vector<8x32xf32> to vector<8x32xbf16>
    %cst_46 = arith.constant dense<0.000000e+00> : vector<8x32xf32>
    %104 = tpu.matmul %103, %99, %cst_46 {dimension_numbers = #tpu.dot_dimension_numbers<[1], [0], [0], [1], [0, 0, 1, 1], [], []>} : vector<8x32xbf16>, vector<32x32xbf16>, vector<8x32xf32> -> vector<8x32xf32>
    %105 = arith.truncf %104 : vector<8x32xf32> to vector<8x32xbf16>
    %cst_47 = arith.constant dense<0.000000e+00> : vector<64x32xf32>
    %106 = tpu.matmul %5, %105, %cst_47 {dimension_numbers = #tpu.dot_dimension_numbers<[1], [0], [0], [1], [0, 0, 1, 1], [], []>} : vector<64x8xbf16>, vector<8x32xbf16>, vector<64x32xf32> -> vector<64x32xf32>
    %107 = arith.truncf %32 : vector<8x32xf32> to vector<8x32xbf16>
    %cst_48 = arith.constant dense<0.000000e+00> : vector<8x32xf32>
    %108 = tpu.matmul %107, %101, %cst_48 {dimension_numbers = #tpu.dot_dimension_numbers<[1], [0], [0], [1], [0, 0, 1, 1], [], []>} : vector<8x32xbf16>, vector<32x32xbf16>, vector<8x32xf32> -> vector<8x32xf32>
    %109 = vector.broadcast %102 : vector<1x32xf32> to vector<8x32xf32>
    %110 = arith.addf %108, %109 : vector<8x32xf32>
    %111 = vector.shape_cast %106 : vector<64x32xf32> to vector<8x8x32xf32>
    %112 = vector.shape_cast %110 : vector<8x32xf32> to vector<1x8x32xf32>
    %113 = vector.broadcast %112 : vector<1x8x32xf32> to vector<8x8x32xf32>
    %114 = arith.addf %111, %113 : vector<8x8x32xf32>
    %cst_49 = arith.constant 2.000000e-01 : f32
    %115 = vector.broadcast %cst_49 : f32 to vector<8x8x32xf32>
    %116 = arith.mulf %115, %114 : vector<8x8x32xf32>
    %117 = arith.maximumf %114, %116 : vector<8x8x32xf32>
    %118 = vector.extract_strided_slice %117 {offsets = [0, 0, 0], sizes = [1, 8, 32], strides = [1, 1, 1]} : vector<8x8x32xf32> to vector<1x8x32xf32>
    %119 = vector.shape_cast %118 : vector<1x8x32xf32> to vector<8x32xf32>
    %120 = vector.extract_strided_slice %117 {offsets = [1, 0, 0], sizes = [1, 8, 32], strides = [1, 1, 1]} : vector<8x8x32xf32> to vector<1x8x32xf32>
    %121 = vector.shape_cast %120 : vector<1x8x32xf32> to vector<8x32xf32>
    %122 = arith.maximumf %119, %121 : vector<8x32xf32>
    %123 = vector.extract_strided_slice %117 {offsets = [2, 0, 0], sizes = [1, 8, 32], strides = [1, 1, 1]} : vector<8x8x32xf32> to vector<1x8x32xf32>
    %124 = vector.shape_cast %123 : vector<1x8x32xf32> to vector<8x32xf32>
    %125 = arith.maximumf %122, %124 : vector<8x32xf32>
    %126 = vector.extract_strided_slice %117 {offsets = [3, 0, 0], sizes = [1, 8, 32], strides = [1, 1, 1]} : vector<8x8x32xf32> to vector<1x8x32xf32>
    %127 = vector.shape_cast %126 : vector<1x8x32xf32> to vector<8x32xf32>
    %128 = arith.maximumf %125, %127 : vector<8x32xf32>
    %129 = vector.extract_strided_slice %117 {offsets = [4, 0, 0], sizes = [1, 8, 32], strides = [1, 1, 1]} : vector<8x8x32xf32> to vector<1x8x32xf32>
    %130 = vector.shape_cast %129 : vector<1x8x32xf32> to vector<8x32xf32>
    %131 = arith.maximumf %128, %130 : vector<8x32xf32>
    %132 = vector.extract_strided_slice %117 {offsets = [5, 0, 0], sizes = [1, 8, 32], strides = [1, 1, 1]} : vector<8x8x32xf32> to vector<1x8x32xf32>
    %133 = vector.shape_cast %132 : vector<1x8x32xf32> to vector<8x32xf32>
    %134 = arith.maximumf %131, %133 : vector<8x32xf32>
    %135 = vector.extract_strided_slice %117 {offsets = [6, 0, 0], sizes = [1, 8, 32], strides = [1, 1, 1]} : vector<8x8x32xf32> to vector<1x8x32xf32>
    %136 = vector.shape_cast %135 : vector<1x8x32xf32> to vector<8x32xf32>
    %137 = arith.maximumf %134, %136 : vector<8x32xf32>
    %138 = vector.extract_strided_slice %117 {offsets = [7, 0, 0], sizes = [1, 8, 32], strides = [1, 1, 1]} : vector<8x8x32xf32> to vector<1x8x32xf32>
    %139 = vector.shape_cast %138 : vector<1x8x32xf32> to vector<8x32xf32>
    %140 = arith.maximumf %137, %139 : vector<8x32xf32>
    %141 = arith.truncf %97 : vector<8x32xf32> to vector<8x32xbf16>
    %c2_50 = arith.constant 2 : index
    %c0_51 = arith.constant 0 : index
    %c0_52 = arith.constant 0 : index
    %142 = vector.load %arg7[%c2_50, %c0_51, %c0_52] : memref<8x32x32xbf16, #tpu.memory_space<vmem>>, vector<1x32x32xbf16>
    %143 = vector.shape_cast %142 : vector<1x32x32xbf16> to vector<32x32xbf16>
    %cst_53 = arith.constant dense<0.000000e+00> : vector<8x32xf32>
    %144 = tpu.matmul %141, %143, %cst_53 {dimension_numbers = #tpu.dot_dimension_numbers<[1], [0], [0], [1], [0, 0, 1, 1], [], []>} : vector<8x32xbf16>, vector<32x32xbf16>, vector<8x32xf32> -> vector<8x32xf32>
    %145 = arith.truncf %140 : vector<8x32xf32> to vector<8x32xbf16>
    %c3 = arith.constant 3 : index
    %c0_54 = arith.constant 0 : index
    %c0_55 = arith.constant 0 : index
    %146 = vector.load %arg7[%c3, %c0_54, %c0_55] : memref<8x32x32xbf16, #tpu.memory_space<vmem>>, vector<1x32x32xbf16>
    %147 = vector.shape_cast %146 : vector<1x32x32xbf16> to vector<32x32xbf16>
    %cst_56 = arith.constant dense<0.000000e+00> : vector<8x32xf32>
    %148 = tpu.matmul %145, %147, %cst_56 {dimension_numbers = #tpu.dot_dimension_numbers<[1], [0], [0], [1], [0, 0, 1, 1], [], []>} : vector<8x32xbf16>, vector<32x32xbf16>, vector<8x32xf32> -> vector<8x32xf32>
    %149 = arith.addf %144, %148 : vector<8x32xf32>
    %150 = vector.extract_strided_slice %8 {offsets = [10, 0], sizes = [1, 32], strides = [1, 1]} : vector<15x32xf32> to vector<1x32xf32>
    %151 = vector.broadcast %150 : vector<1x32xf32> to vector<8x32xf32>
    %152 = arith.addf %149, %151 : vector<8x32xf32>
    %153 = arith.addf %1, %152 : vector<8x32xf32>
    %154 = vector.extract_strided_slice %8 {offsets = [2, 0], sizes = [1, 32], strides = [1, 1]} : vector<15x32xf32> to vector<1x32xf32>
    %155 = vector.extract_strided_slice %8 {offsets = [3, 0], sizes = [1, 32], strides = [1, 1]} : vector<15x32xf32> to vector<1x32xf32>
    %cst_57 = arith.constant dense<0.000000e+00> : vector<8xf32>
    %156 = vector.multi_reduction <add>, %153, %cst_57 [1] : vector<8x32xf32> to vector<8xf32>
    %157 = vector.shape_cast %156 : vector<8xf32> to vector<8x1xf32>
    %cst_58 = arith.constant 3.200000e+01 : f32
    %158 = vector.broadcast %cst_58 : f32 to vector<8x1xf32>
    %159 = arith.divf %157, %158 : vector<8x1xf32>
    %160 = vector.broadcast %159 : vector<8x1xf32> to vector<8x32xf32>
    %161 = arith.subf %153, %160 : vector<8x32xf32>
    %162 = arith.mulf %161, %161 : vector<8x32xf32>
    %cst_59 = arith.constant dense<0.000000e+00> : vector<8xf32>
    %163 = vector.multi_reduction <add>, %162, %cst_59 [1] : vector<8x32xf32> to vector<8xf32>
    %164 = vector.shape_cast %163 : vector<8xf32> to vector<8x1xf32>
    %cst_60 = arith.constant 3.200000e+01 : f32
    %165 = vector.broadcast %cst_60 : f32 to vector<8x1xf32>
    %166 = arith.divf %164, %165 : vector<8x1xf32>
    %167 = vector.broadcast %159 : vector<8x1xf32> to vector<8x32xf32>
    %168 = arith.subf %153, %167 : vector<8x32xf32>
    %cst_61 = arith.constant 9.99999974E-6 : f32
    %169 = vector.broadcast %cst_61 : f32 to vector<8x1xf32>
    %170 = arith.addf %166, %169 : vector<8x1xf32>
    %171 = math.rsqrt %170 : vector<8x1xf32>
    %172 = vector.broadcast %171 : vector<8x1xf32> to vector<8x32xf32>
    %173 = arith.mulf %168, %172 : vector<8x32xf32>
    %174 = vector.broadcast %154 : vector<1x32xf32> to vector<8x32xf32>
    %175 = arith.mulf %173, %174 : vector<8x32xf32>
    %176 = vector.broadcast %155 : vector<1x32xf32> to vector<8x32xf32>
    %177 = arith.addf %175, %176 : vector<8x32xf32>
    %178 = vector.extract_strided_slice %8 {offsets = [4, 0], sizes = [1, 32], strides = [1, 1]} : vector<15x32xf32> to vector<1x32xf32>
    %179 = vector.extract_strided_slice %8 {offsets = [5, 0], sizes = [1, 32], strides = [1, 1]} : vector<15x32xf32> to vector<1x32xf32>
    %cst_62 = arith.constant dense<0.000000e+00> : vector<8xf32>
    %180 = vector.multi_reduction <add>, %3, %cst_62 [1] : vector<8x32xf32> to vector<8xf32>
    %181 = vector.shape_cast %180 : vector<8xf32> to vector<8x1xf32>
    %cst_63 = arith.constant 3.200000e+01 : f32
    %182 = vector.broadcast %cst_63 : f32 to vector<8x1xf32>
    %183 = arith.divf %181, %182 : vector<8x1xf32>
    %184 = vector.broadcast %183 : vector<8x1xf32> to vector<8x32xf32>
    %185 = arith.subf %3, %184 : vector<8x32xf32>
    %186 = arith.mulf %185, %185 : vector<8x32xf32>
    %cst_64 = arith.constant dense<0.000000e+00> : vector<8xf32>
    %187 = vector.multi_reduction <add>, %186, %cst_64 [1] : vector<8x32xf32> to vector<8xf32>
    %188 = vector.shape_cast %187 : vector<8xf32> to vector<8x1xf32>
    %cst_65 = arith.constant 3.200000e+01 : f32
    %189 = vector.broadcast %cst_65 : f32 to vector<8x1xf32>
    %190 = arith.divf %188, %189 : vector<8x1xf32>
    %191 = vector.broadcast %183 : vector<8x1xf32> to vector<8x32xf32>
    %192 = arith.subf %3, %191 : vector<8x32xf32>
    %cst_66 = arith.constant 9.99999974E-6 : f32
    %193 = vector.broadcast %cst_66 : f32 to vector<8x1xf32>
    %194 = arith.addf %190, %193 : vector<8x1xf32>
    %195 = math.rsqrt %194 : vector<8x1xf32>
    %196 = vector.broadcast %195 : vector<8x1xf32> to vector<8x32xf32>
    %197 = arith.mulf %192, %196 : vector<8x32xf32>
    %198 = vector.broadcast %178 : vector<1x32xf32> to vector<8x32xf32>
    %199 = arith.mulf %197, %198 : vector<8x32xf32>
    %200 = vector.broadcast %179 : vector<1x32xf32> to vector<8x32xf32>
    %201 = arith.addf %199, %200 : vector<8x32xf32>
    %c3_67 = arith.constant 3 : index
    %c0_68 = arith.constant 0 : index
    %c0_69 = arith.constant 0 : index
    %c0_70 = arith.constant 0 : index
    %202 = vector.load %arg5[%c3_67, %c0_68, %c0_69, %c0_70] : memref<6x8x32x4xbf16, #tpu.memory_space<vmem>>, vector<1x8x32x4xbf16>
    %203 = vector.shape_cast %202 : vector<1x8x32x4xbf16> to vector<8x32x4xbf16>
    %c4 = arith.constant 4 : index
    %c0_71 = arith.constant 0 : index
    %c0_72 = arith.constant 0 : index
    %c0_73 = arith.constant 0 : index
    %204 = vector.load %arg5[%c4, %c0_71, %c0_72, %c0_73] : memref<6x8x32x4xbf16, #tpu.memory_space<vmem>>, vector<1x8x32x4xbf16>
    %205 = vector.shape_cast %204 : vector<1x8x32x4xbf16> to vector<8x32x4xbf16>
    %c5 = arith.constant 5 : index
    %c0_74 = arith.constant 0 : index
    %c0_75 = arith.constant 0 : index
    %c0_76 = arith.constant 0 : index
    %206 = vector.load %arg5[%c5, %c0_74, %c0_75, %c0_76] : memref<6x8x32x4xbf16, #tpu.memory_space<vmem>>, vector<1x8x32x4xbf16>
    %207 = vector.shape_cast %206 : vector<1x8x32x4xbf16> to vector<8x32x4xbf16>
    %c1_77 = arith.constant 1 : index
    %c0_78 = arith.constant 0 : index
    %c0_79 = arith.constant 0 : index
    %c0_80 = arith.constant 0 : index
    %208 = vector.load %arg6[%c1_77, %c0_78, %c0_79, %c0_80] : memref<2x8x4x32xbf16, #tpu.memory_space<vmem>>, vector<1x8x4x32xbf16>
    %209 = vector.shape_cast %208 : vector<1x8x4x32xbf16> to vector<8x4x32xbf16>
    %210 = vector.extract_strided_slice %8 {offsets = [11, 0], sizes = [1, 32], strides = [1, 1]} : vector<15x32xf32> to vector<1x32xf32>
    %211 = arith.truncf %177 : vector<8x32xf32> to vector<8x32xbf16>
    %212 = vector.shape_cast %211 : vector<8x32xbf16> to vector<1x8x32xbf16>
    %213 = vector.shape_cast %212 : vector<1x8x32xbf16> to vector<1x8x32xbf16>
    %214 = vector.broadcast %213 : vector<1x8x32xbf16> to vector<8x8x32xbf16>
    %215 = arith.truncf %201 : vector<8x32xf32> to vector<8x32xbf16>
    %216 = vector.shape_cast %215 : vector<8x32xbf16> to vector<1x8x32xbf16>
    %217 = vector.shape_cast %216 : vector<1x8x32xbf16> to vector<1x8x32xbf16>
    %218 = vector.broadcast %217 : vector<1x8x32xbf16> to vector<8x8x32xbf16>
    "tpu.trace_start"() <{level = 10 : i32, message = "hnc,hcd->hnd"}> : () -> ()
    %cst_81 = arith.constant dense<0.000000e+00> : vector<8x8x4xf32>
    %219 = tpu.matmul %214, %203, %cst_81 {dimension_numbers = #tpu.dot_dimension_numbers<[2], [1], [1], [2], [0, 0, 0, 1, 1, 2], [0], [0]>} : vector<8x8x32xbf16>, vector<8x32x4xbf16>, vector<8x8x4xf32> -> vector<8x8x4xf32>
    "tpu.trace_stop"() : () -> ()
    "tpu.trace_start"() <{level = 10 : i32, message = "hmc,hcd->hmd"}> : () -> ()
    %cst_82 = arith.constant dense<0.000000e+00> : vector<8x8x4xf32>
    %220 = tpu.matmul %218, %205, %cst_82 {dimension_numbers = #tpu.dot_dimension_numbers<[2], [1], [1], [2], [0, 0, 0, 1, 1, 2], [0], [0]>} : vector<8x8x32xbf16>, vector<8x32x4xbf16>, vector<8x8x4xf32> -> vector<8x8x4xf32>
    %cst_83 = arith.constant dense<0.000000e+00> : vector<8x8x4xf32>
    %221 = tpu.matmul %218, %207, %cst_83 {dimension_numbers = #tpu.dot_dimension_numbers<[2], [1], [1], [2], [0, 0, 0, 1, 1, 2], [0], [0]>} : vector<8x8x32xbf16>, vector<8x32x4xbf16>, vector<8x8x4xf32> -> vector<8x8x4xf32>
    "tpu.trace_stop"() : () -> ()
    %222 = arith.truncf %219 : vector<8x8x4xf32> to vector<8x8x4xbf16>
    %223 = arith.truncf %220 : vector<8x8x4xf32> to vector<8x8x4xbf16>
    "tpu.trace_start"() <{level = 10 : i32, message = "hnd,hmd->hnm"}> : () -> ()
    %cst_84 = arith.constant dense<0.000000e+00> : vector<8x8x8xf32>
    %224 = tpu.matmul %222, %223, %cst_84 {dimension_numbers = #tpu.dot_dimension_numbers<[2], [2], [1], [1], [0, 0, 0, 1, 1, 1], [0], [0]>} : vector<8x8x4xbf16>, vector<8x8x4xbf16>, vector<8x8x8xf32> -> vector<8x8x8xf32>
    "tpu.trace_stop"() : () -> ()
    %cst_85 = arith.constant 5.000000e-01 : f32
    %225 = vector.broadcast %cst_85 : f32 to vector<8x8x8xf32>
    %226 = arith.mulf %224, %225 : vector<8x8x8xf32>
    %cst_86 = arith.constant dense<0xFF800000> : vector<8x8xf32>
    %227 = vector.multi_reduction <maximumf>, %226, %cst_86 [2] : vector<8x8x8xf32> to vector<8x8xf32>
    %228 = vector.shape_cast %227 : vector<8x8xf32> to vector<8x8x1xf32>
    %229 = vector.broadcast %228 : vector<8x8x1xf32> to vector<8x8x8xf32>
    %230 = arith.subf %226, %229 : vector<8x8x8xf32>
    %231 = math.exp %230 : vector<8x8x8xf32>
    %cst_87 = arith.constant dense<0.000000e+00> : vector<8x8xf32>
    %232 = vector.multi_reduction <add>, %231, %cst_87 [2] : vector<8x8x8xf32> to vector<8x8xf32>
    %233 = vector.shape_cast %232 : vector<8x8xf32> to vector<8x8x1xf32>
    %234 = tpu.reciprocal %233 {approx = true} : vector<8x8x1xf32> -> vector<8x8x1xf32>
    %235 = vector.broadcast %234 : vector<8x8x1xf32> to vector<8x8x8xf32>
    %236 = arith.mulf %231, %235 : vector<8x8x8xf32>
    %237 = arith.truncf %236 : vector<8x8x8xf32> to vector<8x8x8xbf16>
    %238 = arith.truncf %221 : vector<8x8x4xf32> to vector<8x8x4xbf16>
    "tpu.trace_start"() <{level = 10 : i32, message = "hnm,hmd->hnd"}> : () -> ()
    %cst_88 = arith.constant dense<0.000000e+00> : vector<8x8x4xf32>
    %239 = tpu.matmul %237, %238, %cst_88 {dimension_numbers = #tpu.dot_dimension_numbers<[2], [1], [1], [2], [0, 0, 0, 1, 1, 2], [0], [0]>} : vector<8x8x8xbf16>, vector<8x8x4xbf16>, vector<8x8x4xf32> -> vector<8x8x4xf32>
    "tpu.trace_stop"() : () -> ()
    %240 = arith.truncf %239 : vector<8x8x4xf32> to vector<8x8x4xbf16>
    "tpu.trace_start"() <{level = 10 : i32, message = "hnd,hdc->hnc"}> : () -> ()
    %cst_89 = arith.constant dense<0.000000e+00> : vector<8x8x32xf32>
    %241 = tpu.matmul %240, %209, %cst_89 {dimension_numbers = #tpu.dot_dimension_numbers<[2], [1], [1], [2], [0, 0, 0, 1, 1, 2], [0], [0]>} : vector<8x8x4xbf16>, vector<8x4x32xbf16>, vector<8x8x32xf32> -> vector<8x8x32xf32>
    "tpu.trace_stop"() : () -> ()
    %242 = vector.extract_strided_slice %241 {offsets = [0, 0, 0], sizes = [1, 8, 32], strides = [1, 1, 1]} : vector<8x8x32xf32> to vector<1x8x32xf32>
    %243 = vector.shape_cast %242 : vector<1x8x32xf32> to vector<8x32xf32>
    %244 = vector.extract_strided_slice %241 {offsets = [1, 0, 0], sizes = [1, 8, 32], strides = [1, 1, 1]} : vector<8x8x32xf32> to vector<1x8x32xf32>
    %245 = vector.shape_cast %244 : vector<1x8x32xf32> to vector<8x32xf32>
    %246 = arith.addf %243, %245 : vector<8x32xf32>
    %247 = vector.extract_strided_slice %241 {offsets = [2, 0, 0], sizes = [1, 8, 32], strides = [1, 1, 1]} : vector<8x8x32xf32> to vector<1x8x32xf32>
    %248 = vector.shape_cast %247 : vector<1x8x32xf32> to vector<8x32xf32>
    %249 = arith.addf %246, %248 : vector<8x32xf32>
    %250 = vector.extract_strided_slice %241 {offsets = [3, 0, 0], sizes = [1, 8, 32], strides = [1, 1, 1]} : vector<8x8x32xf32> to vector<1x8x32xf32>
    %251 = vector.shape_cast %250 : vector<1x8x32xf32> to vector<8x32xf32>
    %252 = arith.addf %249, %251 : vector<8x32xf32>
    %253 = vector.extract_strided_slice %241 {offsets = [4, 0, 0], sizes = [1, 8, 32], strides = [1, 1, 1]} : vector<8x8x32xf32> to vector<1x8x32xf32>
    %254 = vector.shape_cast %253 : vector<1x8x32xf32> to vector<8x32xf32>
    %255 = arith.addf %252, %254 : vector<8x32xf32>
    %256 = vector.extract_strided_slice %241 {offsets = [5, 0, 0], sizes = [1, 8, 32], strides = [1, 1, 1]} : vector<8x8x32xf32> to vector<1x8x32xf32>
    %257 = vector.shape_cast %256 : vector<1x8x32xf32> to vector<8x32xf32>
    %258 = arith.addf %255, %257 : vector<8x32xf32>
    %259 = vector.extract_strided_slice %241 {offsets = [6, 0, 0], sizes = [1, 8, 32], strides = [1, 1, 1]} : vector<8x8x32xf32> to vector<1x8x32xf32>
    %260 = vector.shape_cast %259 : vector<1x8x32xf32> to vector<8x32xf32>
    %261 = arith.addf %258, %260 : vector<8x32xf32>
    %262 = vector.extract_strided_slice %241 {offsets = [7, 0, 0], sizes = [1, 8, 32], strides = [1, 1, 1]} : vector<8x8x32xf32> to vector<1x8x32xf32>
    %263 = vector.shape_cast %262 : vector<1x8x32xf32> to vector<8x32xf32>
    %264 = arith.addf %261, %263 : vector<8x32xf32>
    %265 = vector.broadcast %210 : vector<1x32xf32> to vector<8x32xf32>
    %266 = arith.addf %264, %265 : vector<8x32xf32>
    %c4_90 = arith.constant 4 : index
    %c0_91 = arith.constant 0 : index
    %c0_92 = arith.constant 0 : index
    %267 = vector.load %arg7[%c4_90, %c0_91, %c0_92] : memref<8x32x32xbf16, #tpu.memory_space<vmem>>, vector<1x32x32xbf16>
    %268 = vector.shape_cast %267 : vector<1x32x32xbf16> to vector<32x32xbf16>
    %c5_93 = arith.constant 5 : index
    %c0_94 = arith.constant 0 : index
    %c0_95 = arith.constant 0 : index
    %269 = vector.load %arg7[%c5_93, %c0_94, %c0_95] : memref<8x32x32xbf16, #tpu.memory_space<vmem>>, vector<1x32x32xbf16>
    %270 = vector.shape_cast %269 : vector<1x32x32xbf16> to vector<32x32xbf16>
    %271 = vector.extract_strided_slice %8 {offsets = [12, 0], sizes = [1, 32], strides = [1, 1]} : vector<15x32xf32> to vector<1x32xf32>
    %272 = arith.truncf %201 : vector<8x32xf32> to vector<8x32xbf16>
    %cst_96 = arith.constant dense<0.000000e+00> : vector<8x32xf32>
    %273 = tpu.matmul %272, %268, %cst_96 {dimension_numbers = #tpu.dot_dimension_numbers<[1], [0], [0], [1], [0, 0, 1, 1], [], []>} : vector<8x32xbf16>, vector<32x32xbf16>, vector<8x32xf32> -> vector<8x32xf32>
    %274 = arith.truncf %273 : vector<8x32xf32> to vector<8x32xbf16>
    %cst_97 = arith.constant dense<0.000000e+00> : vector<64x32xf32>
    %275 = tpu.matmul %7, %274, %cst_97 {dimension_numbers = #tpu.dot_dimension_numbers<[1], [0], [0], [1], [0, 0, 1, 1], [], []>} : vector<64x8xbf16>, vector<8x32xbf16>, vector<64x32xf32> -> vector<64x32xf32>
    %276 = arith.truncf %177 : vector<8x32xf32> to vector<8x32xbf16>
    %cst_98 = arith.constant dense<0.000000e+00> : vector<8x32xf32>
    %277 = tpu.matmul %276, %270, %cst_98 {dimension_numbers = #tpu.dot_dimension_numbers<[1], [0], [0], [1], [0, 0, 1, 1], [], []>} : vector<8x32xbf16>, vector<32x32xbf16>, vector<8x32xf32> -> vector<8x32xf32>
    %278 = vector.broadcast %271 : vector<1x32xf32> to vector<8x32xf32>
    %279 = arith.addf %277, %278 : vector<8x32xf32>
    %280 = vector.shape_cast %275 : vector<64x32xf32> to vector<8x8x32xf32>
    %281 = vector.shape_cast %279 : vector<8x32xf32> to vector<1x8x32xf32>
    %282 = vector.broadcast %281 : vector<1x8x32xf32> to vector<8x8x32xf32>
    %283 = arith.addf %280, %282 : vector<8x8x32xf32>
    %cst_99 = arith.constant 2.000000e-01 : f32
    %284 = vector.broadcast %cst_99 : f32 to vector<8x8x32xf32>
    %285 = arith.mulf %284, %283 : vector<8x8x32xf32>
    %286 = arith.maximumf %283, %285 : vector<8x8x32xf32>
    %287 = vector.extract_strided_slice %286 {offsets = [0, 0, 0], sizes = [1, 8, 32], strides = [1, 1, 1]} : vector<8x8x32xf32> to vector<1x8x32xf32>
    %288 = vector.shape_cast %287 : vector<1x8x32xf32> to vector<8x32xf32>
    %289 = vector.extract_strided_slice %286 {offsets = [1, 0, 0], sizes = [1, 8, 32], strides = [1, 1, 1]} : vector<8x8x32xf32> to vector<1x8x32xf32>
    %290 = vector.shape_cast %289 : vector<1x8x32xf32> to vector<8x32xf32>
    %291 = arith.maximumf %288, %290 : vector<8x32xf32>
    %292 = vector.extract_strided_slice %286 {offsets = [2, 0, 0], sizes = [1, 8, 32], strides = [1, 1, 1]} : vector<8x8x32xf32> to vector<1x8x32xf32>
    %293 = vector.shape_cast %292 : vector<1x8x32xf32> to vector<8x32xf32>
    %294 = arith.maximumf %291, %293 : vector<8x32xf32>
    %295 = vector.extract_strided_slice %286 {offsets = [3, 0, 0], sizes = [1, 8, 32], strides = [1, 1, 1]} : vector<8x8x32xf32> to vector<1x8x32xf32>
    %296 = vector.shape_cast %295 : vector<1x8x32xf32> to vector<8x32xf32>
    %297 = arith.maximumf %294, %296 : vector<8x32xf32>
    %298 = vector.extract_strided_slice %286 {offsets = [4, 0, 0], sizes = [1, 8, 32], strides = [1, 1, 1]} : vector<8x8x32xf32> to vector<1x8x32xf32>
    %299 = vector.shape_cast %298 : vector<1x8x32xf32> to vector<8x32xf32>
    %300 = arith.maximumf %297, %299 : vector<8x32xf32>
    %301 = vector.extract_strided_slice %286 {offsets = [5, 0, 0], sizes = [1, 8, 32], strides = [1, 1, 1]} : vector<8x8x32xf32> to vector<1x8x32xf32>
    %302 = vector.shape_cast %301 : vector<1x8x32xf32> to vector<8x32xf32>
    %303 = arith.maximumf %300, %302 : vector<8x32xf32>
    %304 = vector.extract_strided_slice %286 {offsets = [6, 0, 0], sizes = [1, 8, 32], strides = [1, 1, 1]} : vector<8x8x32xf32> to vector<1x8x32xf32>
    %305 = vector.shape_cast %304 : vector<1x8x32xf32> to vector<8x32xf32>
    %306 = arith.maximumf %303, %305 : vector<8x32xf32>
    %307 = vector.extract_strided_slice %286 {offsets = [7, 0, 0], sizes = [1, 8, 32], strides = [1, 1, 1]} : vector<8x8x32xf32> to vector<1x8x32xf32>
    %308 = vector.shape_cast %307 : vector<1x8x32xf32> to vector<8x32xf32>
    %309 = arith.maximumf %306, %308 : vector<8x32xf32>
    %310 = arith.truncf %266 : vector<8x32xf32> to vector<8x32xbf16>
    %c6 = arith.constant 6 : index
    %c0_100 = arith.constant 0 : index
    %c0_101 = arith.constant 0 : index
    %311 = vector.load %arg7[%c6, %c0_100, %c0_101] : memref<8x32x32xbf16, #tpu.memory_space<vmem>>, vector<1x32x32xbf16>
    %312 = vector.shape_cast %311 : vector<1x32x32xbf16> to vector<32x32xbf16>
    %cst_102 = arith.constant dense<0.000000e+00> : vector<8x32xf32>
    %313 = tpu.matmul %310, %312, %cst_102 {dimension_numbers = #tpu.dot_dimension_numbers<[1], [0], [0], [1], [0, 0, 1, 1], [], []>} : vector<8x32xbf16>, vector<32x32xbf16>, vector<8x32xf32> -> vector<8x32xf32>
    %314 = arith.truncf %309 : vector<8x32xf32> to vector<8x32xbf16>
    %c7 = arith.constant 7 : index
    %c0_103 = arith.constant 0 : index
    %c0_104 = arith.constant 0 : index
    %315 = vector.load %arg7[%c7, %c0_103, %c0_104] : memref<8x32x32xbf16, #tpu.memory_space<vmem>>, vector<1x32x32xbf16>
    %316 = vector.shape_cast %315 : vector<1x32x32xbf16> to vector<32x32xbf16>
    %cst_105 = arith.constant dense<0.000000e+00> : vector<8x32xf32>
    %317 = tpu.matmul %314, %316, %cst_105 {dimension_numbers = #tpu.dot_dimension_numbers<[1], [0], [0], [1], [0, 0, 1, 1], [], []>} : vector<8x32xbf16>, vector<32x32xbf16>, vector<8x32xf32> -> vector<8x32xf32>
    %318 = arith.addf %313, %317 : vector<8x32xf32>
    %319 = vector.extract_strided_slice %8 {offsets = [13, 0], sizes = [1, 32], strides = [1, 1]} : vector<15x32xf32> to vector<1x32xf32>
    %320 = vector.broadcast %319 : vector<1x32xf32> to vector<8x32xf32>
    %321 = arith.addf %318, %320 : vector<8x32xf32>
    %322 = arith.addf %153, %321 : vector<8x32xf32>
    %323 = vector.extract_strided_slice %8 {offsets = [6, 0], sizes = [1, 32], strides = [1, 1]} : vector<15x32xf32> to vector<1x32xf32>
    %324 = vector.extract_strided_slice %8 {offsets = [7, 0], sizes = [1, 32], strides = [1, 1]} : vector<15x32xf32> to vector<1x32xf32>
    %cst_106 = arith.constant dense<0.000000e+00> : vector<8xf32>
    %325 = vector.multi_reduction <add>, %322, %cst_106 [1] : vector<8x32xf32> to vector<8xf32>
    %326 = vector.shape_cast %325 : vector<8xf32> to vector<8x1xf32>
    %cst_107 = arith.constant 3.200000e+01 : f32
    %327 = vector.broadcast %cst_107 : f32 to vector<8x1xf32>
    %328 = arith.divf %326, %327 : vector<8x1xf32>
    %329 = vector.broadcast %328 : vector<8x1xf32> to vector<8x32xf32>
    %330 = arith.subf %322, %329 : vector<8x32xf32>
    %331 = arith.mulf %330, %330 : vector<8x32xf32>
    %cst_108 = arith.constant dense<0.000000e+00> : vector<8xf32>
    %332 = vector.multi_reduction <add>, %331, %cst_108 [1] : vector<8x32xf32> to vector<8xf32>
    %333 = vector.shape_cast %332 : vector<8xf32> to vector<8x1xf32>
    %cst_109 = arith.constant 3.200000e+01 : f32
    %334 = vector.broadcast %cst_109 : f32 to vector<8x1xf32>
    %335 = arith.divf %333, %334 : vector<8x1xf32>
    %336 = vector.broadcast %328 : vector<8x1xf32> to vector<8x32xf32>
    %337 = arith.subf %322, %336 : vector<8x32xf32>
    %cst_110 = arith.constant 9.99999974E-6 : f32
    %338 = vector.broadcast %cst_110 : f32 to vector<8x1xf32>
    %339 = arith.addf %335, %338 : vector<8x1xf32>
    %340 = math.rsqrt %339 : vector<8x1xf32>
    %341 = vector.broadcast %340 : vector<8x1xf32> to vector<8x32xf32>
    %342 = arith.mulf %337, %341 : vector<8x32xf32>
    %343 = vector.broadcast %323 : vector<1x32xf32> to vector<8x32xf32>
    %344 = arith.mulf %342, %343 : vector<8x32xf32>
    %345 = vector.broadcast %324 : vector<1x32xf32> to vector<8x32xf32>
    %346 = arith.addf %344, %345 : vector<8x32xf32>
    %347 = arith.truncf %346 : vector<8x32xf32> to vector<8x32xbf16>
    %c0_111 = arith.constant 0 : index
    %c0_112 = arith.constant 0 : index
    %348 = vector.load %arg8[%c0_111, %c0_112] : memref<32x128xbf16, #tpu.memory_space<vmem>>, vector<32x128xbf16>
    %cst_113 = arith.constant dense<0.000000e+00> : vector<8x128xf32>
    %349 = tpu.matmul %347, %348, %cst_113 {dimension_numbers = #tpu.dot_dimension_numbers<[1], [0], [0], [1], [0, 0, 1, 1], [], []>} : vector<8x32xbf16>, vector<32x128xbf16>, vector<8x128xf32> -> vector<8x128xf32>
    %c0_114 = arith.constant 0 : index
    %c0_115 = arith.constant 0 : index
    %350 = vector.load %arg11[%c0_114, %c0_115] : memref<1x128xf32, #tpu.memory_space<vmem>>, vector<1x128xf32>
    %351 = vector.broadcast %350 : vector<1x128xf32> to vector<8x128xf32>
    %352 = arith.addf %349, %351 : vector<8x128xf32>
    %cst_116 = arith.constant 5.000000e-01 : f32
    %353 = vector.broadcast %cst_116 : f32 to vector<8x128xf32>
    %354 = arith.mulf %353, %352 : vector<8x128xf32>
    %cst_117 = arith.constant 4.471500e-02 : f32
    %355 = vector.broadcast %cst_117 : f32 to vector<8x128xf32>
    %356 = arith.mulf %355, %352 : vector<8x128xf32>
    %357 = arith.mulf %356, %352 : vector<8x128xf32>
    %358 = arith.mulf %357, %352 : vector<8x128xf32>
    %359 = arith.addf %352, %358 : vector<8x128xf32>
    %cst_118 = arith.constant 0.797884583 : f32
    %360 = vector.broadcast %cst_118 : f32 to vector<8x128xf32>
    %361 = arith.mulf %360, %359 : vector<8x128xf32>
    %362 = math.tanh %361 : vector<8x128xf32>
    %cst_119 = arith.constant 1.000000e+00 : f32
    %363 = vector.broadcast %cst_119 : f32 to vector<8x128xf32>
    %364 = arith.addf %363, %362 : vector<8x128xf32>
    %365 = arith.mulf %354, %364 : vector<8x128xf32>
    %366 = arith.truncf %365 : vector<8x128xf32> to vector<8x128xbf16>
    %c0_120 = arith.constant 0 : index
    %c0_121 = arith.constant 0 : index
    %367 = vector.load %arg9[%c0_120, %c0_121] : memref<128x32xbf16, #tpu.memory_space<vmem>>, vector<128x32xbf16>
    %cst_122 = arith.constant dense<0.000000e+00> : vector<8x32xf32>
    %368 = tpu.matmul %366, %367, %cst_122 {dimension_numbers = #tpu.dot_dimension_numbers<[1], [0], [0], [1], [0, 0, 1, 1], [], []>} : vector<8x128xbf16>, vector<128x32xbf16>, vector<8x32xf32> -> vector<8x32xf32>
    %369 = vector.extract_strided_slice %8 {offsets = [14, 0], sizes = [1, 32], strides = [1, 1]} : vector<15x32xf32> to vector<1x32xf32>
    %370 = vector.broadcast %369 : vector<1x32xf32> to vector<8x32xf32>
    %371 = arith.addf %368, %370 : vector<8x32xf32>
    %372 = arith.addf %322, %371 : vector<8x32xf32>
    %373 = vector.shape_cast %372 : vector<8x32xf32> to vector<1x8x32xf32>
    %c0_123 = arith.constant 0 : index
    %c0_124 = arith.constant 0 : index
    %c0_125 = arith.constant 0 : index
    %374 = vector.load %arg12[%c0_123, %c0_124, %c0_125] : memref<1x8x32xf32, #tpu.memory_space<vmem>>, vector<1x8x32xf32>
    tpu.vector_store %arg12[%c0_123, %c0_124, %c0_125], %373 {strides = array<i32>} : memref<1x8x32xf32, #tpu.memory_space<vmem>>, vector<1x8x32xf32>,
    return
  }
  func.func @transform_0(%arg0: i32) -> (i32, i32, i32) {
    %c0_i32 = arith.constant 0 : i32
    %c0_i32_0 = arith.constant 0 : i32
    %c0_i32_1 = arith.constant 0 : i32
    return %arg0, %c0_i32, %c0_i32_0 : i32, i32, i32
  }
  func.func @transform_1(%arg0: i32) -> (i32, i32, i32) {
    %c0_i32 = arith.constant 0 : i32
    %c0_i32_0 = arith.constant 0 : i32
    %c0_i32_1 = arith.constant 0 : i32
    return %arg0, %c0_i32, %c0_i32_0 : i32, i32, i32
  }
  func.func @transform_2(%arg0: i32) -> (i32, i32, i32) {
    %c0_i32 = arith.constant 0 : i32
    %c0_i32_0 = arith.constant 0 : i32
    %c0_i32_1 = arith.constant 0 : i32
    return %arg0, %c0_i32, %c0_i32_0 : i32, i32, i32
  }
  func.func @transform_3(%arg0: i32) -> (i32, i32, i32) {
    %c0_i32 = arith.constant 0 : i32
    %c0_i32_0 = arith.constant 0 : i32
    %c0_i32_1 = arith.constant 0 : i32
    return %arg0, %c0_i32, %c0_i32_0 : i32, i32, i32
  }
  func.func @transform_4(%arg0: i32) -> (i32, i32, i32, i32) {
    %c0_i32 = arith.constant 0 : i32
    %c0_i32_0 = arith.constant 0 : i32
    %c0_i32_1 = arith.constant 0 : i32
    %c0_i32_2 = arith.constant 0 : i32
    %c0_i32_3 = arith.constant 0 : i32
    return %c0_i32, %c0_i32_0, %c0_i32_1, %c0_i32_2 : i32, i32, i32, i32
  }
  func.func @transform_5(%arg0: i32) -> (i32, i32, i32, i32) {
    %c0_i32 = arith.constant 0 : i32
    %c0_i32_0 = arith.constant 0 : i32
    %c0_i32_1 = arith.constant 0 : i32
    %c0_i32_2 = arith.constant 0 : i32
    %c0_i32_3 = arith.constant 0 : i32
    return %c0_i32, %c0_i32_0, %c0_i32_1, %c0_i32_2 : i32, i32, i32, i32
  }
  func.func @transform_6(%arg0: i32) -> (i32, i32, i32) {
    %c0_i32 = arith.constant 0 : i32
    %c0_i32_0 = arith.constant 0 : i32
    %c0_i32_1 = arith.constant 0 : i32
    %c0_i32_2 = arith.constant 0 : i32
    return %c0_i32, %c0_i32_0, %c0_i32_1 : i32, i32, i32
  }
  func.func @transform_7(%arg0: i32) -> (i32, i32) {
    %c0_i32 = arith.constant 0 : i32
    %c0_i32_0 = arith.constant 0 : i32
    %c0_i32_1 = arith.constant 0 : i32
    return %c0_i32, %c0_i32_0 : i32, i32
  }
  func.func @transform_8(%arg0: i32) -> (i32, i32) {
    %c0_i32 = arith.constant 0 : i32
    %c0_i32_0 = arith.constant 0 : i32
    %c0_i32_1 = arith.constant 0 : i32
    return %c0_i32, %c0_i32_0 : i32, i32
  }
  func.func @transform_9(%arg0: i32) -> (i32, i32) {
    %c0_i32 = arith.constant 0 : i32
    %c0_i32_0 = arith.constant 0 : i32
    %c0_i32_1 = arith.constant 0 : i32
    return %c0_i32, %c0_i32_0 : i32, i32
  }
  func.func @transform_10(%arg0: i32) -> (i32, i32) {
    %c0_i32 = arith.constant 0 : i32
    %c0_i32_0 = arith.constant 0 : i32
    %c0_i32_1 = arith.constant 0 : i32
    return %c0_i32, %c0_i32_0 : i32, i32
  }
  func.func @transform_11(%arg0: i32) -> (i32, i32, i32) {
    %c0_i32 = arith.constant 0 : i32
    %c0_i32_0 = arith.constant 0 : i32
    %c0_i32_1 = arith.constant 0 : i32
    return %arg0, %c0_i32, %c0_i32_0 : i32, i32, i32
  }
}

</mosaic_0001>

<llo_original>
// kernel: tpu_custom_call.1
$region0: #{tpu_custom_call.1}
  #allocation0 [shape = 'u32[]', space=smem, size = 0x4, offset = 0x4, fixed_abs, tag = 'smem constant byte address 0x4 - core index']
  #allocation1 [shape = 'u32[144,128]{1,0:T(1,128)}', space=vmem, size = 0x12000, scoped, tag = 'internal scratch']
  %s0 = inlined_call_operand.vmem [shape: f32[2,8,32], index: 0, kind: input, shape index: {}]
  %s1 = inlined_call_operand.vmem [shape: f32[2,8,32], index: 1, kind: input, shape index: {}]
  %s2 = inlined_call_operand.vmem [shape: bf16[2,64,8], index: 2, kind: input, shape index: {}]
  %s3 = inlined_call_operand.vmem [shape: bf16[2,64,8], index: 3, kind: input, shape index: {}]
  %s4 = inlined_call_operand.vmem [shape: bf16[6,8,32,4], index: 4, kind: input, shape index: {}]
  %s5 = inlined_call_operand.vmem [shape: bf16[2,8,4,32], index: 5, kind: input, shape index: {}]
  %s6 = inlined_call_operand.vmem [shape: bf16[8,32,32], index: 6, kind: input, shape index: {}]
  %s7 = inlined_call_operand.vmem [shape: bf16[32,128], index: 7, kind: input, shape index: {}]
  %s8 = inlined_call_operand.vmem [shape: bf16[128,32], index: 8, kind: input, shape index: {}]
  %s9 = inlined_call_operand.vmem [shape: f32[15,32], index: 9, kind: input, shape index: {}]
  %s10 = inlined_call_operand.vmem [shape: f32[1,128], index: 10, kind: input, shape index: {}]
  %s11 = inlined_call_operand.hbm [shape: f32[2,8,32], index: 11, kind: output, shape index: {}]
  %s12 = sld [smem:[#allocation0]]
  $region77: #{tpu_custom_call.1} parent=0
    _
  %s14 = ssub.s32 1, %s12
  %s15 = scalar_select 0, %s14, %s12
  $region1: #{tpu_custom_call.1} parent=0
    #allocation2 [shape = 'u8[8192]{0}', space=vmem, size = 0x2000, scoped, tag = 'output window, operand 0']
    #allocation3 [shape = 's32[2]{0}', space=sflag, size = 0x8, scoped, tag = 'scoped memory for tpu_custom_call.1']
    %16 = vsyncpa [#allocation3], 0
    %s17 = scalar_lea.sflag [#allocation3], 1
    %18 = vsyncpa %s17, 0
    loop: start=0, step=1, limit=4
    $region2: #{tpu_custom_call.1} parent=1 // loop_pre_header
      _
    $region3: #{tpu_custom_call.1} parent=1 // loop_header
      %s20 = sphi 0, %s24
      %p21 = scmp.ge.s32.totalorder %s20, 4
      %s30 = sphi 0, %s32
      %s33 = sphi 0, %s30
      %s34 = sphi 0, %s33
      %s50 = sphi 0, %s34
      %s56 = sphi 0, %s58
      %s59 = sphi 0, %s56
      %s60 = sphi 0, %s59
      %s76 = sphi 0, %s60
      %s82 = sphi 0, %s84
      %s85 = sphi 0, %s82
      %s86 = sphi 0, %s85
      %s102 = sphi 0, %s86
      %s108 = sphi 0, %s110
      %s111 = sphi 0, %s108
      %s112 = sphi 0, %s111
      %s128 = sphi 0, %s112
      %s132 = sphi 0, %s132
      %s134 = sphi 0, %s132
      %s135 = sphi 0, %s134
      %s149 = sphi 0, %s135
      %s153 = sphi 0, %s153
      %s155 = sphi 0, %s153
      %s156 = sphi 0, %s155
      %s170 = sphi 0, %s156
      %s174 = sphi 0, %s174
      %s176 = sphi 0, %s174
      %s177 = sphi 0, %s176
      %s191 = sphi 0, %s177
      %s195 = sphi 0, %s195
      %s197 = sphi 0, %s195
      %s198 = sphi 0, %s197
      %s212 = sphi 0, %s198
      %s216 = sphi 0, %s216
      %s218 = sphi 0, %s216
      %s219 = sphi 0, %s218
      %s233 = sphi 0, %s219
      %s237 = sphi 0, %s237
      %s239 = sphi 0, %s237
      %s240 = sphi 0, %s239
      %s254 = sphi 0, %s240
      %s258 = sphi 0, %s258
      %s260 = sphi 0, %s258
      %s261 = sphi 0, %s260
      %s275 = sphi 0, %s261
      %s281 = sphi 0, %s283
      %s284 = sphi 0, %s281
      %s285 = sphi 0, %s284
      %s301 = sphi 0, %s285
    $region4: #{tpu_custom_call.1} parent=1 // loop_header_branch
      %23 = sbr.rel (%p21) target = $region8
    $region5: #{tpu_custom_call.1} parent=1 // loop_body
      %s25 = ssub.s32 %s20, 1
      %s26 = ssub.s32 %s20, 2
      %s27 = sadd.s32 %s20, 1
      %s28 = ssub.s32 %s20, %s27
      %p29 = scmp.eq.s32.totalorder %s28, 0
      %s31 = sadd.s32 %s30, 1
      %s32 = scalar_select %p29, %s30, %s31
      %p35 = pneg %p29
      %p36 = scmp.eq.s32.totalorder %s20, 1
      %p37 = por %p35, %p36
      %p38 = scmp.ne.s32.totalorder %s30, %s33
      %p39 = scmp.eq.s32.totalorder %s20, 0
      %p40 = por %p38, %p39
      %p41 = scmp.ne.s32.totalorder %s30, %s33
      %p42 = scmp.eq.s32.totalorder %s25, 1
      %p43 = por %p41, %p42
      %p44 = scmp.ne.s32.totalorder %s33, %s34
      %p45 = scmp.eq.s32.totalorder %s25, 0
      %p46 = por %p44, %p45
      %p47 = scmp.ne.s32.totalorder %s33, %s34
      %p48 = scmp.eq.s32.totalorder %s26, 1
      %p49 = por %p47, %p48
      %p51 = scmp.ne.s32.totalorder %s34, %s50
      %p52 = scmp.eq.s32.totalorder %s26, 0
      %p53 = por %p51, %p52
      %s54 = ssub.s32 %s20, %s27
      %p55 = scmp.eq.s32.totalorder %s54, 0
      %s57 = sadd.s32 %s56, 1
      %s58 = scalar_select %p55, %s56, %s57
      %p61 = pneg %p55
      %p62 = scmp.eq.s32.totalorder %s20, 1
      %p63 = por %p61, %p62
      %p64 = scmp.ne.s32.totalorder %s56, %s59
      %p65 = scmp.eq.s32.totalorder %s20, 0
      %p66 = por %p64, %p65
      %p67 = scmp.ne.s32.totalorder %s56, %s59
      %p68 = scmp.eq.s32.totalorder %s25, 1
      %p69 = por %p67, %p68
      %p70 = scmp.ne.s32.totalorder %s59, %s60
      %p71 = scmp.eq.s32.totalorder %s25, 0
      %p72 = por %p70, %p71
      %p73 = scmp.ne.s32.totalorder %s59, %s60
      %p74 = scmp.eq.s32.totalorder %s26, 1
      %p75 = por %p73, %p74
      %p77 = scmp.ne.s32.totalorder %s60, %s76
      %p78 = scmp.eq.s32.totalorder %s26, 0
      %p79 = por %p77, %p78
      %s80 = ssub.s32 %s20, %s27
      %p81 = scmp.eq.s32.totalorder %s80, 0
      %s83 = sadd.s32 %s82, 1
      %s84 = scalar_select %p81, %s82, %s83
      %p87 = pneg %p81
      %p88 = scmp.eq.s32.totalorder %s20, 1
      %p89 = por %p87, %p88
      %p90 = scmp.ne.s32.totalorder %s82, %s85
      %p91 = scmp.eq.s32.totalorder %s20, 0
      %p92 = por %p90, %p91
      %p93 = scmp.ne.s32.totalorder %s82, %s85
      %p94 = scmp.eq.s32.totalorder %s25, 1
      %p95 = por %p93, %p94
      %p96 = scmp.ne.s32.totalorder %s85, %s86
      %p97 = scmp.eq.s32.totalorder %s25, 0
      %p98 = por %p96, %p97
      %p99 = scmp.ne.s32.totalorder %s85, %s86
      %p100 = scmp.eq.s32.totalorder %s26, 1
      %p101 = por %p99, %p100
      %p103 = scmp.ne.s32.totalorder %s86, %s102
      %p104 = scmp.eq.s32.totalorder %s26, 0
      %p105 = por %p103, %p104
      %s106 = ssub.s32 %s20, %s27
      %p107 = scmp.eq.s32.totalorder %s106, 0
      %s109 = sadd.s32 %s108, 1
      %s110 = scalar_select %p107, %s108, %s109
      %p113 = pneg %p107
      %p114 = scmp.eq.s32.totalorder %s20, 1
      %p115 = por %p113, %p114
      %p116 = scmp.ne.s32.totalorder %s108, %s111
      %p117 = scmp.eq.s32.totalorder %s20, 0
      %p118 = por %p116, %p117
      %p119 = scmp.ne.s32.totalorder %s108, %s111
      %p120 = scmp.eq.s32.totalorder %s25, 1
      %p121 = por %p119, %p120
      %p122 = scmp.ne.s32.totalorder %s111, %s112
      %p123 = scmp.eq.s32.totalorder %s25, 0
      %p124 = por %p122, %p123
      %p125 = scmp.ne.s32.totalorder %s111, %s112
      %p126 = scmp.eq.s32.totalorder %s26, 1
      %p127 = por %p125, %p126
      %p129 = scmp.ne.s32.totalorder %s112, %s128
      %p130 = scmp.eq.s32.totalorder %s26, 0
      %p131 = por %p129, %p130
      %s133 = sadd.s32 %s132, 1
      %p136 = scmp.eq.s32.totalorder %s20, 1
      %p137 = scmp.ne.s32.totalorder %s132, %s134
      %p138 = scmp.eq.s32.totalorder %s20, 0
      %p139 = por %p137, %p138
      %p140 = scmp.ne.s32.totalorder %s132, %s134
      %p141 = scmp.eq.s32.totalorder %s25, 1
      %p142 = por %p140, %p141
      %p143 = scmp.ne.s32.totalorder %s134, %s135
      %p144 = scmp.eq.s32.totalorder %s25, 0
      %p145 = por %p143, %p144
      %p146 = scmp.ne.s32.totalorder %s134, %s135
      %p147 = scmp.eq.s32.totalorder %s26, 1
      %p148 = por %p146, %p147
      %p150 = scmp.ne.s32.totalorder %s135, %s149
      %p151 = scmp.eq.s32.totalorder %s26, 0
      %p152 = por %p150, %p151
      %s154 = sadd.s32 %s153, 1
      %p157 = scmp.eq.s32.totalorder %s20, 1
      %p158 = scmp.ne.s32.totalorder %s153, %s155
      %p159 = scmp.eq.s32.totalorder %s20, 0
      %p160 = por %p158, %p159
      %p161 = scmp.ne.s32.totalorder %s153, %s155
      %p162 = scmp.eq.s32.totalorder %s25, 1
      %p163 = por %p161, %p162
      %p164 = scmp.ne.s32.totalorder %s155, %s156
      %p165 = scmp.eq.s32.totalorder %s25, 0
      %p166 = por %p164, %p165
      %p167 = scmp.ne.s32.totalorder %s155, %s156
      %p168 = scmp.eq.s32.totalorder %s26, 1
      %p169 = por %p167, %p168
      %p171 = scmp.ne.s32.totalorder %s156, %s170
      %p172 = scmp.eq.s32.totalorder %s26, 0
      %p173 = por %p171, %p172
      %s175 = sadd.s32 %s174, 1
      %p178 = scmp.eq.s32.totalorder %s20, 1
      %p179 = scmp.ne.s32.totalorder %s174, %s176
      %p180 = scmp.eq.s32.totalorder %s20, 0
      %p181 = por %p179, %p180
      %p182 = scmp.ne.s32.totalorder %s174, %s176
      %p183 = scmp.eq.s32.totalorder %s25, 1
      %p184 = por %p182, %p183
      %p185 = scmp.ne.s32.totalorder %s176, %s177
      %p186 = scmp.eq.s32.totalorder %s25, 0
      %p187 = por %p185, %p186
      %p188 = scmp.ne.s32.totalorder %s176, %s177
      %p189 = scmp.eq.s32.totalorder %s26, 1
      %p190 = por %p188, %p189
      %p192 = scmp.ne.s32.totalorder %s177, %s191
      %p193 = scmp.eq.s32.totalorder %s26, 0
      %p194 = por %p192, %p193
      %s196 = sadd.s32 %s195, 1
      %p199 = scmp.eq.s32.totalorder %s20, 1
      %p200 = scmp.ne.s32.totalorder %s195, %s197
      %p201 = scmp.eq.s32.totalorder %s20, 0
      %p202 = por %p200, %p201
      %p203 = scmp.ne.s32.totalorder %s195, %s197
      %p204 = scmp.eq.s32.totalorder %s25, 1
      %p205 = por %p203, %p204
      %p206 = scmp.ne.s32.totalorder %s197, %s198
      %p207 = scmp.eq.s32.totalorder %s25, 0
      %p208 = por %p206, %p207
      %p209 = scmp.ne.s32.totalorder %s197, %s198
      %p210 = scmp.eq.s32.totalorder %s26, 1
      %p211 = por %p209, %p210
      %p213 = scmp.ne.s32.totalorder %s198, %s212
      %p214 = scmp.eq.s32.totalorder %s26, 0
      %p215 = por %p213, %p214
      %s217 = sadd.s32 %s216, 1
      %p220 = scmp.eq.s32.totalorder %s20, 1
      %p221 = scmp.ne.s32.totalorder %s216, %s218
      %p222 = scmp.eq.s32.totalorder %s20, 0
      %p223 = por %p221, %p222
      %p224 = scmp.ne.s32.totalorder %s216, %s218
      %p225 = scmp.eq.s32.totalorder %s25, 1
      %p226 = por %p224, %p225
      %p227 = scmp.ne.s32.totalorder %s218, %s219
      %p228 = scmp.eq.s32.totalorder %s25, 0
      %p229 = por %p227, %p228
      %p230 = scmp.ne.s32.totalorder %s218, %s219
      %p231 = scmp.eq.s32.totalorder %s26, 1
      %p232 = por %p230, %p231
      %p234 = scmp.ne.s32.totalorder %s219, %s233
      %p235 = scmp.eq.s32.totalorder %s26, 0
      %p236 = por %p234, %p235
      %s238 = sadd.s32 %s237, 1
      %p241 = scmp.eq.s32.totalorder %s20, 1
      %p242 = scmp.ne.s32.totalorder %s237, %s239
      %p243 = scmp.eq.s32.totalorder %s20, 0
      %p244 = por %p242, %p243
      %p245 = scmp.ne.s32.totalorder %s237, %s239
      %p246 = scmp.eq.s32.totalorder %s25, 1
      %p247 = por %p245, %p246
      %p248 = scmp.ne.s32.totalorder %s239, %s240
      %p249 = scmp.eq.s32.totalorder %s25, 0
      %p250 = por %p248, %p249
      %p251 = scmp.ne.s32.totalorder %s239, %s240
      %p252 = scmp.eq.s32.totalorder %s26, 1
      %p253 = por %p251, %p252
      %p255 = scmp.ne.s32.totalorder %s240, %s254
      %p256 = scmp.eq.s32.totalorder %s26, 0
      %p257 = por %p255, %p256
      %s259 = sadd.s32 %s258, 1
      %p262 = scmp.eq.s32.totalorder %s20, 1
      %p263 = scmp.ne.s32.totalorder %s258, %s260
      %p264 = scmp.eq.s32.totalorder %s20, 0
      %p265 = por %p263, %p264
      %p266 = scmp.ne.s32.totalorder %s258, %s260
      %p267 = scmp.eq.s32.totalorder %s25, 1
      %p268 = por %p266, %p267
      %p269 = scmp.ne.s32.totalorder %s260, %s261
      %p270 = scmp.eq.s32.totalorder %s25, 0
      %p271 = por %p269, %p270
      %p272 = scmp.ne.s32.totalorder %s260, %s261
      %p273 = scmp.eq.s32.totalorder %s26, 1
      %p274 = por %p272, %p273
      %p276 = scmp.ne.s32.totalorder %s261, %s275
      %p277 = scmp.eq.s32.totalorder %s26, 0
      %p278 = por %p276, %p277
      %s279 = ssub.s32 %s20, %s27
      %p280 = scmp.eq.s32.totalorder %s279, 0
      %s282 = sadd.s32 %s281, 1
      %s283 = scalar_select %p280, %s281, %s282
      %p286 = pneg %p280
      %p287 = scmp.eq.s32.totalorder %s20, 1
      %p288 = por %p286, %p287
      %p289 = scmp.ne.s32.totalorder %s281, %s284
      %p290 = scmp.eq.s32.totalorder %s20, 0
      %p291 = por %p289, %p290
      %p292 = scmp.ne.s32.totalorder %s281, %s284
      %p293 = scmp.eq.s32.totalorder %s25, 1
      %p294 = por %p292, %p293
      %p295 = scmp.ne.s32.totalorder %s284, %s285
      %p296 = scmp.eq.s32.totalorder %s25, 0
      %p297 = por %p295, %p296
      %p298 = scmp.ne.s32.totalorder %s284, %s285
      %p299 = scmp.eq.s32.totalorder %s26, 1
      %p300 = por %p298, %p299
      %p302 = scmp.ne.s32.totalorder %s285, %s301
      %p303 = scmp.eq.s32.totalorder %s26, 0
      %p304 = por %p302, %p303
      %p305 = scmp.le.s32.totalorder 1, %s20
      %p306 = scmp.lt.s32.totalorder %s20, 3
      %p307 = pnand %p305, %p306
      %p308 = pneg %p307
      // Predicated region
      $region9: #{tpu_custom_call.1} parent=5 // pred_check
        _
      $region10: #{tpu_custom_call.1} parent=5 // pred_check_branch
        %310 = sbr.rel (%p307) target = $region12
      $region11: #{tpu_custom_call.1} parent=5 // pred_region
        %s311 = ssub.s32 %s20, 1
        // Predicated region
        $region13: #{tpu_custom_call.1} parent=11 // pred_check
          %p312 = pneg %p145
        $region14: #{tpu_custom_call.1} parent=11 // pred_check_branch
          %314 = sbr.rel (%p312) target = $region16
        $region15: #{tpu_custom_call.1} parent=11 // pred_region
          _
        $region16: #{tpu_custom_call.1} parent=11 // pred_fallthru
          _
        // Predicated region
        $region17: #{tpu_custom_call.1} parent=11 // pred_check
          %p315 = pneg %p166
        $region18: #{tpu_custom_call.1} parent=11 // pred_check_branch
          %317 = sbr.rel (%p315) target = $region20
        $region19: #{tpu_custom_call.1} parent=11 // pred_region
          _
        $region20: #{tpu_custom_call.1} parent=11 // pred_fallthru
          _
        // Predicated region
        $region21: #{tpu_custom_call.1} parent=11 // pred_check
          %p318 = pneg %p187
        $region22: #{tpu_custom_call.1} parent=11 // pred_check_branch
          %320 = sbr.rel (%p318) target = $region24
        $region23: #{tpu_custom_call.1} parent=11 // pred_region
          _
        $region24: #{tpu_custom_call.1} parent=11 // pred_fallthru
          _
        // Predicated region
        $region25: #{tpu_custom_call.1} parent=11 // pred_check
          %p321 = pneg %p208
        $region26: #{tpu_custom_call.1} parent=11 // pred_check_branch
          %323 = sbr.rel (%p321) target = $region28
        $region27: #{tpu_custom_call.1} parent=11 // pred_region
          _
        $region28: #{tpu_custom_call.1} parent=11 // pred_fallthru
          _
        // Predicated region
        $region29: #{tpu_custom_call.1} parent=11 // pred_check
          %p324 = pneg %p229
        $region30: #{tpu_custom_call.1} parent=11 // pred_check_branch
          %326 = sbr.rel (%p324) target = $region32
        $region31: #{tpu_custom_call.1} parent=11 // pred_region
          _
        $region32: #{tpu_custom_call.1} parent=11 // pred_fallthru
          _
        // Predicated region
        $region33: #{tpu_custom_call.1} parent=11 // pred_check
          %p327 = pneg %p250
        $region34: #{tpu_custom_call.1} parent=11 // pred_check_branch
          %329 = sbr.rel (%p327) target = $region36
        $region35: #{tpu_custom_call.1} parent=11 // pred_region
          _
        $region36: #{tpu_custom_call.1} parent=11 // pred_fallthru
          _
        // Predicated region
        $region37: #{tpu_custom_call.1} parent=11 // pred_check
          %p330 = pneg %p271
        $region38: #{tpu_custom_call.1} parent=11 // pred_check_branch
          %332 = sbr.rel (%p330) target = $region40
        $region39: #{tpu_custom_call.1} parent=11 // pred_region
          _
        $region40: #{tpu_custom_call.1} parent=11 // pred_fallthru
          _
      $region12: #{tpu_custom_call.1} parent=5 // pred_fallthru
        _
      %p333 = scmp.lt.s32.totalorder %s20, 2
      // Predicated region
      $region41: #{tpu_custom_call.1} parent=5 // pred_check
        %p334 = pneg %p333
      $region42: #{tpu_custom_call.1} parent=5 // pred_check_branch
        %336 = sbr.rel (%p334) target = $region44
      $region43: #{tpu_custom_call.1} parent=5 // pred_region
        // Predicated region
        $region45: #{tpu_custom_call.1} parent=43 // pred_check
          %p337 = pneg %p40
        $region46: #{tpu_custom_call.1} parent=43 // pred_check_branch
          %339 = sbr.rel (%p337) target = $region48
        $region47: #{tpu_custom_call.1} parent=43 // pred_region
          %p340 = scmp.lt.s32.totalorder %s20, 1
          %s341 = scalar_select %p340, %s20, 1
          %s342 = smul.addr %s341, 8
          %s343 = scalar_lea.vmem %s0, %s342
        $region48: #{tpu_custom_call.1} parent=43 // pred_fallthru
          _
        // Predicated region
        $region49: #{tpu_custom_call.1} parent=43 // pred_check
          %p344 = pneg %p66
        $region50: #{tpu_custom_call.1} parent=43 // pred_check_branch
          %346 = sbr.rel (%p344) target = $region52
        $region51: #{tpu_custom_call.1} parent=43 // pred_region
          %p347 = scmp.lt.s32.totalorder %s20, 1
          %s348 = scalar_select %p347, %s20, 1
          %s349 = smul.addr %s348, 8
          %s350 = scalar_lea.vmem %s1, %s349
        $region52: #{tpu_custom_call.1} parent=43 // pred_fallthru
          _
        // Predicated region
        $region53: #{tpu_custom_call.1} parent=43 // pred_check
          %p351 = pneg %p92
        $region54: #{tpu_custom_call.1} parent=43 // pred_check_branch
          %353 = sbr.rel (%p351) target = $region56
        $region55: #{tpu_custom_call.1} parent=43 // pred_region
          %p354 = scmp.lt.s32.totalorder %s20, 1
          %s355 = scalar_select %p354, %s20, 1
          %s356 = smul.addr %s355, 8
          %s357 = smul.addr %s356, 4
          %s358 = scalar_lea.vmem %s2, %s357
        $region56: #{tpu_custom_call.1} parent=43 // pred_fallthru
          _
        // Predicated region
        $region57: #{tpu_custom_call.1} parent=43 // pred_check
          %p359 = pneg %p118
        $region58: #{tpu_custom_call.1} parent=43 // pred_check_branch
          %361 = sbr.rel (%p359) target = $region60
        $region59: #{tpu_custom_call.1} parent=43 // pred_region
          %p362 = scmp.lt.s32.totalorder %s20, 1
          %s363 = scalar_select %p362, %s20, 1
          %s364 = smul.addr %s363, 8
          %s365 = smul.addr %s364, 4
          %s366 = scalar_lea.vmem %s3, %s365
        $region60: #{tpu_custom_call.1} parent=43 // pred_fallthru
          _
      $region44: #{tpu_custom_call.1} parent=5 // pred_fallthru
        _
      %p367 = scmp.le.s32.totalorder 1, %s20
      %p368 = scmp.lt.s32.totalorder %s20, 3
      %p369 = pnand %p367, %p368
      %p370 = pneg %p369
      // Predicated region
      $region61: #{tpu_custom_call.1} parent=5 // pred_check
        _
      $region62: #{tpu_custom_call.1} parent=5 // pred_check_branch
        %372 = sbr.rel (%p369) target = $region64
      $region63: #{tpu_custom_call.1} parent=5 // pred_region
        %s373 = ssub.s32 %s20, 1
        %p374 = scmp.lt.s32.totalorder %s25, 1
        %s375 = scalar_select %p374, %s25, 1
        %s376 = smul.addr %s375, 8
        %s377 = scalar_lea.vmem %s0, %s376
        %p378 = pneg %p46
        %p379 = pneg %p43
        %p380 = scmp.lt.s32.totalorder %s25, 1
        %s381 = scalar_select %p380, %s25, 1
        %s382 = smul.addr %s381, 8
        %s383 = scalar_lea.vmem %s1, %s382
        %p384 = pneg %p72
        %p385 = pneg %p69
        %p386 = scmp.lt.s32.totalorder %s25, 1
        %s387 = scalar_select %p386, %s25, 1
        %s388 = smul.addr %s387, 8
        %s389 = smul.addr %s388, 4
        %s390 = scalar_lea.vmem %s2, %s389
        %p391 = pneg %p98
        %p392 = pneg %p95
        %p393 = scmp.lt.s32.totalorder %s25, 1
        %s394 = scalar_select %p393, %s25, 1
        %s395 = smul.addr %s394, 8
        %s396 = smul.addr %s395, 4
        %s397 = scalar_lea.vmem %s3, %s396
        %p398 = pneg %p124
        %p399 = pneg %p121
        %p400 = pneg %p145
        %p401 = pneg %p142
        %p402 = pneg %p166
        %p403 = pneg %p163
        %p404 = pneg %p187
        %p405 = pneg %p184
        %p406 = pneg %p208
        %p407 = pneg %p205
        %p408 = pneg %p229
        %p409 = pneg %p226
        %p410 = pneg %p250
        %p411 = pneg %p247
        %p412 = pneg %p271
        %p413 = pneg %p268
        %p414 = pneg %p297
        %p415 = pneg %p294
        %s416 = sand.u32 %s284, 1
        %s417 = scalar_lea.sflag [#allocation3], %s416
        %s418 = sand.u32 %s284, 1
        %s419 = smul.addr %s418, 8
        %s420 = scalar_lea.vmem [#allocation2], %s419
        %p421 = scmp.lt.s32.totalorder %s25, 1
        %s422 = scalar_select %p421, %s25, 1
        %s423 = smul.addr %s422, 8
        %s424 = scalar_lea.vmem %s0, %s423
        %p425 = scmp.lt.s32.totalorder %s25, 1
        %s426 = scalar_select %p425, %s25, 1
        %s427 = smul.addr %s426, 8
        %s428 = scalar_lea.vmem %s1, %s427
        %p429 = scmp.lt.s32.totalorder %s25, 1
        %s430 = scalar_select %p429, %s25, 1
        %s431 = smul.addr %s430, 8
        %s432 = smul.addr %s431, 4
        %s433 = scalar_lea.vmem %s2, %s432
        %p434 = scmp.lt.s32.totalorder %s25, 1
        %s435 = scalar_select %p434, %s25, 1
        %s436 = smul.addr %s435, 8
        %s437 = smul.addr %s436, 4
        %s438 = scalar_lea.vmem %s3, %s437
        %v440 = vld [vmem:[%s424] sm:$0xff]
        %v441 = vld [vmem:[%s428] sm:$0xff]
        %v442 = vld [vmem:[%s433] sm:$0xf]
        %v443 = vld [vmem:[%s433 + $0x4] sm:$0xf]
        %v444 = vld [vmem:[%s433 + $0x8] sm:$0xf]
        %v445 = vld [vmem:[%s433 + $0xc] sm:$0xf]
        %v446 = vld [vmem:[%s433 + $0x10] sm:$0xf]
        %v447 = vld [vmem:[%s433 + $0x14] sm:$0xf]
        %v448 = vld [vmem:[%s433 + $0x18] sm:$0xf]
        %v449 = vld [vmem:[%s433 + $0x1c] sm:$0xf]
        %v450 = vld [vmem:[%s438] sm:$0xf]
        %v451 = vld [vmem:[%s438 + $0x4] sm:$0xf]
        %v452 = vld [vmem:[%s438 + $0x8] sm:$0xf]
        %v453 = vld [vmem:[%s438 + $0xc] sm:$0xf]
        %v454 = vld [vmem:[%s438 + $0x10] sm:$0xf]
        %v455 = vld [vmem:[%s438 + $0x14] sm:$0xf]
        %v456 = vld [vmem:[%s438 + $0x18] sm:$0xf]
        %v457 = vld [vmem:[%s438 + $0x1c] sm:$0xf]
        %v458 = vld [vmem:[%s9] sm:$0xff]
        %v459 = vld [vmem:[%s9 + $0x8] sm:$0x7f]
        %vm460 = vcmask 261120
        %v461 = vsel %vm460, %v440, 0.0
        %462 = vadd.xlane.f32.xlu0 %v461
        %v463 = vpop.xlane.xlu0 %462
        %v464 = vrcp.pop 32.0
        %v465 = vmul.f32 %v463, %v464
        %v466 = vsub.f32 %v440, %v465
        %v467 = vmul.f32 %v466, %v466
        %v468 = vsel %vm460, %v467, 0.0
        %469 = vadd.xlane.f32.xlu0 %v468
        %v470 = vpop.xlane.xlu0 %469
        %v471 = vmul.f32 %v470, %v464
        %v472 = vadd.f32 %v471, 1e-05
        %v473 = vrsqrt.pop %v472
        %v474 = vmul.f32 %v466, %v473
        %v475 = vlaneseq
        %v476 = vshrl.u32 %v475, 7
        %v477 = vsub.s32 0, %v476
        %v478 = vrot.slane %v458, %v477
        %v479 = vmul.f32 %v474, %v478
        %v480 = vlaneseq
        %v481 = vshrl.u32 %v480, 7
        %v482 = vsub.s32 1, %v481
        %v483 = vrot.slane %v458, %v482
        %v484 = vadd.f32 %v479, %v483
        %v485 = vld [vmem:[%s4] sm:$0xf]
        %v486 = vld [vmem:[%s4 + $0x4] sm:$0xf]
        %v487 = vld [vmem:[%s4 + $0x8] sm:$0xf]
        %v488 = vld [vmem:[%s4 + $0xc] sm:$0xf]
        %v489 = vld [vmem:[%s4 + $0x10] sm:$0xf]
        %v490 = vld [vmem:[%s4 + $0x14] sm:$0xf]
        %v491 = vld [vmem:[%s4 + $0x18] sm:$0xf]
        %v492 = vld [vmem:[%s4 + $0x1c] sm:$0xf]
        %v493 = vld [vmem:[%s4 + $0x20] sm:$0xf]
        %v494 = vld [vmem:[%s4 + $0x24] sm:$0xf]
        %v495 = vld [vmem:[%s4 + $0x28] sm:$0xf]
        %v496 = vld [vmem:[%s4 + $0x2c] sm:$0xf]
        %v497 = vld [vmem:[%s4 + $0x30] sm:$0xf]
        %v498 = vld [vmem:[%s4 + $0x34] sm:$0xf]
        %v499 = vld [vmem:[%s4 + $0x38] sm:$0xf]
        %v500 = vld [vmem:[%s4 + $0x3c] sm:$0xf]
        %v501 = vld [vmem:[%s4 + $0x40] sm:$0xf]
        %v502 = vld [vmem:[%s4 + $0x44] sm:$0xf]
        %v503 = vld [vmem:[%s4 + $0x48] sm:$0xf]
        %v504 = vld [vmem:[%s4 + $0x4c] sm:$0xf]
        %v505 = vld [vmem:[%s4 + $0x50] sm:$0xf]
        %v506 = vld [vmem:[%s4 + $0x54] sm:$0xf]
        %v507 = vld [vmem:[%s4 + $0x58] sm:$0xf]
        %v508 = vld [vmem:[%s4 + $0x5c] sm:$0xf]
        %v509 = vld [vmem:[%s4 + $0x60] sm:$0xf]
        %v510 = vld [vmem:[%s4 + $0x64] sm:$0xf]
        %v511 = vld [vmem:[%s4 + $0x68] sm:$0xf]
        %v512 = vld [vmem:[%s4 + $0x6c] sm:$0xf]
        %v513 = vld [vmem:[%s4 + $0x70] sm:$0xf]
        %v514 = vld [vmem:[%s4 + $0x74] sm:$0xf]
        %v515 = vld [vmem:[%s4 + $0x78] sm:$0xf]
        %v516 = vld [vmem:[%s4 + $0x7c] sm:$0xf]
        %s517 = scalar_lea.vmem %s4, 128
        %v518 = vld [vmem:[%s517] sm:$0xf]
        %v519 = vld [vmem:[%s517 + $0x4] sm:$0xf]
        %v520 = vld [vmem:[%s517 + $0x8] sm:$0xf]
        %v521 = vld [vmem:[%s517 + $0xc] sm:$0xf]
        %v522 = vld [vmem:[%s517 + $0x10] sm:$0xf]
        %v523 = vld [vmem:[%s517 + $0x14] sm:$0xf]
        %v524 = vld [vmem:[%s517 + $0x18] sm:$0xf]
        %v525 = vld [vmem:[%s517 + $0x1c] sm:$0xf]
        %v526 = vld [vmem:[%s517 + $0x20] sm:$0xf]
        %v527 = vld [vmem:[%s517 + $0x24] sm:$0xf]
        %v528 = vld [vmem:[%s517 + $0x28] sm:$0xf]
        %v529 = vld [vmem:[%s517 + $0x2c] sm:$0xf]
        %v530 = vld [vmem:[%s517 + $0x30] sm:$0xf]
        %v531 = vld [vmem:[%s517 + $0x34] sm:$0xf]
        %v532 = vld [vmem:[%s517 + $0x38] sm:$0xf]
        %v533 = vld [vmem:[%s517 + $0x3c] sm:$0xf]
        %v534 = vld [vmem:[%s517 + $0x40] sm:$0xf]
        %v535 = vld [vmem:[%s517 + $0x44] sm:$0xf]
        %v536 = vld [vmem:[%s517 + $0x48] sm:$0xf]
        %v537 = vld [vmem:[%s517 + $0x4c] sm:$0xf]
        %v538 = vld [vmem:[%s517 + $0x50] sm:$0xf]
        %v539 = vld [vmem:[%s517 + $0x54] sm:$0xf]
        %v540 = vld [vmem:[%s517 + $0x58] sm:$0xf]
        %v541 = vld [vmem:[%s517 + $0x5c] sm:$0xf]
        %v542 = vld [vmem:[%s517 + $0x60] sm:$0xf]
        %v543 = vld [vmem:[%s517 + $0x64] sm:$0xf]
        %v544 = vld [vmem:[%s517 + $0x68] sm:$0xf]
        %v545 = vld [vmem:[%s517 + $0x6c] sm:$0xf]
        %v546 = vld [vmem:[%s517 + $0x70] sm:$0xf]
        %v547 = vld [vmem:[%s517 + $0x74] sm:$0xf]
        %v548 = vld [vmem:[%s517 + $0x78] sm:$0xf]
        %v549 = vld [vmem:[%s517 + $0x7c] sm:$0xf]
        %s550 = scalar_lea.vmem %s4, 256
        %v551 = vld [vmem:[%s550] sm:$0xf]
        %v552 = vld [vmem:[%s550 + $0x4] sm:$0xf]
        %v553 = vld [vmem:[%s550 + $0x8] sm:$0xf]
        %v554 = vld [vmem:[%s550 + $0xc] sm:$0xf]
        %v555 = vld [vmem:[%s550 + $0x10] sm:$0xf]
        %v556 = vld [vmem:[%s550 + $0x14] sm:$0xf]
        %v557 = vld [vmem:[%s550 + $0x18] sm:$0xf]
        %v558 = vld [vmem:[%s550 + $0x1c] sm:$0xf]
        %v559 = vld [vmem:[%s550 + $0x20] sm:$0xf]
        %v560 = vld [vmem:[%s550 + $0x24] sm:$0xf]
        %v561 = vld [vmem:[%s550 + $0x28] sm:$0xf]
        %v562 = vld [vmem:[%s550 + $0x2c] sm:$0xf]
        %v563 = vld [vmem:[%s550 + $0x30] sm:$0xf]
        %v564 = vld [vmem:[%s550 + $0x34] sm:$0xf]
        %v565 = vld [vmem:[%s550 + $0x38] sm:$0xf]
        %v566 = vld [vmem:[%s550 + $0x3c] sm:$0xf]
        %v567 = vld [vmem:[%s550 + $0x40] sm:$0xf]
        %v568 = vld [vmem:[%s550 + $0x44] sm:$0xf]
        %v569 = vld [vmem:[%s550 + $0x48] sm:$0xf]
        %v570 = vld [vmem:[%s550 + $0x4c] sm:$0xf]
        %v571 = vld [vmem:[%s550 + $0x50] sm:$0xf]
        %v572 = vld [vmem:[%s550 + $0x54] sm:$0xf]
        %v573 = vld [vmem:[%s550 + $0x58] sm:$0xf]
        %v574 = vld [vmem:[%s550 + $0x5c] sm:$0xf]
        %v575 = vld [vmem:[%s550 + $0x60] sm:$0xf]
        %v576 = vld [vmem:[%s550 + $0x64] sm:$0xf]
        %v577 = vld [vmem:[%s550 + $0x68] sm:$0xf]
        %v578 = vld [vmem:[%s550 + $0x6c] sm:$0xf]
        %v579 = vld [vmem:[%s550 + $0x70] sm:$0xf]
        %v580 = vld [vmem:[%s550 + $0x74] sm:$0xf]
        %v581 = vld [vmem:[%s550 + $0x78] sm:$0xf]
        %v582 = vld [vmem:[%s550 + $0x7c] sm:$0xf]
        %v583 = vld [vmem:[%s5] sm:$0x3]
        %v584 = vld [vmem:[%s5 + $0x2] sm:$0x3]
        %v585 = vld [vmem:[%s5 + $0x4] sm:$0x3]
        %v586 = vld [vmem:[%s5 + $0x6] sm:$0x3]
        %v587 = vld [vmem:[%s5 + $0x8] sm:$0x3]
        %v588 = vld [vmem:[%s5 + $0xa] sm:$0x3]
        %v589 = vld [vmem:[%s5 + $0xc] sm:$0x3]
        %v590 = vld [vmem:[%s5 + $0xe] sm:$0x3]
        %v591 = vpack.c.bf16 %v484, %v484
        %v596 = vunpack.c.l.b16 %v485
        %v597 = vunpack.c.l.b16 %v486
        %v598 = vunpack.c.l.b16 %v487
        %v599 = vunpack.c.l.b16 %v488
        %v600 = vpack.c.b16 %v597, %v596
        %v601 = vpack.c.b16 %v599, %v598
        %v605 = vsel %vm460, %v591, 0
        %607 = vmatprep.subr.bf16.mxu0 0
        %608 = vmatpush1.bf16.msra.mxu0 %v600
        %609 = vmatprep.subr.bf16.mxu0 0
        %610 = vmatpush1.bf16.msra.mxu0 %v601
        %611 = vmatprep.subr.bf16.mxu0 0
        %612 = vmatpush1.bf16.msra.mxu0 0
        %613 = vmatprep.subr.bf16.mxu0 0
        %614 = vmatpush1.bf16.msra.mxu0 0
        %615 = vmatprep.subr.bf16.mxu0 0
        %616 = vmatpush1.bf16.msra.mxu0 0
        %617 = vmatprep.subr.bf16.mxu0 0
        %618 = vmatpush1.bf16.msra.mxu0 0
        %619 = vmatprep.subr.bf16.mxu0 0
        %620 = vmatpush1.bf16.msra.mxu0 0
        %621 = vmatprep.subr.bf16.mxu0 0
        %622 = vmatpush1.bf16.msra.mxu0 0
        %623 = vmatprep.subr.bf16.mxu0 0
        %624 = vmatpush1.bf16.msra.mxu0 0
        %625 = vmatprep.subr.bf16.mxu0 0
        %626 = vmatpush1.bf16.msra.mxu0 0
        %627 = vmatprep.subr.bf16.mxu0 0
        %628 = vmatpush1.bf16.msra.mxu0 0
        %629 = vmatprep.subr.bf16.mxu0 0
        %630 = vmatpush1.bf16.msra.mxu0 0
        %631 = vmatprep.subr.bf16.mxu0 0
        %632 = vmatpush1.bf16.msra.mxu0 0
        %633 = vmatprep.subr.bf16.mxu0 0
        %634 = vmatpush1.bf16.msra.mxu0 0
        %635 = vmatprep.subr.bf16.mxu0 0
        %636 = vmatpush1.bf16.msra.mxu0 0
        %637 = vmatprep.subr.bf16.mxu0 0
        %638 = vmatpush1.bf16.msra.mxu0 0
        %639 = vmatprep.mubr.bf16.mxu0 0
        %640 = vmatmul.mubr.bf16.gmra.mrb[0].mxu0 %v605
        %v641 = vpop.f32.mrb[0].mxu0
        %v642 = vadd.f32 0.0, %v641
        %v643 = vpop.f32.mrb[0].mxu0
        %v644 = vpop.f32.mrb[0].mxu0
        %v645 = vpop.f32.mrb[0].mxu0
        %646 = vdwg.mxu0
        %v651 = vunpack.c.l.b16 %v489
        %v652 = vunpack.c.l.b16 %v490
        %v653 = vunpack.c.l.b16 %v491
        %v654 = vunpack.c.l.b16 %v492
        %v655 = vpack.c.b16 %v652, %v651
        %v656 = vpack.c.b16 %v654, %v653
        %659 = vmatprep.subr.bf16.mxu0 0
        %660 = vmatpush1.bf16.msra.mxu0 %v655
        %661 = vmatprep.subr.bf16.mxu0 0
        %662 = vmatpush1.bf16.msra.mxu0 %v656
        %663 = vmatprep.subr.bf16.mxu0 0
        %664 = vmatpush1.bf16.msra.mxu0 0
        %665 = vmatprep.subr.bf16.mxu0 0
        %666 = vmatpush1.bf16.msra.mxu0 0
        %667 = vmatprep.subr.bf16.mxu0 0
        %668 = vmatpush1.bf16.msra.mxu0 0
        %669 = vmatprep.subr.bf16.mxu0 0
        %670 = vmatpush1.bf16.msra.mxu0 0
        %671 = vmatprep.subr.bf16.mxu0 0
        %672 = vmatpush1.bf16.msra.mxu0 0
        %673 = vmatprep.subr.bf16.mxu0 0
        %674 = vmatpush1.bf16.msra.mxu0 0
        %675 = vmatprep.subr.bf16.mxu0 0
        %676 = vmatpush1.bf16.msra.mxu0 0
        %677 = vmatprep.subr.bf16.mxu0 0
        %678 = vmatpush1.bf16.msra.mxu0 0
        %679 = vmatprep.subr.bf16.mxu0 0
        %680 = vmatpush1.bf16.msra.mxu0 0
        %681 = vmatprep.subr.bf16.mxu0 0
        %682 = vmatpush1.bf16.msra.mxu0 0
        %683 = vmatprep.subr.bf16.mxu0 0
        %684 = vmatpush1.bf16.msra.mxu0 0
        %685 = vmatprep.subr.bf16.mxu0 0
        %686 = vmatpush1.bf16.msra.mxu0 0
        %687 = vmatprep.subr.bf16.mxu0 0
        %688 = vmatpush1.bf16.msra.mxu0 0
        %689 = vmatprep.subr.bf16.mxu0 0
        %690 = vmatpush1.bf16.msra.mxu0 0
        %691 = vmatprep.mubr.bf16.mxu0 0
        %692 = vmatmul.mubr.bf16.gmra.mrb[0].mxu0 %v605
        %v693 = vpop.f32.mrb[0].mxu0
        %v694 = vadd.f32 0.0, %v693
        %v695 = vpop.f32.mrb[0].mxu0
        %v696 = vpop.f32.mrb[0].mxu0
        %v697 = vpop.f32.mrb[0].mxu0
        %698 = vdwg.mxu0
        %v703 = vunpack.c.l.b16 %v493
        %v704 = vunpack.c.l.b16 %v494
        %v705 = vunpack.c.l.b16 %v495
        %v706 = vunpack.c.l.b16 %v496
        %v707 = vpack.c.b16 %v704, %v703
        %v708 = vpack.c.b16 %v706, %v705
        %711 = vmatprep.subr.bf16.mxu0 0
        %712 = vmatpush1.bf16.msra.mxu0 %v707
        %713 = vmatprep.subr.bf16.mxu0 0
        %714 = vmatpush1.bf16.msra.mxu0 %v708
        %715 = vmatprep.subr.bf16.mxu0 0
        %716 = vmatpush1.bf16.msra.mxu0 0
        %717 = vmatprep.subr.bf16.mxu0 0
        %718 = vmatpush1.bf16.msra.mxu0 0
        %719 = vmatprep.subr.bf16.mxu0 0
        %720 = vmatpush1.bf16.msra.mxu0 0
        %721 = vmatprep.subr.bf16.mxu0 0
        %722 = vmatpush1.bf16.msra.mxu0 0
        %723 = vmatprep.subr.bf16.mxu0 0
        %724 = vmatpush1.bf16.msra.mxu0 0
        %725 = vmatprep.subr.bf16.mxu0 0
        %726 = vmatpush1.bf16.msra.mxu0 0
        %727 = vmatprep.subr.bf16.mxu0 0
        %728 = vmatpush1.bf16.msra.mxu0 0
        %729 = vmatprep.subr.bf16.mxu0 0
        %730 = vmatpush1.bf16.msra.mxu0 0
        %731 = vmatprep.subr.bf16.mxu0 0
        %732 = vmatpush1.bf16.msra.mxu0 0
        %733 = vmatprep.subr.bf16.mxu0 0
        %734 = vmatpush1.bf16.msra.mxu0 0
        %735 = vmatprep.subr.bf16.mxu0 0
        %736 = vmatpush1.bf16.msra.mxu0 0
        %737 = vmatprep.subr.bf16.mxu0 0
        %738 = vmatpush1.bf16.msra.mxu0 0
        %739 = vmatprep.subr.bf16.mxu0 0
        %740 = vmatpush1.bf16.msra.mxu0 0
        %741 = vmatprep.subr.bf16.mxu0 0
        %742 = vmatpush1.bf16.msra.mxu0 0
        %743 = vmatprep.mubr.bf16.mxu0 0
        %744 = vmatmul.mubr.bf16.gmra.mrb[0].mxu0 %v605
        %v745 = vpop.f32.mrb[0].mxu0
        %v746 = vadd.f32 0.0, %v745
        %v747 = vpop.f32.mrb[0].mxu0
        %v748 = vpop.f32.mrb[0].mxu0
        %v749 = vpop.f32.mrb[0].mxu0
        %750 = vdwg.mxu0
        %v755 = vunpack.c.l.b16 %v497
        %v756 = vunpack.c.l.b16 %v498
        %v757 = vunpack.c.l.b16 %v499
        %v758 = vunpack.c.l.b16 %v500
        %v759 = vpack.c.b16 %v756, %v755
        %v760 = vpack.c.b16 %v758, %v757
        %763 = vmatprep.subr.bf16.mxu0 0
        %764 = vmatpush1.bf16.msra.mxu0 %v759
        %765 = vmatprep.subr.bf16.mxu0 0
        %766 = vmatpush1.bf16.msra.mxu0 %v760
        %767 = vmatprep.subr.bf16.mxu0 0
        %768 = vmatpush1.bf16.msra.mxu0 0
        %769 = vmatprep.subr.bf16.mxu0 0
        %770 = vmatpush1.bf16.msra.mxu0 0
        %771 = vmatprep.subr.bf16.mxu0 0
        %772 = vmatpush1.bf16.msra.mxu0 0
        %773 = vmatprep.subr.bf16.mxu0 0
        %774 = vmatpush1.bf16.msra.mxu0 0
        %775 = vmatprep.subr.bf16.mxu0 0
        %776 = vmatpush1.bf16.msra.mxu0 0
        %777 = vmatprep.subr.bf16.mxu0 0
        %778 = vmatpush1.bf16.msra.mxu0 0
        %779 = vmatprep.subr.bf16.mxu0 0
        %780 = vmatpush1.bf16.msra.mxu0 0
        %781 = vmatprep.subr.bf16.mxu0 0
        %782 = vmatpush1.bf16.msra.mxu0 0
        %783 = vmatprep.subr.bf16.mxu0 0
        %784 = vmatpush1.bf16.msra.mxu0 0
        %785 = vmatprep.subr.bf16.mxu0 0
        %786 = vmatpush1.bf16.msra.mxu0 0
        %787 = vmatprep.subr.bf16.mxu0 0
        %788 = vmatpush1.bf16.msra.mxu0 0
        %789 = vmatprep.subr.bf16.mxu0 0
        %790 = vmatpush1.bf16.msra.mxu0 0
        %791 = vmatprep.subr.bf16.mxu0 0
        %792 = vmatpush1.bf16.msra.mxu0 0
        %793 = vmatprep.subr.bf16.mxu0 0
        %794 = vmatpush1.bf16.msra.mxu0 0
        %795 = vmatprep.mubr.bf16.mxu0 0
        %796 = vmatmul.mubr.bf16.gmra.mrb[0].mxu0 %v605
        %v797 = vpop.f32.mrb[0].mxu0
        %v798 = vadd.f32 0.0, %v797
        %v799 = vpop.f32.mrb[0].mxu0
        %v800 = vpop.f32.mrb[0].mxu0
        %v801 = vpop.f32.mrb[0].mxu0
        %802 = vdwg.mxu0
        %v807 = vunpack.c.l.b16 %v501
        %v808 = vunpack.c.l.b16 %v502
        %v809 = vunpack.c.l.b16 %v503
        %v810 = vunpack.c.l.b16 %v504
        %v811 = vpack.c.b16 %v808, %v807
        %v812 = vpack.c.b16 %v810, %v809
        %815 = vmatprep.subr.bf16.mxu0 0
        %816 = vmatpush1.bf16.msra.mxu0 %v811
        %817 = vmatprep.subr.bf16.mxu0 0
        %818 = vmatpush1.bf16.msra.mxu0 %v812
        %819 = vmatprep.subr.bf16.mxu0 0
        %820 = vmatpush1.bf16.msra.mxu0 0
        %821 = vmatprep.subr.bf16.mxu0 0
        %822 = vmatpush1.bf16.msra.mxu0 0
        %823 = vmatprep.subr.bf16.mxu0 0
        %824 = vmatpush1.bf16.msra.mxu0 0
        %825 = vmatprep.subr.bf16.mxu0 0
        %826 = vmatpush1.bf16.msra.mxu0 0
        %827 = vmatprep.subr.bf16.mxu0 0
        %828 = vmatpush1.bf16.msra.mxu0 0
        %829 = vmatprep.subr.bf16.mxu0 0
        %830 = vmatpush1.bf16.msra.mxu0 0
        %831 = vmatprep.subr.bf16.mxu0 0
        %832 = vmatpush1.bf16.msra.mxu0 0
        %833 = vmatprep.subr.bf16.mxu0 0
        %834 = vmatpush1.bf16.msra.mxu0 0
        %835 = vmatprep.subr.bf16.mxu0 0
        %836 = vmatpush1.bf16.msra.mxu0 0
        %837 = vmatprep.subr.bf16.mxu0 0
        %838 = vmatpush1.bf16.msra.mxu0 0
        %839 = vmatprep.subr.bf16.mxu0 0
        %840 = vmatpush1.bf16.msra.mxu0 0
        %841 = vmatprep.subr.bf16.mxu0 0
        %842 = vmatpush1.bf16.msra.mxu0 0
        %843 = vmatprep.subr.bf16.mxu0 0
        %844 = vmatpush1.bf16.msra.mxu0 0
        %845 = vmatprep.subr.bf16.mxu0 0
        %846 = vmatpush1.bf16.msra.mxu0 0
        %847 = vmatprep.mubr.bf16.mxu0 0
        %848 = vmatmul.mubr.bf16.gmra.mrb[0].mxu0 %v605
        %v849 = vpop.f32.mrb[0].mxu0
        %v850 = vadd.f32 0.0, %v849
        %v851 = vpop.f32.mrb[0].mxu0
        %v852 = vpop.f32.mrb[0].mxu0
        %v853 = vpop.f32.mrb[0].mxu0
        %854 = vdwg.mxu0
        %v859 = vunpack.c.l.b16 %v505
        %v860 = vunpack.c.l.b16 %v506
        %v861 = vunpack.c.l.b16 %v507
        %v862 = vunpack.c.l.b16 %v508
        %v863 = vpack.c.b16 %v860, %v859
        %v864 = vpack.c.b16 %v862, %v861
        %867 = vmatprep.subr.bf16.mxu0 0
        %868 = vmatpush1.bf16.msra.mxu0 %v863
        %869 = vmatprep.subr.bf16.mxu0 0
        %870 = vmatpush1.bf16.msra.mxu0 %v864
        %871 = vmatprep.subr.bf16.mxu0 0
        %872 = vmatpush1.bf16.msra.mxu0 0
        %873 = vmatprep.subr.bf16.mxu0 0
        %874 = vmatpush1.bf16.msra.mxu0 0
        %875 = vmatprep.subr.bf16.mxu0 0
        %876 = vmatpush1.bf16.msra.mxu0 0
        %877 = vmatprep.subr.bf16.mxu0 0
        %878 = vmatpush1.bf16.msra.mxu0 0
        %879 = vmatprep.subr.bf16.mxu0 0
        %880 = vmatpush1.bf16.msra.mxu0 0
        %881 = vmatprep.subr.bf16.mxu0 0
        %882 = vmatpush1.bf16.msra.mxu0 0
        %883 = vmatprep.subr.bf16.mxu0 0
        %884 = vmatpush1.bf16.msra.mxu0 0
        %885 = vmatprep.subr.bf16.mxu0 0
        %886 = vmatpush1.bf16.msra.mxu0 0
        %887 = vmatprep.subr.bf16.mxu0 0
        %888 = vmatpush1.bf16.msra.mxu0 0
        %889 = vmatprep.subr.bf16.mxu0 0
        %890 = vmatpush1.bf16.msra.mxu0 0
        %891 = vmatprep.subr.bf16.mxu0 0
        %892 = vmatpush1.bf16.msra.mxu0 0
        %893 = vmatprep.subr.bf16.mxu0 0
        %894 = vmatpush1.bf16.msra.mxu0 0
        %895 = vmatprep.subr.bf16.mxu0 0
        %896 = vmatpush1.bf16.msra.mxu0 0
        %897 = vmatprep.subr.bf16.mxu0 0
        %898 = vmatpush1.bf16.msra.mxu0 0
        %899 = vmatprep.mubr.bf16.mxu0 0
        %900 = vmatmul.mubr.bf16.gmra.mrb[0].mxu0 %v605
        %v901 = vpop.f32.mrb[0].mxu0
        %v902 = vadd.f32 0.0, %v901
        %v903 = vpop.f32.mrb[0].mxu0
        %v904 = vpop.f32.mrb[0].mxu0
        %v905 = vpop.f32.mrb[0].mxu0
        %906 = vdwg.mxu0
        %v911 = vunpack.c.l.b16 %v509
        %v912 = vunpack.c.l.b16 %v510
        %v913 = vunpack.c.l.b16 %v511
        %v914 = vunpack.c.l.b16 %v512
        %v915 = vpack.c.b16 %v912, %v911
        %v916 = vpack.c.b16 %v914, %v913
        %919 = vmatprep.subr.bf16.mxu0 0
        %920 = vmatpush1.bf16.msra.mxu0 %v915
        %921 = vmatprep.subr.bf16.mxu0 0
        %922 = vmatpush1.bf16.msra.mxu0 %v916
        %923 = vmatprep.subr.bf16.mxu0 0
        %924 = vmatpush1.bf16.msra.mxu0 0
        %925 = vmatprep.subr.bf16.mxu0 0
        %926 = vmatpush1.bf16.msra.mxu0 0
        %927 = vmatprep.subr.bf16.mxu0 0
        %928 = vmatpush1.bf16.msra.mxu0 0
        %929 = vmatprep.subr.bf16.mxu0 0
        %930 = vmatpush1.bf16.msra.mxu0 0
        %931 = vmatprep.subr.bf16.mxu0 0
        %932 = vmatpush1.bf16.msra.mxu0 0
        %933 = vmatprep.subr.bf16.mxu0 0
        %934 = vmatpush1.bf16.msra.mxu0 0
        %935 = vmatprep.subr.bf16.mxu0 0
        %936 = vmatpush1.bf16.msra.mxu0 0
        %937 = vmatprep.subr.bf16.mxu0 0
        %938 = vmatpush1.bf16.msra.mxu0 0
        %939 = vmatprep.subr.bf16.mxu0 0
        %940 = vmatpush1.bf16.msra.mxu0 0
        %941 = vmatprep.subr.bf16.mxu0 0
        %942 = vmatpush1.bf16.msra.mxu0 0
        %943 = vmatprep.subr.bf16.mxu0 0
        %944 = vmatpush1.bf16.msra.mxu0 0
        %945 = vmatprep.subr.bf16.mxu0 0
        %946 = vmatpush1.bf16.msra.mxu0 0
        %947 = vmatprep.subr.bf16.mxu0 0
        %948 = vmatpush1.bf16.msra.mxu0 0
        %949 = vmatprep.subr.bf16.mxu0 0
        %950 = vmatpush1.bf16.msra.mxu0 0
        %951 = vmatprep.mubr.bf16.mxu0 0
        %952 = vmatmul.mubr.bf16.gmra.mrb[0].mxu0 %v605
        %v953 = vpop.f32.mrb[0].mxu0
        %v954 = vadd.f32 0.0, %v953
        %v955 = vpop.f32.mrb[0].mxu0
        %v956 = vpop.f32.mrb[0].mxu0
        %v957 = vpop.f32.mrb[0].mxu0
        %958 = vdwg.mxu0
        %v963 = vunpack.c.l.b16 %v513
        %v964 = vunpack.c.l.b16 %v514
        %v965 = vunpack.c.l.b16 %v515
        %v966 = vunpack.c.l.b16 %v516
        %v967 = vpack.c.b16 %v964, %v963
        %v968 = vpack.c.b16 %v966, %v965
        %971 = vmatprep.subr.bf16.mxu0 0
        %972 = vmatpush1.bf16.msra.mxu0 %v967
        %973 = vmatprep.subr.bf16.mxu0 0
        %974 = vmatpush1.bf16.msra.mxu0 %v968
        %975 = vmatprep.subr.bf16.mxu0 0
        %976 = vmatpush1.bf16.msra.mxu0 0
        %977 = vmatprep.subr.bf16.mxu0 0
        %978 = vmatpush1.bf16.msra.mxu0 0
        %979 = vmatprep.subr.bf16.mxu0 0
        %980 = vmatpush1.bf16.msra.mxu0 0
        %981 = vmatprep.subr.bf16.mxu0 0
        %982 = vmatpush1.bf16.msra.mxu0 0
        %983 = vmatprep.subr.bf16.mxu0 0
        %984 = vmatpush1.bf16.msra.mxu0 0
        %985 = vmatprep.subr.bf16.mxu0 0
        %986 = vmatpush1.bf16.msra.mxu0 0
        %987 = vmatprep.subr.bf16.mxu0 0
        %988 = vmatpush1.bf16.msra.mxu0 0
        %989 = vmatprep.subr.bf16.mxu0 0
        %990 = vmatpush1.bf16.msra.mxu0 0
        %991 = vmatprep.subr.bf16.mxu0 0
        %992 = vmatpush1.bf16.msra.mxu0 0
        %993 = vmatprep.subr.bf16.mxu0 0
        %994 = vmatpush1.bf16.msra.mxu0 0
        %995 = vmatprep.subr.bf16.mxu0 0
        %996 = vmatpush1.bf16.msra.mxu0 0
        %997 = vmatprep.subr.bf16.mxu0 0
        %998 = vmatpush1.bf16.msra.mxu0 0
        %999 = vmatprep.subr.bf16.mxu0 0
        %1000 = vmatpush1.bf16.msra.mxu0 0
        %1001 = vmatprep.subr.bf16.mxu0 0
        %1002 = vmatpush1.bf16.msra.mxu0 0
        %1003 = vmatprep.mubr.bf16.mxu0 0
        %1004 = vmatmul.mubr.bf16.gmra.mrb[0].mxu0 %v605
        %v1005 = vpop.f32.mrb[0].mxu0
        %v1006 = vadd.f32 0.0, %v1005
        %v1007 = vpop.f32.mrb[0].mxu0
        %v1008 = vpop.f32.mrb[0].mxu0
        %v1009 = vpop.f32.mrb[0].mxu0
        %1010 = vdwg.mxu0
        %v1015 = vunpack.c.l.b16 %v518
        %v1016 = vunpack.c.l.b16 %v519
        %v1017 = vunpack.c.l.b16 %v520
        %v1018 = vunpack.c.l.b16 %v521
        %v1019 = vpack.c.b16 %v1016, %v1015
        %v1020 = vpack.c.b16 %v1018, %v1017
        %1023 = vmatprep.subr.bf16.mxu0 0
        %1024 = vmatpush1.bf16.msra.mxu0 %v1019
        %1025 = vmatprep.subr.bf16.mxu0 0
        %1026 = vmatpush1.bf16.msra.mxu0 %v1020
        %1027 = vmatprep.subr.bf16.mxu0 0
        %1028 = vmatpush1.bf16.msra.mxu0 0
        %1029 = vmatprep.subr.bf16.mxu0 0
        %1030 = vmatpush1.bf16.msra.mxu0 0
        %1031 = vmatprep.subr.bf16.mxu0 0
        %1032 = vmatpush1.bf16.msra.mxu0 0
        %1033 = vmatprep.subr.bf16.mxu0 0
        %1034 = vmatpush1.bf16.msra.mxu0 0
        %1035 = vmatprep.subr.bf16.mxu0 0
        %1036 = vmatpush1.bf16.msra.mxu0 0
        %1037 = vmatprep.subr.bf16.mxu0 0
        %1038 = vmatpush1.bf16.msra.mxu0 0
        %1039 = vmatprep.subr.bf16.mxu0 0
        %1040 = vmatpush1.bf16.msra.mxu0 0
        %1041 = vmatprep.subr.bf16.mxu0 0
        %1042 = vmatpush1.bf16.msra.mxu0 0
        %1043 = vmatprep.subr.bf16.mxu0 0
        %1044 = vmatpush1.bf16.msra.mxu0 0
        %1045 = vmatprep.subr.bf16.mxu0 0
        %1046 = vmatpush1.bf16.msra.mxu0 0
        %1047 = vmatprep.subr.bf16.mxu0 0
        %1048 = vmatpush1.bf16.msra.mxu0 0
        %1049 = vmatprep.subr.bf16.mxu0 0
        %1050 = vmatpush1.bf16.msra.mxu0 0
        %1051 = vmatprep.subr.bf16.mxu0 0
        %1052 = vmatpush1.bf16.msra.mxu0 0
        %1053 = vmatprep.subr.bf16.mxu0 0
        %1054 = vmatpush1.bf16.msra.mxu0 0
        %1055 = vmatprep.mubr.bf16.mxu0 0
        %1056 = vmatmul.mubr.bf16.gmra.mrb[0].mxu0 %v605
        %v1057 = vpop.f32.mrb[0].mxu0
        %v1058 = vadd.f32 0.0, %v1057
        %v1059 = vpop.f32.mrb[0].mxu0
        %v1060 = vpop.f32.mrb[0].mxu0
        %v1061 = vpop.f32.mrb[0].mxu0
        %1062 = vdwg.mxu0
        %v1067 = vunpack.c.l.b16 %v522
        %v1068 = vunpack.c.l.b16 %v523
        %v1069 = vunpack.c.l.b16 %v524
        %v1070 = vunpack.c.l.b16 %v525
        %v1071 = vpack.c.b16 %v1068, %v1067
        %v1072 = vpack.c.b16 %v1070, %v1069
        %1075 = vmatprep.subr.bf16.mxu0 0
        %1076 = vmatpush1.bf16.msra.mxu0 %v1071
        %1077 = vmatprep.subr.bf16.mxu0 0
        %1078 = vmatpush1.bf16.msra.mxu0 %v1072
        %1079 = vmatprep.subr.bf16.mxu0 0
        %1080 = vmatpush1.bf16.msra.mxu0 0
        %1081 = vmatprep.subr.bf16.mxu0 0
        %1082 = vmatpush1.bf16.msra.mxu0 0
        %1083 = vmatprep.subr.bf16.mxu0 0
        %1084 = vmatpush1.bf16.msra.mxu0 0
        %1085 = vmatprep.subr.bf16.mxu0 0
        %1086 = vmatpush1.bf16.msra.mxu0 0
        %1087 = vmatprep.subr.bf16.mxu0 0
        %1088 = vmatpush1.bf16.msra.mxu0 0
        %1089 = vmatprep.subr.bf16.mxu0 0
        %1090 = vmatpush1.bf16.msra.mxu0 0
        %1091 = vmatprep.subr.bf16.mxu0 0
        %1092 = vmatpush1.bf16.msra.mxu0 0
        %1093 = vmatprep.subr.bf16.mxu0 0
        %1094 = vmatpush1.bf16.msra.mxu0 0
        %1095 = vmatprep.subr.bf16.mxu0 0
        %1096 = vmatpush1.bf16.msra.mxu0 0
        %1097 = vmatprep.subr.bf16.mxu0 0
        %1098 = vmatpush1.bf16.msra.mxu0 0
        %1099 = vmatprep.subr.bf16.mxu0 0
        %1100 = vmatpush1.bf16.msra.mxu0 0
        %1101 = vmatprep.subr.bf16.mxu0 0
        %1102 = vmatpush1.bf16.msra.mxu0 0
        %1103 = vmatprep.subr.bf16.mxu0 0
        %1104 = vmatpush1.bf16.msra.mxu0 0
        %1105 = vmatprep.subr.bf16.mxu0 0
        %1106 = vmatpush1.bf16.msra.mxu0 0
        %1107 = vmatprep.mubr.bf16.mxu0 0
        %1108 = vmatmul.mubr.bf16.gmra.mrb[0].mxu0 %v605
        %v1109 = vpop.f32.mrb[0].mxu0
        %v1110 = vadd.f32 0.0, %v1109
        %v1111 = vpop.f32.mrb[0].mxu0
        %v1112 = vpop.f32.mrb[0].mxu0
        %v1113 = vpop.f32.mrb[0].mxu0
        %1114 = vdwg.mxu0
        %v1119 = vunpack.c.l.b16 %v526
        %v1120 = vunpack.c.l.b16 %v527
        %v1121 = vunpack.c.l.b16 %v528
        %v1122 = vunpack.c.l.b16 %v529
        %v1123 = vpack.c.b16 %v1120, %v1119
        %v1124 = vpack.c.b16 %v1122, %v1121
        %1127 = vmatprep.subr.bf16.mxu0 0
        %1128 = vmatpush1.bf16.msra.mxu0 %v1123
        %1129 = vmatprep.subr.bf16.mxu0 0
        %1130 = vmatpush1.bf16.msra.mxu0 %v1124
        %1131 = vmatprep.subr.bf16.mxu0 0
        %1132 = vmatpush1.bf16.msra.mxu0 0
        %1133 = vmatprep.subr.bf16.mxu0 0
        %1134 = vmatpush1.bf16.msra.mxu0 0
        %1135 = vmatprep.subr.bf16.mxu0 0
        %1136 = vmatpush1.bf16.msra.mxu0 0
        %1137 = vmatprep.subr.bf16.mxu0 0
        %1138 = vmatpush1.bf16.msra.mxu0 0
        %1139 = vmatprep.subr.bf16.mxu0 0
        %1140 = vmatpush1.bf16.msra.mxu0 0
        %1141 = vmatprep.subr.bf16.mxu0 0
        %1142 = vmatpush1.bf16.msra.mxu0 0
        %1143 = vmatprep.subr.bf16.mxu0 0
        %1144 = vmatpush1.bf16.msra.mxu0 0
        %1145 = vmatprep.subr.bf16.mxu0 0
        %1146 = vmatpush1.bf16.msra.mxu0 0
        %1147 = vmatprep.subr.bf16.mxu0 0
        %1148 = vmatpush1.bf16.msra.mxu0 0
        %1149 = vmatprep.subr.bf16.mxu0 0
        %1150 = vmatpush1.bf16.msra.mxu0 0
        %1151 = vmatprep.subr.bf16.mxu0 0
        %1152 = vmatpush1.bf16.msra.mxu0 0
        %1153 = vmatprep.subr.bf16.mxu0 0
        %1154 = vmatpush1.bf16.msra.mxu0 0
        %1155 = vmatprep.subr.bf16.mxu0 0
        %1156 = vmatpush1.bf16.msra.mxu0 0
        %1157 = vmatprep.subr.bf16.mxu0 0
        %1158 = vmatpush1.bf16.msra.mxu0 0
        %1159 = vmatprep.mubr.bf16.mxu0 0
        %1160 = vmatmul.mubr.bf16.gmra.mrb[0].mxu0 %v605
        %v1161 = vpop.f32.mrb[0].mxu0
        %v1162 = vadd.f32 0.0, %v1161
        %v1163 = vpop.f32.mrb[0].mxu0
        %v1164 = vpop.f32.mrb[0].mxu0
        %v1165 = vpop.f32.mrb[0].mxu0
        %1166 = vdwg.mxu0
        %v1171 = vunpack.c.l.b16 %v530
        %v1172 = vunpack.c.l.b16 %v531
        %v1173 = vunpack.c.l.b16 %v532
        %v1174 = vunpack.c.l.b16 %v533
        %v1175 = vpack.c.b16 %v1172, %v1171
        %v1176 = vpack.c.b16 %v1174, %v1173
        %1179 = vmatprep.subr.bf16.mxu0 0
        %1180 = vmatpush1.bf16.msra.mxu0 %v1175
        %1181 = vmatprep.subr.bf16.mxu0 0
        %1182 = vmatpush1.bf16.msra.mxu0 %v1176
        %1183 = vmatprep.subr.bf16.mxu0 0
        %1184 = vmatpush1.bf16.msra.mxu0 0
        %1185 = vmatprep.subr.bf16.mxu0 0
        %1186 = vmatpush1.bf16.msra.mxu0 0
        %1187 = vmatprep.subr.bf16.mxu0 0
        %1188 = vmatpush1.bf16.msra.mxu0 0
        %1189 = vmatprep.subr.bf16.mxu0 0
        %1190 = vmatpush1.bf16.msra.mxu0 0
        %1191 = vmatprep.subr.bf16.mxu0 0
        %1192 = vmatpush1.bf16.msra.mxu0 0
        %1193 = vmatprep.subr.bf16.mxu0 0
        %1194 = vmatpush1.bf16.msra.mxu0 0
        %1195 = vmatprep.subr.bf16.mxu0 0
        %1196 = vmatpush1.bf16.msra.mxu0 0
        %1197 = vmatprep.subr.bf16.mxu0 0
        %1198 = vmatpush1.bf16.msra.mxu0 0
        %1199 = vmatprep.subr.bf16.mxu0 0
        %1200 = vmatpush1.bf16.msra.mxu0 0
        %1201 = vmatprep.subr.bf16.mxu0 0
        %1202 = vmatpush1.bf16.msra.mxu0 0
        %1203 = vmatprep.subr.bf16.mxu0 0
        %1204 = vmatpush1.bf16.msra.mxu0 0
        %1205 = vmatprep.subr.bf16.mxu0 0
        %1206 = vmatpush1.bf16.msra.mxu0 0
        %1207 = vmatprep.subr.bf16.mxu0 0
        %1208 = vmatpush1.bf16.msra.mxu0 0
        %1209 = vmatprep.subr.bf16.mxu0 0
        %1210 = vmatpush1.bf16.msra.mxu0 0
        %1211 = vmatprep.mubr.bf16.mxu0 0
        %1212 = vmatmul.mubr.bf16.gmra.mrb[0].mxu0 %v605
        %v1213 = vpop.f32.mrb[0].mxu0
        %v1214 = vadd.f32 0.0, %v1213
        %v1215 = vpop.f32.mrb[0].mxu0
        %v1216 = vpop.f32.mrb[0].mxu0
        %v1217 = vpop.f32.mrb[0].mxu0
        %1218 = vdwg.mxu0
        %v1223 = vunpack.c.l.b16 %v534
        %v1224 = vunpack.c.l.b16 %v535
        %v1225 = vunpack.c.l.b16 %v536
        %v1226 = vunpack.c.l.b16 %v537
        %v1227 = vpack.c.b16 %v1224, %v1223
        %v1228 = vpack.c.b16 %v1226, %v1225
        %1231 = vmatprep.subr.bf16.mxu0 0
        %1232 = vmatpush1.bf16.msra.mxu0 %v1227
        %1233 = vmatprep.subr.bf16.mxu0 0
        %1234 = vmatpush1.bf16.msra.mxu0 %v1228
        %1235 = vmatprep.subr.bf16.mxu0 0
        %1236 = vmatpush1.bf16.msra.mxu0 0
        %1237 = vmatprep.subr.bf16.mxu0 0
        %1238 = vmatpush1.bf16.msra.mxu0 0
        %1239 = vmatprep.subr.bf16.mxu0 0
        %1240 = vmatpush1.bf16.msra.mxu0 0
        %1241 = vmatprep.subr.bf16.mxu0 0
        %1242 = vmatpush1.bf16.msra.mxu0 0
        %1243 = vmatprep.subr.bf16.mxu0 0
        %1244 = vmatpush1.bf16.msra.mxu0 0
        %1245 = vmatprep.subr.bf16.mxu0 0
        %1246 = vmatpush1.bf16.msra.mxu0 0
        %1247 = vmatprep.subr.bf16.mxu0 0
        %1248 = vmatpush1.bf16.msra.mxu0 0
        %1249 = vmatprep.subr.bf16.mxu0 0
        %1250 = vmatpush1.bf16.msra.mxu0 0
        %1251 = vmatprep.subr.bf16.mxu0 0
        %1252 = vmatpush1.bf16.msra.mxu0 0
        %1253 = vmatprep.subr.bf16.mxu0 0
        %1254 = vmatpush1.bf16.msra.mxu0 0
        %1255 = vmatprep.subr.bf16.mxu0 0
        %1256 = vmatpush1.bf16.msra.mxu0 0
        %1257 = vmatprep.subr.bf16.mxu0 0
        %1258 = vmatpush1.bf16.msra.mxu0 0
        %1259 = vmatprep.subr.bf16.mxu0 0
        %1260 = vmatpush1.bf16.msra.mxu0 0
        %1261 = vmatprep.subr.bf16.mxu0 0
        %1262 = vmatpush1.bf16.msra.mxu0 0
        %1263 = vmatprep.mubr.bf16.mxu0 0
        %1264 = vmatmul.mubr.bf16.gmra.mrb[0].mxu0 %v605
        %v1265 = vpop.f32.mrb[0].mxu0
        %v1266 = vadd.f32 0.0, %v1265
        %v1267 = vpop.f32.mrb[0].mxu0
        %v1268 = vpop.f32.mrb[0].mxu0
        %v1269 = vpop.f32.mrb[0].mxu0
        %1270 = vdwg.mxu0
        %v1275 = vunpack.c.l.b16 %v538
        %v1276 = vunpack.c.l.b16 %v539
        %v1277 = vunpack.c.l.b16 %v540
        %v1278 = vunpack.c.l.b16 %v541
        %v1279 = vpack.c.b16 %v1276, %v1275
        %v1280 = vpack.c.b16 %v1278, %v1277
        %1283 = vmatprep.subr.bf16.mxu0 0
        %1284 = vmatpush1.bf16.msra.mxu0 %v1279
        %1285 = vmatprep.subr.bf16.mxu0 0
        %1286 = vmatpush1.bf16.msra.mxu0 %v1280
        %1287 = vmatprep.subr.bf16.mxu0 0
        %1288 = vmatpush1.bf16.msra.mxu0 0
        %1289 = vmatprep.subr.bf16.mxu0 0
        %1290 = vmatpush1.bf16.msra.mxu0 0
        %1291 = vmatprep.subr.bf16.mxu0 0
        %1292 = vmatpush1.bf16.msra.mxu0 0
        %1293 = vmatprep.subr.bf16.mxu0 0
        %1294 = vmatpush1.bf16.msra.mxu0 0
        %1295 = vmatprep.subr.bf16.mxu0 0
        %1296 = vmatpush1.bf16.msra.mxu0 0
        %1297 = vmatprep.subr.bf16.mxu0 0
        %1298 = vmatpush1.bf16.msra.mxu0 0
        %1299 = vmatprep.subr.bf16.mxu0 0
        %1300 = vmatpush1.bf16.msra.mxu0 0
        %1301 = vmatprep.subr.bf16.mxu0 0
        %1302 = vmatpush1.bf16.msra.mxu0 0
        %1303 = vmatprep.subr.bf16.mxu0 0
        %1304 = vmatpush1.bf16.msra.mxu0 0
        %1305 = vmatprep.subr.bf16.mxu0 0
        %1306 = vmatpush1.bf16.msra.mxu0 0
        %1307 = vmatprep.subr.bf16.mxu0 0
        %1308 = vmatpush1.bf16.msra.mxu0 0
        %1309 = vmatprep.subr.bf16.mxu0 0
        %1310 = vmatpush1.bf16.msra.mxu0 0
        %1311 = vmatprep.subr.bf16.mxu0 0
        %1312 = vmatpush1.bf16.msra.mxu0 0
        %1313 = vmatprep.subr.bf16.mxu0 0
        %1314 = vmatpush1.bf16.msra.mxu0 0
        %1315 = vmatprep.mubr.bf16.mxu0 0
        %1316 = vmatmul.mubr.bf16.gmra.mrb[0].mxu0 %v605
        %v1317 = vpop.f32.mrb[0].mxu0
        %v1318 = vadd.f32 0.0, %v1317
        %v1319 = vpop.f32.mrb[0].mxu0
        %v1320 = vpop.f32.mrb[0].mxu0
        %v1321 = vpop.f32.mrb[0].mxu0
        %1322 = vdwg.mxu0
        %v1327 = vunpack.c.l.b16 %v542
        %v1328 = vunpack.c.l.b16 %v543
        %v1329 = vunpack.c.l.b16 %v544
        %v1330 = vunpack.c.l.b16 %v545
        %v1331 = vpack.c.b16 %v1328, %v1327
        %v1332 = vpack.c.b16 %v1330, %v1329
        %1335 = vmatprep.subr.bf16.mxu0 0
        %1336 = vmatpush1.bf16.msra.mxu0 %v1331
        %1337 = vmatprep.subr.bf16.mxu0 0
        %1338 = vmatpush1.bf16.msra.mxu0 %v1332
        %1339 = vmatprep.subr.bf16.mxu0 0
        %1340 = vmatpush1.bf16.msra.mxu0 0
        %1341 = vmatprep.subr.bf16.mxu0 0
        %1342 = vmatpush1.bf16.msra.mxu0 0
        %1343 = vmatprep.subr.bf16.mxu0 0
        %1344 = vmatpush1.bf16.msra.mxu0 0
        %1345 = vmatprep.subr.bf16.mxu0 0
        %1346 = vmatpush1.bf16.msra.mxu0 0
        %1347 = vmatprep.subr.bf16.mxu0 0
        %1348 = vmatpush1.bf16.msra.mxu0 0
        %1349 = vmatprep.subr.bf16.mxu0 0
        %1350 = vmatpush1.bf16.msra.mxu0 0
        %1351 = vmatprep.subr.bf16.mxu0 0
        %1352 = vmatpush1.bf16.msra.mxu0 0
        %1353 = vmatprep.subr.bf16.mxu0 0
        %1354 = vmatpush1.bf16.msra.mxu0 0
        %1355 = vmatprep.subr.bf16.mxu0 0
        %1356 = vmatpush1.bf16.msra.mxu0 0
        %1357 = vmatprep.subr.bf16.mxu0 0
        %1358 = vmatpush1.bf16.msra.mxu0 0
        %1359 = vmatprep.subr.bf16.mxu0 0
        %1360 = vmatpush1.bf16.msra.mxu0 0
        %1361 = vmatprep.subr.bf16.mxu0 0
        %1362 = vmatpush1.bf16.msra.mxu0 0
        %1363 = vmatprep.subr.bf16.mxu0 0
        %1364 = vmatpush1.bf16.msra.mxu0 0
        %1365 = vmatprep.subr.bf16.mxu0 0
        %1366 = vmatpush1.bf16.msra.mxu0 0
        %1367 = vmatprep.mubr.bf16.mxu0 0
        %1368 = vmatmul.mubr.bf16.gmra.mrb[0].mxu0 %v605
        %v1369 = vpop.f32.mrb[0].mxu0
        %v1370 = vadd.f32 0.0, %v1369
        %v1371 = vpop.f32.mrb[0].mxu0
        %v1372 = vpop.f32.mrb[0].mxu0
        %v1373 = vpop.f32.mrb[0].mxu0
        %1374 = vdwg.mxu0
        %v1379 = vunpack.c.l.b16 %v546
        %v1380 = vunpack.c.l.b16 %v547
        %v1381 = vunpack.c.l.b16 %v548
        %v1382 = vunpack.c.l.b16 %v549
        %v1383 = vpack.c.b16 %v1380, %v1379
        %v1384 = vpack.c.b16 %v1382, %v1381
        %1387 = vmatprep.subr.bf16.mxu0 0
        %1388 = vmatpush1.bf16.msra.mxu0 %v1383
        %1389 = vmatprep.subr.bf16.mxu0 0
        %1390 = vmatpush1.bf16.msra.mxu0 %v1384
        %1391 = vmatprep.subr.bf16.mxu0 0
        %1392 = vmatpush1.bf16.msra.mxu0 0
        %1393 = vmatprep.subr.bf16.mxu0 0
        %1394 = vmatpush1.bf16.msra.mxu0 0
        %1395 = vmatprep.subr.bf16.mxu0 0
        %1396 = vmatpush1.bf16.msra.mxu0 0
        %1397 = vmatprep.subr.bf16.mxu0 0
        %1398 = vmatpush1.bf16.msra.mxu0 0
        %1399 = vmatprep.subr.bf16.mxu0 0
        %1400 = vmatpush1.bf16.msra.mxu0 0
        %1401 = vmatprep.subr.bf16.mxu0 0
        %1402 = vmatpush1.bf16.msra.mxu0 0
        %1403 = vmatprep.subr.bf16.mxu0 0
        %1404 = vmatpush1.bf16.msra.mxu0 0
        %1405 = vmatprep.subr.bf16.mxu0 0
        %1406 = vmatpush1.bf16.msra.mxu0 0
        %1407 = vmatprep.subr.bf16.mxu0 0
        %1408 = vmatpush1.bf16.msra.mxu0 0
        %1409 = vmatprep.subr.bf16.mxu0 0
        %1410 = vmatpush1.bf16.msra.mxu0 0
        %1411 = vmatprep.subr.bf16.mxu0 0
        %1412 = vmatpush1.bf16.msra.mxu0 0
        %1413 = vmatprep.subr.bf16.mxu0 0
        %1414 = vmatpush1.bf16.msra.mxu0 0
        %1415 = vmatprep.subr.bf16.mxu0 0
        %1416 = vmatpush1.bf16.msra.mxu0 0
        %1417 = vmatprep.subr.bf16.mxu0 0
        %1418 = vmatpush1.bf16.msra.mxu0 0
        %1419 = vmatprep.mubr.bf16.mxu0 0
        %1420 = vmatmul.mubr.bf16.gmra.mrb[0].mxu0 %v605
        %v1421 = vpop.f32.mrb[0].mxu0
        %v1422 = vadd.f32 0.0, %v1421
        %v1423 = vpop.f32.mrb[0].mxu0
        %v1424 = vpop.f32.mrb[0].mxu0
        %v1425 = vpop.f32.mrb[0].mxu0
        %1426 = vdwg.mxu0
        %v1431 = vunpack.c.l.b16 %v551
        %v1432 = vunpack.c.l.b16 %v552
        %v1433 = vunpack.c.l.b16 %v553
        %v1434 = vunpack.c.l.b16 %v554
        %v1435 = vpack.c.b16 %v1432, %v1431
        %v1436 = vpack.c.b16 %v1434, %v1433
        %1439 = vmatprep.subr.bf16.mxu0 0
        %1440 = vmatpush1.bf16.msra.mxu0 %v1435
        %1441 = vmatprep.subr.bf16.mxu0 0
        %1442 = vmatpush1.bf16.msra.mxu0 %v1436
        %1443 = vmatprep.subr.bf16.mxu0 0
        %1444 = vmatpush1.bf16.msra.mxu0 0
        %1445 = vmatprep.subr.bf16.mxu0 0
        %1446 = vmatpush1.bf16.msra.mxu0 0
        %1447 = vmatprep.subr.bf16.mxu0 0
        %1448 = vmatpush1.bf16.msra.mxu0 0
        %1449 = vmatprep.subr.bf16.mxu0 0
        %1450 = vmatpush1.bf16.msra.mxu0 0
        %1451 = vmatprep.subr.bf16.mxu0 0
        %1452 = vmatpush1.bf16.msra.mxu0 0
        %1453 = vmatprep.subr.bf16.mxu0 0
        %1454 = vmatpush1.bf16.msra.mxu0 0
        %1455 = vmatprep.subr.bf16.mxu0 0
        %1456 = vmatpush1.bf16.msra.mxu0 0
        %1457 = vmatprep.subr.bf16.mxu0 0
        %1458 = vmatpush1.bf16.msra.mxu0 0
        %1459 = vmatprep.subr.bf16.mxu0 0
        %1460 = vmatpush1.bf16.msra.mxu0 0
        %1461 = vmatprep.subr.bf16.mxu0 0
        %1462 = vmatpush1.bf16.msra.mxu0 0
        %1463 = vmatprep.subr.bf16.mxu0 0
        %1464 = vmatpush1.bf16.msra.mxu0 0
        %1465 = vmatprep.subr.bf16.mxu0 0
        %1466 = vmatpush1.bf16.msra.mxu0 0
        %1467 = vmatprep.subr.bf16.mxu0 0
        %1468 = vmatpush1.bf16.msra.mxu0 0
        %1469 = vmatprep.subr.bf16.mxu0 0
        %1470 = vmatpush1.bf16.msra.mxu0 0
        %1471 = vmatprep.mubr.bf16.mxu0 0
        %1472 = vmatmul.mubr.bf16.gmra.mrb[0].mxu0 %v605
        %v1473 = vpop.f32.mrb[0].mxu0
        %v1474 = vadd.f32 0.0, %v1473
        %v1475 = vpop.f32.mrb[0].mxu0
        %v1476 = vpop.f32.mrb[0].mxu0
        %v1477 = vpop.f32.mrb[0].mxu0
        %1478 = vdwg.mxu0
        %v1483 = vunpack.c.l.b16 %v555
        %v1484 = vunpack.c.l.b16 %v556
        %v1485 = vunpack.c.l.b16 %v557
        %v1486 = vunpack.c.l.b16 %v558
        %v1487 = vpack.c.b16 %v1484, %v1483
        %v1488 = vpack.c.b16 %v1486, %v1485
        %1491 = vmatprep.subr.bf16.mxu0 0
        %1492 = vmatpush1.bf16.msra.mxu0 %v1487
        %1493 = vmatprep.subr.bf16.mxu0 0
        %1494 = vmatpush1.bf16.msra.mxu0 %v1488
        %1495 = vmatprep.subr.bf16.mxu0 0
        %1496 = vmatpush1.bf16.msra.mxu0 0
        %1497 = vmatprep.subr.bf16.mxu0 0
        %1498 = vmatpush1.bf16.msra.mxu0 0
        %1499 = vmatprep.subr.bf16.mxu0 0
        %1500 = vmatpush1.bf16.msra.mxu0 0
        %1501 = vmatprep.subr.bf16.mxu0 0
        %1502 = vmatpush1.bf16.msra.mxu0 0
        %1503 = vmatprep.subr.bf16.mxu0 0
        %1504 = vmatpush1.bf16.msra.mxu0 0
        %1505 = vmatprep.subr.bf16.mxu0 0
        %1506 = vmatpush1.bf16.msra.mxu0 0
        %1507 = vmatprep.subr.bf16.mxu0 0
        %1508 = vmatpush1.bf16.msra.mxu0 0
        %1509 = vmatprep.subr.bf16.mxu0 0
        %1510 = vmatpush1.bf16.msra.mxu0 0
        %1511 = vmatprep.subr.bf16.mxu0 0
        %1512 = vmatpush1.bf16.msra.mxu0 0
        %1513 = vmatprep.subr.bf16.mxu0 0
        %1514 = vmatpush1.bf16.msra.mxu0 0
        %1515 = vmatprep.subr.bf16.mxu0 0
        %1516 = vmatpush1.bf16.msra.mxu0 0
        %1517 = vmatprep.subr.bf16.mxu0 0
        %1518 = vmatpush1.bf16.msra.mxu0 0
        %1519 = vmatprep.subr.bf16.mxu0 0
        %1520 = vmatpush1.bf16.msra.mxu0 0
        %1521 = vmatprep.subr.bf16.mxu0 0
        %1522 = vmatpush1.bf16.msra.mxu0 0
        %1523 = vmatprep.mubr.bf16.mxu0 0
        %1524 = vmatmul.mubr.bf16.gmra.mrb[0].mxu0 %v605
        %v1525 = vpop.f32.mrb[0].mxu0
        %v1526 = vadd.f32 0.0, %v1525
        %v1527 = vpop.f32.mrb[0].mxu0
        %v1528 = vpop.f32.mrb[0].mxu0
        %v1529 = vpop.f32.mrb[0].mxu0
        %1530 = vdwg.mxu0
        %v1535 = vunpack.c.l.b16 %v559
        %v1536 = vunpack.c.l.b16 %v560
        %v1537 = vunpack.c.l.b16 %v561
        %v1538 = vunpack.c.l.b16 %v562
        %v1539 = vpack.c.b16 %v1536, %v1535
        %v1540 = vpack.c.b16 %v1538, %v1537
        %1543 = vmatprep.subr.bf16.mxu0 0
        %1544 = vmatpush1.bf16.msra.mxu0 %v1539
        %1545 = vmatprep.subr.bf16.mxu0 0
        %1546 = vmatpush1.bf16.msra.mxu0 %v1540
        %1547 = vmatprep.subr.bf16.mxu0 0
        %1548 = vmatpush1.bf16.msra.mxu0 0
        %1549 = vmatprep.subr.bf16.mxu0 0
        %1550 = vmatpush1.bf16.msra.mxu0 0
        %1551 = vmatprep.subr.bf16.mxu0 0
        %1552 = vmatpush1.bf16.msra.mxu0 0
        %1553 = vmatprep.subr.bf16.mxu0 0
        %1554 = vmatpush1.bf16.msra.mxu0 0
        %1555 = vmatprep.subr.bf16.mxu0 0
        %1556 = vmatpush1.bf16.msra.mxu0 0
        %1557 = vmatprep.subr.bf16.mxu0 0
        %1558 = vmatpush1.bf16.msra.mxu0 0
        %1559 = vmatprep.subr.bf16.mxu0 0
        %1560 = vmatpush1.bf16.msra.mxu0 0
        %1561 = vmatprep.subr.bf16.mxu0 0
        %1562 = vmatpush1.bf16.msra.mxu0 0
        %1563 = vmatprep.subr.bf16.mxu0 0
        %1564 = vmatpush1.bf16.msra.mxu0 0
        %1565 = vmatprep.subr.bf16.mxu0 0
        %1566 = vmatpush1.bf16.msra.mxu0 0
        %1567 = vmatprep.subr.bf16.mxu0 0
        %1568 = vmatpush1.bf16.msra.mxu0 0
        %1569 = vmatprep.subr.bf16.mxu0 0
        %1570 = vmatpush1.bf16.msra.mxu0 0
        %1571 = vmatprep.subr.bf16.mxu0 0
        %1572 = vmatpush1.bf16.msra.mxu0 0
        %1573 = vmatprep.subr.bf16.mxu0 0
        %1574 = vmatpush1.bf16.msra.mxu0 0
        %1575 = vmatprep.mubr.bf16.mxu0 0
        %1576 = vmatmul.mubr.bf16.gmra.mrb[0].mxu0 %v605
        %v1577 = vpop.f32.mrb[0].mxu0
        %v1578 = vadd.f32 0.0, %v1577
        %v1579 = vpop.f32.mrb[0].mxu0
        %v1580 = vpop.f32.mrb[0].mxu0
        %v1581 = vpop.f32.mrb[0].mxu0
        %1582 = vdwg.mxu0
        %v1587 = vunpack.c.l.b16 %v563
        %v1588 = vunpack.c.l.b16 %v564
        %v1589 = vunpack.c.l.b16 %v565
        %v1590 = vunpack.c.l.b16 %v566
        %v1591 = vpack.c.b16 %v1588, %v1587
        %v1592 = vpack.c.b16 %v1590, %v1589
        %1595 = vmatprep.subr.bf16.mxu0 0
        %1596 = vmatpush1.bf16.msra.mxu0 %v1591
        %1597 = vmatprep.subr.bf16.mxu0 0
        %1598 = vmatpush1.bf16.msra.mxu0 %v1592
        %1599 = vmatprep.subr.bf16.mxu0 0
        %1600 = vmatpush1.bf16.msra.mxu0 0
        %1601 = vmatprep.subr.bf16.mxu0 0
        %1602 = vmatpush1.bf16.msra.mxu0 0
        %1603 = vmatprep.subr.bf16.mxu0 0
        %1604 = vmatpush1.bf16.msra.mxu0 0
        %1605 = vmatprep.subr.bf16.mxu0 0
        %1606 = vmatpush1.bf16.msra.mxu0 0
        %1607 = vmatprep.subr.bf16.mxu0 0
        %1608 = vmatpush1.bf16.msra.mxu0 0
        %1609 = vmatprep.subr.bf16.mxu0 0
        %1610 = vmatpush1.bf16.msra.mxu0 0
        %1611 = vmatprep.subr.bf16.mxu0 0
        %1612 = vmatpush1.bf16.msra.mxu0 0
        %1613 = vmatprep.subr.bf16.mxu0 0
        %1614 = vmatpush1.bf16.msra.mxu0 0
        %1615 = vmatprep.subr.bf16.mxu0 0
        %1616 = vmatpush1.bf16.msra.mxu0 0
        %1617 = vmatprep.subr.bf16.mxu0 0
        %1618 = vmatpush1.bf16.msra.mxu0 0
        %1619 = vmatprep.subr.bf16.mxu0 0
        %1620 = vmatpush1.bf16.msra.mxu0 0
        %1621 = vmatprep.subr.bf16.mxu0 0
        %1622 = vmatpush1.bf16.msra.mxu0 0
        %1623 = vmatprep.subr.bf16.mxu0 0
        %1624 = vmatpush1.bf16.msra.mxu0 0
        %1625 = vmatprep.subr.bf16.mxu0 0
        %1626 = vmatpush1.bf16.msra.mxu0 0
        %1627 = vmatprep.mubr.bf16.mxu0 0
        %1628 = vmatmul.mubr.bf16.gmra.mrb[0].mxu0 %v605
        %v1629 = vpop.f32.mrb[0].mxu0
        %v1630 = vadd.f32 0.0, %v1629
        %v1631 = vpop.f32.mrb[0].mxu0
        %v1632 = vpop.f32.mrb[0].mxu0
        %v1633 = vpop.f32.mrb[0].mxu0
        %1634 = vdwg.mxu0
        %v1639 = vunpack.c.l.b16 %v567
        %v1640 = vunpack.c.l.b16 %v568
        %v1641 = vunpack.c.l.b16 %v569
        %v1642 = vunpack.c.l.b16 %v570
        %v1643 = vpack.c.b16 %v1640, %v1639
        %v1644 = vpack.c.b16 %v1642, %v1641
        %1647 = vmatprep.subr.bf16.mxu0 0
        %1648 = vmatpush1.bf16.msra.mxu0 %v1643
        %1649 = vmatprep.subr.bf16.mxu0 0
        %1650 = vmatpush1.bf16.msra.mxu0 %v1644
        %1651 = vmatprep.subr.bf16.mxu0 0
        %1652 = vmatpush1.bf16.msra.mxu0 0
        %1653 = vmatprep.subr.bf16.mxu0 0
        %1654 = vmatpush1.bf16.msra.mxu0 0
        %1655 = vmatprep.subr.bf16.mxu0 0
        %1656 = vmatpush1.bf16.msra.mxu0 0
        %1657 = vmatprep.subr.bf16.mxu0 0
        %1658 = vmatpush1.bf16.msra.mxu0 0
        %1659 = vmatprep.subr.bf16.mxu0 0
        %1660 = vmatpush1.bf16.msra.mxu0 0
        %1661 = vmatprep.subr.bf16.mxu0 0
        %1662 = vmatpush1.bf16.msra.mxu0 0
        %1663 = vmatprep.subr.bf16.mxu0 0
        %1664 = vmatpush1.bf16.msra.mxu0 0
        %1665 = vmatprep.subr.bf16.mxu0 0
        %1666 = vmatpush1.bf16.msra.mxu0 0
        %1667 = vmatprep.subr.bf16.mxu0 0
        %1668 = vmatpush1.bf16.msra.mxu0 0
        %1669 = vmatprep.subr.bf16.mxu0 0
        %1670 = vmatpush1.bf16.msra.mxu0 0
        %1671 = vmatprep.subr.bf16.mxu0 0
        %1672 = vmatpush1.bf16.msra.mxu0 0
        %1673 = vmatprep.subr.bf16.mxu0 0
        %1674 = vmatpush1.bf16.msra.mxu0 0
        %1675 = vmatprep.subr.bf16.mxu0 0
        %1676 = vmatpush1.bf16.msra.mxu0 0
        %1677 = vmatprep.subr.bf16.mxu0 0
        %1678 = vmatpush1.bf16.msra.mxu0 0
        %1679 = vmatprep.mubr.bf16.mxu0 0
        %1680 = vmatmul.mubr.bf16.gmra.mrb[0].mxu0 %v605
        %v1681 = vpop.f32.mrb[0].mxu0
        %v1682 = vadd.f32 0.0, %v1681
        %v1683 = vpop.f32.mrb[0].mxu0
        %v1684 = vpop.f32.mrb[0].mxu0
        %v1685 = vpop.f32.mrb[0].mxu0
        %1686 = vdwg.mxu0
        %v1691 = vunpack.c.l.b16 %v571
        %v1692 = vunpack.c.l.b16 %v572
        %v1693 = vunpack.c.l.b16 %v573
        %v1694 = vunpack.c.l.b16 %v574
        %v1695 = vpack.c.b16 %v1692, %v1691
        %v1696 = vpack.c.b16 %v1694, %v1693
        %1699 = vmatprep.subr.bf16.mxu0 0
        %1700 = vmatpush1.bf16.msra.mxu0 %v1695
        %1701 = vmatprep.subr.bf16.mxu0 0
        %1702 = vmatpush1.bf16.msra.mxu0 %v1696
        %1703 = vmatprep.subr.bf16.mxu0 0
        %1704 = vmatpush1.bf16.msra.mxu0 0
        %1705 = vmatprep.subr.bf16.mxu0 0
        %1706 = vmatpush1.bf16.msra.mxu0 0
        %1707 = vmatprep.subr.bf16.mxu0 0
        %1708 = vmatpush1.bf16.msra.mxu0 0
        %1709 = vmatprep.subr.bf16.mxu0 0
        %1710 = vmatpush1.bf16.msra.mxu0 0
        %1711 = vmatprep.subr.bf16.mxu0 0
        %1712 = vmatpush1.bf16.msra.mxu0 0
        %1713 = vmatprep.subr.bf16.mxu0 0
        %1714 = vmatpush1.bf16.msra.mxu0 0
        %1715 = vmatprep.subr.bf16.mxu0 0
        %1716 = vmatpush1.bf16.msra.mxu0 0
        %1717 = vmatprep.subr.bf16.mxu0 0
        %1718 = vmatpush1.bf16.msra.mxu0 0
        %1719 = vmatprep.subr.bf16.mxu0 0
        %1720 = vmatpush1.bf16.msra.mxu0 0
        %1721 = vmatprep.subr.bf16.mxu0 0
        %1722 = vmatpush1.bf16.msra.mxu0 0
        %1723 = vmatprep.subr.bf16.mxu0 0
        %1724 = vmatpush1.bf16.msra.mxu0 0
        %1725 = vmatprep.subr.bf16.mxu0 0
        %1726 = vmatpush1.bf16.msra.mxu0 0
        %1727 = vmatprep.subr.bf16.mxu0 0
        %1728 = vmatpush1.bf16.msra.mxu0 0
        %1729 = vmatprep.subr.bf16.mxu0 0
        %1730 = vmatpush1.bf16.msra.mxu0 0
        %1731 = vmatprep.mubr.bf16.mxu0 0
        %1732 = vmatmul.mubr.bf16.gmra.mrb[0].mxu0 %v605
        %v1733 = vpop.f32.mrb[0].mxu0
        %v1734 = vadd.f32 0.0, %v1733
        %v1735 = vpop.f32.mrb[0].mxu0
        %v1736 = vpop.f32.mrb[0].mxu0
        %v1737 = vpop.f32.mrb[0].mxu0
        %1738 = vdwg.mxu0
        %v1743 = vunpack.c.l.b16 %v575
        %v1744 = vunpack.c.l.b16 %v576
        %v1745 = vunpack.c.l.b16 %v577
        %v1746 = vunpack.c.l.b16 %v578
        %v1747 = vpack.c.b16 %v1744, %v1743
        %v1748 = vpack.c.b16 %v1746, %v1745
        %1751 = vmatprep.subr.bf16.mxu0 0
        %1752 = vmatpush1.bf16.msra.mxu0 %v1747
        %1753 = vmatprep.subr.bf16.mxu0 0
        %1754 = vmatpush1.bf16.msra.mxu0 %v1748
        %1755 = vmatprep.subr.bf16.mxu0 0
        %1756 = vmatpush1.bf16.msra.mxu0 0
        %1757 = vmatprep.subr.bf16.mxu0 0
        %1758 = vmatpush1.bf16.msra.mxu0 0
        %1759 = vmatprep.subr.bf16.mxu0 0
        %1760 = vmatpush1.bf16.msra.mxu0 0
        %1761 = vmatprep.subr.bf16.mxu0 0
        %1762 = vmatpush1.bf16.msra.mxu0 0
        %1763 = vmatprep.subr.bf16.mxu0 0
        %1764 = vmatpush1.bf16.msra.mxu0 0
        %1765 = vmatprep.subr.bf16.mxu0 0
        %1766 = vmatpush1.bf16.msra.mxu0 0
        %1767 = vmatprep.subr.bf16.mxu0 0
        %1768 = vmatpush1.bf16.msra.mxu0 0
        %1769 = vmatprep.subr.bf16.mxu0 0
        %1770 = vmatpush1.bf16.msra.mxu0 0
        %1771 = vmatprep.subr.bf16.mxu0 0
        %1772 = vmatpush1.bf16.msra.mxu0 0
        %1773 = vmatprep.subr.bf16.mxu0 0
        %1774 = vmatpush1.bf16.msra.mxu0 0
        %1775 = vmatprep.subr.bf16.mxu0 0
        %1776 = vmatpush1.bf16.msra.mxu0 0
        %1777 = vmatprep.subr.bf16.mxu0 0
        %1778 = vmatpush1.bf16.msra.mxu0 0
        %1779 = vmatprep.subr.bf16.mxu0 0
        %1780 = vmatpush1.bf16.msra.mxu0 0
        %1781 = vmatprep.subr.bf16.mxu0 0
        %1782 = vmatpush1.bf16.msra.mxu0 0
        %1783 = vmatprep.mubr.bf16.mxu0 0
        %1784 = vmatmul.mubr.bf16.gmra.mrb[0].mxu0 %v605
        %v1785 = vpop.f32.mrb[0].mxu0
        %v1786 = vadd.f32 0.0, %v1785
        %v1787 = vpop.f32.mrb[0].mxu0
        %v1788 = vpop.f32.mrb[0].mxu0
        %v1789 = vpop.f32.mrb[0].mxu0
        %1790 = vdwg.mxu0
        %v1795 = vunpack.c.l.b16 %v579
        %v1796 = vunpack.c.l.b16 %v580
        %v1797 = vunpack.c.l.b16 %v581
        %v1798 = vunpack.c.l.b16 %v582
        %v1799 = vpack.c.b16 %v1796, %v1795
        %v1800 = vpack.c.b16 %v1798, %v1797
        %1803 = vmatprep.subr.bf16.mxu0 0
        %1804 = vmatpush1.bf16.msra.mxu0 %v1799
        %1805 = vmatprep.subr.bf16.mxu0 0
        %1806 = vmatpush1.bf16.msra.mxu0 %v1800
        %1807 = vmatprep.subr.bf16.mxu0 0
        %1808 = vmatpush1.bf16.msra.mxu0 0
        %1809 = vmatprep.subr.bf16.mxu0 0
        %1810 = vmatpush1.bf16.msra.mxu0 0
        %1811 = vmatprep.subr.bf16.mxu0 0
        %1812 = vmatpush1.bf16.msra.mxu0 0
        %1813 = vmatprep.subr.bf16.mxu0 0
        %1814 = vmatpush1.bf16.msra.mxu0 0
        %1815 = vmatprep.subr.bf16.mxu0 0
        %1816 = vmatpush1.bf16.msra.mxu0 0
        %1817 = vmatprep.subr.bf16.mxu0 0
        %1818 = vmatpush1.bf16.msra.mxu0 0
        %1819 = vmatprep.subr.bf16.mxu0 0
        %1820 = vmatpush1.bf16.msra.mxu0 0
        %1821 = vmatprep.subr.bf16.mxu0 0
        %1822 = vmatpush1.bf16.msra.mxu0 0
        %1823 = vmatprep.subr.bf16.mxu0 0
        %1824 = vmatpush1.bf16.msra.mxu0 0
        %1825 = vmatprep.subr.bf16.mxu0 0
        %1826 = vmatpush1.bf16.msra.mxu0 0
        %1827 = vmatprep.subr.bf16.mxu0 0
        %1828 = vmatpush1.bf16.msra.mxu0 0
        %1829 = vmatprep.subr.bf16.mxu0 0
        %1830 = vmatpush1.bf16.msra.mxu0 0
        %1831 = vmatprep.subr.bf16.mxu0 0
        %1832 = vmatpush1.bf16.msra.mxu0 0
        %1833 = vmatprep.subr.bf16.mxu0 0
        %1834 = vmatpush1.bf16.msra.mxu0 0
        %1835 = vmatprep.mubr.bf16.mxu0 0
        %1836 = vmatmul.mubr.bf16.gmra.mrb[0].mxu0 %v605
        %v1837 = vpop.f32.mrb[0].mxu0
        %v1838 = vadd.f32 0.0, %v1837
        %v1839 = vpop.f32.mrb[0].mxu0
        %v1840 = vpop.f32.mrb[0].mxu0
        %v1841 = vpop.f32.mrb[0].mxu0
        %1842 = vdwg.mxu0
        %v1843 = vpack.c.bf16 %v642, %v642
        %v1844 = vpack.c.bf16 %v694, %v694
        %v1845 = vpack.c.bf16 %v746, %v746
        %v1846 = vpack.c.bf16 %v798, %v798
        %v1847 = vpack.c.bf16 %v850, %v850
        %v1848 = vpack.c.bf16 %v902, %v902
        %v1849 = vpack.c.bf16 %v954, %v954
        %v1850 = vpack.c.bf16 %v1006, %v1006
        %v1851 = vpack.c.bf16 %v1058, %v1058
        %v1852 = vpack.c.bf16 %v1110, %v1110
        %v1853 = vpack.c.bf16 %v1162, %v1162
        %v1854 = vpack.c.bf16 %v1214, %v1214
        %v1855 = vpack.c.bf16 %v1266, %v1266
        %v1856 = vpack.c.bf16 %v1318, %v1318
        %v1857 = vpack.c.bf16 %v1370, %v1370
        %v1858 = vpack.c.bf16 %v1422, %v1422
        %vm1859 = vcmask 31744
        %v1861 = vsel %vm1859, %v1843, 0
        %v1864 = vsel %vm1859, %v1851, 0
        %1866 = vmatprep.subr.bf16.mxu0 0
        %1867 = vmatpush1.bf16.xpose.msra.mxu0 %v1864
        %1868 = vmatprep.subr.bf16.mxu0 0
        %1869 = vmatpush1.bf16.xpose.msra.mxu0 0
        %1870 = vmatprep.subr.bf16.mxu0 0
        %1871 = vmatpush1.bf16.xpose.msra.mxu0 0
        %1872 = vmatprep.subr.bf16.mxu0 0
        %1873 = vmatpush1.bf16.xpose.msra.mxu0 0
        %1874 = vmatprep.subr.bf16.mxu0 0
        %1875 = vmatpush1.bf16.xpose.msra.mxu0 0
        %1876 = vmatprep.subr.bf16.mxu0 0
        %1877 = vmatpush1.bf16.xpose.msra.mxu0 0
        %1878 = vmatprep.subr.bf16.mxu0 0
        %1879 = vmatpush1.bf16.xpose.msra.mxu0 0
        %1880 = vmatprep.subr.bf16.mxu0 0
        %1881 = vmatpush1.bf16.xpose.msra.mxu0 0
        %1882 = vmatprep.subr.bf16.mxu0 0
        %1883 = vmatpush1.bf16.xpose.msra.mxu0 0
        %1884 = vmatprep.subr.bf16.mxu0 0
        %1885 = vmatpush1.bf16.xpose.msra.mxu0 0
        %1886 = vmatprep.subr.bf16.mxu0 0
        %1887 = vmatpush1.bf16.xpose.msra.mxu0 0
        %1888 = vmatprep.subr.bf16.mxu0 0
        %1889 = vmatpush1.bf16.xpose.msra.mxu0 0
        %1890 = vmatprep.subr.bf16.mxu0 0
        %1891 = vmatpush1.bf16.xpose.msra.mxu0 0
        %1892 = vmatprep.subr.bf16.mxu0 0
        %1893 = vmatpush1.bf16.xpose.msra.mxu0 0
        %1894 = vmatprep.subr.bf16.mxu0 0
        %1895 = vmatpush1.bf16.xpose.msra.mxu0 0
        %1896 = vmatprep.subr.bf16.mxu0 0
        %1897 = vmatpush1.bf16.xpose.msra.mxu0 0
        %1898 = vmatprep.mubr.bf16.mxu0 0
        %1899 = vmatmul.mubr.bf16.gmra.mrb[0].mxu0 %v1861
        %v1900 = vpop.f32.mrb[0].mxu0
        %v1901 = vadd.f32 0.0, %v1900
        %v1902 = vpop.f32.mrb[0].mxu0
        %v1903 = vpop.f32.mrb[0].mxu0
        %v1904 = vpop.f32.mrb[0].mxu0
        %1905 = vdwg.mxu0
        %v1907 = vsel %vm1859, %v1844, 0
        %v1910 = vsel %vm1859, %v1852, 0
        %1912 = vmatprep.subr.bf16.mxu0 0
        %1913 = vmatpush1.bf16.xpose.msra.mxu0 %v1910
        %1914 = vmatprep.subr.bf16.mxu0 0
        %1915 = vmatpush1.bf16.xpose.msra.mxu0 0
        %1916 = vmatprep.subr.bf16.mxu0 0
        %1917 = vmatpush1.bf16.xpose.msra.mxu0 0
        %1918 = vmatprep.subr.bf16.mxu0 0
        %1919 = vmatpush1.bf16.xpose.msra.mxu0 0
        %1920 = vmatprep.subr.bf16.mxu0 0
        %1921 = vmatpush1.bf16.xpose.msra.mxu0 0
        %1922 = vmatprep.subr.bf16.mxu0 0
        %1923 = vmatpush1.bf16.xpose.msra.mxu0 0
        %1924 = vmatprep.subr.bf16.mxu0 0
        %1925 = vmatpush1.bf16.xpose.msra.mxu0 0
        %1926 = vmatprep.subr.bf16.mxu0 0
        %1927 = vmatpush1.bf16.xpose.msra.mxu0 0
        %1928 = vmatprep.subr.bf16.mxu0 0
        %1929 = vmatpush1.bf16.xpose.msra.mxu0 0
        %1930 = vmatprep.subr.bf16.mxu0 0
        %1931 = vmatpush1.bf16.xpose.msra.mxu0 0
        %1932 = vmatprep.subr.bf16.mxu0 0
        %1933 = vmatpush1.bf16.xpose.msra.mxu0 0
        %1934 = vmatprep.subr.bf16.mxu0 0
        %1935 = vmatpush1.bf16.xpose.msra.mxu0 0
        %1936 = vmatprep.subr.bf16.mxu0 0
        %1937 = vmatpush1.bf16.xpose.msra.mxu0 0
        %1938 = vmatprep.subr.bf16.mxu0 0
        %1939 = vmatpush1.bf16.xpose.msra.mxu0 0
        %1940 = vmatprep.subr.bf16.mxu0 0
        %1941 = vmatpush1.bf16.xpose.msra.mxu0 0
        %1942 = vmatprep.subr.bf16.mxu0 0
        %1943 = vmatpush1.bf16.xpose.msra.mxu0 0
        %1944 = vmatprep.mubr.bf16.mxu0 0
        %1945 = vmatmul.mubr.bf16.gmra.mrb[0].mxu0 %v1907
        %v1946 = vpop.f32.mrb[0].mxu0
        %v1947 = vadd.f32 0.0, %v1946
        %v1948 = vpop.f32.mrb[0].mxu0
        %v1949 = vpop.f32.mrb[0].mxu0
        %v1950 = vpop.f32.mrb[0].mxu0
        %1951 = vdwg.mxu0
        %v1953 = vsel %vm1859, %v1845, 0
        %v1956 = vsel %vm1859, %v1853, 0
        %1958 = vmatprep.subr.bf16.mxu0 0
        %1959 = vmatpush1.bf16.xpose.msra.mxu0 %v1956
        %1960 = vmatprep.subr.bf16.mxu0 0
        %1961 = vmatpush1.bf16.xpose.msra.mxu0 0
        %1962 = vmatprep.subr.bf16.mxu0 0
        %1963 = vmatpush1.bf16.xpose.msra.mxu0 0
        %1964 = vmatprep.subr.bf16.mxu0 0
        %1965 = vmatpush1.bf16.xpose.msra.mxu0 0
        %1966 = vmatprep.subr.bf16.mxu0 0
        %1967 = vmatpush1.bf16.xpose.msra.mxu0 0
        %1968 = vmatprep.subr.bf16.mxu0 0
        %1969 = vmatpush1.bf16.xpose.msra.mxu0 0
        %1970 = vmatprep.subr.bf16.mxu0 0
        %1971 = vmatpush1.bf16.xpose.msra.mxu0 0
        %1972 = vmatprep.subr.bf16.mxu0 0
        %1973 = vmatpush1.bf16.xpose.msra.mxu0 0
        %1974 = vmatprep.subr.bf16.mxu0 0
        %1975 = vmatpush1.bf16.xpose.msra.mxu0 0
        %1976 = vmatprep.subr.bf16.mxu0 0
        %1977 = vmatpush1.bf16.xpose.msra.mxu0 0
        %1978 = vmatprep.subr.bf16.mxu0 0
        %1979 = vmatpush1.bf16.xpose.msra.mxu0 0
        %1980 = vmatprep.subr.bf16.mxu0 0
        %1981 = vmatpush1.bf16.xpose.msra.mxu0 0
        %1982 = vmatprep.subr.bf16.mxu0 0
        %1983 = vmatpush1.bf16.xpose.msra.mxu0 0
        %1984 = vmatprep.subr.bf16.mxu0 0
        %1985 = vmatpush1.bf16.xpose.msra.mxu0 0
        %1986 = vmatprep.subr.bf16.mxu0 0
        %1987 = vmatpush1.bf16.xpose.msra.mxu0 0
        %1988 = vmatprep.subr.bf16.mxu0 0
        %1989 = vmatpush1.bf16.xpose.msra.mxu0 0
        %1990 = vmatprep.mubr.bf16.mxu0 0
        %1991 = vmatmul.mubr.bf16.gmra.mrb[0].mxu0 %v1953
        %v1992 = vpop.f32.mrb[0].mxu0
        %v1993 = vadd.f32 0.0, %v1992
        %v1994 = vpop.f32.mrb[0].mxu0
        %v1995 = vpop.f32.mrb[0].mxu0
        %v1996 = vpop.f32.mrb[0].mxu0
        %1997 = vdwg.mxu0
        %v1999 = vsel %vm1859, %v1846, 0
        %v2002 = vsel %vm1859, %v1854, 0
        %2004 = vmatprep.subr.bf16.mxu0 0
        %2005 = vmatpush1.bf16.xpose.msra.mxu0 %v2002
        %2006 = vmatprep.subr.bf16.mxu0 0
        %2007 = vmatpush1.bf16.xpose.msra.mxu0 0
        %2008 = vmatprep.subr.bf16.mxu0 0
        %2009 = vmatpush1.bf16.xpose.msra.mxu0 0
        %2010 = vmatprep.subr.bf16.mxu0 0
        %2011 = vmatpush1.bf16.xpose.msra.mxu0 0
        %2012 = vmatprep.subr.bf16.mxu0 0
        %2013 = vmatpush1.bf16.xpose.msra.mxu0 0
        %2014 = vmatprep.subr.bf16.mxu0 0
        %2015 = vmatpush1.bf16.xpose.msra.mxu0 0
        %2016 = vmatprep.subr.bf16.mxu0 0
        %2017 = vmatpush1.bf16.xpose.msra.mxu0 0
        %2018 = vmatprep.subr.bf16.mxu0 0
        %2019 = vmatpush1.bf16.xpose.msra.mxu0 0
        %2020 = vmatprep.subr.bf16.mxu0 0
        %2021 = vmatpush1.bf16.xpose.msra.mxu0 0
        %2022 = vmatprep.subr.bf16.mxu0 0
        %2023 = vmatpush1.bf16.xpose.msra.mxu0 0
        %2024 = vmatprep.subr.bf16.mxu0 0
        %2025 = vmatpush1.bf16.xpose.msra.mxu0 0
        %2026 = vmatprep.subr.bf16.mxu0 0
        %2027 = vmatpush1.bf16.xpose.msra.mxu0 0
        %2028 = vmatprep.subr.bf16.mxu0 0
        %2029 = vmatpush1.bf16.xpose.msra.mxu0 0
        %2030 = vmatprep.subr.bf16.mxu0 0
        %2031 = vmatpush1.bf16.xpose.msra.mxu0 0
        %2032 = vmatprep.subr.bf16.mxu0 0
        %2033 = vmatpush1.bf16.xpose.msra.mxu0 0
        %2034 = vmatprep.subr.bf16.mxu0 0
        %2035 = vmatpush1.bf16.xpose.msra.mxu0 0
        %2036 = vmatprep.mubr.bf16.mxu0 0
        %2037 = vmatmul.mubr.bf16.gmra.mrb[0].mxu0 %v1999
        %v2038 = vpop.f32.mrb[0].mxu0
        %v2039 = vadd.f32 0.0, %v2038
        %v2040 = vpop.f32.mrb[0].mxu0
        %v2041 = vpop.f32.mrb[0].mxu0
        %v2042 = vpop.f32.mrb[0].mxu0
        %2043 = vdwg.mxu0
        %v2045 = vsel %vm1859, %v1847, 0
        %v2048 = vsel %vm1859, %v1855, 0
        %2050 = vmatprep.subr.bf16.mxu0 0
        %2051 = vmatpush1.bf16.xpose.msra.mxu0 %v2048
        %2052 = vmatprep.subr.bf16.mxu0 0
        %2053 = vmatpush1.bf16.xpose.msra.mxu0 0
        %2054 = vmatprep.subr.bf16.mxu0 0
        %2055 = vmatpush1.bf16.xpose.msra.mxu0 0
        %2056 = vmatprep.subr.bf16.mxu0 0
        %2057 = vmatpush1.bf16.xpose.msra.mxu0 0
        %2058 = vmatprep.subr.bf16.mxu0 0
        %2059 = vmatpush1.bf16.xpose.msra.mxu0 0
        %2060 = vmatprep.subr.bf16.mxu0 0
        %2061 = vmatpush1.bf16.xpose.msra.mxu0 0
        %2062 = vmatprep.subr.bf16.mxu0 0
        %2063 = vmatpush1.bf16.xpose.msra.mxu0 0
        %2064 = vmatprep.subr.bf16.mxu0 0
        %2065 = vmatpush1.bf16.xpose.msra.mxu0 0
        %2066 = vmatprep.subr.bf16.mxu0 0
        %2067 = vmatpush1.bf16.xpose.msra.mxu0 0
        %2068 = vmatprep.subr.bf16.mxu0 0
        %2069 = vmatpush1.bf16.xpose.msra.mxu0 0
        %2070 = vmatprep.subr.bf16.mxu0 0
        %2071 = vmatpush1.bf16.xpose.msra.mxu0 0
        %2072 = vmatprep.subr.bf16.mxu0 0
        %2073 = vmatpush1.bf16.xpose.msra.mxu0 0
        %2074 = vmatprep.subr.bf16.mxu0 0
        %2075 = vmatpush1.bf16.xpose.msra.mxu0 0
        %2076 = vmatprep.subr.bf16.mxu0 0
        %2077 = vmatpush1.bf16.xpose.msra.mxu0 0
        %2078 = vmatprep.subr.bf16.mxu0 0
        %2079 = vmatpush1.bf16.xpose.msra.mxu0 0
        %2080 = vmatprep.subr.bf16.mxu0 0
        %2081 = vmatpush1.bf16.xpose.msra.mxu0 0
        %2082 = vmatprep.mubr.bf16.mxu0 0
        %2083 = vmatmul.mubr.bf16.gmra.mrb[0].mxu0 %v2045
        %v2084 = vpop.f32.mrb[0].mxu0
        %v2085 = vadd.f32 0.0, %v2084
        %v2086 = vpop.f32.mrb[0].mxu0
        %v2087 = vpop.f32.mrb[0].mxu0
        %v2088 = vpop.f32.mrb[0].mxu0
        %2089 = vdwg.mxu0
        %v2091 = vsel %vm1859, %v1848, 0
        %v2094 = vsel %vm1859, %v1856, 0
        %2096 = vmatprep.subr.bf16.mxu0 0
        %2097 = vmatpush1.bf16.xpose.msra.mxu0 %v2094
        %2098 = vmatprep.subr.bf16.mxu0 0
        %2099 = vmatpush1.bf16.xpose.msra.mxu0 0
        %2100 = vmatprep.subr.bf16.mxu0 0
        %2101 = vmatpush1.bf16.xpose.msra.mxu0 0
        %2102 = vmatprep.subr.bf16.mxu0 0
        %2103 = vmatpush1.bf16.xpose.msra.mxu0 0
        %2104 = vmatprep.subr.bf16.mxu0 0
        %2105 = vmatpush1.bf16.xpose.msra.mxu0 0
        %2106 = vmatprep.subr.bf16.mxu0 0
        %2107 = vmatpush1.bf16.xpose.msra.mxu0 0
        %2108 = vmatprep.subr.bf16.mxu0 0
        %2109 = vmatpush1.bf16.xpose.msra.mxu0 0
        %2110 = vmatprep.subr.bf16.mxu0 0
        %2111 = vmatpush1.bf16.xpose.msra.mxu0 0
        %2112 = vmatprep.subr.bf16.mxu0 0
        %2113 = vmatpush1.bf16.xpose.msra.mxu0 0
        %2114 = vmatprep.subr.bf16.mxu0 0
        %2115 = vmatpush1.bf16.xpose.msra.mxu0 0
        %2116 = vmatprep.subr.bf16.mxu0 0
        %2117 = vmatpush1.bf16.xpose.msra.mxu0 0
        %2118 = vmatprep.subr.bf16.mxu0 0
        %2119 = vmatpush1.bf16.xpose.msra.mxu0 0
        %2120 = vmatprep.subr.bf16.mxu0 0
        %2121 = vmatpush1.bf16.xpose.msra.mxu0 0
        %2122 = vmatprep.subr.bf16.mxu0 0
        %2123 = vmatpush1.bf16.xpose.msra.mxu0 0
        %2124 = vmatprep.subr.bf16.mxu0 0
        %2125 = vmatpush1.bf16.xpose.msra.mxu0 0
        %2126 = vmatprep.subr.bf16.mxu0 0
        %2127 = vmatpush1.bf16.xpose.msra.mxu0 0
        %2128 = vmatprep.mubr.bf16.mxu0 0
        %2129 = vmatmul.mubr.bf16.gmra.mrb[0].mxu0 %v2091
        %v2130 = vpop.f32.mrb[0].mxu0
        %v2131 = vadd.f32 0.0, %v2130
        %v2132 = vpop.f32.mrb[0].mxu0
        %v2133 = vpop.f32.mrb[0].mxu0
        %v2134 = vpop.f32.mrb[0].mxu0
        %2135 = vdwg.mxu0
        %v2137 = vsel %vm1859, %v1849, 0
        %v2140 = vsel %vm1859, %v1857, 0
        %2142 = vmatprep.subr.bf16.mxu0 0
        %2143 = vmatpush1.bf16.xpose.msra.mxu0 %v2140
        %2144 = vmatprep.subr.bf16.mxu0 0
        %2145 = vmatpush1.bf16.xpose.msra.mxu0 0
        %2146 = vmatprep.subr.bf16.mxu0 0
        %2147 = vmatpush1.bf16.xpose.msra.mxu0 0
        %2148 = vmatprep.subr.bf16.mxu0 0
        %2149 = vmatpush1.bf16.xpose.msra.mxu0 0
        %2150 = vmatprep.subr.bf16.mxu0 0
        %2151 = vmatpush1.bf16.xpose.msra.mxu0 0
        %2152 = vmatprep.subr.bf16.mxu0 0
        %2153 = vmatpush1.bf16.xpose.msra.mxu0 0
        %2154 = vmatprep.subr.bf16.mxu0 0
        %2155 = vmatpush1.bf16.xpose.msra.mxu0 0
        %2156 = vmatprep.subr.bf16.mxu0 0
        %2157 = vmatpush1.bf16.xpose.msra.mxu0 0
        %2158 = vmatprep.subr.bf16.mxu0 0
        %2159 = vmatpush1.bf16.xpose.msra.mxu0 0
        %2160 = vmatprep.subr.bf16.mxu0 0
        %2161 = vmatpush1.bf16.xpose.msra.mxu0 0
        %2162 = vmatprep.subr.bf16.mxu0 0
        %2163 = vmatpush1.bf16.xpose.msra.mxu0 0
        %2164 = vmatprep.subr.bf16.mxu0 0
        %2165 = vmatpush1.bf16.xpose.msra.mxu0 0
        %2166 = vmatprep.subr.bf16.mxu0 0
        %2167 = vmatpush1.bf16.xpose.msra.mxu0 0
        %2168 = vmatprep.subr.bf16.mxu0 0
        %2169 = vmatpush1.bf16.xpose.msra.mxu0 0
        %2170 = vmatprep.subr.bf16.mxu0 0
        %2171 = vmatpush1.bf16.xpose.msra.mxu0 0
        %2172 = vmatprep.subr.bf16.mxu0 0
        %2173 = vmatpush1.bf16.xpose.msra.mxu0 0
        %2174 = vmatprep.mubr.bf16.mxu0 0
        %2175 = vmatmul.mubr.bf16.gmra.mrb[0].mxu0 %v2137
        %v2176 = vpop.f32.mrb[0].mxu0
        %v2177 = vadd.f32 0.0, %v2176
        %v2178 = vpop.f32.mrb[0].mxu0
        %v2179 = vpop.f32.mrb[0].mxu0
        %v2180 = vpop.f32.mrb[0].mxu0
        %2181 = vdwg.mxu0
        %v2183 = vsel %vm1859, %v1850, 0
        %v2186 = vsel %vm1859, %v1858, 0
        %2188 = vmatprep.subr.bf16.mxu0 0
        %2189 = vmatpush1.bf16.xpose.msra.mxu0 %v2186
        %2190 = vmatprep.subr.bf16.mxu0 0
        %2191 = vmatpush1.bf16.xpose.msra.mxu0 0
        %2192 = vmatprep.subr.bf16.mxu0 0
        %2193 = vmatpush1.bf16.xpose.msra.mxu0 0
        %2194 = vmatprep.subr.bf16.mxu0 0
        %2195 = vmatpush1.bf16.xpose.msra.mxu0 0
        %2196 = vmatprep.subr.bf16.mxu0 0
        %2197 = vmatpush1.bf16.xpose.msra.mxu0 0
        %2198 = vmatprep.subr.bf16.mxu0 0
        %2199 = vmatpush1.bf16.xpose.msra.mxu0 0
        %2200 = vmatprep.subr.bf16.mxu0 0
        %2201 = vmatpush1.bf16.xpose.msra.mxu0 0
        %2202 = vmatprep.subr.bf16.mxu0 0
        %2203 = vmatpush1.bf16.xpose.msra.mxu0 0
        %2204 = vmatprep.subr.bf16.mxu0 0
        %2205 = vmatpush1.bf16.xpose.msra.mxu0 0
        %2206 = vmatprep.subr.bf16.mxu0 0
        %2207 = vmatpush1.bf16.xpose.msra.mxu0 0
        %2208 = vmatprep.subr.bf16.mxu0 0
        %2209 = vmatpush1.bf16.xpose.msra.mxu0 0
        %2210 = vmatprep.subr.bf16.mxu0 0
        %2211 = vmatpush1.bf16.xpose.msra.mxu0 0
        %2212 = vmatprep.subr.bf16.mxu0 0
        %2213 = vmatpush1.bf16.xpose.msra.mxu0 0
        %2214 = vmatprep.subr.bf16.mxu0 0
        %2215 = vmatpush1.bf16.xpose.msra.mxu0 0
        %2216 = vmatprep.subr.bf16.mxu0 0
        %2217 = vmatpush1.bf16.xpose.msra.mxu0 0
        %2218 = vmatprep.subr.bf16.mxu0 0
        %2219 = vmatpush1.bf16.xpose.msra.mxu0 0
        %2220 = vmatprep.mubr.bf16.mxu0 0
        %2221 = vmatmul.mubr.bf16.gmra.mrb[0].mxu0 %v2183
        %v2222 = vpop.f32.mrb[0].mxu0
        %v2223 = vadd.f32 0.0, %v2222
        %v2224 = vpop.f32.mrb[0].mxu0
        %v2225 = vpop.f32.mrb[0].mxu0
        %v2226 = vpop.f32.mrb[0].mxu0
        %2227 = vdwg.mxu0
        %v2228 = vmul.f32 %v1901, 0.5
        %v2229 = vmul.f32 %v1947, 0.5
        %v2230 = vmul.f32 %v1993, 0.5
        %v2231 = vmul.f32 %v2039, 0.5
        %v2232 = vmul.f32 %v2085, 0.5
        %v2233 = vmul.f32 %v2131, 0.5
        %v2234 = vmul.f32 %v2177, 0.5
        %v2235 = vmul.f32 %v2223, 0.5
        %vm2236 = vcmask 64512
        %v2237 = vsel %vm2236, %v2228, -inf
        %2238 = vmax.xlane.f32.xlu0 %v2237
        %v2239 = vpop.xlane.xlu0 %2238
        %v2240 = vsel %vm2236, %v2229, -inf
        %2241 = vmax.xlane.f32.xlu0 %v2240
        %v2242 = vpop.xlane.xlu0 %2241
        %v2243 = vsel %vm2236, %v2230, -inf
        %2244 = vmax.xlane.f32.xlu0 %v2243
        %v2245 = vpop.xlane.xlu0 %2244
        %v2246 = vsel %vm2236, %v2231, -inf
        %2247 = vmax.xlane.f32.xlu0 %v2246
        %v2248 = vpop.xlane.xlu0 %2247
        %v2249 = vsel %vm2236, %v2232, -inf
        %2250 = vmax.xlane.f32.xlu0 %v2249
        %v2251 = vpop.xlane.xlu0 %2250
        %v2252 = vsel %vm2236, %v2233, -inf
        %2253 = vmax.xlane.f32.xlu0 %v2252
        %v2254 = vpop.xlane.xlu0 %2253
        %v2255 = vsel %vm2236, %v2234, -inf
        %2256 = vmax.xlane.f32.xlu0 %v2255
        %v2257 = vpop.xlane.xlu0 %2256
        %v2258 = vsel %vm2236, %v2235, -inf
        %2259 = vmax.xlane.f32.xlu0 %v2258
        %v2260 = vpop.xlane.xlu0 %2259
        %v2261 = vsub.f32 %v2228, %v2239
        %v2262 = vsub.f32 %v2229, %v2242
        %v2263 = vsub.f32 %v2230, %v2245
        %v2264 = vsub.f32 %v2231, %v2248
        %v2265 = vsub.f32 %v2232, %v2251
        %v2266 = vsub.f32 %v2233, %v2254
        %v2267 = vsub.f32 %v2234, %v2257
        %v2268 = vsub.f32 %v2235, %v2260
        %v2269 = vmul.f32 %v2261, 1.442695
        %v2270 = vpow.pop %v2269
        %v2271 = vmul.f32 %v2262, 1.442695
        %v2272 = vpow.pop %v2271
        %v2273 = vmul.f32 %v2263, 1.442695
        %v2274 = vpow.pop %v2273
        %v2275 = vmul.f32 %v2264, 1.442695
        %v2276 = vpow.pop %v2275
        %v2277 = vmul.f32 %v2265, 1.442695
        %v2278 = vpow.pop %v2277
        %v2279 = vmul.f32 %v2266, 1.442695
        %v2280 = vpow.pop %v2279
        %v2281 = vmul.f32 %v2267, 1.442695
        %v2282 = vpow.pop %v2281
        %v2283 = vmul.f32 %v2268, 1.442695
        %v2284 = vpow.pop %v2283
        %v2285 = vsel %vm2236, %v2270, 0.0
        %2286 = vadd.xlane.f32.xlu0 %v2285
        %v2287 = vpop.xlane.xlu0 %2286
        %v2288 = vsel %vm2236, %v2272, 0.0
        %2289 = vadd.xlane.f32.xlu0 %v2288
        %v2290 = vpop.xlane.xlu0 %2289
        %v2291 = vsel %vm2236, %v2274, 0.0
        %2292 = vadd.xlane.f32.xlu0 %v2291
        %v2293 = vpop.xlane.xlu0 %2292
        %v2294 = vsel %vm2236, %v2276, 0.0
        %2295 = vadd.xlane.f32.xlu0 %v2294
        %v2296 = vpop.xlane.xlu0 %2295
        %v2297 = vsel %vm2236, %v2278, 0.0
        %2298 = vadd.xlane.f32.xlu0 %v2297
        %v2299 = vpop.xlane.xlu0 %2298
        %v2300 = vsel %vm2236, %v2280, 0.0
        %2301 = vadd.xlane.f32.xlu0 %v2300
        %v2302 = vpop.xlane.xlu0 %2301
        %v2303 = vsel %vm2236, %v2282, 0.0
        %2304 = vadd.xlane.f32.xlu0 %v2303
        %v2305 = vpop.xlane.xlu0 %2304
        %v2306 = vsel %vm2236, %v2284, 0.0
        %2307 = vadd.xlane.f32.xlu0 %v2306
        %v2308 = vpop.xlane.xlu0 %2307
        %v2309 = vrcp.pop %v2287
        %v2310 = vrcp.pop %v2290
        %v2311 = vrcp.pop %v2293
        %v2312 = vrcp.pop %v2296
        %v2313 = vrcp.pop %v2299
        %v2314 = vrcp.pop %v2302
        %v2315 = vrcp.pop %v2305
        %v2316 = vrcp.pop %v2308
        %v2317 = vmul.f32 %v2270, %v2309
        %v2318 = vmul.f32 %v2272, %v2310
        %v2319 = vmul.f32 %v2274, %v2311
        %v2320 = vmul.f32 %v2276, %v2312
        %v2321 = vmul.f32 %v2278, %v2313
        %v2322 = vmul.f32 %v2280, %v2314
        %v2323 = vmul.f32 %v2282, %v2315
        %v2324 = vmul.f32 %v2284, %v2316
        %v2325 = vpack.c.bf16 %v2317, %v2317
        %v2326 = vpack.c.bf16 %v2318, %v2318
        %v2327 = vpack.c.bf16 %v2319, %v2319
        %v2328 = vpack.c.bf16 %v2320, %v2320
        %v2329 = vpack.c.bf16 %v2321, %v2321
        %v2330 = vpack.c.bf16 %v2322, %v2322
        %v2331 = vpack.c.bf16 %v2323, %v2323
        %v2332 = vpack.c.bf16 %v2324, %v2324
        %v2333 = vpack.c.bf16 %v1474, %v1474
        %v2334 = vpack.c.bf16 %v1526, %v1526
        %v2335 = vpack.c.bf16 %v1578, %v1578
        %v2336 = vpack.c.bf16 %v1630, %v1630
        %v2337 = vpack.c.bf16 %v1682, %v1682
        %v2338 = vpack.c.bf16 %v1734, %v1734
        %v2339 = vpack.c.bf16 %v1786, %v1786
        %v2340 = vpack.c.bf16 %v1838, %v1838
        %v2342 = vsel %vm2236, %v2325, 0
        %vm2344 = vcmask 1043456
        %v2346 = vsel %vm2344, %v2333, 0
        %2348 = vmatprep.subr.bf16.mxu0 0
        %2349 = vmatpush1.bf16.msra.mxu0 %v2346
        %2350 = vmatprep.subr.bf16.mxu0 0
        %2351 = vmatpush1.bf16.msra.mxu0 0
        %2352 = vmatprep.subr.bf16.mxu0 0
        %2353 = vmatpush1.bf16.msra.mxu0 0
        %2354 = vmatprep.subr.bf16.mxu0 0
        %2355 = vmatpush1.bf16.msra.mxu0 0
        %2356 = vmatprep.subr.bf16.mxu0 0
        %2357 = vmatpush1.bf16.msra.mxu0 0
        %2358 = vmatprep.subr.bf16.mxu0 0
        %2359 = vmatpush1.bf16.msra.mxu0 0
        %2360 = vmatprep.subr.bf16.mxu0 0
        %2361 = vmatpush1.bf16.msra.mxu0 0
        %2362 = vmatprep.subr.bf16.mxu0 0
        %2363 = vmatpush1.bf16.msra.mxu0 0
        %2364 = vmatprep.subr.bf16.mxu0 0
        %2365 = vmatpush1.bf16.msra.mxu0 0
        %2366 = vmatprep.subr.bf16.mxu0 0
        %2367 = vmatpush1.bf16.msra.mxu0 0
        %2368 = vmatprep.subr.bf16.mxu0 0
        %2369 = vmatpush1.bf16.msra.mxu0 0
        %2370 = vmatprep.subr.bf16.mxu0 0
        %2371 = vmatpush1.bf16.msra.mxu0 0
        %2372 = vmatprep.subr.bf16.mxu0 0
        %2373 = vmatpush1.bf16.msra.mxu0 0
        %2374 = vmatprep.subr.bf16.mxu0 0
        %2375 = vmatpush1.bf16.msra.mxu0 0
        %2376 = vmatprep.subr.bf16.mxu0 0
        %2377 = vmatpush1.bf16.msra.mxu0 0
        %2378 = vmatprep.subr.bf16.mxu0 0
        %2379 = vmatpush1.bf16.msra.mxu0 0
        %2380 = vmatprep.mubr.bf16.mxu0 0
        %2381 = vmatmul.mubr.bf16.gmra.mrb[0].mxu0 %v2342
        %v2382 = vpop.f32.mrb[0].mxu0
        %v2383 = vadd.f32 0.0, %v2382
        %v2384 = vpop.f32.mrb[0].mxu0
        %v2385 = vpop.f32.mrb[0].mxu0
        %v2386 = vpop.f32.mrb[0].mxu0
        %2387 = vdwg.mxu0
        %v2389 = vsel %vm2236, %v2326, 0
        %v2392 = vsel %vm2344, %v2334, 0
        %2394 = vmatprep.subr.bf16.mxu0 0
        %2395 = vmatpush1.bf16.msra.mxu0 %v2392
        %2396 = vmatprep.subr.bf16.mxu0 0
        %2397 = vmatpush1.bf16.msra.mxu0 0
        %2398 = vmatprep.subr.bf16.mxu0 0
        %2399 = vmatpush1.bf16.msra.mxu0 0
        %2400 = vmatprep.subr.bf16.mxu0 0
        %2401 = vmatpush1.bf16.msra.mxu0 0
        %2402 = vmatprep.subr.bf16.mxu0 0
        %2403 = vmatpush1.bf16.msra.mxu0 0
        %2404 = vmatprep.subr.bf16.mxu0 0
        %2405 = vmatpush1.bf16.msra.mxu0 0
        %2406 = vmatprep.subr.bf16.mxu0 0
        %2407 = vmatpush1.bf16.msra.mxu0 0
        %2408 = vmatprep.subr.bf16.mxu0 0
        %2409 = vmatpush1.bf16.msra.mxu0 0
        %2410 = vmatprep.subr.bf16.mxu0 0
        %2411 = vmatpush1.bf16.msra.mxu0 0
        %2412 = vmatprep.subr.bf16.mxu0 0
        %2413 = vmatpush1.bf16.msra.mxu0 0
        %2414 = vmatprep.subr.bf16.mxu0 0
        %2415 = vmatpush1.bf16.msra.mxu0 0
        %2416 = vmatprep.subr.bf16.mxu0 0
        %2417 = vmatpush1.bf16.msra.mxu0 0
        %2418 = vmatprep.subr.bf16.mxu0 0
        %2419 = vmatpush1.bf16.msra.mxu0 0
        %2420 = vmatprep.subr.bf16.mxu0 0
        %2421 = vmatpush1.bf16.msra.mxu0 0
        %2422 = vmatprep.subr.bf16.mxu0 0
        %2423 = vmatpush1.bf16.msra.mxu0 0
        %2424 = vmatprep.subr.bf16.mxu0 0
        %2425 = vmatpush1.bf16.msra.mxu0 0
        %2426 = vmatprep.mubr.bf16.mxu0 0
        %2427 = vmatmul.mubr.bf16.gmra.mrb[0].mxu0 %v2389
        %v2428 = vpop.f32.mrb[0].mxu0
        %v2429 = vadd.f32 0.0, %v2428
        %v2430 = vpop.f32.mrb[0].mxu0
        %v2431 = vpop.f32.mrb[0].mxu0
        %v2432 = vpop.f32.mrb[0].mxu0
        %2433 = vdwg.mxu0
        %v2435 = vsel %vm2236, %v2327, 0
        %v2438 = vsel %vm2344, %v2335, 0
        %2440 = vmatprep.subr.bf16.mxu0 0
        %2441 = vmatpush1.bf16.msra.mxu0 %v2438
        %2442 = vmatprep.subr.bf16.mxu0 0
        %2443 = vmatpush1.bf16.msra.mxu0 0
        %2444 = vmatprep.subr.bf16.mxu0 0
        %2445 = vmatpush1.bf16.msra.mxu0 0
        %2446 = vmatprep.subr.bf16.mxu0 0
        %2447 = vmatpush1.bf16.msra.mxu0 0
        %2448 = vmatprep.subr.bf16.mxu0 0
        %2449 = vmatpush1.bf16.msra.mxu0 0
        %2450 = vmatprep.subr.bf16.mxu0 0
        %2451 = vmatpush1.bf16.msra.mxu0 0
        %2452 = vmatprep.subr.bf16.mxu0 0
        %2453 = vmatpush1.bf16.msra.mxu0 0
        %2454 = vmatprep.subr.bf16.mxu0 0
        %2455 = vmatpush1.bf16.msra.mxu0 0
        %2456 = vmatprep.subr.bf16.mxu0 0
        %2457 = vmatpush1.bf16.msra.mxu0 0
        %2458 = vmatprep.subr.bf16.mxu0 0
        %2459 = vmatpush1.bf16.msra.mxu0 0
        %2460 = vmatprep.subr.bf16.mxu0 0
        %2461 = vmatpush1.bf16.msra.mxu0 0
        %2462 = vmatprep.subr.bf16.mxu0 0
        %2463 = vmatpush1.bf16.msra.mxu0 0
        %2464 = vmatprep.subr.bf16.mxu0 0
        %2465 = vmatpush1.bf16.msra.mxu0 0
        %2466 = vmatprep.subr.bf16.mxu0 0
        %2467 = vmatpush1.bf16.msra.mxu0 0
        %2468 = vmatprep.subr.bf16.mxu0 0
        %2469 = vmatpush1.bf16.msra.mxu0 0
        %2470 = vmatprep.subr.bf16.mxu0 0
        %2471 = vmatpush1.bf16.msra.mxu0 0
        %2472 = vmatprep.mubr.bf16.mxu0 0
        %2473 = vmatmul.mubr.bf16.gmra.mrb[0].mxu0 %v2435
        %v2474 = vpop.f32.mrb[0].mxu0
        %v2475 = vadd.f32 0.0, %v2474
        %v2476 = vpop.f32.mrb[0].mxu0
        %v2477 = vpop.f32.mrb[0].mxu0
        %v2478 = vpop.f32.mrb[0].mxu0
        %2479 = vdwg.mxu0
        %v2481 = vsel %vm2236, %v2328, 0
        %v2484 = vsel %vm2344, %v2336, 0
        %2486 = vmatprep.subr.bf16.mxu0 0
        %2487 = vmatpush1.bf16.msra.mxu0 %v2484
        %2488 = vmatprep.subr.bf16.mxu0 0
        %2489 = vmatpush1.bf16.msra.mxu0 0
        %2490 = vmatprep.subr.bf16.mxu0 0
        %2491 = vmatpush1.bf16.msra.mxu0 0
        %2492 = vmatprep.subr.bf16.mxu0 0
        %2493 = vmatpush1.bf16.msra.mxu0 0
        %2494 = vmatprep.subr.bf16.mxu0 0
        %2495 = vmatpush1.bf16.msra.mxu0 0
        %2496 = vmatprep.subr.bf16.mxu0 0
        %2497 = vmatpush1.bf16.msra.mxu0 0
        %2498 = vmatprep.subr.bf16.mxu0 0
        %2499 = vmatpush1.bf16.msra.mxu0 0
        %2500 = vmatprep.subr.bf16.mxu0 0
        %2501 = vmatpush1.bf16.msra.mxu0 0
        %2502 = vmatprep.subr.bf16.mxu0 0
        %2503 = vmatpush1.bf16.msra.mxu0 0
        %2504 = vmatprep.subr.bf16.mxu0 0
        %2505 = vmatpush1.bf16.msra.mxu0 0
        %2506 = vmatprep.subr.bf16.mxu0 0
        %2507 = vmatpush1.bf16.msra.mxu0 0
        %2508 = vmatprep.subr.bf16.mxu0 0
        %2509 = vmatpush1.bf16.msra.mxu0 0
        %2510 = vmatprep.subr.bf16.mxu0 0
        %2511 = vmatpush1.bf16.msra.mxu0 0
        %2512 = vmatprep.subr.bf16.mxu0 0
        %2513 = vmatpush1.bf16.msra.mxu0 0
        %2514 = vmatprep.subr.bf16.mxu0 0
        %2515 = vmatpush1.bf16.msra.mxu0 0
        %2516 = vmatprep.subr.bf16.mxu0 0
        %2517 = vmatpush1.bf16.msra.mxu0 0
        %2518 = vmatprep.mubr.bf16.mxu0 0
        %2519 = vmatmul.mubr.bf16.gmra.mrb[0].mxu0 %v2481
        %v2520 = vpop.f32.mrb[0].mxu0
        %v2521 = vadd.f32 0.0, %v2520
        %v2522 = vpop.f32.mrb[0].mxu0
        %v2523 = vpop.f32.mrb[0].mxu0
        %v2524 = vpop.f32.mrb[0].mxu0
        %2525 = vdwg.mxu0
        %v2527 = vsel %vm2236, %v2329, 0
        %v2530 = vsel %vm2344, %v2337, 0
        %2532 = vmatprep.subr.bf16.mxu0 0
        %2533 = vmatpush1.bf16.msra.mxu0 %v2530
        %2534 = vmatprep.subr.bf16.mxu0 0
        %2535 = vmatpush1.bf16.msra.mxu0 0
        %2536 = vmatprep.subr.bf16.mxu0 0
        %2537 = vmatpush1.bf16.msra.mxu0 0
        %2538 = vmatprep.subr.bf16.mxu0 0
        %2539 = vmatpush1.bf16.msra.mxu0 0
        %2540 = vmatprep.subr.bf16.mxu0 0
        %2541 = vmatpush1.bf16.msra.mxu0 0
        %2542 = vmatprep.subr.bf16.mxu0 0
        %2543 = vmatpush1.bf16.msra.mxu0 0
        %2544 = vmatprep.subr.bf16.mxu0 0
        %2545 = vmatpush1.bf16.msra.mxu0 0
        %2546 = vmatprep.subr.bf16.mxu0 0
        %2547 = vmatpush1.bf16.msra.mxu0 0
        %2548 = vmatprep.subr.bf16.mxu0 0
        %2549 = vmatpush1.bf16.msra.mxu0 0
        %2550 = vmatprep.subr.bf16.mxu0 0
        %2551 = vmatpush1.bf16.msra.mxu0 0
        %2552 = vmatprep.subr.bf16.mxu0 0
        %2553 = vmatpush1.bf16.msra.mxu0 0
        %2554 = vmatprep.subr.bf16.mxu0 0
        %2555 = vmatpush1.bf16.msra.mxu0 0
        %2556 = vmatprep.subr.bf16.mxu0 0
        %2557 = vmatpush1.bf16.msra.mxu0 0
        %2558 = vmatprep.subr.bf16.mxu0 0
        %2559 = vmatpush1.bf16.msra.mxu0 0
        %2560 = vmatprep.subr.bf16.mxu0 0
        %2561 = vmatpush1.bf16.msra.mxu0 0
        %2562 = vmatprep.subr.bf16.mxu0 0
        %2563 = vmatpush1.bf16.msra.mxu0 0
        %2564 = vmatprep.mubr.bf16.mxu0 0
        %2565 = vmatmul.mubr.bf16.gmra.mrb[0].mxu0 %v2527
        %v2566 = vpop.f32.mrb[0].mxu0
        %v2567 = vadd.f32 0.0, %v2566
        %v2568 = vpop.f32.mrb[0].mxu0
        %v2569 = vpop.f32.mrb[0].mxu0
        %v2570 = vpop.f32.mrb[0].mxu0
        %2571 = vdwg.mxu0
        %v2573 = vsel %vm2236, %v2330, 0
        %v2576 = vsel %vm2344, %v2338, 0
        %2578 = vmatprep.subr.bf16.mxu0 0
        %2579 = vmatpush1.bf16.msra.mxu0 %v2576
        %2580 = vmatprep.subr.bf16.mxu0 0
        %2581 = vmatpush1.bf16.msra.mxu0 0
        %2582 = vmatprep.subr.bf16.mxu0 0
        %2583 = vmatpush1.bf16.msra.mxu0 0
        %2584 = vmatprep.subr.bf16.mxu0 0
        %2585 = vmatpush1.bf16.msra.mxu0 0
        %2586 = vmatprep.subr.bf16.mxu0 0
        %2587 = vmatpush1.bf16.msra.mxu0 0
        %2588 = vmatprep.subr.bf16.mxu0 0
        %2589 = vmatpush1.bf16.msra.mxu0 0
        %2590 = vmatprep.subr.bf16.mxu0 0
        %2591 = vmatpush1.bf16.msra.mxu0 0
        %2592 = vmatprep.subr.bf16.mxu0 0
        %2593 = vmatpush1.bf16.msra.mxu0 0
        %2594 = vmatprep.subr.bf16.mxu0 0
        %2595 = vmatpush1.bf16.msra.mxu0 0
        %2596 = vmatprep.subr.bf16.mxu0 0
        %2597 = vmatpush1.bf16.msra.mxu0 0
        %2598 = vmatprep.subr.bf16.mxu0 0
        %2599 = vmatpush1.bf16.msra.mxu0 0
        %2600 = vmatprep.subr.bf16.mxu0 0
        %2601 = vmatpush1.bf16.msra.mxu0 0
        %2602 = vmatprep.subr.bf16.mxu0 0
        %2603 = vmatpush1.bf16.msra.mxu0 0
        %2604 = vmatprep.subr.bf16.mxu0 0
        %2605 = vmatpush1.bf16.msra.mxu0 0
        %2606 = vmatprep.subr.bf16.mxu0 0
        %2607 = vmatpush1.bf16.msra.mxu0 0
        %2608 = vmatprep.subr.bf16.mxu0 0
        %2609 = vmatpush1.bf16.msra.mxu0 0
        %2610 = vmatprep.mubr.bf16.mxu0 0
        %2611 = vmatmul.mubr.bf16.gmra.mrb[0].mxu0 %v2573
        %v2612 = vpop.f32.mrb[0].mxu0
        %v2613 = vadd.f32 0.0, %v2612
        %v2614 = vpop.f32.mrb[0].mxu0
        %v2615 = vpop.f32.mrb[0].mxu0
        %v2616 = vpop.f32.mrb[0].mxu0
        %2617 = vdwg.mxu0
        %v2619 = vsel %vm2236, %v2331, 0
        %v2622 = vsel %vm2344, %v2339, 0
        %2624 = vmatprep.subr.bf16.mxu0 0
        %2625 = vmatpush1.bf16.msra.mxu0 %v2622
        %2626 = vmatprep.subr.bf16.mxu0 0
        %2627 = vmatpush1.bf16.msra.mxu0 0
        %2628 = vmatprep.subr.bf16.mxu0 0
        %2629 = vmatpush1.bf16.msra.mxu0 0
        %2630 = vmatprep.subr.bf16.mxu0 0
        %2631 = vmatpush1.bf16.msra.mxu0 0
        %2632 = vmatprep.subr.bf16.mxu0 0
        %2633 = vmatpush1.bf16.msra.mxu0 0
        %2634 = vmatprep.subr.bf16.mxu0 0
        %2635 = vmatpush1.bf16.msra.mxu0 0
        %2636 = vmatprep.subr.bf16.mxu0 0
        %2637 = vmatpush1.bf16.msra.mxu0 0
        %2638 = vmatprep.subr.bf16.mxu0 0
        %2639 = vmatpush1.bf16.msra.mxu0 0
        %2640 = vmatprep.subr.bf16.mxu0 0
        %2641 = vmatpush1.bf16.msra.mxu0 0
        %2642 = vmatprep.subr.bf16.mxu0 0
        %2643 = vmatpush1.bf16.msra.mxu0 0
        %2644 = vmatprep.subr.bf16.mxu0 0
        %2645 = vmatpush1.bf16.msra.mxu0 0
        %2646 = vmatprep.subr.bf16.mxu0 0
        %2647 = vmatpush1.bf16.msra.mxu0 0
        %2648 = vmatprep.subr.bf16.mxu0 0
        %2649 = vmatpush1.bf16.msra.mxu0 0
        %2650 = vmatprep.subr.bf16.mxu0 0
        %2651 = vmatpush1.bf16.msra.mxu0 0
        %2652 = vmatprep.subr.bf16.mxu0 0
        %2653 = vmatpush1.bf16.msra.mxu0 0
        %2654 = vmatprep.subr.bf16.mxu0 0
        %2655 = vmatpush1.bf16.msra.mxu0 0
        %2656 = vmatprep.mubr.bf16.mxu0 0
        %2657 = vmatmul.mubr.bf16.gmra.mrb[0].mxu0 %v2619
        %v2658 = vpop.f32.mrb[0].mxu0
        %v2659 = vadd.f32 0.0, %v2658
        %v2660 = vpop.f32.mrb[0].mxu0
        %v2661 = vpop.f32.mrb[0].mxu0
        %v2662 = vpop.f32.mrb[0].mxu0
        %2663 = vdwg.mxu0
        %v2665 = vsel %vm2236, %v2332, 0
        %v2668 = vsel %vm2344, %v2340, 0
        %2670 = vmatprep.subr.bf16.mxu0 0
        %2671 = vmatpush1.bf16.msra.mxu0 %v2668
        %2672 = vmatprep.subr.bf16.mxu0 0
        %2673 = vmatpush1.bf16.msra.mxu0 0
        %2674 = vmatprep.subr.bf16.mxu0 0
        %2675 = vmatpush1.bf16.msra.mxu0 0
        %2676 = vmatprep.subr.bf16.mxu0 0
        %2677 = vmatpush1.bf16.msra.mxu0 0
        %2678 = vmatprep.subr.bf16.mxu0 0
        %2679 = vmatpush1.bf16.msra.mxu0 0
        %2680 = vmatprep.subr.bf16.mxu0 0
        %2681 = vmatpush1.bf16.msra.mxu0 0
        %2682 = vmatprep.subr.bf16.mxu0 0
        %2683 = vmatpush1.bf16.msra.mxu0 0
        %2684 = vmatprep.subr.bf16.mxu0 0
        %2685 = vmatpush1.bf16.msra.mxu0 0
        %2686 = vmatprep.subr.bf16.mxu0 0
        %2687 = vmatpush1.bf16.msra.mxu0 0
        %2688 = vmatprep.subr.bf16.mxu0 0
        %2689 = vmatpush1.bf16.msra.mxu0 0
        %2690 = vmatprep.subr.bf16.mxu0 0
        %2691 = vmatpush1.bf16.msra.mxu0 0
        %2692 = vmatprep.subr.bf16.mxu0 0
        %2693 = vmatpush1.bf16.msra.mxu0 0
        %2694 = vmatprep.subr.bf16.mxu0 0
        %2695 = vmatpush1.bf16.msra.mxu0 0
        %2696 = vmatprep.subr.bf16.mxu0 0
        %2697 = vmatpush1.bf16.msra.mxu0 0
        %2698 = vmatprep.subr.bf16.mxu0 0
        %2699 = vmatpush1.bf16.msra.mxu0 0
        %2700 = vmatprep.subr.bf16.mxu0 0
        %2701 = vmatpush1.bf16.msra.mxu0 0
        %2702 = vmatprep.mubr.bf16.mxu0 0
        %2703 = vmatmul.mubr.bf16.gmra.mrb[0].mxu0 %v2665
        %v2704 = vpop.f32.mrb[0].mxu0
        %v2705 = vadd.f32 0.0, %v2704
        %v2706 = vpop.f32.mrb[0].mxu0
        %v2707 = vpop.f32.mrb[0].mxu0
        %v2708 = vpop.f32.mrb[0].mxu0
        %2709 = vdwg.mxu0
        %v2710 = vpack.c.bf16 %v2383, %v2383
        %v2711 = vpack.c.bf16 %v2429, %v2429
        %v2712 = vpack.c.bf16 %v2475, %v2475
        %v2713 = vpack.c.bf16 %v2521, %v2521
        %v2714 = vpack.c.bf16 %v2567, %v2567
        %v2715 = vpack.c.bf16 %v2613, %v2613
        %v2716 = vpack.c.bf16 %v2659, %v2659
        %v2717 = vpack.c.bf16 %v2705, %v2705
        %v2719 = vsel %vm1859, %v2710, 0
        %vm2721 = vcmask 1041408
        %v2723 = vsel %vm2721, %v583, 0
        %2725 = vmatprep.subr.bf16.mxu0 0
        %2726 = vmatpush1.bf16.msra.mxu0 %v2723
        %2727 = vmatprep.subr.bf16.mxu0 0
        %2728 = vmatpush1.bf16.msra.mxu0 0
        %2729 = vmatprep.subr.bf16.mxu0 0
        %2730 = vmatpush1.bf16.msra.mxu0 0
        %2731 = vmatprep.subr.bf16.mxu0 0
        %2732 = vmatpush1.bf16.msra.mxu0 0
        %2733 = vmatprep.subr.bf16.mxu0 0
        %2734 = vmatpush1.bf16.msra.mxu0 0
        %2735 = vmatprep.subr.bf16.mxu0 0
        %2736 = vmatpush1.bf16.msra.mxu0 0
        %2737 = vmatprep.subr.bf16.mxu0 0
        %2738 = vmatpush1.bf16.msra.mxu0 0
        %2739 = vmatprep.subr.bf16.mxu0 0
        %2740 = vmatpush1.bf16.msra.mxu0 0
        %2741 = vmatprep.subr.bf16.mxu0 0
        %2742 = vmatpush1.bf16.msra.mxu0 0
        %2743 = vmatprep.subr.bf16.mxu0 0
        %2744 = vmatpush1.bf16.msra.mxu0 0
        %2745 = vmatprep.subr.bf16.mxu0 0
        %2746 = vmatpush1.bf16.msra.mxu0 0
        %2747 = vmatprep.subr.bf16.mxu0 0
        %2748 = vmatpush1.bf16.msra.mxu0 0
        %2749 = vmatprep.subr.bf16.mxu0 0
        %2750 = vmatpush1.bf16.msra.mxu0 0
        %2751 = vmatprep.subr.bf16.mxu0 0
        %2752 = vmatpush1.bf16.msra.mxu0 0
        %2753 = vmatprep.subr.bf16.mxu0 0
        %2754 = vmatpush1.bf16.msra.mxu0 0
        %2755 = vmatprep.subr.bf16.mxu0 0
        %2756 = vmatpush1.bf16.msra.mxu0 0
        %2757 = vmatprep.mubr.bf16.mxu0 0
        %2758 = vmatmul.mubr.bf16.gmra.mrb[0].mxu0 %v2719
        %v2759 = vpop.f32.mrb[0].mxu0
        %v2760 = vadd.f32 0.0, %v2759
        %v2761 = vpop.f32.mrb[0].mxu0
        %v2762 = vpop.f32.mrb[0].mxu0
        %v2763 = vpop.f32.mrb[0].mxu0
        %2764 = vdwg.mxu0
        %v2766 = vsel %vm1859, %v2711, 0
        %v2769 = vsel %vm2721, %v584, 0
        %2771 = vmatprep.subr.bf16.mxu0 0
        %2772 = vmatpush1.bf16.msra.mxu0 %v2769
        %2773 = vmatprep.subr.bf16.mxu0 0
        %2774 = vmatpush1.bf16.msra.mxu0 0
        %2775 = vmatprep.subr.bf16.mxu0 0
        %2776 = vmatpush1.bf16.msra.mxu0 0
        %2777 = vmatprep.subr.bf16.mxu0 0
        %2778 = vmatpush1.bf16.msra.mxu0 0
        %2779 = vmatprep.subr.bf16.mxu0 0
        %2780 = vmatpush1.bf16.msra.mxu0 0
        %2781 = vmatprep.subr.bf16.mxu0 0
        %2782 = vmatpush1.bf16.msra.mxu0 0
        %2783 = vmatprep.subr.bf16.mxu0 0
        %2784 = vmatpush1.bf16.msra.mxu0 0
        %2785 = vmatprep.subr.bf16.mxu0 0
        %2786 = vmatpush1.bf16.msra.mxu0 0
        %2787 = vmatprep.subr.bf16.mxu0 0
        %2788 = vmatpush1.bf16.msra.mxu0 0
        %2789 = vmatprep.subr.bf16.mxu0 0
        %2790 = vmatpush1.bf16.msra.mxu0 0
        %2791 = vmatprep.subr.bf16.mxu0 0
        %2792 = vmatpush1.bf16.msra.mxu0 0
        %2793 = vmatprep.subr.bf16.mxu0 0
        %2794 = vmatpush1.bf16.msra.mxu0 0
        %2795 = vmatprep.subr.bf16.mxu0 0
        %2796 = vmatpush1.bf16.msra.mxu0 0
        %2797 = vmatprep.subr.bf16.mxu0 0
        %2798 = vmatpush1.bf16.msra.mxu0 0
        %2799 = vmatprep.subr.bf16.mxu0 0
        %2800 = vmatpush1.bf16.msra.mxu0 0
        %2801 = vmatprep.subr.bf16.mxu0 0
        %2802 = vmatpush1.bf16.msra.mxu0 0
        %2803 = vmatprep.mubr.bf16.mxu0 0
        %2804 = vmatmul.mubr.bf16.gmra.mrb[0].mxu0 %v2766
        %v2805 = vpop.f32.mrb[0].mxu0
        %v2806 = vadd.f32 0.0, %v2805
        %v2807 = vpop.f32.mrb[0].mxu0
        %v2808 = vpop.f32.mrb[0].mxu0
        %v2809 = vpop.f32.mrb[0].mxu0
        %2810 = vdwg.mxu0
        %v2812 = vsel %vm1859, %v2712, 0
        %v2815 = vsel %vm2721, %v585, 0
        %2817 = vmatprep.subr.bf16.mxu0 0
        %2818 = vmatpush1.bf16.msra.mxu0 %v2815
        %2819 = vmatprep.subr.bf16.mxu0 0
        %2820 = vmatpush1.bf16.msra.mxu0 0
        %2821 = vmatprep.subr.bf16.mxu0 0
        %2822 = vmatpush1.bf16.msra.mxu0 0
        %2823 = vmatprep.subr.bf16.mxu0 0
        %2824 = vmatpush1.bf16.msra.mxu0 0
        %2825 = vmatprep.subr.bf16.mxu0 0
        %2826 = vmatpush1.bf16.msra.mxu0 0
        %2827 = vmatprep.subr.bf16.mxu0 0
        %2828 = vmatpush1.bf16.msra.mxu0 0
        %2829 = vmatprep.subr.bf16.mxu0 0
        %2830 = vmatpush1.bf16.msra.mxu0 0
        %2831 = vmatprep.subr.bf16.mxu0 0
        %2832 = vmatpush1.bf16.msra.mxu0 0
        %2833 = vmatprep.subr.bf16.mxu0 0
        %2834 = vmatpush1.bf16.msra.mxu0 0
        %2835 = vmatprep.subr.bf16.mxu0 0
        %2836 = vmatpush1.bf16.msra.mxu0 0
        %2837 = vmatprep.subr.bf16.mxu0 0
        %2838 = vmatpush1.bf16.msra.mxu0 0
        %2839 = vmatprep.subr.bf16.mxu0 0
        %2840 = vmatpush1.bf16.msra.mxu0 0
        %2841 = vmatprep.subr.bf16.mxu0 0
        %2842 = vmatpush1.bf16.msra.mxu0 0
        %2843 = vmatprep.subr.bf16.mxu0 0
        %2844 = vmatpush1.bf16.msra.mxu0 0
        %2845 = vmatprep.subr.bf16.mxu0 0
        %2846 = vmatpush1.bf16.msra.mxu0 0
        %2847 = vmatprep.subr.bf16.mxu0 0
        %2848 = vmatpush1.bf16.msra.mxu0 0
        %2849 = vmatprep.mubr.bf16.mxu0 0
        %2850 = vmatmul.mubr.bf16.gmra.mrb[0].mxu0 %v2812
        %v2851 = vpop.f32.mrb[0].mxu0
        %v2852 = vadd.f32 0.0, %v2851
        %v2853 = vpop.f32.mrb[0].mxu0
        %v2854 = vpop.f32.mrb[0].mxu0
        %v2855 = vpop.f32.mrb[0].mxu0
        %2856 = vdwg.mxu0
        %v2858 = vsel %vm1859, %v2713, 0
        %v2861 = vsel %vm2721, %v586, 0
        %2863 = vmatprep.subr.bf16.mxu0 0
        %2864 = vmatpush1.bf16.msra.mxu0 %v2861
        %2865 = vmatprep.subr.bf16.mxu0 0
        %2866 = vmatpush1.bf16.msra.mxu0 0
        %2867 = vmatprep.subr.bf16.mxu0 0
        %2868 = vmatpush1.bf16.msra.mxu0 0
        %2869 = vmatprep.subr.bf16.mxu0 0
        %2870 = vmatpush1.bf16.msra.mxu0 0
        %2871 = vmatprep.subr.bf16.mxu0 0
        %2872 = vmatpush1.bf16.msra.mxu0 0
        %2873 = vmatprep.subr.bf16.mxu0 0
        %2874 = vmatpush1.bf16.msra.mxu0 0
        %2875 = vmatprep.subr.bf16.mxu0 0
        %2876 = vmatpush1.bf16.msra.mxu0 0
        %2877 = vmatprep.subr.bf16.mxu0 0
        %2878 = vmatpush1.bf16.msra.mxu0 0
        %2879 = vmatprep.subr.bf16.mxu0 0
        %2880 = vmatpush1.bf16.msra.mxu0 0
        %2881 = vmatprep.subr.bf16.mxu0 0
        %2882 = vmatpush1.bf16.msra.mxu0 0
        %2883 = vmatprep.subr.bf16.mxu0 0
        %2884 = vmatpush1.bf16.msra.mxu0 0
        %2885 = vmatprep.subr.bf16.mxu0 0
        %2886 = vmatpush1.bf16.msra.mxu0 0
        %2887 = vmatprep.subr.bf16.mxu0 0
        %2888 = vmatpush1.bf16.msra.mxu0 0
        %2889 = vmatprep.subr.bf16.mxu0 0
        %2890 = vmatpush1.bf16.msra.mxu0 0
        %2891 = vmatprep.subr.bf16.mxu0 0
        %2892 = vmatpush1.bf16.msra.mxu0 0
        %2893 = vmatprep.subr.bf16.mxu0 0
        %2894 = vmatpush1.bf16.msra.mxu0 0
        %2895 = vmatprep.mubr.bf16.mxu0 0
        %2896 = vmatmul.mubr.bf16.gmra.mrb[0].mxu0 %v2858
        %v2897 = vpop.f32.mrb[0].mxu0
        %v2898 = vadd.f32 0.0, %v2897
        %v2899 = vpop.f32.mrb[0].mxu0
        %v2900 = vpop.f32.mrb[0].mxu0
        %v2901 = vpop.f32.mrb[0].mxu0
        %2902 = vdwg.mxu0
        %v2904 = vsel %vm1859, %v2714, 0
        %v2907 = vsel %vm2721, %v587, 0
        %2909 = vmatprep.subr.bf16.mxu0 0
        %2910 = vmatpush1.bf16.msra.mxu0 %v2907
        %2911 = vmatprep.subr.bf16.mxu0 0
        %2912 = vmatpush1.bf16.msra.mxu0 0
        %2913 = vmatprep.subr.bf16.mxu0 0
        %2914 = vmatpush1.bf16.msra.mxu0 0
        %2915 = vmatprep.subr.bf16.mxu0 0
        %2916 = vmatpush1.bf16.msra.mxu0 0
        %2917 = vmatprep.subr.bf16.mxu0 0
        %2918 = vmatpush1.bf16.msra.mxu0 0
        %2919 = vmatprep.subr.bf16.mxu0 0
        %2920 = vmatpush1.bf16.msra.mxu0 0
        %2921 = vmatprep.subr.bf16.mxu0 0
        %2922 = vmatpush1.bf16.msra.mxu0 0
        %2923 = vmatprep.subr.bf16.mxu0 0
        %2924 = vmatpush1.bf16.msra.mxu0 0
        %2925 = vmatprep.subr.bf16.mxu0 0
        %2926 = vmatpush1.bf16.msra.mxu0 0
        %2927 = vmatprep.subr.bf16.mxu0 0
        %2928 = vmatpush1.bf16.msra.mxu0 0
        %2929 = vmatprep.subr.bf16.mxu0 0
        %2930 = vmatpush1.bf16.msra.mxu0 0
        %2931 = vmatprep.subr.bf16.mxu0 0
        %2932 = vmatpush1.bf16.msra.mxu0 0
        %2933 = vmatprep.subr.bf16.mxu0 0
        %2934 = vmatpush1.bf16.msra.mxu0 0
        %2935 = vmatprep.subr.bf16.mxu0 0
        %2936 = vmatpush1.bf16.msra.mxu0 0
        %2937 = vmatprep.subr.bf16.mxu0 0
        %2938 = vmatpush1.bf16.msra.mxu0 0
        %2939 = vmatprep.subr.bf16.mxu0 0
        %2940 = vmatpush1.bf16.msra.mxu0 0
        %2941 = vmatprep.mubr.bf16.mxu0 0
        %2942 = vmatmul.mubr.bf16.gmra.mrb[0].mxu0 %v2904
        %v2943 = vpop.f32.mrb[0].mxu0
        %v2944 = vadd.f32 0.0, %v2943
        %v2945 = vpop.f32.mrb[0].mxu0
        %v2946 = vpop.f32.mrb[0].mxu0
        %v2947 = vpop.f32.mrb[0].mxu0
        %2948 = vdwg.mxu0
        %v2950 = vsel %vm1859, %v2715, 0
        %v2953 = vsel %vm2721, %v588, 0
        %2955 = vmatprep.subr.bf16.mxu0 0
        %2956 = vmatpush1.bf16.msra.mxu0 %v2953
        %2957 = vmatprep.subr.bf16.mxu0 0
        %2958 = vmatpush1.bf16.msra.mxu0 0
        %2959 = vmatprep.subr.bf16.mxu0 0
        %2960 = vmatpush1.bf16.msra.mxu0 0
        %2961 = vmatprep.subr.bf16.mxu0 0
        %2962 = vmatpush1.bf16.msra.mxu0 0
        %2963 = vmatprep.subr.bf16.mxu0 0
        %2964 = vmatpush1.bf16.msra.mxu0 0
        %2965 = vmatprep.subr.bf16.mxu0 0
        %2966 = vmatpush1.bf16.msra.mxu0 0
        %2967 = vmatprep.subr.bf16.mxu0 0
        %2968 = vmatpush1.bf16.msra.mxu0 0
        %2969 = vmatprep.subr.bf16.mxu0 0
        %2970 = vmatpush1.bf16.msra.mxu0 0
        %2971 = vmatprep.subr.bf16.mxu0 0
        %2972 = vmatpush1.bf16.msra.mxu0 0
        %2973 = vmatprep.subr.bf16.mxu0 0
        %2974 = vmatpush1.bf16.msra.mxu0 0
        %2975 = vmatprep.subr.bf16.mxu0 0
        %2976 = vmatpush1.bf16.msra.mxu0 0
        %2977 = vmatprep.subr.bf16.mxu0 0
        %2978 = vmatpush1.bf16.msra.mxu0 0
        %2979 = vmatprep.subr.bf16.mxu0 0
        %2980 = vmatpush1.bf16.msra.mxu0 0
        %2981 = vmatprep.subr.bf16.mxu0 0
        %2982 = vmatpush1.bf16.msra.mxu0 0
        %2983 = vmatprep.subr.bf16.mxu0 0
        %2984 = vmatpush1.bf16.msra.mxu0 0
        %2985 = vmatprep.subr.bf16.mxu0 0
        %2986 = vmatpush1.bf16.msra.mxu0 0
        %2987 = vmatprep.mubr.bf16.mxu0 0
        %2988 = vmatmul.mubr.bf16.gmra.mrb[0].mxu0 %v2950
        %v2989 = vpop.f32.mrb[0].mxu0
        %v2990 = vadd.f32 0.0, %v2989
        %v2991 = vpop.f32.mrb[0].mxu0
        %v2992 = vpop.f32.mrb[0].mxu0
        %v2993 = vpop.f32.mrb[0].mxu0
        %2994 = vdwg.mxu0
        %v2996 = vsel %vm1859, %v2716, 0
        %v2999 = vsel %vm2721, %v589, 0
        %3001 = vmatprep.subr.bf16.mxu0 0
        %3002 = vmatpush1.bf16.msra.mxu0 %v2999
        %3003 = vmatprep.subr.bf16.mxu0 0
        %3004 = vmatpush1.bf16.msra.mxu0 0
        %3005 = vmatprep.subr.bf16.mxu0 0
        %3006 = vmatpush1.bf16.msra.mxu0 0
        %3007 = vmatprep.subr.bf16.mxu0 0
        %3008 = vmatpush1.bf16.msra.mxu0 0
        %3009 = vmatprep.subr.bf16.mxu0 0
        %3010 = vmatpush1.bf16.msra.mxu0 0
        %3011 = vmatprep.subr.bf16.mxu0 0
        %3012 = vmatpush1.bf16.msra.mxu0 0
        %3013 = vmatprep.subr.bf16.mxu0 0
        %3014 = vmatpush1.bf16.msra.mxu0 0
        %3015 = vmatprep.subr.bf16.mxu0 0
        %3016 = vmatpush1.bf16.msra.mxu0 0
        %3017 = vmatprep.subr.bf16.mxu0 0
        %3018 = vmatpush1.bf16.msra.mxu0 0
        %3019 = vmatprep.subr.bf16.mxu0 0
        %3020 = vmatpush1.bf16.msra.mxu0 0
        %3021 = vmatprep.subr.bf16.mxu0 0
        %3022 = vmatpush1.bf16.msra.mxu0 0
        %3023 = vmatprep.subr.bf16.mxu0 0
        %3024 = vmatpush1.bf16.msra.mxu0 0
        %3025 = vmatprep.subr.bf16.mxu0 0
        %3026 = vmatpush1.bf16.msra.mxu0 0
        %3027 = vmatprep.subr.bf16.mxu0 0
        %3028 = vmatpush1.bf16.msra.mxu0 0
        %3029 = vmatprep.subr.bf16.mxu0 0
        %3030 = vmatpush1.bf16.msra.mxu0 0
        %3031 = vmatprep.subr.bf16.mxu0 0
        %3032 = vmatpush1.bf16.msra.mxu0 0
        %3033 = vmatprep.mubr.bf16.mxu0 0
        %3034 = vmatmul.mubr.bf16.gmra.mrb[0].mxu0 %v2996
        %v3035 = vpop.f32.mrb[0].mxu0
        %v3036 = vadd.f32 0.0, %v3035
        %v3037 = vpop.f32.mrb[0].mxu0
        %v3038 = vpop.f32.mrb[0].mxu0
        %v3039 = vpop.f32.mrb[0].mxu0
        %3040 = vdwg.mxu0
        %v3042 = vsel %vm1859, %v2717, 0
        %v3045 = vsel %vm2721, %v590, 0
        %3047 = vmatprep.subr.bf16.mxu0 0
        %3048 = vmatpush1.bf16.msra.mxu0 %v3045
        %3049 = vmatprep.subr.bf16.mxu0 0
        %3050 = vmatpush1.bf16.msra.mxu0 0
        %3051 = vmatprep.subr.bf16.mxu0 0
        %3052 = vmatpush1.bf16.msra.mxu0 0
        %3053 = vmatprep.subr.bf16.mxu0 0
        %3054 = vmatpush1.bf16.msra.mxu0 0
        %3055 = vmatprep.subr.bf16.mxu0 0
        %3056 = vmatpush1.bf16.msra.mxu0 0
        %3057 = vmatprep.subr.bf16.mxu0 0
        %3058 = vmatpush1.bf16.msra.mxu0 0
        %3059 = vmatprep.subr.bf16.mxu0 0
        %3060 = vmatpush1.bf16.msra.mxu0 0
        %3061 = vmatprep.subr.bf16.mxu0 0
        %3062 = vmatpush1.bf16.msra.mxu0 0
        %3063 = vmatprep.subr.bf16.mxu0 0
        %3064 = vmatpush1.bf16.msra.mxu0 0
        %3065 = vmatprep.subr.bf16.mxu0 0
        %3066 = vmatpush1.bf16.msra.mxu0 0
        %3067 = vmatprep.subr.bf16.mxu0 0
        %3068 = vmatpush1.bf16.msra.mxu0 0
        %3069 = vmatprep.subr.bf16.mxu0 0
        %3070 = vmatpush1.bf16.msra.mxu0 0
        %3071 = vmatprep.subr.bf16.mxu0 0
        %3072 = vmatpush1.bf16.msra.mxu0 0
        %3073 = vmatprep.subr.bf16.mxu0 0
        %3074 = vmatpush1.bf16.msra.mxu0 0
        %3075 = vmatprep.subr.bf16.mxu0 0
        %3076 = vmatpush1.bf16.msra.mxu0 0
        %3077 = vmatprep.subr.bf16.mxu0 0
        %3078 = vmatpush1.bf16.msra.mxu0 0
        %3079 = vmatprep.mubr.bf16.mxu0 0
        %3080 = vmatmul.mubr.bf16.gmra.mrb[0].mxu0 %v3042
        %v3081 = vpop.f32.mrb[0].mxu0
        %v3082 = vadd.f32 0.0, %v3081
        %v3083 = vpop.f32.mrb[0].mxu0
        %v3084 = vpop.f32.mrb[0].mxu0
        %v3085 = vpop.f32.mrb[0].mxu0
        %3086 = vdwg.mxu0
        %v3087 = vadd.f32 %v2760, %v2806
        %v3088 = vadd.f32 %v3087, %v2852
        %v3089 = vadd.f32 %v3088, %v2898
        %v3090 = vadd.f32 %v3089, %v2944
        %v3091 = vadd.f32 %v3090, %v2990
        %v3092 = vadd.f32 %v3091, %v3036
        %v3093 = vadd.f32 %v3092, %v3082
        %v3094 = vlaneseq
        %v3095 = vshrl.u32 %v3094, 7
        %v3096 = vsub.s32 0, %v3095
        %v3097 = vrot.slane %v459, %v3096
        %v3098 = vadd.f32 %v3093, %v3097
        %v3099 = vld [vmem:[%s6] sm:$0xf]
        %v3100 = vld [vmem:[%s6 + $0x4] sm:$0xf]
        %v3101 = vld [vmem:[%s6 + $0x8] sm:$0xf]
        %v3102 = vld [vmem:[%s6 + $0xc] sm:$0xf]
        %s3103 = scalar_lea.vmem %s6, 16
        %v3104 = vld [vmem:[%s3103] sm:$0xf]
        %v3105 = vld [vmem:[%s3103 + $0x4] sm:$0xf]
        %v3106 = vld [vmem:[%s3103 + $0x8] sm:$0xf]
        %v3107 = vld [vmem:[%s3103 + $0xc] sm:$0xf]
        %v3112 = vunpack.c.l.b16 %v3099
        %v3113 = vunpack.c.l.b16 %v3100
        %v3114 = vunpack.c.l.b16 %v3101
        %v3115 = vunpack.c.l.b16 %v3102
        %v3116 = vpack.c.b16 %v3113, %v3112
        %v3117 = vpack.c.b16 %v3115, %v3114
        %3120 = vmatprep.subr.bf16.mxu0 0
        %3121 = vmatpush1.bf16.msra.mxu0 %v3116
        %3122 = vmatprep.subr.bf16.mxu0 0
        %3123 = vmatpush1.bf16.msra.mxu0 %v3117
        %3124 = vmatprep.subr.bf16.mxu0 0
        %3125 = vmatpush1.bf16.msra.mxu0 0
        %3126 = vmatprep.subr.bf16.mxu0 0
        %3127 = vmatpush1.bf16.msra.mxu0 0
        %3128 = vmatprep.subr.bf16.mxu0 0
        %3129 = vmatpush1.bf16.msra.mxu0 0
        %3130 = vmatprep.subr.bf16.mxu0 0
        %3131 = vmatpush1.bf16.msra.mxu0 0
        %3132 = vmatprep.subr.bf16.mxu0 0
        %3133 = vmatpush1.bf16.msra.mxu0 0
        %3134 = vmatprep.subr.bf16.mxu0 0
        %3135 = vmatpush1.bf16.msra.mxu0 0
        %3136 = vmatprep.subr.bf16.mxu0 0
        %3137 = vmatpush1.bf16.msra.mxu0 0
        %3138 = vmatprep.subr.bf16.mxu0 0
        %3139 = vmatpush1.bf16.msra.mxu0 0
        %3140 = vmatprep.subr.bf16.mxu0 0
        %3141 = vmatpush1.bf16.msra.mxu0 0
        %3142 = vmatprep.subr.bf16.mxu0 0
        %3143 = vmatpush1.bf16.msra.mxu0 0
        %3144 = vmatprep.subr.bf16.mxu0 0
        %3145 = vmatpush1.bf16.msra.mxu0 0
        %3146 = vmatprep.subr.bf16.mxu0 0
        %3147 = vmatpush1.bf16.msra.mxu0 0
        %3148 = vmatprep.subr.bf16.mxu0 0
        %3149 = vmatpush1.bf16.msra.mxu0 0
        %3150 = vmatprep.subr.bf16.mxu0 0
        %3151 = vmatpush1.bf16.msra.mxu0 0
        %3152 = vmatprep.mubr.bf16.mxu0 0
        %3153 = vmatmul.mubr.bf16.gmra.mrb[0].mxu0 %v605
        %v3154 = vpop.f32.mrb[0].mxu0
        %v3155 = vadd.f32 0.0, %v3154
        %v3156 = vpop.f32.mrb[0].mxu0
        %v3157 = vpop.f32.mrb[0].mxu0
        %v3158 = vpop.f32.mrb[0].mxu0
        %3159 = vdwg.mxu0
        %v3160 = vpack.c.bf16 %v3155, %v3155
        %v3169 = vunpack.c.l.b16 %v442
        %v3170 = vunpack.c.l.b16 %v443
        %v3171 = vunpack.c.l.b16 %v444
        %v3172 = vunpack.c.l.b16 %v445
        %v3173 = vunpack.c.l.b16 %v446
        %v3174 = vunpack.c.l.b16 %v447
        %v3175 = vunpack.c.l.b16 %v448
        %v3176 = vunpack.c.l.b16 %v449
        %v3177 = vpack.c.b16 %v3170, %v3169
        %v3178 = vpack.c.b16 %v3172, %v3171
        %v3179 = vpack.c.b16 %v3174, %v3173
        %v3180 = vpack.c.b16 %v3176, %v3175
        %v3182 = vsel %vm2236, %v3177, 0
        %v3185 = vsel %vm2236, %v3178, 0
        %v3188 = vsel %vm2236, %v3179, 0
        %v3191 = vsel %vm2236, %v3180, 0
        %v3194 = vsel %vm2344, %v3160, 0
        %3196 = vmatprep.subr.bf16.mxu0 0
        %3197 = vmatpush1.bf16.msra.mxu0 %v3194
        %3198 = vmatprep.subr.bf16.mxu0 0
        %3199 = vmatpush1.bf16.msra.mxu0 0
        %3200 = vmatprep.subr.bf16.mxu0 0
        %3201 = vmatpush1.bf16.msra.mxu0 0
        %3202 = vmatprep.subr.bf16.mxu0 0
        %3203 = vmatpush1.bf16.msra.mxu0 0
        %3204 = vmatprep.subr.bf16.mxu0 0
        %3205 = vmatpush1.bf16.msra.mxu0 0
        %3206 = vmatprep.subr.bf16.mxu0 0
        %3207 = vmatpush1.bf16.msra.mxu0 0
        %3208 = vmatprep.subr.bf16.mxu0 0
        %3209 = vmatpush1.bf16.msra.mxu0 0
        %3210 = vmatprep.subr.bf16.mxu0 0
        %3211 = vmatpush1.bf16.msra.mxu0 0
        %3212 = vmatprep.subr.bf16.mxu0 0
        %3213 = vmatpush1.bf16.msra.mxu0 0
        %3214 = vmatprep.subr.bf16.mxu0 0
        %3215 = vmatpush1.bf16.msra.mxu0 0
        %3216 = vmatprep.subr.bf16.mxu0 0
        %3217 = vmatpush1.bf16.msra.mxu0 0
        %3218 = vmatprep.subr.bf16.mxu0 0
        %3219 = vmatpush1.bf16.msra.mxu0 0
        %3220 = vmatprep.subr.bf16.mxu0 0
        %3221 = vmatpush1.bf16.msra.mxu0 0
        %3222 = vmatprep.subr.bf16.mxu0 0
        %3223 = vmatpush1.bf16.msra.mxu0 0
        %3224 = vmatprep.subr.bf16.mxu0 0
        %3225 = vmatpush1.bf16.msra.mxu0 0
        %3226 = vmatprep.subr.bf16.mxu0 0
        %3227 = vmatpush1.bf16.msra.mxu0 0
        %3228 = vmatprep.mubr.bf16.mxu0 0
        %3229 = vmatmul.mubr.bf16.gmra.mrb[0].mxu0 %v3182
        %v3230 = vpop.f32.mrb[0].mxu0
        %v3231 = vadd.f32 0.0, %v3230
        %v3232 = vpop.f32.mrb[0].mxu0
        %v3233 = vpop.f32.mrb[0].mxu0
        %v3234 = vadd.f32 0.0, %v3233
        %v3235 = vpop.f32.mrb[0].mxu0
        %3236 = vmatprep.mubr.bf16.mxu0 0
        %3237 = vmatmul.mubr.bf16.gmra.mrb[0].mxu0 %v3185
        %v3238 = vpop.f32.mrb[0].mxu0
        %v3239 = vadd.f32 0.0, %v3238
        %v3240 = vpop.f32.mrb[0].mxu0
        %v3241 = vpop.f32.mrb[0].mxu0
        %v3242 = vadd.f32 0.0, %v3241
        %v3243 = vpop.f32.mrb[0].mxu0
        %3244 = vmatprep.mubr.bf16.mxu0 0
        %3245 = vmatmul.mubr.bf16.gmra.mrb[0].mxu0 %v3188
        %v3246 = vpop.f32.mrb[0].mxu0
        %v3247 = vadd.f32 0.0, %v3246
        %v3248 = vpop.f32.mrb[0].mxu0
        %v3249 = vpop.f32.mrb[0].mxu0
        %v3250 = vadd.f32 0.0, %v3249
        %v3251 = vpop.f32.mrb[0].mxu0
        %3252 = vmatprep.mubr.bf16.mxu0 0
        %3253 = vmatmul.mubr.bf16.gmra.mrb[0].mxu0 %v3191
        %v3254 = vpop.f32.mrb[0].mxu0
        %v3255 = vadd.f32 0.0, %v3254
        %v3256 = vpop.f32.mrb[0].mxu0
        %v3257 = vpop.f32.mrb[0].mxu0
        %v3258 = vadd.f32 0.0, %v3257
        %v3259 = vpop.f32.mrb[0].mxu0
        %3260 = vdwg.mxu0
        %v3261 = vlaneseq
        %v3262 = vshrl.u32 %v3261, 7
        %v3263 = vsub.s32 1, %v3262
        %v3264 = vrot.slane %v459, %v3263
        %v3269 = vunpack.c.l.b16 %v3104
        %v3270 = vunpack.c.l.b16 %v3105
        %v3271 = vunpack.c.l.b16 %v3106
        %v3272 = vunpack.c.l.b16 %v3107
        %v3273 = vpack.c.b16 %v3270, %v3269
        %v3274 = vpack.c.b16 %v3272, %v3271
        %3277 = vmatprep.subr.bf16.mxu0 0
        %3278 = vmatpush1.bf16.msra.mxu0 %v3273
        %3279 = vmatprep.subr.bf16.mxu0 0
        %3280 = vmatpush1.bf16.msra.mxu0 %v3274
        %3281 = vmatprep.subr.bf16.mxu0 0
        %3282 = vmatpush1.bf16.msra.mxu0 0
        %3283 = vmatprep.subr.bf16.mxu0 0
        %3284 = vmatpush1.bf16.msra.mxu0 0
        %3285 = vmatprep.subr.bf16.mxu0 0
        %3286 = vmatpush1.bf16.msra.mxu0 0
        %3287 = vmatprep.subr.bf16.mxu0 0
        %3288 = vmatpush1.bf16.msra.mxu0 0
        %3289 = vmatprep.subr.bf16.mxu0 0
        %3290 = vmatpush1.bf16.msra.mxu0 0
        %3291 = vmatprep.subr.bf16.mxu0 0
        %3292 = vmatpush1.bf16.msra.mxu0 0
        %3293 = vmatprep.subr.bf16.mxu0 0
        %3294 = vmatpush1.bf16.msra.mxu0 0
        %3295 = vmatprep.subr.bf16.mxu0 0
        %3296 = vmatpush1.bf16.msra.mxu0 0
        %3297 = vmatprep.subr.bf16.mxu0 0
        %3298 = vmatpush1.bf16.msra.mxu0 0
        %3299 = vmatprep.subr.bf16.mxu0 0
        %3300 = vmatpush1.bf16.msra.mxu0 0
        %3301 = vmatprep.subr.bf16.mxu0 0
        %3302 = vmatpush1.bf16.msra.mxu0 0
        %3303 = vmatprep.subr.bf16.mxu0 0
        %3304 = vmatpush1.bf16.msra.mxu0 0
        %3305 = vmatprep.subr.bf16.mxu0 0
        %3306 = vmatpush1.bf16.msra.mxu0 0
        %3307 = vmatprep.subr.bf16.mxu0 0
        %3308 = vmatpush1.bf16.msra.mxu0 0
        %3309 = vmatprep.mubr.bf16.mxu0 0
        %3310 = vmatmul.mubr.bf16.gmra.mrb[0].mxu0 %v605
        %v3311 = vpop.f32.mrb[0].mxu0
        %v3312 = vadd.f32 %v3264, %v3311
        %v3313 = vpop.f32.mrb[0].mxu0
        %v3314 = vpop.f32.mrb[0].mxu0
        %v3315 = vpop.f32.mrb[0].mxu0
        %3316 = vdwg.mxu0
        %v3317 = vadd.f32 %v3231, %v3312
        %v3318 = vadd.f32 %v3234, %v3312
        %v3319 = vadd.f32 %v3239, %v3312
        %v3320 = vadd.f32 %v3242, %v3312
        %v3321 = vadd.f32 %v3247, %v3312
        %v3322 = vadd.f32 %v3250, %v3312
        %v3323 = vadd.f32 %v3255, %v3312
        %v3324 = vadd.f32 %v3258, %v3312
        %v3325 = vmul.f32 %v3317, 0.2
        %v3326 = vmul.f32 %v3318, 0.2
        %v3327 = vmul.f32 %v3319, 0.2
        %v3328 = vmul.f32 %v3320, 0.2
        %v3329 = vmul.f32 %v3321, 0.2
        %v3330 = vmul.f32 %v3322, 0.2
        %v3331 = vmul.f32 %v3323, 0.2
        %v3332 = vmul.f32 %v3324, 0.2
        %v3333 = vmax.f32 %v3317, %v3325
        %v3334 = vmax.f32 %v3318, %v3326
        %v3335 = vmax.f32 %v3319, %v3327
        %v3336 = vmax.f32 %v3320, %v3328
        %v3337 = vmax.f32 %v3321, %v3329
        %v3338 = vmax.f32 %v3322, %v3330
        %v3339 = vmax.f32 %v3323, %v3331
        %v3340 = vmax.f32 %v3324, %v3332
        %v3341 = vmax.f32 %v3333, %v3334
        %v3342 = vmax.f32 %v3341, %v3335
        %v3343 = vmax.f32 %v3342, %v3336
        %v3344 = vmax.f32 %v3343, %v3337
        %v3345 = vmax.f32 %v3344, %v3338
        %v3346 = vmax.f32 %v3345, %v3339
        %v3347 = vmax.f32 %v3346, %v3340
        %v3348 = vpack.c.bf16 %v3098, %v3098
        %s3349 = scalar_lea.vmem %s6, 32
        %v3350 = vld [vmem:[%s3349] sm:$0xf]
        %v3351 = vld [vmem:[%s3349 + $0x4] sm:$0xf]
        %v3352 = vld [vmem:[%s3349 + $0x8] sm:$0xf]
        %v3353 = vld [vmem:[%s3349 + $0xc] sm:$0xf]
        %v3354 = vpack.c.bf16 %v3347, %v3347
        %s3355 = scalar_lea.vmem %s6, 48
        %v3356 = vld [vmem:[%s3355] sm:$0xf]
        %v3357 = vld [vmem:[%s3355 + $0x4] sm:$0xf]
        %v3358 = vld [vmem:[%s3355 + $0x8] sm:$0xf]
        %v3359 = vld [vmem:[%s3355 + $0xc] sm:$0xf]
        %v3364 = vunpack.c.l.b16 %v3356
        %v3365 = vunpack.c.l.b16 %v3357
        %v3366 = vunpack.c.l.b16 %v3358
        %v3367 = vunpack.c.l.b16 %v3359
        %v3368 = vpack.c.b16 %v3365, %v3364
        %v3369 = vpack.c.b16 %v3367, %v3366
        %v3373 = vsel %vm460, %v3354, 0
        %3375 = vmatprep.subr.bf16.mxu0 0
        %3376 = vmatpush1.bf16.msra.mxu0 %v3368
        %3377 = vmatprep.subr.bf16.mxu0 0
        %3378 = vmatpush1.bf16.msra.mxu0 %v3369
        %3379 = vmatprep.subr.bf16.mxu0 0
        %3380 = vmatpush1.bf16.msra.mxu0 0
        %3381 = vmatprep.subr.bf16.mxu0 0
        %3382 = vmatpush1.bf16.msra.mxu0 0
        %3383 = vmatprep.subr.bf16.mxu0 0
        %3384 = vmatpush1.bf16.msra.mxu0 0
        %3385 = vmatprep.subr.bf16.mxu0 0
        %3386 = vmatpush1.bf16.msra.mxu0 0
        %3387 = vmatprep.subr.bf16.mxu0 0
        %3388 = vmatpush1.bf16.msra.mxu0 0
        %3389 = vmatprep.subr.bf16.mxu0 0
        %3390 = vmatpush1.bf16.msra.mxu0 0
        %3391 = vmatprep.subr.bf16.mxu0 0
        %3392 = vmatpush1.bf16.msra.mxu0 0
        %3393 = vmatprep.subr.bf16.mxu0 0
        %3394 = vmatpush1.bf16.msra.mxu0 0
        %3395 = vmatprep.subr.bf16.mxu0 0
        %3396 = vmatpush1.bf16.msra.mxu0 0
        %3397 = vmatprep.subr.bf16.mxu0 0
        %3398 = vmatpush1.bf16.msra.mxu0 0
        %3399 = vmatprep.subr.bf16.mxu0 0
        %3400 = vmatpush1.bf16.msra.mxu0 0
        %3401 = vmatprep.subr.bf16.mxu0 0
        %3402 = vmatpush1.bf16.msra.mxu0 0
        %3403 = vmatprep.subr.bf16.mxu0 0
        %3404 = vmatpush1.bf16.msra.mxu0 0
        %3405 = vmatprep.subr.bf16.mxu0 0
        %3406 = vmatpush1.bf16.msra.mxu0 0
        %3407 = vmatprep.mubr.bf16.mxu0 0
        %3408 = vmatmul.mubr.bf16.gmra.mrb[0].mxu0 %v3373
        %v3409 = vpop.f32.mrb[0].mxu0
        %v3410 = vadd.f32 0.0, %v3409
        %v3411 = vpop.f32.mrb[0].mxu0
        %v3412 = vpop.f32.mrb[0].mxu0
        %v3413 = vpop.f32.mrb[0].mxu0
        %3414 = vdwg.mxu0
        %v3419 = vunpack.c.l.b16 %v3350
        %v3420 = vunpack.c.l.b16 %v3351
        %v3421 = vunpack.c.l.b16 %v3352
        %v3422 = vunpack.c.l.b16 %v3353
        %v3423 = vpack.c.b16 %v3420, %v3419
        %v3424 = vpack.c.b16 %v3422, %v3421
        %v3428 = vsel %vm460, %v3348, 0
        %3430 = vmatprep.subr.bf16.mxu0 0
        %3431 = vmatpush1.bf16.msra.mxu0 %v3423
        %3432 = vmatprep.subr.bf16.mxu0 0
        %3433 = vmatpush1.bf16.msra.mxu0 %v3424
        %3434 = vmatprep.subr.bf16.mxu0 0
        %3435 = vmatpush1.bf16.msra.mxu0 0
        %3436 = vmatprep.subr.bf16.mxu0 0
        %3437 = vmatpush1.bf16.msra.mxu0 0
        %3438 = vmatprep.subr.bf16.mxu0 0
        %3439 = vmatpush1.bf16.msra.mxu0 0
        %3440 = vmatprep.subr.bf16.mxu0 0
        %3441 = vmatpush1.bf16.msra.mxu0 0
        %3442 = vmatprep.subr.bf16.mxu0 0
        %3443 = vmatpush1.bf16.msra.mxu0 0
        %3444 = vmatprep.subr.bf16.mxu0 0
        %3445 = vmatpush1.bf16.msra.mxu0 0
        %3446 = vmatprep.subr.bf16.mxu0 0
        %3447 = vmatpush1.bf16.msra.mxu0 0
        %3448 = vmatprep.subr.bf16.mxu0 0
        %3449 = vmatpush1.bf16.msra.mxu0 0
        %3450 = vmatprep.subr.bf16.mxu0 0
        %3451 = vmatpush1.bf16.msra.mxu0 0
        %3452 = vmatprep.subr.bf16.mxu0 0
        %3453 = vmatpush1.bf16.msra.mxu0 0
        %3454 = vmatprep.subr.bf16.mxu0 0
        %3455 = vmatpush1.bf16.msra.mxu0 0
        %3456 = vmatprep.subr.bf16.mxu0 0
        %3457 = vmatpush1.bf16.msra.mxu0 0
        %3458 = vmatprep.subr.bf16.mxu0 0
        %3459 = vmatpush1.bf16.msra.mxu0 0
        %3460 = vmatprep.subr.bf16.mxu0 0
        %3461 = vmatpush1.bf16.msra.mxu0 0
        %3462 = vmatprep.mubr.bf16.mxu0 0
        %3463 = vmatmul.mubr.bf16.gmra.mrb[0].mxu0 %v3428
        %v3464 = vpop.f32.mrb[0].mxu0
        %v3465 = vadd.f32 %v3410, %v3464
        %v3466 = vpop.f32.mrb[0].mxu0
        %v3467 = vpop.f32.mrb[0].mxu0
        %v3468 = vpop.f32.mrb[0].mxu0
        %3469 = vdwg.mxu0
        %v3470 = vlaneseq
        %v3471 = vshrl.u32 %v3470, 7
        %v3472 = vsub.s32 2, %v3471
        %v3473 = vrot.slane %v459, %v3472
        %v3474 = vadd.f32 %v3465, %v3473
        %v3475 = vadd.f32 %v440, %v3474
        %v3476 = vsel %vm460, %v3475, 0.0
        %3477 = vadd.xlane.f32.xlu0 %v3476
        %v3478 = vpop.xlane.xlu0 %3477
        %v3479 = vmul.f32 %v3478, %v464
        %v3480 = vsub.f32 %v3475, %v3479
        %v3481 = vmul.f32 %v3480, %v3480
        %v3482 = vsel %vm460, %v3481, 0.0
        %3483 = vadd.xlane.f32.xlu0 %v3482
        %v3484 = vpop.xlane.xlu0 %3483
        %v3485 = vmul.f32 %v3484, %v464
        %v3486 = vadd.f32 %v3485, 1e-05
        %v3487 = vrsqrt.pop %v3486
        %v3488 = vmul.f32 %v3480, %v3487
        %v3489 = vlaneseq
        %v3490 = vshrl.u32 %v3489, 7
        %v3491 = vsub.s32 2, %v3490
        %v3492 = vrot.slane %v458, %v3491
        %v3493 = vmul.f32 %v3488, %v3492
        %v3494 = vlaneseq
        %v3495 = vshrl.u32 %v3494, 7
        %v3496 = vsub.s32 3, %v3495
        %v3497 = vrot.slane %v458, %v3496
        %v3498 = vadd.f32 %v3493, %v3497
        %v3499 = vsel %vm460, %v441, 0.0
        %3500 = vadd.xlane.f32.xlu0 %v3499
        %v3501 = vpop.xlane.xlu0 %3500
        %v3502 = vmul.f32 %v3501, %v464
        %v3503 = vsub.f32 %v441, %v3502
        %v3504 = vmul.f32 %v3503, %v3503
        %v3505 = vsel %vm460, %v3504, 0.0
        %3506 = vadd.xlane.f32.xlu0 %v3505
        %v3507 = vpop.xlane.xlu0 %3506
        %v3508 = vmul.f32 %v3507, %v464
        %v3509 = vadd.f32 %v3508, 1e-05
        %v3510 = vrsqrt.pop %v3509
        %v3511 = vmul.f32 %v3503, %v3510
        %v3512 = vlaneseq
        %v3513 = vshrl.u32 %v3512, 7
        %v3514 = vsub.s32 4, %v3513
        %v3515 = vrot.slane %v458, %v3514
        %v3516 = vmul.f32 %v3511, %v3515
        %v3517 = vlaneseq
        %v3518 = vshrl.u32 %v3517, 7
        %v3519 = vsub.s32 5, %v3518
        %v3520 = vrot.slane %v458, %v3519
        %v3521 = vadd.f32 %v3516, %v3520
        %s3522 = scalar_lea.vmem %s4, 384
        %v3523 = vld [vmem:[%s3522] sm:$0xf]
        %v3524 = vld [vmem:[%s3522 + $0x4] sm:$0xf]
        %v3525 = vld [vmem:[%s3522 + $0x8] sm:$0xf]
        %v3526 = vld [vmem:[%s3522 + $0xc] sm:$0xf]
        %v3527 = vld [vmem:[%s3522 + $0x10] sm:$0xf]
        %v3528 = vld [vmem:[%s3522 + $0x14] sm:$0xf]
        %v3529 = vld [vmem:[%s3522 + $0x18] sm:$0xf]
        %v3530 = vld [vmem:[%s3522 + $0x1c] sm:$0xf]
        %v3531 = vld [vmem:[%s3522 + $0x20] sm:$0xf]
        %v3532 = vld [vmem:[%s3522 + $0x24] sm:$0xf]
        %v3533 = vld [vmem:[%s3522 + $0x28] sm:$0xf]
        %v3534 = vld [vmem:[%s3522 + $0x2c] sm:$0xf]
        %v3535 = vld [vmem:[%s3522 + $0x30] sm:$0xf]
        %v3536 = vld [vmem:[%s3522 + $0x34] sm:$0xf]
        %v3537 = vld [vmem:[%s3522 + $0x38] sm:$0xf]
        %v3538 = vld [vmem:[%s3522 + $0x3c] sm:$0xf]
        %v3539 = vld [vmem:[%s3522 + $0x40] sm:$0xf]
        %v3540 = vld [vmem:[%s3522 + $0x44] sm:$0xf]
        %v3541 = vld [vmem:[%s3522 + $0x48] sm:$0xf]
        %v3542 = vld [vmem:[%s3522 + $0x4c] sm:$0xf]
        %v3543 = vld [vmem:[%s3522 + $0x50] sm:$0xf]
        %v3544 = vld [vmem:[%s3522 + $0x54] sm:$0xf]
        %v3545 = vld [vmem:[%s3522 + $0x58] sm:$0xf]
        %v3546 = vld [vmem:[%s3522 + $0x5c] sm:$0xf]
        %v3547 = vld [vmem:[%s3522 + $0x60] sm:$0xf]
        %v3548 = vld [vmem:[%s3522 + $0x64] sm:$0xf]
        %v3549 = vld [vmem:[%s3522 + $0x68] sm:$0xf]
        %v3550 = vld [vmem:[%s3522 + $0x6c] sm:$0xf]
        %v3551 = vld [vmem:[%s3522 + $0x70] sm:$0xf]
        %v3552 = vld [vmem:[%s3522 + $0x74] sm:$0xf]
        %v3553 = vld [vmem:[%s3522 + $0x78] sm:$0xf]
        %v3554 = vld [vmem:[%s3522 + $0x7c] sm:$0xf]
        %s3555 = scalar_lea.vmem %s4, 512
        %v3556 = vld [vmem:[%s3555] sm:$0xf]
        %v3557 = vld [vmem:[%s3555 + $0x4] sm:$0xf]
        %v3558 = vld [vmem:[%s3555 + $0x8] sm:$0xf]
        %v3559 = vld [vmem:[%s3555 + $0xc] sm:$0xf]
        %v3560 = vld [vmem:[%s3555 + $0x10] sm:$0xf]
        %v3561 = vld [vmem:[%s3555 + $0x14] sm:$0xf]
        %v3562 = vld [vmem:[%s3555 + $0x18] sm:$0xf]
        %v3563 = vld [vmem:[%s3555 + $0x1c] sm:$0xf]
        %v3564 = vld [vmem:[%s3555 + $0x20] sm:$0xf]
        %v3565 = vld [vmem:[%s3555 + $0x24] sm:$0xf]
        %v3566 = vld [vmem:[%s3555 + $0x28] sm:$0xf]
        %v3567 = vld [vmem:[%s3555 + $0x2c] sm:$0xf]
        %v3568 = vld [vmem:[%s3555 + $0x30] sm:$0xf]
        %v3569 = vld [vmem:[%s3555 + $0x34] sm:$0xf]
        %v3570 = vld [vmem:[%s3555 + $0x38] sm:$0xf]
        %v3571 = vld [vmem:[%s3555 + $0x3c] sm:$0xf]
        %v3572 = vld [vmem:[%s3555 + $0x40] sm:$0xf]
        %v3573 = vld [vmem:[%s3555 + $0x44] sm:$0xf]
        %v3574 = vld [vmem:[%s3555 + $0x48] sm:$0xf]
        %v3575 = vld [vmem:[%s3555 + $0x4c] sm:$0xf]
        %v3576 = vld [vmem:[%s3555 + $0x50] sm:$0xf]
        %v3577 = vld [vmem:[%s3555 + $0x54] sm:$0xf]
        %v3578 = vld [vmem:[%s3555 + $0x58] sm:$0xf]
        %v3579 = vld [vmem:[%s3555 + $0x5c] sm:$0xf]
        %v3580 = vld [vmem:[%s3555 + $0x60] sm:$0xf]
        %v3581 = vld [vmem:[%s3555 + $0x64] sm:$0xf]
        %v3582 = vld [vmem:[%s3555 + $0x68] sm:$0xf]
        %v3583 = vld [vmem:[%s3555 + $0x6c] sm:$0xf]
        %v3584 = vld [vmem:[%s3555 + $0x70] sm:$0xf]
        %v3585 = vld [vmem:[%s3555 + $0x74] sm:$0xf]
        %v3586 = vld [vmem:[%s3555 + $0x78] sm:$0xf]
        %v3587 = vld [vmem:[%s3555 + $0x7c] sm:$0xf]
        %s3588 = scalar_lea.vmem %s4, 640
        %v3589 = vld [vmem:[%s3588] sm:$0xf]
        %v3590 = vld [vmem:[%s3588 + $0x4] sm:$0xf]
        %v3591 = vld [vmem:[%s3588 + $0x8] sm:$0xf]
        %v3592 = vld [vmem:[%s3588 + $0xc] sm:$0xf]
        %v3593 = vld [vmem:[%s3588 + $0x10] sm:$0xf]
        %v3594 = vld [vmem:[%s3588 + $0x14] sm:$0xf]
        %v3595 = vld [vmem:[%s3588 + $0x18] sm:$0xf]
        %v3596 = vld [vmem:[%s3588 + $0x1c] sm:$0xf]
        %v3597 = vld [vmem:[%s3588 + $0x20] sm:$0xf]
        %v3598 = vld [vmem:[%s3588 + $0x24] sm:$0xf]
        %v3599 = vld [vmem:[%s3588 + $0x28] sm:$0xf]
        %v3600 = vld [vmem:[%s3588 + $0x2c] sm:$0xf]
        %v3601 = vld [vmem:[%s3588 + $0x30] sm:$0xf]
        %v3602 = vld [vmem:[%s3588 + $0x34] sm:$0xf]
        %v3603 = vld [vmem:[%s3588 + $0x38] sm:$0xf]
        %v3604 = vld [vmem:[%s3588 + $0x3c] sm:$0xf]
        %v3605 = vld [vmem:[%s3588 + $0x40] sm:$0xf]
        %v3606 = vld [vmem:[%s3588 + $0x44] sm:$0xf]
        %v3607 = vld [vmem:[%s3588 + $0x48] sm:$0xf]
        %v3608 = vld [vmem:[%s3588 + $0x4c] sm:$0xf]
        %v3609 = vld [vmem:[%s3588 + $0x50] sm:$0xf]
        %v3610 = vld [vmem:[%s3588 + $0x54] sm:$0xf]
        %v3611 = vld [vmem:[%s3588 + $0x58] sm:$0xf]
        %v3612 = vld [vmem:[%s3588 + $0x5c] sm:$0xf]
        %v3613 = vld [vmem:[%s3588 + $0x60] sm:$0xf]
        %v3614 = vld [vmem:[%s3588 + $0x64] sm:$0xf]
        %v3615 = vld [vmem:[%s3588 + $0x68] sm:$0xf]
        %v3616 = vld [vmem:[%s3588 + $0x6c] sm:$0xf]
        %v3617 = vld [vmem:[%s3588 + $0x70] sm:$0xf]
        %v3618 = vld [vmem:[%s3588 + $0x74] sm:$0xf]
        %v3619 = vld [vmem:[%s3588 + $0x78] sm:$0xf]
        %v3620 = vld [vmem:[%s3588 + $0x7c] sm:$0xf]
        %s3621 = scalar_lea.vmem %s5, 16
        %v3622 = vld [vmem:[%s3621] sm:$0x3]
        %v3623 = vld [vmem:[%s3621 + $0x2] sm:$0x3]
        %v3624 = vld [vmem:[%s3621 + $0x4] sm:$0x3]
        %v3625 = vld [vmem:[%s3621 + $0x6] sm:$0x3]
        %v3626 = vld [vmem:[%s3621 + $0x8] sm:$0x3]
        %v3627 = vld [vmem:[%s3621 + $0xa] sm:$0x3]
        %v3628 = vld [vmem:[%s3621 + $0xc] sm:$0x3]
        %v3629 = vld [vmem:[%s3621 + $0xe] sm:$0x3]
        %v3630 = vpack.c.bf16 %v3498, %v3498
        %v3631 = vpack.c.bf16 %v3521, %v3521
        %v3636 = vunpack.c.l.b16 %v3523
        %v3637 = vunpack.c.l.b16 %v3524
        %v3638 = vunpack.c.l.b16 %v3525
        %v3639 = vunpack.c.l.b16 %v3526
        %v3640 = vpack.c.b16 %v3637, %v3636
        %v3641 = vpack.c.b16 %v3639, %v3638
        %v3645 = vsel %vm460, %v3630, 0
        %3647 = vmatprep.subr.bf16.mxu0 0
        %3648 = vmatpush1.bf16.msra.mxu0 %v3640
        %3649 = vmatprep.subr.bf16.mxu0 0
        %3650 = vmatpush1.bf16.msra.mxu0 %v3641
        %3651 = vmatprep.subr.bf16.mxu0 0
        %3652 = vmatpush1.bf16.msra.mxu0 0
        %3653 = vmatprep.subr.bf16.mxu0 0
        %3654 = vmatpush1.bf16.msra.mxu0 0
        %3655 = vmatprep.subr.bf16.mxu0 0
        %3656 = vmatpush1.bf16.msra.mxu0 0
        %3657 = vmatprep.subr.bf16.mxu0 0
        %3658 = vmatpush1.bf16.msra.mxu0 0
        %3659 = vmatprep.subr.bf16.mxu0 0
        %3660 = vmatpush1.bf16.msra.mxu0 0
        %3661 = vmatprep.subr.bf16.mxu0 0
        %3662 = vmatpush1.bf16.msra.mxu0 0
        %3663 = vmatprep.subr.bf16.mxu0 0
        %3664 = vmatpush1.bf16.msra.mxu0 0
        %3665 = vmatprep.subr.bf16.mxu0 0
        %3666 = vmatpush1.bf16.msra.mxu0 0
        %3667 = vmatprep.subr.bf16.mxu0 0
        %3668 = vmatpush1.bf16.msra.mxu0 0
        %3669 = vmatprep.subr.bf16.mxu0 0
        %3670 = vmatpush1.bf16.msra.mxu0 0
        %3671 = vmatprep.subr.bf16.mxu0 0
        %3672 = vmatpush1.bf16.msra.mxu0 0
        %3673 = vmatprep.subr.bf16.mxu0 0
        %3674 = vmatpush1.bf16.msra.mxu0 0
        %3675 = vmatprep.subr.bf16.mxu0 0
        %3676 = vmatpush1.bf16.msra.mxu0 0
        %3677 = vmatprep.subr.bf16.mxu0 0
        %3678 = vmatpush1.bf16.msra.mxu0 0
        %3679 = vmatprep.mubr.bf16.mxu0 0
        %3680 = vmatmul.mubr.bf16.gmra.mrb[0].mxu0 %v3645
        %v3681 = vpop.f32.mrb[0].mxu0
        %v3682 = vadd.f32 0.0, %v3681
        %v3683 = vpop.f32.mrb[0].mxu0
        %v3684 = vpop.f32.mrb[0].mxu0
        %v3685 = vpop.f32.mrb[0].mxu0
        %3686 = vdwg.mxu0
        %v3691 = vunpack.c.l.b16 %v3527
        %v3692 = vunpack.c.l.b16 %v3528
        %v3693 = vunpack.c.l.b16 %v3529
        %v3694 = vunpack.c.l.b16 %v3530
        %v3695 = vpack.c.b16 %v3692, %v3691
        %v3696 = vpack.c.b16 %v3694, %v3693
        %3699 = vmatprep.subr.bf16.mxu0 0
        %3700 = vmatpush1.bf16.msra.mxu0 %v3695
        %3701 = vmatprep.subr.bf16.mxu0 0
        %3702 = vmatpush1.bf16.msra.mxu0 %v3696
        %3703 = vmatprep.subr.bf16.mxu0 0
        %3704 = vmatpush1.bf16.msra.mxu0 0
        %3705 = vmatprep.subr.bf16.mxu0 0
        %3706 = vmatpush1.bf16.msra.mxu0 0
        %3707 = vmatprep.subr.bf16.mxu0 0
        %3708 = vmatpush1.bf16.msra.mxu0 0
        %3709 = vmatprep.subr.bf16.mxu0 0
        %3710 = vmatpush1.bf16.msra.mxu0 0
        %3711 = vmatprep.subr.bf16.mxu0 0
        %3712 = vmatpush1.bf16.msra.mxu0 0
        %3713 = vmatprep.subr.bf16.mxu0 0
        %3714 = vmatpush1.bf16.msra.mxu0 0
        %3715 = vmatprep.subr.bf16.mxu0 0
        %3716 = vmatpush1.bf16.msra.mxu0 0
        %3717 = vmatprep.subr.bf16.mxu0 0
        %3718 = vmatpush1.bf16.msra.mxu0 0
        %3719 = vmatprep.subr.bf16.mxu0 0
        %3720 = vmatpush1.bf16.msra.mxu0 0
        %3721 = vmatprep.subr.bf16.mxu0 0
        %3722 = vmatpush1.bf16.msra.mxu0 0
        %3723 = vmatprep.subr.bf16.mxu0 0
        %3724 = vmatpush1.bf16.msra.mxu0 0
        %3725 = vmatprep.subr.bf16.mxu0 0
        %3726 = vmatpush1.bf16.msra.mxu0 0
        %3727 = vmatprep.subr.bf16.mxu0 0
        %3728 = vmatpush1.bf16.msra.mxu0 0
        %3729 = vmatprep.subr.bf16.mxu0 0
        %3730 = vmatpush1.bf16.msra.mxu0 0
        %3731 = vmatprep.mubr.bf16.mxu0 0
        %3732 = vmatmul.mubr.bf16.gmra.mrb[0].mxu0 %v3645
        %v3733 = vpop.f32.mrb[0].mxu0
        %v3734 = vadd.f32 0.0, %v3733
        %v3735 = vpop.f32.mrb[0].mxu0
        %v3736 = vpop.f32.mrb[0].mxu0
        %v3737 = vpop.f32.mrb[0].mxu0
        %3738 = vdwg.mxu0
        %v3743 = vunpack.c.l.b16 %v3531
        %v3744 = vunpack.c.l.b16 %v3532
        %v3745 = vunpack.c.l.b16 %v3533
        %v3746 = vunpack.c.l.b16 %v3534
        %v3747 = vpack.c.b16 %v3744, %v3743
        %v3748 = vpack.c.b16 %v3746, %v3745
        %3751 = vmatprep.subr.bf16.mxu0 0
        %3752 = vmatpush1.bf16.msra.mxu0 %v3747
        %3753 = vmatprep.subr.bf16.mxu0 0
        %3754 = vmatpush1.bf16.msra.mxu0 %v3748
        %3755 = vmatprep.subr.bf16.mxu0 0
        %3756 = vmatpush1.bf16.msra.mxu0 0
        %3757 = vmatprep.subr.bf16.mxu0 0
        %3758 = vmatpush1.bf16.msra.mxu0 0
        %3759 = vmatprep.subr.bf16.mxu0 0
        %3760 = vmatpush1.bf16.msra.mxu0 0
        %3761 = vmatprep.subr.bf16.mxu0 0
        %3762 = vmatpush1.bf16.msra.mxu0 0
        %3763 = vmatprep.subr.bf16.mxu0 0
        %3764 = vmatpush1.bf16.msra.mxu0 0
        %3765 = vmatprep.subr.bf16.mxu0 0
        %3766 = vmatpush1.bf16.msra.mxu0 0
        %3767 = vmatprep.subr.bf16.mxu0 0
        %3768 = vmatpush1.bf16.msra.mxu0 0
        %3769 = vmatprep.subr.bf16.mxu0 0
        %3770 = vmatpush1.bf16.msra.mxu0 0
        %3771 = vmatprep.subr.bf16.mxu0 0
        %3772 = vmatpush1.bf16.msra.mxu0 0
        %3773 = vmatprep.subr.bf16.mxu0 0
        %3774 = vmatpush1.bf16.msra.mxu0 0
        %3775 = vmatprep.subr.bf16.mxu0 0
        %3776 = vmatpush1.bf16.msra.mxu0 0
        %3777 = vmatprep.subr.bf16.mxu0 0
        %3778 = vmatpush1.bf16.msra.mxu0 0
        %3779 = vmatprep.subr.bf16.mxu0 0
        %3780 = vmatpush1.bf16.msra.mxu0 0
        %3781 = vmatprep.subr.bf16.mxu0 0
        %3782 = vmatpush1.bf16.msra.mxu0 0
        %3783 = vmatprep.mubr.bf16.mxu0 0
        %3784 = vmatmul.mubr.bf16.gmra.mrb[0].mxu0 %v3645
        %v3785 = vpop.f32.mrb[0].mxu0
        %v3786 = vadd.f32 0.0, %v3785
        %v3787 = vpop.f32.mrb[0].mxu0
        %v3788 = vpop.f32.mrb[0].mxu0
        %v3789 = vpop.f32.mrb[0].mxu0
        %3790 = vdwg.mxu0
        %v3795 = vunpack.c.l.b16 %v3535
        %v3796 = vunpack.c.l.b16 %v3536
        %v3797 = vunpack.c.l.b16 %v3537
        %v3798 = vunpack.c.l.b16 %v3538
        %v3799 = vpack.c.b16 %v3796, %v3795
        %v3800 = vpack.c.b16 %v3798, %v3797
        %3803 = vmatprep.subr.bf16.mxu0 0
        %3804 = vmatpush1.bf16.msra.mxu0 %v3799
        %3805 = vmatprep.subr.bf16.mxu0 0
        %3806 = vmatpush1.bf16.msra.mxu0 %v3800
        %3807 = vmatprep.subr.bf16.mxu0 0
        %3808 = vmatpush1.bf16.msra.mxu0 0
        %3809 = vmatprep.subr.bf16.mxu0 0
        %3810 = vmatpush1.bf16.msra.mxu0 0
        %3811 = vmatprep.subr.bf16.mxu0 0
        %3812 = vmatpush1.bf16.msra.mxu0 0
        %3813 = vmatprep.subr.bf16.mxu0 0
        %3814 = vmatpush1.bf16.msra.mxu0 0
        %3815 = vmatprep.subr.bf16.mxu0 0
        %3816 = vmatpush1.bf16.msra.mxu0 0
        %3817 = vmatprep.subr.bf16.mxu0 0
        %3818 = vmatpush1.bf16.msra.mxu0 0
        %3819 = vmatprep.subr.bf16.mxu0 0
        %3820 = vmatpush1.bf16.msra.mxu0 0
        %3821 = vmatprep.subr.bf16.mxu0 0
        %3822 = vmatpush1.bf16.msra.mxu0 0
        %3823 = vmatprep.subr.bf16.mxu0 0
        %3824 = vmatpush1.bf16.msra.mxu0 0
        %3825 = vmatprep.subr.bf16.mxu0 0
        %3826 = vmatpush1.bf16.msra.mxu0 0
        %3827 = vmatprep.subr.bf16.mxu0 0
        %3828 = vmatpush1.bf16.msra.mxu0 0
        %3829 = vmatprep.subr.bf16.mxu0 0
        %3830 = vmatpush1.bf16.msra.mxu0 0
        %3831 = vmatprep.subr.bf16.mxu0 0
        %3832 = vmatpush1.bf16.msra.mxu0 0
        %3833 = vmatprep.subr.bf16.mxu0 0
        %3834 = vmatpush1.bf16.msra.mxu0 0
        %3835 = vmatprep.mubr.bf16.mxu0 0
        %3836 = vmatmul.mubr.bf16.gmra.mrb[0].mxu0 %v3645
        %v3837 = vpop.f32.mrb[0].mxu0
        %v3838 = vadd.f32 0.0, %v3837
        %v3839 = vpop.f32.mrb[0].mxu0
        %v3840 = vpop.f32.mrb[0].mxu0
        %v3841 = vpop.f32.mrb[0].mxu0
        %3842 = vdwg.mxu0
        %v3847 = vunpack.c.l.b16 %v3539
        %v3848 = vunpack.c.l.b16 %v3540
        %v3849 = vunpack.c.l.b16 %v3541
        %v3850 = vunpack.c.l.b16 %v3542
        %v3851 = vpack.c.b16 %v3848, %v3847
        %v3852 = vpack.c.b16 %v3850, %v3849
        %3855 = vmatprep.subr.bf16.mxu0 0
        %3856 = vmatpush1.bf16.msra.mxu0 %v3851
        %3857 = vmatprep.subr.bf16.mxu0 0
        %3858 = vmatpush1.bf16.msra.mxu0 %v3852
        %3859 = vmatprep.subr.bf16.mxu0 0
        %3860 = vmatpush1.bf16.msra.mxu0 0
        %3861 = vmatprep.subr.bf16.mxu0 0
        %3862 = vmatpush1.bf16.msra.mxu0 0
        %3863 = vmatprep.subr.bf16.mxu0 0
        %3864 = vmatpush1.bf16.msra.mxu0 0
        %3865 = vmatprep.subr.bf16.mxu0 0
        %3866 = vmatpush1.bf16.msra.mxu0 0
        %3867 = vmatprep.subr.bf16.mxu0 0
        %3868 = vmatpush1.bf16.msra.mxu0 0
        %3869 = vmatprep.subr.bf16.mxu0 0
        %3870 = vmatpush1.bf16.msra.mxu0 0
        %3871 = vmatprep.subr.bf16.mxu0 0
        %3872 = vmatpush1.bf16.msra.mxu0 0
        %3873 = vmatprep.subr.bf16.mxu0 0
        %3874 = vmatpush1.bf16.msra.mxu0 0
        %3875 = vmatprep.subr.bf16.mxu0 0
        %3876 = vmatpush1.bf16.msra.mxu0 0
        %3877 = vmatprep.subr.bf16.mxu0 0
        %3878 = vmatpush1.bf16.msra.mxu0 0
        %3879 = vmatprep.subr.bf16.mxu0 0
        %3880 = vmatpush1.bf16.msra.mxu0 0
        %3881 = vmatprep.subr.bf16.mxu0 0
        %3882 = vmatpush1.bf16.msra.mxu0 0
        %3883 = vmatprep.subr.bf16.mxu0 0
        %3884 = vmatpush1.bf16.msra.mxu0 0
        %3885 = vmatprep.subr.bf16.mxu0 0
        %3886 = vmatpush1.bf16.msra.mxu0 0
        %3887 = vmatprep.mubr.bf16.mxu0 0
        %3888 = vmatmul.mubr.bf16.gmra.mrb[0].mxu0 %v3645
        %v3889 = vpop.f32.mrb[0].mxu0
        %v3890 = vadd.f32 0.0, %v3889
        %v3891 = vpop.f32.mrb[0].mxu0
        %v3892 = vpop.f32.mrb[0].mxu0
        %v3893 = vpop.f32.mrb[0].mxu0
        %3894 = vdwg.mxu0
        %v3899 = vunpack.c.l.b16 %v3543
        %v3900 = vunpack.c.l.b16 %v3544
        %v3901 = vunpack.c.l.b16 %v3545
        %v3902 = vunpack.c.l.b16 %v3546
        %v3903 = vpack.c.b16 %v3900, %v3899
        %v3904 = vpack.c.b16 %v3902, %v3901
        %3907 = vmatprep.subr.bf16.mxu0 0
        %3908 = vmatpush1.bf16.msra.mxu0 %v3903
        %3909 = vmatprep.subr.bf16.mxu0 0
        %3910 = vmatpush1.bf16.msra.mxu0 %v3904
        %3911 = vmatprep.subr.bf16.mxu0 0
        %3912 = vmatpush1.bf16.msra.mxu0 0
        %3913 = vmatprep.subr.bf16.mxu0 0
        %3914 = vmatpush1.bf16.msra.mxu0 0
        %3915 = vmatprep.subr.bf16.mxu0 0
        %3916 = vmatpush1.bf16.msra.mxu0 0
        %3917 = vmatprep.subr.bf16.mxu0 0
        %3918 = vmatpush1.bf16.msra.mxu0 0
        %3919 = vmatprep.subr.bf16.mxu0 0
        %3920 = vmatpush1.bf16.msra.mxu0 0
        %3921 = vmatprep.subr.bf16.mxu0 0
        %3922 = vmatpush1.bf16.msra.mxu0 0
        %3923 = vmatprep.subr.bf16.mxu0 0
        %3924 = vmatpush1.bf16.msra.mxu0 0
        %3925 = vmatprep.subr.bf16.mxu0 0
        %3926 = vmatpush1.bf16.msra.mxu0 0
        %3927 = vmatprep.subr.bf16.mxu0 0
        %3928 = vmatpush1.bf16.msra.mxu0 0
        %3929 = vmatprep.subr.bf16.mxu0 0
        %3930 = vmatpush1.bf16.msra.mxu0 0
        %3931 = vmatprep.subr.bf16.mxu0 0
        %3932 = vmatpush1.bf16.msra.mxu0 0
        %3933 = vmatprep.subr.bf16.mxu0 0
        %3934 = vmatpush1.bf16.msra.mxu0 0
        %3935 = vmatprep.subr.bf16.mxu0 0
        %3936 = vmatpush1.bf16.msra.mxu0 0
        %3937 = vmatprep.subr.bf16.mxu0 0
        %3938 = vmatpush1.bf16.msra.mxu0 0
        %3939 = vmatprep.mubr.bf16.mxu0 0
        %3940 = vmatmul.mubr.bf16.gmra.mrb[0].mxu0 %v3645
        %v3941 = vpop.f32.mrb[0].mxu0
        %v3942 = vadd.f32 0.0, %v3941
        %v3943 = vpop.f32.mrb[0].mxu0
        %v3944 = vpop.f32.mrb[0].mxu0
        %v3945 = vpop.f32.mrb[0].mxu0
        %3946 = vdwg.mxu0
        %v3951 = vunpack.c.l.b16 %v3547
        %v3952 = vunpack.c.l.b16 %v3548
        %v3953 = vunpack.c.l.b16 %v3549
        %v3954 = vunpack.c.l.b16 %v3550
        %v3955 = vpack.c.b16 %v3952, %v3951
        %v3956 = vpack.c.b16 %v3954, %v3953
        %3959 = vmatprep.subr.bf16.mxu0 0
        %3960 = vmatpush1.bf16.msra.mxu0 %v3955
        %3961 = vmatprep.subr.bf16.mxu0 0
        %3962 = vmatpush1.bf16.msra.mxu0 %v3956
        %3963 = vmatprep.subr.bf16.mxu0 0
        %3964 = vmatpush1.bf16.msra.mxu0 0
        %3965 = vmatprep.subr.bf16.mxu0 0
        %3966 = vmatpush1.bf16.msra.mxu0 0
        %3967 = vmatprep.subr.bf16.mxu0 0
        %3968 = vmatpush1.bf16.msra.mxu0 0
        %3969 = vmatprep.subr.bf16.mxu0 0
        %3970 = vmatpush1.bf16.msra.mxu0 0
        %3971 = vmatprep.subr.bf16.mxu0 0
        %3972 = vmatpush1.bf16.msra.mxu0 0
        %3973 = vmatprep.subr.bf16.mxu0 0
        %3974 = vmatpush1.bf16.msra.mxu0 0
        %3975 = vmatprep.subr.bf16.mxu0 0
        %3976 = vmatpush1.bf16.msra.mxu0 0
        %3977 = vmatprep.subr.bf16.mxu0 0
        %3978 = vmatpush1.bf16.msra.mxu0 0
        %3979 = vmatprep.subr.bf16.mxu0 0
        %3980 = vmatpush1.bf16.msra.mxu0 0
        %3981 = vmatprep.subr.bf16.mxu0 0
        %3982 = vmatpush1.bf16.msra.mxu0 0
        %3983 = vmatprep.subr.bf16.mxu0 0
        %3984 = vmatpush1.bf16.msra.mxu0 0
        %3985 = vmatprep.subr.bf16.mxu0 0
        %3986 = vmatpush1.bf16.msra.mxu0 0
        %3987 = vmatprep.subr.bf16.mxu0 0
        %3988 = vmatpush1.bf16.msra.mxu0 0
        %3989 = vmatprep.subr.bf16.mxu0 0
        %3990 = vmatpush1.bf16.msra.mxu0 0
        %3991 = vmatprep.mubr.bf16.mxu0 0
        %3992 = vmatmul.mubr.bf16.gmra.mrb[0].mxu0 %v3645
        %v3993 = vpop.f32.mrb[0].mxu0
        %v3994 = vadd.f32 0.0, %v3993
        %v3995 = vpop.f32.mrb[0].mxu0
        %v3996 = vpop.f32.mrb[0].mxu0
        %v3997 = vpop.f32.mrb[0].mxu0
        %3998 = vdwg.mxu0
        %v4003 = vunpack.c.l.b16 %v3551
        %v4004 = vunpack.c.l.b16 %v3552
        %v4005 = vunpack.c.l.b16 %v3553
        %v4006 = vunpack.c.l.b16 %v3554
        %v4007 = vpack.c.b16 %v4004, %v4003
        %v4008 = vpack.c.b16 %v4006, %v4005
        %4011 = vmatprep.subr.bf16.mxu0 0
        %4012 = vmatpush1.bf16.msra.mxu0 %v4007
        %4013 = vmatprep.subr.bf16.mxu0 0
        %4014 = vmatpush1.bf16.msra.mxu0 %v4008
        %4015 = vmatprep.subr.bf16.mxu0 0
        %4016 = vmatpush1.bf16.msra.mxu0 0
        %4017 = vmatprep.subr.bf16.mxu0 0
        %4018 = vmatpush1.bf16.msra.mxu0 0
        %4019 = vmatprep.subr.bf16.mxu0 0
        %4020 = vmatpush1.bf16.msra.mxu0 0
        %4021 = vmatprep.subr.bf16.mxu0 0
        %4022 = vmatpush1.bf16.msra.mxu0 0
        %4023 = vmatprep.subr.bf16.mxu0 0
        %4024 = vmatpush1.bf16.msra.mxu0 0
        %4025 = vmatprep.subr.bf16.mxu0 0
        %4026 = vmatpush1.bf16.msra.mxu0 0
        %4027 = vmatprep.subr.bf16.mxu0 0
        %4028 = vmatpush1.bf16.msra.mxu0 0
        %4029 = vmatprep.subr.bf16.mxu0 0
        %4030 = vmatpush1.bf16.msra.mxu0 0
        %4031 = vmatprep.subr.bf16.mxu0 0
        %4032 = vmatpush1.bf16.msra.mxu0 0
        %4033 = vmatprep.subr.bf16.mxu0 0
        %4034 = vmatpush1.bf16.msra.mxu0 0
        %4035 = vmatprep.subr.bf16.mxu0 0
        %4036 = vmatpush1.bf16.msra.mxu0 0
        %4037 = vmatprep.subr.bf16.mxu0 0
        %4038 = vmatpush1.bf16.msra.mxu0 0
        %4039 = vmatprep.subr.bf16.mxu0 0
        %4040 = vmatpush1.bf16.msra.mxu0 0
        %4041 = vmatprep.subr.bf16.mxu0 0
        %4042 = vmatpush1.bf16.msra.mxu0 0
        %4043 = vmatprep.mubr.bf16.mxu0 0
        %4044 = vmatmul.mubr.bf16.gmra.mrb[0].mxu0 %v3645
        %v4045 = vpop.f32.mrb[0].mxu0
        %v4046 = vadd.f32 0.0, %v4045
        %v4047 = vpop.f32.mrb[0].mxu0
        %v4048 = vpop.f32.mrb[0].mxu0
        %v4049 = vpop.f32.mrb[0].mxu0
        %4050 = vdwg.mxu0
        %v4055 = vunpack.c.l.b16 %v3556
        %v4056 = vunpack.c.l.b16 %v3557
        %v4057 = vunpack.c.l.b16 %v3558
        %v4058 = vunpack.c.l.b16 %v3559
        %v4059 = vpack.c.b16 %v4056, %v4055
        %v4060 = vpack.c.b16 %v4058, %v4057
        %v4064 = vsel %vm460, %v3631, 0
        %4066 = vmatprep.subr.bf16.mxu0 0
        %4067 = vmatpush1.bf16.msra.mxu0 %v4059
        %4068 = vmatprep.subr.bf16.mxu0 0
        %4069 = vmatpush1.bf16.msra.mxu0 %v4060
        %4070 = vmatprep.subr.bf16.mxu0 0
        %4071 = vmatpush1.bf16.msra.mxu0 0
        %4072 = vmatprep.subr.bf16.mxu0 0
        %4073 = vmatpush1.bf16.msra.mxu0 0
        %4074 = vmatprep.subr.bf16.mxu0 0
        %4075 = vmatpush1.bf16.msra.mxu0 0
        %4076 = vmatprep.subr.bf16.mxu0 0
        %4077 = vmatpush1.bf16.msra.mxu0 0
        %4078 = vmatprep.subr.bf16.mxu0 0
        %4079 = vmatpush1.bf16.msra.mxu0 0
        %4080 = vmatprep.subr.bf16.mxu0 0
        %4081 = vmatpush1.bf16.msra.mxu0 0
        %4082 = vmatprep.subr.bf16.mxu0 0
        %4083 = vmatpush1.bf16.msra.mxu0 0
        %4084 = vmatprep.subr.bf16.mxu0 0
        %4085 = vmatpush1.bf16.msra.mxu0 0
        %4086 = vmatprep.subr.bf16.mxu0 0
        %4087 = vmatpush1.bf16.msra.mxu0 0
        %4088 = vmatprep.subr.bf16.mxu0 0
        %4089 = vmatpush1.bf16.msra.mxu0 0
        %4090 = vmatprep.subr.bf16.mxu0 0
        %4091 = vmatpush1.bf16.msra.mxu0 0
        %4092 = vmatprep.subr.bf16.mxu0 0
        %4093 = vmatpush1.bf16.msra.mxu0 0
        %4094 = vmatprep.subr.bf16.mxu0 0
        %4095 = vmatpush1.bf16.msra.mxu0 0
        %4096 = vmatprep.subr.bf16.mxu0 0
        %4097 = vmatpush1.bf16.msra.mxu0 0
        %4098 = vmatprep.mubr.bf16.mxu0 0
        %4099 = vmatmul.mubr.bf16.gmra.mrb[0].mxu0 %v4064
        %v4100 = vpop.f32.mrb[0].mxu0
        %v4101 = vadd.f32 0.0, %v4100
        %v4102 = vpop.f32.mrb[0].mxu0
        %v4103 = vpop.f32.mrb[0].mxu0
        %v4104 = vpop.f32.mrb[0].mxu0
        %4105 = vdwg.mxu0
        %v4110 = vunpack.c.l.b16 %v3560
        %v4111 = vunpack.c.l.b16 %v3561
        %v4112 = vunpack.c.l.b16 %v3562
        %v4113 = vunpack.c.l.b16 %v3563
        %v4114 = vpack.c.b16 %v4111, %v4110
        %v4115 = vpack.c.b16 %v4113, %v4112
        %4118 = vmatprep.subr.bf16.mxu0 0
        %4119 = vmatpush1.bf16.msra.mxu0 %v4114
        %4120 = vmatprep.subr.bf16.mxu0 0
        %4121 = vmatpush1.bf16.msra.mxu0 %v4115
        %4122 = vmatprep.subr.bf16.mxu0 0
        %4123 = vmatpush1.bf16.msra.mxu0 0
        %4124 = vmatprep.subr.bf16.mxu0 0
        %4125 = vmatpush1.bf16.msra.mxu0 0
        %4126 = vmatprep.subr.bf16.mxu0 0
        %4127 = vmatpush1.bf16.msra.mxu0 0
        %4128 = vmatprep.subr.bf16.mxu0 0
        %4129 = vmatpush1.bf16.msra.mxu0 0
        %4130 = vmatprep.subr.bf16.mxu0 0
        %4131 = vmatpush1.bf16.msra.mxu0 0
        %4132 = vmatprep.subr.bf16.mxu0 0
        %4133 = vmatpush1.bf16.msra.mxu0 0
        %4134 = vmatprep.subr.bf16.mxu0 0
        %4135 = vmatpush1.bf16.msra.mxu0 0
        %4136 = vmatprep.subr.bf16.mxu0 0
        %4137 = vmatpush1.bf16.msra.mxu0 0
        %4138 = vmatprep.subr.bf16.mxu0 0
        %4139 = vmatpush1.bf16.msra.mxu0 0
        %4140 = vmatprep.subr.bf16.mxu0 0
        %4141 = vmatpush1.bf16.msra.mxu0 0
        %4142 = vmatprep.subr.bf16.mxu0 0
        %4143 = vmatpush1.bf16.msra.mxu0 0
        %4144 = vmatprep.subr.bf16.mxu0 0
        %4145 = vmatpush1.bf16.msra.mxu0 0
        %4146 = vmatprep.subr.bf16.mxu0 0
        %4147 = vmatpush1.bf16.msra.mxu0 0
        %4148 = vmatprep.subr.bf16.mxu0 0
        %4149 = vmatpush1.bf16.msra.mxu0 0
        %4150 = vmatprep.mubr.bf16.mxu0 0
        %4151 = vmatmul.mubr.bf16.gmra.mrb[0].mxu0 %v4064
        %v4152 = vpop.f32.mrb[0].mxu0
        %v4153 = vadd.f32 0.0, %v4152
        %v4154 = vpop.f32.mrb[0].mxu0
        %v4155 = vpop.f32.mrb[0].mxu0
        %v4156 = vpop.f32.mrb[0].mxu0
        %4157 = vdwg.mxu0
        %v4162 = vunpack.c.l.b16 %v3564
        %v4163 = vunpack.c.l.b16 %v3565
        %v4164 = vunpack.c.l.b16 %v3566
        %v4165 = vunpack.c.l.b16 %v3567
        %v4166 = vpack.c.b16 %v4163, %v4162
        %v4167 = vpack.c.b16 %v4165, %v4164
        %4170 = vmatprep.subr.bf16.mxu0 0
        %4171 = vmatpush1.bf16.msra.mxu0 %v4166
        %4172 = vmatprep.subr.bf16.mxu0 0
        %4173 = vmatpush1.bf16.msra.mxu0 %v4167
        %4174 = vmatprep.subr.bf16.mxu0 0
        %4175 = vmatpush1.bf16.msra.mxu0 0
        %4176 = vmatprep.subr.bf16.mxu0 0
        %4177 = vmatpush1.bf16.msra.mxu0 0
        %4178 = vmatprep.subr.bf16.mxu0 0
        %4179 = vmatpush1.bf16.msra.mxu0 0
        %4180 = vmatprep.subr.bf16.mxu0 0
        %4181 = vmatpush1.bf16.msra.mxu0 0
        %4182 = vmatprep.subr.bf16.mxu0 0
        %4183 = vmatpush1.bf16.msra.mxu0 0
        %4184 = vmatprep.subr.bf16.mxu0 0
        %4185 = vmatpush1.bf16.msra.mxu0 0
        %4186 = vmatprep.subr.bf16.mxu0 0
        %4187 = vmatpush1.bf16.msra.mxu0 0
        %4188 = vmatprep.subr.bf16.mxu0 0
        %4189 = vmatpush1.bf16.msra.mxu0 0
        %4190 = vmatprep.subr.bf16.mxu0 0
        %4191 = vmatpush1.bf16.msra.mxu0 0
        %4192 = vmatprep.subr.bf16.mxu0 0
        %4193 = vmatpush1.bf16.msra.mxu0 0
        %4194 = vmatprep.subr.bf16.mxu0 0
        %4195 = vmatpush1.bf16.msra.mxu0 0
        %4196 = vmatprep.subr.bf16.mxu0 0
        %4197 = vmatpush1.bf16.msra.mxu0 0
        %4198 = vmatprep.subr.bf16.mxu0 0
        %4199 = vmatpush1.bf16.msra.mxu0 0
        %4200 = vmatprep.subr.bf16.mxu0 0
        %4201 = vmatpush1.bf16.msra.mxu0 0
        %4202 = vmatprep.mubr.bf16.mxu0 0
        %4203 = vmatmul.mubr.bf16.gmra.mrb[0].mxu0 %v4064
        %v4204 = vpop.f32.mrb[0].mxu0
        %v4205 = vadd.f32 0.0, %v4204
        %v4206 = vpop.f32.mrb[0].mxu0
        %v4207 = vpop.f32.mrb[0].mxu0
        %v4208 = vpop.f32.mrb[0].mxu0
        %4209 = vdwg.mxu0
        %v4214 = vunpack.c.l.b16 %v3568
        %v4215 = vunpack.c.l.b16 %v3569
        %v4216 = vunpack.c.l.b16 %v3570
        %v4217 = vunpack.c.l.b16 %v3571
        %v4218 = vpack.c.b16 %v4215, %v4214
        %v4219 = vpack.c.b16 %v4217, %v4216
        %4222 = vmatprep.subr.bf16.mxu0 0
        %4223 = vmatpush1.bf16.msra.mxu0 %v4218
        %4224 = vmatprep.subr.bf16.mxu0 0
        %4225 = vmatpush1.bf16.msra.mxu0 %v4219
        %4226 = vmatprep.subr.bf16.mxu0 0
        %4227 = vmatpush1.bf16.msra.mxu0 0
        %4228 = vmatprep.subr.bf16.mxu0 0
        %4229 = vmatpush1.bf16.msra.mxu0 0
        %4230 = vmatprep.subr.bf16.mxu0 0
        %4231 = vmatpush1.bf16.msra.mxu0 0
        %4232 = vmatprep.subr.bf16.mxu0 0
        %4233 = vmatpush1.bf16.msra.mxu0 0
        %4234 = vmatprep.subr.bf16.mxu0 0
        %4235 = vmatpush1.bf16.msra.mxu0 0
        %4236 = vmatprep.subr.bf16.mxu0 0
        %4237 = vmatpush1.bf16.msra.mxu0 0
        %4238 = vmatprep.subr.bf16.mxu0 0
        %4239 = vmatpush1.bf16.msra.mxu0 0
        %4240 = vmatprep.subr.bf16.mxu0 0
        %4241 = vmatpush1.bf16.msra.mxu0 0
        %4242 = vmatprep.subr.bf16.mxu0 0
        %4243 = vmatpush1.bf16.msra.mxu0 0
        %4244 = vmatprep.subr.bf16.mxu0 0
        %4245 = vmatpush1.bf16.msra.mxu0 0
        %4246 = vmatprep.subr.bf16.mxu0 0
        %4247 = vmatpush1.bf16.msra.mxu0 0
        %4248 = vmatprep.subr.bf16.mxu0 0
        %4249 = vmatpush1.bf16.msra.mxu0 0
        %4250 = vmatprep.subr.bf16.mxu0 0
        %4251 = vmatpush1.bf16.msra.mxu0 0
        %4252 = vmatprep.subr.bf16.mxu0 0
        %4253 = vmatpush1.bf16.msra.mxu0 0
        %4254 = vmatprep.mubr.bf16.mxu0 0
        %4255 = vmatmul.mubr.bf16.gmra.mrb[0].mxu0 %v4064
        %v4256 = vpop.f32.mrb[0].mxu0
        %v4257 = vadd.f32 0.0, %v4256
        %v4258 = vpop.f32.mrb[0].mxu0
        %v4259 = vpop.f32.mrb[0].mxu0
        %v4260 = vpop.f32.mrb[0].mxu0
        %4261 = vdwg.mxu0
        %v4266 = vunpack.c.l.b16 %v3572
        %v4267 = vunpack.c.l.b16 %v3573
        %v4268 = vunpack.c.l.b16 %v3574
        %v4269 = vunpack.c.l.b16 %v3575
        %v4270 = vpack.c.b16 %v4267, %v4266
        %v4271 = vpack.c.b16 %v4269, %v4268
        %4274 = vmatprep.subr.bf16.mxu0 0
        %4275 = vmatpush1.bf16.msra.mxu0 %v4270
        %4276 = vmatprep.subr.bf16.mxu0 0
        %4277 = vmatpush1.bf16.msra.mxu0 %v4271
        %4278 = vmatprep.subr.bf16.mxu0 0
        %4279 = vmatpush1.bf16.msra.mxu0 0
        %4280 = vmatprep.subr.bf16.mxu0 0
        %4281 = vmatpush1.bf16.msra.mxu0 0
        %4282 = vmatprep.subr.bf16.mxu0 0
        %4283 = vmatpush1.bf16.msra.mxu0 0
        %4284 = vmatprep.subr.bf16.mxu0 0
        %4285 = vmatpush1.bf16.msra.mxu0 0
        %4286 = vmatprep.subr.bf16.mxu0 0
        %4287 = vmatpush1.bf16.msra.mxu0 0
        %4288 = vmatprep.subr.bf16.mxu0 0
        %4289 = vmatpush1.bf16.msra.mxu0 0
        %4290 = vmatprep.subr.bf16.mxu0 0
        %4291 = vmatpush1.bf16.msra.mxu0 0
        %4292 = vmatprep.subr.bf16.mxu0 0
        %4293 = vmatpush1.bf16.msra.mxu0 0
        %4294 = vmatprep.subr.bf16.mxu0 0
        %4295 = vmatpush1.bf16.msra.mxu0 0
        %4296 = vmatprep.subr.bf16.mxu0 0
        %4297 = vmatpush1.bf16.msra.mxu0 0
        %4298 = vmatprep.subr.bf16.mxu0 0
        %4299 = vmatpush1.bf16.msra.mxu0 0
        %4300 = vmatprep.subr.bf16.mxu0 0
        %4301 = vmatpush1.bf16.msra.mxu0 0
        %4302 = vmatprep.subr.bf16.mxu0 0
        %4303 = vmatpush1.bf16.msra.mxu0 0
        %4304 = vmatprep.subr.bf16.mxu0 0
        %4305 = vmatpush1.bf16.msra.mxu0 0
        %4306 = vmatprep.mubr.bf16.mxu0 0
        %4307 = vmatmul.mubr.bf16.gmra.mrb[0].mxu0 %v4064
        %v4308 = vpop.f32.mrb[0].mxu0
        %v4309 = vadd.f32 0.0, %v4308
        %v4310 = vpop.f32.mrb[0].mxu0
        %v4311 = vpop.f32.mrb[0].mxu0
        %v4312 = vpop.f32.mrb[0].mxu0
        %4313 = vdwg.mxu0
        %v4318 = vunpack.c.l.b16 %v3576
        %v4319 = vunpack.c.l.b16 %v3577
        %v4320 = vunpack.c.l.b16 %v3578
        %v4321 = vunpack.c.l.b16 %v3579
        %v4322 = vpack.c.b16 %v4319, %v4318
        %v4323 = vpack.c.b16 %v4321, %v4320
        %4326 = vmatprep.subr.bf16.mxu0 0
        %4327 = vmatpush1.bf16.msra.mxu0 %v4322
        %4328 = vmatprep.subr.bf16.mxu0 0
        %4329 = vmatpush1.bf16.msra.mxu0 %v4323
        %4330 = vmatprep.subr.bf16.mxu0 0
        %4331 = vmatpush1.bf16.msra.mxu0 0
        %4332 = vmatprep.subr.bf16.mxu0 0
        %4333 = vmatpush1.bf16.msra.mxu0 0
        %4334 = vmatprep.subr.bf16.mxu0 0
        %4335 = vmatpush1.bf16.msra.mxu0 0
        %4336 = vmatprep.subr.bf16.mxu0 0
        %4337 = vmatpush1.bf16.msra.mxu0 0
        %4338 = vmatprep.subr.bf16.mxu0 0
        %4339 = vmatpush1.bf16.msra.mxu0 0
        %4340 = vmatprep.subr.bf16.mxu0 0
        %4341 = vmatpush1.bf16.msra.mxu0 0
        %4342 = vmatprep.subr.bf16.mxu0 0
        %4343 = vmatpush1.bf16.msra.mxu0 0
        %4344 = vmatprep.subr.bf16.mxu0 0
        %4345 = vmatpush1.bf16.msra.mxu0 0
        %4346 = vmatprep.subr.bf16.mxu0 0
        %4347 = vmatpush1.bf16.msra.mxu0 0
        %4348 = vmatprep.subr.bf16.mxu0 0
        %4349 = vmatpush1.bf16.msra.mxu0 0
        %4350 = vmatprep.subr.bf16.mxu0 0
        %4351 = vmatpush1.bf16.msra.mxu0 0
        %4352 = vmatprep.subr.bf16.mxu0 0
        %4353 = vmatpush1.bf16.msra.mxu0 0
        %4354 = vmatprep.subr.bf16.mxu0 0
        %4355 = vmatpush1.bf16.msra.mxu0 0
        %4356 = vmatprep.subr.bf16.mxu0 0
        %4357 = vmatpush1.bf16.msra.mxu0 0
        %4358 = vmatprep.mubr.bf16.mxu0 0
        %4359 = vmatmul.mubr.bf16.gmra.mrb[0].mxu0 %v4064
        %v4360 = vpop.f32.mrb[0].mxu0
        %v4361 = vadd.f32 0.0, %v4360
        %v4362 = vpop.f32.mrb[0].mxu0
        %v4363 = vpop.f32.mrb[0].mxu0
        %v4364 = vpop.f32.mrb[0].mxu0
        %4365 = vdwg.mxu0
        %v4370 = vunpack.c.l.b16 %v3580
        %v4371 = vunpack.c.l.b16 %v3581
        %v4372 = vunpack.c.l.b16 %v3582
        %v4373 = vunpack.c.l.b16 %v3583
        %v4374 = vpack.c.b16 %v4371, %v4370
        %v4375 = vpack.c.b16 %v4373, %v4372
        %4378 = vmatprep.subr.bf16.mxu0 0
        %4379 = vmatpush1.bf16.msra.mxu0 %v4374
        %4380 = vmatprep.subr.bf16.mxu0 0
        %4381 = vmatpush1.bf16.msra.mxu0 %v4375
        %4382 = vmatprep.subr.bf16.mxu0 0
        %4383 = vmatpush1.bf16.msra.mxu0 0
        %4384 = vmatprep.subr.bf16.mxu0 0
        %4385 = vmatpush1.bf16.msra.mxu0 0
        %4386 = vmatprep.subr.bf16.mxu0 0
        %4387 = vmatpush1.bf16.msra.mxu0 0
        %4388 = vmatprep.subr.bf16.mxu0 0
        %4389 = vmatpush1.bf16.msra.mxu0 0
        %4390 = vmatprep.subr.bf16.mxu0 0
        %4391 = vmatpush1.bf16.msra.mxu0 0
        %4392 = vmatprep.subr.bf16.mxu0 0
        %4393 = vmatpush1.bf16.msra.mxu0 0
        %4394 = vmatprep.subr.bf16.mxu0 0
        %4395 = vmatpush1.bf16.msra.mxu0 0
        %4396 = vmatprep.subr.bf16.mxu0 0
        %4397 = vmatpush1.bf16.msra.mxu0 0
        %4398 = vmatprep.subr.bf16.mxu0 0
        %4399 = vmatpush1.bf16.msra.mxu0 0
        %4400 = vmatprep.subr.bf16.mxu0 0
        %4401 = vmatpush1.bf16.msra.mxu0 0
        %4402 = vmatprep.subr.bf16.mxu0 0
        %4403 = vmatpush1.bf16.msra.mxu0 0
        %4404 = vmatprep.subr.bf16.mxu0 0
        %4405 = vmatpush1.bf16.msra.mxu0 0
        %4406 = vmatprep.subr.bf16.mxu0 0
        %4407 = vmatpush1.bf16.msra.mxu0 0
        %4408 = vmatprep.subr.bf16.mxu0 0
        %4409 = vmatpush1.bf16.msra.mxu0 0
        %4410 = vmatprep.mubr.bf16.mxu0 0
        %4411 = vmatmul.mubr.bf16.gmra.mrb[0].mxu0 %v4064
        %v4412 = vpop.f32.mrb[0].mxu0
        %v4413 = vadd.f32 0.0, %v4412
        %v4414 = vpop.f32.mrb[0].mxu0
        %v4415 = vpop.f32.mrb[0].mxu0
        %v4416 = vpop.f32.mrb[0].mxu0
        %4417 = vdwg.mxu0
        %v4422 = vunpack.c.l.b16 %v3584
        %v4423 = vunpack.c.l.b16 %v3585
        %v4424 = vunpack.c.l.b16 %v3586
        %v4425 = vunpack.c.l.b16 %v3587
        %v4426 = vpack.c.b16 %v4423, %v4422
        %v4427 = vpack.c.b16 %v4425, %v4424
        %4430 = vmatprep.subr.bf16.mxu0 0
        %4431 = vmatpush1.bf16.msra.mxu0 %v4426
        %4432 = vmatprep.subr.bf16.mxu0 0
        %4433 = vmatpush1.bf16.msra.mxu0 %v4427
        %4434 = vmatprep.subr.bf16.mxu0 0
        %4435 = vmatpush1.bf16.msra.mxu0 0
        %4436 = vmatprep.subr.bf16.mxu0 0
        %4437 = vmatpush1.bf16.msra.mxu0 0
        %4438 = vmatprep.subr.bf16.mxu0 0
        %4439 = vmatpush1.bf16.msra.mxu0 0
        %4440 = vmatprep.subr.bf16.mxu0 0
        %4441 = vmatpush1.bf16.msra.mxu0 0
        %4442 = vmatprep.subr.bf16.mxu0 0
        %4443 = vmatpush1.bf16.msra.mxu0 0
        %4444 = vmatprep.subr.bf16.mxu0 0
        %4445 = vmatpush1.bf16.msra.mxu0 0
        %4446 = vmatprep.subr.bf16.mxu0 0
        %4447 = vmatpush1.bf16.msra.mxu0 0
        %4448 = vmatprep.subr.bf16.mxu0 0
        %4449 = vmatpush1.bf16.msra.mxu0 0
        %4450 = vmatprep.subr.bf16.mxu0 0
        %4451 = vmatpush1.bf16.msra.mxu0 0
        %4452 = vmatprep.subr.bf16.mxu0 0
        %4453 = vmatpush1.bf16.msra.mxu0 0
        %4454 = vmatprep.subr.bf16.mxu0 0
        %4455 = vmatpush1.bf16.msra.mxu0 0
        %4456 = vmatprep.subr.bf16.mxu0 0
        %4457 = vmatpush1.bf16.msra.mxu0 0
        %4458 = vmatprep.subr.bf16.mxu0 0
        %4459 = vmatpush1.bf16.msra.mxu0 0
        %4460 = vmatprep.subr.bf16.mxu0 0
        %4461 = vmatpush1.bf16.msra.mxu0 0
        %4462 = vmatprep.mubr.bf16.mxu0 0
        %4463 = vmatmul.mubr.bf16.gmra.mrb[0].mxu0 %v4064
        %v4464 = vpop.f32.mrb[0].mxu0
        %v4465 = vadd.f32 0.0, %v4464
        %v4466 = vpop.f32.mrb[0].mxu0
        %v4467 = vpop.f32.mrb[0].mxu0
        %v4468 = vpop.f32.mrb[0].mxu0
        %4469 = vdwg.mxu0
        %v4474 = vunpack.c.l.b16 %v3589
        %v4475 = vunpack.c.l.b16 %v3590
        %v4476 = vunpack.c.l.b16 %v3591
        %v4477 = vunpack.c.l.b16 %v3592
        %v4478 = vpack.c.b16 %v4475, %v4474
        %v4479 = vpack.c.b16 %v4477, %v4476
        %4482 = vmatprep.subr.bf16.mxu0 0
        %4483 = vmatpush1.bf16.msra.mxu0 %v4478
        %4484 = vmatprep.subr.bf16.mxu0 0
        %4485 = vmatpush1.bf16.msra.mxu0 %v4479
        %4486 = vmatprep.subr.bf16.mxu0 0
        %4487 = vmatpush1.bf16.msra.mxu0 0
        %4488 = vmatprep.subr.bf16.mxu0 0
        %4489 = vmatpush1.bf16.msra.mxu0 0
        %4490 = vmatprep.subr.bf16.mxu0 0
        %4491 = vmatpush1.bf16.msra.mxu0 0
        %4492 = vmatprep.subr.bf16.mxu0 0
        %4493 = vmatpush1.bf16.msra.mxu0 0
        %4494 = vmatprep.subr.bf16.mxu0 0
        %4495 = vmatpush1.bf16.msra.mxu0 0
        %4496 = vmatprep.subr.bf16.mxu0 0
        %4497 = vmatpush1.bf16.msra.mxu0 0
        %4498 = vmatprep.subr.bf16.mxu0 0
        %4499 = vmatpush1.bf16.msra.mxu0 0
        %4500 = vmatprep.subr.bf16.mxu0 0
        %4501 = vmatpush1.bf16.msra.mxu0 0
        %4502 = vmatprep.subr.bf16.mxu0 0
        %4503 = vmatpush1.bf16.msra.mxu0 0
        %4504 = vmatprep.subr.bf16.mxu0 0
        %4505 = vmatpush1.bf16.msra.mxu0 0
        %4506 = vmatprep.subr.bf16.mxu0 0
        %4507 = vmatpush1.bf16.msra.mxu0 0
        %4508 = vmatprep.subr.bf16.mxu0 0
        %4509 = vmatpush1.bf16.msra.mxu0 0
        %4510 = vmatprep.subr.bf16.mxu0 0
        %4511 = vmatpush1.bf16.msra.mxu0 0
        %4512 = vmatprep.subr.bf16.mxu0 0
        %4513 = vmatpush1.bf16.msra.mxu0 0
        %4514 = vmatprep.mubr.bf16.mxu0 0
        %4515 = vmatmul.mubr.bf16.gmra.mrb[0].mxu0 %v4064
        %v4516 = vpop.f32.mrb[0].mxu0
        %v4517 = vadd.f32 0.0, %v4516
        %v4518 = vpop.f32.mrb[0].mxu0
        %v4519 = vpop.f32.mrb[0].mxu0
        %v4520 = vpop.f32.mrb[0].mxu0
        %4521 = vdwg.mxu0
        %v4526 = vunpack.c.l.b16 %v3593
        %v4527 = vunpack.c.l.b16 %v3594
        %v4528 = vunpack.c.l.b16 %v3595
        %v4529 = vunpack.c.l.b16 %v3596
        %v4530 = vpack.c.b16 %v4527, %v4526
        %v4531 = vpack.c.b16 %v4529, %v4528
        %4534 = vmatprep.subr.bf16.mxu0 0
        %4535 = vmatpush1.bf16.msra.mxu0 %v4530
        %4536 = vmatprep.subr.bf16.mxu0 0
        %4537 = vmatpush1.bf16.msra.mxu0 %v4531
        %4538 = vmatprep.subr.bf16.mxu0 0
        %4539 = vmatpush1.bf16.msra.mxu0 0
        %4540 = vmatprep.subr.bf16.mxu0 0
        %4541 = vmatpush1.bf16.msra.mxu0 0
        %4542 = vmatprep.subr.bf16.mxu0 0
        %4543 = vmatpush1.bf16.msra.mxu0 0
        %4544 = vmatprep.subr.bf16.mxu0 0
        %4545 = vmatpush1.bf16.msra.mxu0 0
        %4546 = vmatprep.subr.bf16.mxu0 0
        %4547 = vmatpush1.bf16.msra.mxu0 0
        %4548 = vmatprep.subr.bf16.mxu0 0
        %4549 = vmatpush1.bf16.msra.mxu0 0
        %4550 = vmatprep.subr.bf16.mxu0 0
        %4551 = vmatpush1.bf16.msra.mxu0 0
        %4552 = vmatprep.subr.bf16.mxu0 0
        %4553 = vmatpush1.bf16.msra.mxu0 0
        %4554 = vmatprep.subr.bf16.mxu0 0
        %4555 = vmatpush1.bf16.msra.mxu0 0
        %4556 = vmatprep.subr.bf16.mxu0 0
        %4557 = vmatpush1.bf16.msra.mxu0 0
        %4558 = vmatprep.subr.bf16.mxu0 0
        %4559 = vmatpush1.bf16.msra.mxu0 0
        %4560 = vmatprep.subr.bf16.mxu0 0
        %4561 = vmatpush1.bf16.msra.mxu0 0
        %4562 = vmatprep.subr.bf16.mxu0 0
        %4563 = vmatpush1.bf16.msra.mxu0 0
        %4564 = vmatprep.subr.bf16.mxu0 0
        %4565 = vmatpush1.bf16.msra.mxu0 0
        %4566 = vmatprep.mubr.bf16.mxu0 0
        %4567 = vmatmul.mubr.bf16.gmra.mrb[0].mxu0 %v4064
        %v4568 = vpop.f32.mrb[0].mxu0
        %v4569 = vadd.f32 0.0, %v4568
        %v4570 = vpop.f32.mrb[0].mxu0
        %v4571 = vpop.f32.mrb[0].mxu0
        %v4572 = vpop.f32.mrb[0].mxu0
        %4573 = vdwg.mxu0
        %v4578 = vunpack.c.l.b16 %v3597
        %v4579 = vunpack.c.l.b16 %v3598
        %v4580 = vunpack.c.l.b16 %v3599
        %v4581 = vunpack.c.l.b16 %v3600
        %v4582 = vpack.c.b16 %v4579, %v4578
        %v4583 = vpack.c.b16 %v4581, %v4580
        %4586 = vmatprep.subr.bf16.mxu0 0
        %4587 = vmatpush1.bf16.msra.mxu0 %v4582
        %4588 = vmatprep.subr.bf16.mxu0 0
        %4589 = vmatpush1.bf16.msra.mxu0 %v4583
        %4590 = vmatprep.subr.bf16.mxu0 0
        %4591 = vmatpush1.bf16.msra.mxu0 0
        %4592 = vmatprep.subr.bf16.mxu0 0
        %4593 = vmatpush1.bf16.msra.mxu0 0
        %4594 = vmatprep.subr.bf16.mxu0 0
        %4595 = vmatpush1.bf16.msra.mxu0 0
        %4596 = vmatprep.subr.bf16.mxu0 0
        %4597 = vmatpush1.bf16.msra.mxu0 0
        %4598 = vmatprep.subr.bf16.mxu0 0
        %4599 = vmatpush1.bf16.msra.mxu0 0
        %4600 = vmatprep.subr.bf16.mxu0 0
        %4601 = vmatpush1.bf16.msra.mxu0 0
        %4602 = vmatprep.subr.bf16.mxu0 0
        %4603 = vmatpush1.bf16.msra.mxu0 0
        %4604 = vmatprep.subr.bf16.mxu0 0
        %4605 = vmatpush1.bf16.msra.mxu0 0
        %4606 = vmatprep.subr.bf16.mxu0 0
        %4607 = vmatpush1.bf16.msra.mxu0 0
        %4608 = vmatprep.subr.bf16.mxu0 0
        %4609 = vmatpush1.bf16.msra.mxu0 0
        %4610 = vmatprep.subr.bf16.mxu0 0
        %4611 = vmatpush1.bf16.msra.mxu0 0
        %4612 = vmatprep.subr.bf16.mxu0 0
        %4613 = vmatpush1.bf16.msra.mxu0 0
        %4614 = vmatprep.subr.bf16.mxu0 0
        %4615 = vmatpush1.bf16.msra.mxu0 0
        %4616 = vmatprep.subr.bf16.mxu0 0
        %4617 = vmatpush1.bf16.msra.mxu0 0
        %4618 = vmatprep.mubr.bf16.mxu0 0
        %4619 = vmatmul.mubr.bf16.gmra.mrb[0].mxu0 %v4064
        %v4620 = vpop.f32.mrb[0].mxu0
        %v4621 = vadd.f32 0.0, %v4620
        %v4622 = vpop.f32.mrb[0].mxu0
        %v4623 = vpop.f32.mrb[0].mxu0
        %v4624 = vpop.f32.mrb[0].mxu0
        %4625 = vdwg.mxu0
        %v4630 = vunpack.c.l.b16 %v3601
        %v4631 = vunpack.c.l.b16 %v3602
        %v4632 = vunpack.c.l.b16 %v3603
        %v4633 = vunpack.c.l.b16 %v3604
        %v4634 = vpack.c.b16 %v4631, %v4630
        %v4635 = vpack.c.b16 %v4633, %v4632
        %4638 = vmatprep.subr.bf16.mxu0 0
        %4639 = vmatpush1.bf16.msra.mxu0 %v4634
        %4640 = vmatprep.subr.bf16.mxu0 0
        %4641 = vmatpush1.bf16.msra.mxu0 %v4635
        %4642 = vmatprep.subr.bf16.mxu0 0
        %4643 = vmatpush1.bf16.msra.mxu0 0
        %4644 = vmatprep.subr.bf16.mxu0 0
        %4645 = vmatpush1.bf16.msra.mxu0 0
        %4646 = vmatprep.subr.bf16.mxu0 0
        %4647 = vmatpush1.bf16.msra.mxu0 0
        %4648 = vmatprep.subr.bf16.mxu0 0
        %4649 = vmatpush1.bf16.msra.mxu0 0
        %4650 = vmatprep.subr.bf16.mxu0 0
        %4651 = vmatpush1.bf16.msra.mxu0 0
        %4652 = vmatprep.subr.bf16.mxu0 0
        %4653 = vmatpush1.bf16.msra.mxu0 0
        %4654 = vmatprep.subr.bf16.mxu0 0
        %4655 = vmatpush1.bf16.msra.mxu0 0
        %4656 = vmatprep.subr.bf16.mxu0 0
        %4657 = vmatpush1.bf16.msra.mxu0 0
        %4658 = vmatprep.subr.bf16.mxu0 0
        %4659 = vmatpush1.bf16.msra.mxu0 0
        %4660 = vmatprep.subr.bf16.mxu0 0
        %4661 = vmatpush1.bf16.msra.mxu0 0
        %4662 = vmatprep.subr.bf16.mxu0 0
        %4663 = vmatpush1.bf16.msra.mxu0 0
        %4664 = vmatprep.subr.bf16.mxu0 0
        %4665 = vmatpush1.bf16.msra.mxu0 0
        %4666 = vmatprep.subr.bf16.mxu0 0
        %4667 = vmatpush1.bf16.msra.mxu0 0
        %4668 = vmatprep.subr.bf16.mxu0 0
        %4669 = vmatpush1.bf16.msra.mxu0 0
        %4670 = vmatprep.mubr.bf16.mxu0 0
        %4671 = vmatmul.mubr.bf16.gmra.mrb[0].mxu0 %v4064
        %v4672 = vpop.f32.mrb[0].mxu0
        %v4673 = vadd.f32 0.0, %v4672
        %v4674 = vpop.f32.mrb[0].mxu0
        %v4675 = vpop.f32.mrb[0].mxu0
        %v4676 = vpop.f32.mrb[0].mxu0
        %4677 = vdwg.mxu0
        %v4682 = vunpack.c.l.b16 %v3605
        %v4683 = vunpack.c.l.b16 %v3606
        %v4684 = vunpack.c.l.b16 %v3607
        %v4685 = vunpack.c.l.b16 %v3608
        %v4686 = vpack.c.b16 %v4683, %v4682
        %v4687 = vpack.c.b16 %v4685, %v4684
        %4690 = vmatprep.subr.bf16.mxu0 0
        %4691 = vmatpush1.bf16.msra.mxu0 %v4686
        %4692 = vmatprep.subr.bf16.mxu0 0
        %4693 = vmatpush1.bf16.msra.mxu0 %v4687
        %4694 = vmatprep.subr.bf16.mxu0 0
        %4695 = vmatpush1.bf16.msra.mxu0 0
        %4696 = vmatprep.subr.bf16.mxu0 0
        %4697 = vmatpush1.bf16.msra.mxu0 0
        %4698 = vmatprep.subr.bf16.mxu0 0
        %4699 = vmatpush1.bf16.msra.mxu0 0
        %4700 = vmatprep.subr.bf16.mxu0 0
        %4701 = vmatpush1.bf16.msra.mxu0 0
        %4702 = vmatprep.subr.bf16.mxu0 0
        %4703 = vmatpush1.bf16.msra.mxu0 0
        %4704 = vmatprep.subr.bf16.mxu0 0
        %4705 = vmatpush1.bf16.msra.mxu0 0
        %4706 = vmatprep.subr.bf16.mxu0 0
        %4707 = vmatpush1.bf16.msra.mxu0 0
        %4708 = vmatprep.subr.bf16.mxu0 0
        %4709 = vmatpush1.bf16.msra.mxu0 0
        %4710 = vmatprep.subr.bf16.mxu0 0
        %4711 = vmatpush1.bf16.msra.mxu0 0
        %4712 = vmatprep.subr.bf16.mxu0 0
        %4713 = vmatpush1.bf16.msra.mxu0 0
        %4714 = vmatprep.subr.bf16.mxu0 0
        %4715 = vmatpush1.bf16.msra.mxu0 0
        %4716 = vmatprep.subr.bf16.mxu0 0
        %4717 = vmatpush1.bf16.msra.mxu0 0
        %4718 = vmatprep.subr.bf16.mxu0 0
        %4719 = vmatpush1.bf16.msra.mxu0 0
        %4720 = vmatprep.subr.bf16.mxu0 0
        %4721 = vmatpush1.bf16.msra.mxu0 0
        %4722 = vmatprep.mubr.bf16.mxu0 0
        %4723 = vmatmul.mubr.bf16.gmra.mrb[0].mxu0 %v4064
        %v4724 = vpop.f32.mrb[0].mxu0
        %v4725 = vadd.f32 0.0, %v4724
        %v4726 = vpop.f32.mrb[0].mxu0
        %v4727 = vpop.f32.mrb[0].mxu0
        %v4728 = vpop.f32.mrb[0].mxu0
        %4729 = vdwg.mxu0
        %v4734 = vunpack.c.l.b16 %v3609
        %v4735 = vunpack.c.l.b16 %v3610
        %v4736 = vunpack.c.l.b16 %v3611
        %v4737 = vunpack.c.l.b16 %v3612
        %v4738 = vpack.c.b16 %v4735, %v4734
        %v4739 = vpack.c.b16 %v4737, %v4736
        %4742 = vmatprep.subr.bf16.mxu0 0
        %4743 = vmatpush1.bf16.msra.mxu0 %v4738
        %4744 = vmatprep.subr.bf16.mxu0 0
        %4745 = vmatpush1.bf16.msra.mxu0 %v4739
        %4746 = vmatprep.subr.bf16.mxu0 0
        %4747 = vmatpush1.bf16.msra.mxu0 0
        %4748 = vmatprep.subr.bf16.mxu0 0
        %4749 = vmatpush1.bf16.msra.mxu0 0
        %4750 = vmatprep.subr.bf16.mxu0 0
        %4751 = vmatpush1.bf16.msra.mxu0 0
        %4752 = vmatprep.subr.bf16.mxu0 0
        %4753 = vmatpush1.bf16.msra.mxu0 0
        %4754 = vmatprep.subr.bf16.mxu0 0
        %4755 = vmatpush1.bf16.msra.mxu0 0
        %4756 = vmatprep.subr.bf16.mxu0 0
        %4757 = vmatpush1.bf16.msra.mxu0 0
        %4758 = vmatprep.subr.bf16.mxu0 0
        %4759 = vmatpush1.bf16.msra.mxu0 0
        %4760 = vmatprep.subr.bf16.mxu0 0
        %4761 = vmatpush1.bf16.msra.mxu0 0
        %4762 = vmatprep.subr.bf16.mxu0 0
        %4763 = vmatpush1.bf16.msra.mxu0 0
        %4764 = vmatprep.subr.bf16.mxu0 0
        %4765 = vmatpush1.bf16.msra.mxu0 0
        %4766 = vmatprep.subr.bf16.mxu0 0
        %4767 = vmatpush1.bf16.msra.mxu0 0
        %4768 = vmatprep.subr.bf16.mxu0 0
        %4769 = vmatpush1.bf16.msra.mxu0 0
        %4770 = vmatprep.subr.bf16.mxu0 0
        %4771 = vmatpush1.bf16.msra.mxu0 0
        %4772 = vmatprep.subr.bf16.mxu0 0
        %4773 = vmatpush1.bf16.msra.mxu0 0
        %4774 = vmatprep.mubr.bf16.mxu0 0
        %4775 = vmatmul.mubr.bf16.gmra.mrb[0].mxu0 %v4064
        %v4776 = vpop.f32.mrb[0].mxu0
        %v4777 = vadd.f32 0.0, %v4776
        %v4778 = vpop.f32.mrb[0].mxu0
        %v4779 = vpop.f32.mrb[0].mxu0
        %v4780 = vpop.f32.mrb[0].mxu0
        %4781 = vdwg.mxu0
        %v4786 = vunpack.c.l.b16 %v3613
        %v4787 = vunpack.c.l.b16 %v3614
        %v4788 = vunpack.c.l.b16 %v3615
        %v4789 = vunpack.c.l.b16 %v3616
        %v4790 = vpack.c.b16 %v4787, %v4786
        %v4791 = vpack.c.b16 %v4789, %v4788
        %4794 = vmatprep.subr.bf16.mxu0 0
        %4795 = vmatpush1.bf16.msra.mxu0 %v4790
        %4796 = vmatprep.subr.bf16.mxu0 0
        %4797 = vmatpush1.bf16.msra.mxu0 %v4791
        %4798 = vmatprep.subr.bf16.mxu0 0
        %4799 = vmatpush1.bf16.msra.mxu0 0
        %4800 = vmatprep.subr.bf16.mxu0 0
        %4801 = vmatpush1.bf16.msra.mxu0 0
        %4802 = vmatprep.subr.bf16.mxu0 0
        %4803 = vmatpush1.bf16.msra.mxu0 0
        %4804 = vmatprep.subr.bf16.mxu0 0
        %4805 = vmatpush1.bf16.msra.mxu0 0
        %4806 = vmatprep.subr.bf16.mxu0 0
        %4807 = vmatpush1.bf16.msra.mxu0 0
        %4808 = vmatprep.subr.bf16.mxu0 0
        %4809 = vmatpush1.bf16.msra.mxu0 0
        %4810 = vmatprep.subr.bf16.mxu0 0
        %4811 = vmatpush1.bf16.msra.mxu0 0
        %4812 = vmatprep.subr.bf16.mxu0 0
        %4813 = vmatpush1.bf16.msra.mxu0 0
        %4814 = vmatprep.subr.bf16.mxu0 0
        %4815 = vmatpush1.bf16.msra.mxu0 0
        %4816 = vmatprep.subr.bf16.mxu0 0
        %4817 = vmatpush1.bf16.msra.mxu0 0
        %4818 = vmatprep.subr.bf16.mxu0 0
        %4819 = vmatpush1.bf16.msra.mxu0 0
        %4820 = vmatprep.subr.bf16.mxu0 0
        %4821 = vmatpush1.bf16.msra.mxu0 0
        %4822 = vmatprep.subr.bf16.mxu0 0
        %4823 = vmatpush1.bf16.msra.mxu0 0
        %4824 = vmatprep.subr.bf16.mxu0 0
        %4825 = vmatpush1.bf16.msra.mxu0 0
        %4826 = vmatprep.mubr.bf16.mxu0 0
        %4827 = vmatmul.mubr.bf16.gmra.mrb[0].mxu0 %v4064
        %v4828 = vpop.f32.mrb[0].mxu0
        %v4829 = vadd.f32 0.0, %v4828
        %v4830 = vpop.f32.mrb[0].mxu0
        %v4831 = vpop.f32.mrb[0].mxu0
        %v4832 = vpop.f32.mrb[0].mxu0
        %4833 = vdwg.mxu0
        %v4838 = vunpack.c.l.b16 %v3617
        %v4839 = vunpack.c.l.b16 %v3618
        %v4840 = vunpack.c.l.b16 %v3619
        %v4841 = vunpack.c.l.b16 %v3620
        %v4842 = vpack.c.b16 %v4839, %v4838
        %v4843 = vpack.c.b16 %v4841, %v4840
        %4846 = vmatprep.subr.bf16.mxu0 0
        %4847 = vmatpush1.bf16.msra.mxu0 %v4842
        %4848 = vmatprep.subr.bf16.mxu0 0
        %4849 = vmatpush1.bf16.msra.mxu0 %v4843
        %4850 = vmatprep.subr.bf16.mxu0 0
        %4851 = vmatpush1.bf16.msra.mxu0 0
        %4852 = vmatprep.subr.bf16.mxu0 0
        %4853 = vmatpush1.bf16.msra.mxu0 0
        %4854 = vmatprep.subr.bf16.mxu0 0
        %4855 = vmatpush1.bf16.msra.mxu0 0
        %4856 = vmatprep.subr.bf16.mxu0 0
        %4857 = vmatpush1.bf16.msra.mxu0 0
        %4858 = vmatprep.subr.bf16.mxu0 0
        %4859 = vmatpush1.bf16.msra.mxu0 0
        %4860 = vmatprep.subr.bf16.mxu0 0
        %4861 = vmatpush1.bf16.msra.mxu0 0
        %4862 = vmatprep.subr.bf16.mxu0 0
        %4863 = vmatpush1.bf16.msra.mxu0 0
        %4864 = vmatprep.subr.bf16.mxu0 0
        %4865 = vmatpush1.bf16.msra.mxu0 0
        %4866 = vmatprep.subr.bf16.mxu0 0
        %4867 = vmatpush1.bf16.msra.mxu0 0
        %4868 = vmatprep.subr.bf16.mxu0 0
        %4869 = vmatpush1.bf16.msra.mxu0 0
        %4870 = vmatprep.subr.bf16.mxu0 0
        %4871 = vmatpush1.bf16.msra.mxu0 0
        %4872 = vmatprep.subr.bf16.mxu0 0
        %4873 = vmatpush1.bf16.msra.mxu0 0
        %4874 = vmatprep.subr.bf16.mxu0 0
        %4875 = vmatpush1.bf16.msra.mxu0 0
        %4876 = vmatprep.subr.bf16.mxu0 0
        %4877 = vmatpush1.bf16.msra.mxu0 0
        %4878 = vmatprep.mubr.bf16.mxu0 0
        %4879 = vmatmul.mubr.bf16.gmra.mrb[0].mxu0 %v4064
        %v4880 = vpop.f32.mrb[0].mxu0
        %v4881 = vadd.f32 0.0, %v4880
        %v4882 = vpop.f32.mrb[0].mxu0
        %v4883 = vpop.f32.mrb[0].mxu0
        %v4884 = vpop.f32.mrb[0].mxu0
        %4885 = vdwg.mxu0
        %v4886 = vpack.c.bf16 %v3682, %v3682
        %v4887 = vpack.c.bf16 %v3734, %v3734
        %v4888 = vpack.c.bf16 %v3786, %v3786
        %v4889 = vpack.c.bf16 %v3838, %v3838
        %v4890 = vpack.c.bf16 %v3890, %v3890
        %v4891 = vpack.c.bf16 %v3942, %v3942
        %v4892 = vpack.c.bf16 %v3994, %v3994
        %v4893 = vpack.c.bf16 %v4046, %v4046
        %v4894 = vpack.c.bf16 %v4101, %v4101
        %v4895 = vpack.c.bf16 %v4153, %v4153
        %v4896 = vpack.c.bf16 %v4205, %v4205
        %v4897 = vpack.c.bf16 %v4257, %v4257
        %v4898 = vpack.c.bf16 %v4309, %v4309
        %v4899 = vpack.c.bf16 %v4361, %v4361
        %v4900 = vpack.c.bf16 %v4413, %v4413
        %v4901 = vpack.c.bf16 %v4465, %v4465
        %v4903 = vsel %vm1859, %v4886, 0
        %v4906 = vsel %vm1859, %v4894, 0
        %4908 = vmatprep.subr.bf16.mxu0 0
        %4909 = vmatpush1.bf16.xpose.msra.mxu0 %v4906
        %4910 = vmatprep.subr.bf16.mxu0 0
        %4911 = vmatpush1.bf16.xpose.msra.mxu0 0
        %4912 = vmatprep.subr.bf16.mxu0 0
        %4913 = vmatpush1.bf16.xpose.msra.mxu0 0
        %4914 = vmatprep.subr.bf16.mxu0 0
        %4915 = vmatpush1.bf16.xpose.msra.mxu0 0
        %4916 = vmatprep.subr.bf16.mxu0 0
        %4917 = vmatpush1.bf16.xpose.msra.mxu0 0
        %4918 = vmatprep.subr.bf16.mxu0 0
        %4919 = vmatpush1.bf16.xpose.msra.mxu0 0
        %4920 = vmatprep.subr.bf16.mxu0 0
        %4921 = vmatpush1.bf16.xpose.msra.mxu0 0
        %4922 = vmatprep.subr.bf16.mxu0 0
        %4923 = vmatpush1.bf16.xpose.msra.mxu0 0
        %4924 = vmatprep.subr.bf16.mxu0 0
        %4925 = vmatpush1.bf16.xpose.msra.mxu0 0
        %4926 = vmatprep.subr.bf16.mxu0 0
        %4927 = vmatpush1.bf16.xpose.msra.mxu0 0
        %4928 = vmatprep.subr.bf16.mxu0 0
        %4929 = vmatpush1.bf16.xpose.msra.mxu0 0
        %4930 = vmatprep.subr.bf16.mxu0 0
        %4931 = vmatpush1.bf16.xpose.msra.mxu0 0
        %4932 = vmatprep.subr.bf16.mxu0 0
        %4933 = vmatpush1.bf16.xpose.msra.mxu0 0
        %4934 = vmatprep.subr.bf16.mxu0 0
        %4935 = vmatpush1.bf16.xpose.msra.mxu0 0
        %4936 = vmatprep.subr.bf16.mxu0 0
        %4937 = vmatpush1.bf16.xpose.msra.mxu0 0
        %4938 = vmatprep.subr.bf16.mxu0 0
        %4939 = vmatpush1.bf16.xpose.msra.mxu0 0
        %4940 = vmatprep.mubr.bf16.mxu0 0
        %4941 = vmatmul.mubr.bf16.gmra.mrb[0].mxu0 %v4903
        %v4942 = vpop.f32.mrb[0].mxu0
        %v4943 = vadd.f32 0.0, %v4942
        %v4944 = vpop.f32.mrb[0].mxu0
        %v4945 = vpop.f32.mrb[0].mxu0
        %v4946 = vpop.f32.mrb[0].mxu0
        %4947 = vdwg.mxu0
        %v4949 = vsel %vm1859, %v4887, 0
        %v4952 = vsel %vm1859, %v4895, 0
        %4954 = vmatprep.subr.bf16.mxu0 0
        %4955 = vmatpush1.bf16.xpose.msra.mxu0 %v4952
        %4956 = vmatprep.subr.bf16.mxu0 0
        %4957 = vmatpush1.bf16.xpose.msra.mxu0 0
        %4958 = vmatprep.subr.bf16.mxu0 0
        %4959 = vmatpush1.bf16.xpose.msra.mxu0 0
        %4960 = vmatprep.subr.bf16.mxu0 0
        %4961 = vmatpush1.bf16.xpose.msra.mxu0 0
        %4962 = vmatprep.subr.bf16.mxu0 0
        %4963 = vmatpush1.bf16.xpose.msra.mxu0 0
        %4964 = vmatprep.subr.bf16.mxu0 0
        %4965 = vmatpush1.bf16.xpose.msra.mxu0 0
        %4966 = vmatprep.subr.bf16.mxu0 0
        %4967 = vmatpush1.bf16.xpose.msra.mxu0 0
        %4968 = vmatprep.subr.bf16.mxu0 0
        %4969 = vmatpush1.bf16.xpose.msra.mxu0 0
        %4970 = vmatprep.subr.bf16.mxu0 0
        %4971 = vmatpush1.bf16.xpose.msra.mxu0 0
        %4972 = vmatprep.subr.bf16.mxu0 0
        %4973 = vmatpush1.bf16.xpose.msra.mxu0 0
        %4974 = vmatprep.subr.bf16.mxu0 0
        %4975 = vmatpush1.bf16.xpose.msra.mxu0 0
        %4976 = vmatprep.subr.bf16.mxu0 0
        %4977 = vmatpush1.bf16.xpose.msra.mxu0 0
        %4978 = vmatprep.subr.bf16.mxu0 0
        %4979 = vmatpush1.bf16.xpose.msra.mxu0 0
        %4980 = vmatprep.subr.bf16.mxu0 0
        %4981 = vmatpush1.bf16.xpose.msra.mxu0 0
        %4982 = vmatprep.subr.bf16.mxu0 0
        %4983 = vmatpush1.bf16.xpose.msra.mxu0 0
        %4984 = vmatprep.subr.bf16.mxu0 0
        %4985 = vmatpush1.bf16.xpose.msra.mxu0 0
        %4986 = vmatprep.mubr.bf16.mxu0 0
        %4987 = vmatmul.mubr.bf16.gmra.mrb[0].mxu0 %v4949
        %v4988 = vpop.f32.mrb[0].mxu0
        %v4989 = vadd.f32 0.0, %v4988
        %v4990 = vpop.f32.mrb[0].mxu0
        %v4991 = vpop.f32.mrb[0].mxu0
        %v4992 = vpop.f32.mrb[0].mxu0
        %4993 = vdwg.mxu0
        %v4995 = vsel %vm1859, %v4888, 0
        %v4998 = vsel %vm1859, %v4896, 0
        %5000 = vmatprep.subr.bf16.mxu0 0
        %5001 = vmatpush1.bf16.xpose.msra.mxu0 %v4998
        %5002 = vmatprep.subr.bf16.mxu0 0
        %5003 = vmatpush1.bf16.xpose.msra.mxu0 0
        %5004 = vmatprep.subr.bf16.mxu0 0
        %5005 = vmatpush1.bf16.xpose.msra.mxu0 0
        %5006 = vmatprep.subr.bf16.mxu0 0
        %5007 = vmatpush1.bf16.xpose.msra.mxu0 0
        %5008 = vmatprep.subr.bf16.mxu0 0
        %5009 = vmatpush1.bf16.xpose.msra.mxu0 0
        %5010 = vmatprep.subr.bf16.mxu0 0
        %5011 = vmatpush1.bf16.xpose.msra.mxu0 0
        %5012 = vmatprep.subr.bf16.mxu0 0
        %5013 = vmatpush1.bf16.xpose.msra.mxu0 0
        %5014 = vmatprep.subr.bf16.mxu0 0
        %5015 = vmatpush1.bf16.xpose.msra.mxu0 0
        %5016 = vmatprep.subr.bf16.mxu0 0
        %5017 = vmatpush1.bf16.xpose.msra.mxu0 0
        %5018 = vmatprep.subr.bf16.mxu0 0
        %5019 = vmatpush1.bf16.xpose.msra.mxu0 0
        %5020 = vmatprep.subr.bf16.mxu0 0
        %5021 = vmatpush1.bf16.xpose.msra.mxu0 0
        %5022 = vmatprep.subr.bf16.mxu0 0
        %5023 = vmatpush1.bf16.xpose.msra.mxu0 0
        %5024 = vmatprep.subr.bf16.mxu0 0
        %5025 = vmatpush1.bf16.xpose.msra.mxu0 0
        %5026 = vmatprep.subr.bf16.mxu0 0
        %5027 = vmatpush1.bf16.xpose.msra.mxu0 0
        %5028 = vmatprep.subr.bf16.mxu0 0
        %5029 = vmatpush1.bf16.xpose.msra.mxu0 0
        %5030 = vmatprep.subr.bf16.mxu0 0
        %5031 = vmatpush1.bf16.xpose.msra.mxu0 0
        %5032 = vmatprep.mubr.bf16.mxu0 0
        %5033 = vmatmul.mubr.bf16.gmra.mrb[0].mxu0 %v4995
        %v5034 = vpop.f32.mrb[0].mxu0
        %v5035 = vadd.f32 0.0, %v5034
        %v5036 = vpop.f32.mrb[0].mxu0
        %v5037 = vpop.f32.mrb[0].mxu0
        %v5038 = vpop.f32.mrb[0].mxu0
        %5039 = vdwg.mxu0
        %v5041 = vsel %vm1859, %v4889, 0
        %v5044 = vsel %vm1859, %v4897, 0
        %5046 = vmatprep.subr.bf16.mxu0 0
        %5047 = vmatpush1.bf16.xpose.msra.mxu0 %v5044
        %5048 = vmatprep.subr.bf16.mxu0 0
        %5049 = vmatpush1.bf16.xpose.msra.mxu0 0
        %5050 = vmatprep.subr.bf16.mxu0 0
        %5051 = vmatpush1.bf16.xpose.msra.mxu0 0
        %5052 = vmatprep.subr.bf16.mxu0 0
        %5053 = vmatpush1.bf16.xpose.msra.mxu0 0
        %5054 = vmatprep.subr.bf16.mxu0 0
        %5055 = vmatpush1.bf16.xpose.msra.mxu0 0
        %5056 = vmatprep.subr.bf16.mxu0 0
        %5057 = vmatpush1.bf16.xpose.msra.mxu0 0
        %5058 = vmatprep.subr.bf16.mxu0 0
        %5059 = vmatpush1.bf16.xpose.msra.mxu0 0
        %5060 = vmatprep.subr.bf16.mxu0 0
        %5061 = vmatpush1.bf16.xpose.msra.mxu0 0
        %5062 = vmatprep.subr.bf16.mxu0 0
        %5063 = vmatpush1.bf16.xpose.msra.mxu0 0
        %5064 = vmatprep.subr.bf16.mxu0 0
        %5065 = vmatpush1.bf16.xpose.msra.mxu0 0
        %5066 = vmatprep.subr.bf16.mxu0 0
        %5067 = vmatpush1.bf16.xpose.msra.mxu0 0
        %5068 = vmatprep.subr.bf16.mxu0 0
        %5069 = vmatpush1.bf16.xpose.msra.mxu0 0
        %5070 = vmatprep.subr.bf16.mxu0 0
        %5071 = vmatpush1.bf16.xpose.msra.mxu0 0
        %5072 = vmatprep.subr.bf16.mxu0 0
        %5073 = vmatpush1.bf16.xpose.msra.mxu0 0
        %5074 = vmatprep.subr.bf16.mxu0 0
        %5075 = vmatpush1.bf16.xpose.msra.mxu0 0
        %5076 = vmatprep.subr.bf16.mxu0 0
        %5077 = vmatpush1.bf16.xpose.msra.mxu0 0
        %5078 = vmatprep.mubr.bf16.mxu0 0
        %5079 = vmatmul.mubr.bf16.gmra.mrb[0].mxu0 %v5041
        %v5080 = vpop.f32.mrb[0].mxu0
        %v5081 = vadd.f32 0.0, %v5080
        %v5082 = vpop.f32.mrb[0].mxu0
        %v5083 = vpop.f32.mrb[0].mxu0
        %v5084 = vpop.f32.mrb[0].mxu0
        %5085 = vdwg.mxu0
        %v5087 = vsel %vm1859, %v4890, 0
        %v5090 = vsel %vm1859, %v4898, 0
        %5092 = vmatprep.subr.bf16.mxu0 0
        %5093 = vmatpush1.bf16.xpose.msra.mxu0 %v5090
        %5094 = vmatprep.subr.bf16.mxu0 0
        %5095 = vmatpush1.bf16.xpose.msra.mxu0 0
        %5096 = vmatprep.subr.bf16.mxu0 0
        %5097 = vmatpush1.bf16.xpose.msra.mxu0 0
        %5098 = vmatprep.subr.bf16.mxu0 0
        %5099 = vmatpush1.bf16.xpose.msra.mxu0 0
        %5100 = vmatprep.subr.bf16.mxu0 0
        %5101 = vmatpush1.bf16.xpose.msra.mxu0 0
        %5102 = vmatprep.subr.bf16.mxu0 0
        %5103 = vmatpush1.bf16.xpose.msra.mxu0 0
        %5104 = vmatprep.subr.bf16.mxu0 0
        %5105 = vmatpush1.bf16.xpose.msra.mxu0 0
        %5106 = vmatprep.subr.bf16.mxu0 0
        %5107 = vmatpush1.bf16.xpose.msra.mxu0 0
        %5108 = vmatprep.subr.bf16.mxu0 0
        %5109 = vmatpush1.bf16.xpose.msra.mxu0 0
        %5110 = vmatprep.subr.bf16.mxu0 0
        %5111 = vmatpush1.bf16.xpose.msra.mxu0 0
        %5112 = vmatprep.subr.bf16.mxu0 0
        %5113 = vmatpush1.bf16.xpose.msra.mxu0 0
        %5114 = vmatprep.subr.bf16.mxu0 0
        %5115 = vmatpush1.bf16.xpose.msra.mxu0 0
        %5116 = vmatprep.subr.bf16.mxu0 0
        %5117 = vmatpush1.bf16.xpose.msra.mxu0 0
        %5118 = vmatprep.subr.bf16.mxu0 0
        %5119 = vmatpush1.bf16.xpose.msra.mxu0 0
        %5120 = vmatprep.subr.bf16.mxu0 0
        %5121 = vmatpush1.bf16.xpose.msra.mxu0 0
        %5122 = vmatprep.subr.bf16.mxu0 0
        %5123 = vmatpush1.bf16.xpose.msra.mxu0 0
        %5124 = vmatprep.mubr.bf16.mxu0 0
        %5125 = vmatmul.mubr.bf16.gmra.mrb[0].mxu0 %v5087
        %v5126 = vpop.f32.mrb[0].mxu0
        %v5127 = vadd.f32 0.0, %v5126
        %v5128 = vpop.f32.mrb[0].mxu0
        %v5129 = vpop.f32.mrb[0].mxu0
        %v5130 = vpop.f32.mrb[0].mxu0
        %5131 = vdwg.mxu0
        %v5133 = vsel %vm1859, %v4891, 0
        %v5136 = vsel %vm1859, %v4899, 0
        %5138 = vmatprep.subr.bf16.mxu0 0
        %5139 = vmatpush1.bf16.xpose.msra.mxu0 %v5136
        %5140 = vmatprep.subr.bf16.mxu0 0
        %5141 = vmatpush1.bf16.xpose.msra.mxu0 0
        %5142 = vmatprep.subr.bf16.mxu0 0
        %5143 = vmatpush1.bf16.xpose.msra.mxu0 0
        %5144 = vmatprep.subr.bf16.mxu0 0
        %5145 = vmatpush1.bf16.xpose.msra.mxu0 0
        %5146 = vmatprep.subr.bf16.mxu0 0
        %5147 = vmatpush1.bf16.xpose.msra.mxu0 0
        %5148 = vmatprep.subr.bf16.mxu0 0
        %5149 = vmatpush1.bf16.xpose.msra.mxu0 0
        %5150 = vmatprep.subr.bf16.mxu0 0
        %5151 = vmatpush1.bf16.xpose.msra.mxu0 0
        %5152 = vmatprep.subr.bf16.mxu0 0
        %5153 = vmatpush1.bf16.xpose.msra.mxu0 0
        %5154 = vmatprep.subr.bf16.mxu0 0
        %5155 = vmatpush1.bf16.xpose.msra.mxu0 0
        %5156 = vmatprep.subr.bf16.mxu0 0
        %5157 = vmatpush1.bf16.xpose.msra.mxu0 0
        %5158 = vmatprep.subr.bf16.mxu0 0
        %5159 = vmatpush1.bf16.xpose.msra.mxu0 0
        %5160 = vmatprep.subr.bf16.mxu0 0
        %5161 = vmatpush1.bf16.xpose.msra.mxu0 0
        %5162 = vmatprep.subr.bf16.mxu0 0
        %5163 = vmatpush1.bf16.xpose.msra.mxu0 0
        %5164 = vmatprep.subr.bf16.mxu0 0
        %5165 = vmatpush1.bf16.xpose.msra.mxu0 0
        %5166 = vmatprep.subr.bf16.mxu0 0
        %5167 = vmatpush1.bf16.xpose.msra.mxu0 0
        %5168 = vmatprep.subr.bf16.mxu0 0
        %5169 = vmatpush1.bf16.xpose.msra.mxu0 0
        %5170 = vmatprep.mubr.bf16.mxu0 0
        %5171 = vmatmul.mubr.bf16.gmra.mrb[0].mxu0 %v5133
        %v5172 = vpop.f32.mrb[0].mxu0
        %v5173 = vadd.f32 0.0, %v5172
        %v5174 = vpop.f32.mrb[0].mxu0
        %v5175 = vpop.f32.mrb[0].mxu0
        %v5176 = vpop.f32.mrb[0].mxu0
        %5177 = vdwg.mxu0
        %v5179 = vsel %vm1859, %v4892, 0
        %v5182 = vsel %vm1859, %v4900, 0
        %5184 = vmatprep.subr.bf16.mxu0 0
        %5185 = vmatpush1.bf16.xpose.msra.mxu0 %v5182
        %5186 = vmatprep.subr.bf16.mxu0 0
        %5187 = vmatpush1.bf16.xpose.msra.mxu0 0
        %5188 = vmatprep.subr.bf16.mxu0 0
        %5189 = vmatpush1.bf16.xpose.msra.mxu0 0
        %5190 = vmatprep.subr.bf16.mxu0 0
        %5191 = vmatpush1.bf16.xpose.msra.mxu0 0
        %5192 = vmatprep.subr.bf16.mxu0 0
        %5193 = vmatpush1.bf16.xpose.msra.mxu0 0
        %5194 = vmatprep.subr.bf16.mxu0 0
        %5195 = vmatpush1.bf16.xpose.msra.mxu0 0
        %5196 = vmatprep.subr.bf16.mxu0 0
        %5197 = vmatpush1.bf16.xpose.msra.mxu0 0
        %5198 = vmatprep.subr.bf16.mxu0 0
        %5199 = vmatpush1.bf16.xpose.msra.mxu0 0
        %5200 = vmatprep.subr.bf16.mxu0 0
        %5201 = vmatpush1.bf16.xpose.msra.mxu0 0
        %5202 = vmatprep.subr.bf16.mxu0 0
        %5203 = vmatpush1.bf16.xpose.msra.mxu0 0
        %5204 = vmatprep.subr.bf16.mxu0 0
        %5205 = vmatpush1.bf16.xpose.msra.mxu0 0
        %5206 = vmatprep.subr.bf16.mxu0 0
        %5207 = vmatpush1.bf16.xpose.msra.mxu0 0
        %5208 = vmatprep.subr.bf16.mxu0 0
        %5209 = vmatpush1.bf16.xpose.msra.mxu0 0
        %5210 = vmatprep.subr.bf16.mxu0 0
        %5211 = vmatpush1.bf16.xpose.msra.mxu0 0
        %5212 = vmatprep.subr.bf16.mxu0 0
        %5213 = vmatpush1.bf16.xpose.msra.mxu0 0
        %5214 = vmatprep.subr.bf16.mxu0 0
        %5215 = vmatpush1.bf16.xpose.msra.mxu0 0
        %5216 = vmatprep.mubr.bf16.mxu0 0
        %5217 = vmatmul.mubr.bf16.gmra.mrb[0].mxu0 %v5179
        %v5218 = vpop.f32.mrb[0].mxu0
        %v5219 = vadd.f32 0.0, %v5218
        %v5220 = vpop.f32.mrb[0].mxu0
        %v5221 = vpop.f32.mrb[0].mxu0
        %v5222 = vpop.f32.mrb[0].mxu0
        %5223 = vdwg.mxu0
        %v5225 = vsel %vm1859, %v4893, 0
        %v5228 = vsel %vm1859, %v4901, 0
        %5230 = vmatprep.subr.bf16.mxu0 0
        %5231 = vmatpush1.bf16.xpose.msra.mxu0 %v5228
        %5232 = vmatprep.subr.bf16.mxu0 0
        %5233 = vmatpush1.bf16.xpose.msra.mxu0 0
        %5234 = vmatprep.subr.bf16.mxu0 0
        %5235 = vmatpush1.bf16.xpose.msra.mxu0 0
        %5236 = vmatprep.subr.bf16.mxu0 0
        %5237 = vmatpush1.bf16.xpose.msra.mxu0 0
        %5238 = vmatprep.subr.bf16.mxu0 0
        %5239 = vmatpush1.bf16.xpose.msra.mxu0 0
        %5240 = vmatprep.subr.bf16.mxu0 0
        %5241 = vmatpush1.bf16.xpose.msra.mxu0 0
        %5242 = vmatprep.subr.bf16.mxu0 0
        %5243 = vmatpush1.bf16.xpose.msra.mxu0 0
        %5244 = vmatprep.subr.bf16.mxu0 0
        %5245 = vmatpush1.bf16.xpose.msra.mxu0 0
        %5246 = vmatprep.subr.bf16.mxu0 0
        %5247 = vmatpush1.bf16.xpose.msra.mxu0 0
        %5248 = vmatprep.subr.bf16.mxu0 0
        %5249 = vmatpush1.bf16.xpose.msra.mxu0 0
        %5250 = vmatprep.subr.bf16.mxu0 0
        %5251 = vmatpush1.bf16.xpose.msra.mxu0 0
        %5252 = vmatprep.subr.bf16.mxu0 0
        %5253 = vmatpush1.bf16.xpose.msra.mxu0 0
        %5254 = vmatprep.subr.bf16.mxu0 0
        %5255 = vmatpush1.bf16.xpose.msra.mxu0 0
        %5256 = vmatprep.subr.bf16.mxu0 0
        %5257 = vmatpush1.bf16.xpose.msra.mxu0 0
        %5258 = vmatprep.subr.bf16.mxu0 0
        %5259 = vmatpush1.bf16.xpose.msra.mxu0 0
        %5260 = vmatprep.subr.bf16.mxu0 0
        %5261 = vmatpush1.bf16.xpose.msra.mxu0 0
        %5262 = vmatprep.mubr.bf16.mxu0 0
        %5263 = vmatmul.mubr.bf16.gmra.mrb[0].mxu0 %v5225
        %v5264 = vpop.f32.mrb[0].mxu0
        %v5265 = vadd.f32 0.0, %v5264
        %v5266 = vpop.f32.mrb[0].mxu0
        %v5267 = vpop.f32.mrb[0].mxu0
        %v5268 = vpop.f32.mrb[0].mxu0
        %5269 = vdwg.mxu0
        %v5270 = vmul.f32 %v4943, 0.5
        %v5271 = vmul.f32 %v4989, 0.5
        %v5272 = vmul.f32 %v5035, 0.5
        %v5273 = vmul.f32 %v5081, 0.5
        %v5274 = vmul.f32 %v5127, 0.5
        %v5275 = vmul.f32 %v5173, 0.5
        %v5276 = vmul.f32 %v5219, 0.5
        %v5277 = vmul.f32 %v5265, 0.5
        %v5278 = vsel %vm2236, %v5270, -inf
        %5279 = vmax.xlane.f32.xlu0 %v5278
        %v5280 = vpop.xlane.xlu0 %5279
        %v5281 = vsel %vm2236, %v5271, -inf
        %5282 = vmax.xlane.f32.xlu0 %v5281
        %v5283 = vpop.xlane.xlu0 %5282
        %v5284 = vsel %vm2236, %v5272, -inf
        %5285 = vmax.xlane.f32.xlu0 %v5284
        %v5286 = vpop.xlane.xlu0 %5285
        %v5287 = vsel %vm2236, %v5273, -inf
        %5288 = vmax.xlane.f32.xlu0 %v5287
        %v5289 = vpop.xlane.xlu0 %5288
        %v5290 = vsel %vm2236, %v5274, -inf
        %5291 = vmax.xlane.f32.xlu0 %v5290
        %v5292 = vpop.xlane.xlu0 %5291
        %v5293 = vsel %vm2236, %v5275, -inf
        %5294 = vmax.xlane.f32.xlu0 %v5293
        %v5295 = vpop.xlane.xlu0 %5294
        %v5296 = vsel %vm2236, %v5276, -inf
        %5297 = vmax.xlane.f32.xlu0 %v5296
        %v5298 = vpop.xlane.xlu0 %5297
        %v5299 = vsel %vm2236, %v5277, -inf
        %5300 = vmax.xlane.f32.xlu0 %v5299
        %v5301 = vpop.xlane.xlu0 %5300
        %v5302 = vsub.f32 %v5270, %v5280
        %v5303 = vsub.f32 %v5271, %v5283
        %v5304 = vsub.f32 %v5272, %v5286
        %v5305 = vsub.f32 %v5273, %v5289
        %v5306 = vsub.f32 %v5274, %v5292
        %v5307 = vsub.f32 %v5275, %v5295
        %v5308 = vsub.f32 %v5276, %v5298
        %v5309 = vsub.f32 %v5277, %v5301
        %v5310 = vmul.f32 %v5302, 1.442695
        %v5311 = vpow.pop %v5310
        %v5312 = vmul.f32 %v5303, 1.442695
        %v5313 = vpow.pop %v5312
        %v5314 = vmul.f32 %v5304, 1.442695
        %v5315 = vpow.pop %v5314
        %v5316 = vmul.f32 %v5305, 1.442695
        %v5317 = vpow.pop %v5316
        %v5318 = vmul.f32 %v5306, 1.442695
        %v5319 = vpow.pop %v5318
        %v5320 = vmul.f32 %v5307, 1.442695
        %v5321 = vpow.pop %v5320
        %v5322 = vmul.f32 %v5308, 1.442695
        %v5323 = vpow.pop %v5322
        %v5324 = vmul.f32 %v5309, 1.442695
        %v5325 = vpow.pop %v5324
        %v5326 = vsel %vm2236, %v5311, 0.0
        %5327 = vadd.xlane.f32.xlu0 %v5326
        %v5328 = vpop.xlane.xlu0 %5327
        %v5329 = vsel %vm2236, %v5313, 0.0
        %5330 = vadd.xlane.f32.xlu0 %v5329
        %v5331 = vpop.xlane.xlu0 %5330
        %v5332 = vsel %vm2236, %v5315, 0.0
        %5333 = vadd.xlane.f32.xlu0 %v5332
        %v5334 = vpop.xlane.xlu0 %5333
        %v5335 = vsel %vm2236, %v5317, 0.0
        %5336 = vadd.xlane.f32.xlu0 %v5335
        %v5337 = vpop.xlane.xlu0 %5336
        %v5338 = vsel %vm2236, %v5319, 0.0
        %5339 = vadd.xlane.f32.xlu0 %v5338
        %v5340 = vpop.xlane.xlu0 %5339
        %v5341 = vsel %vm2236, %v5321, 0.0
        %5342 = vadd.xlane.f32.xlu0 %v5341
        %v5343 = vpop.xlane.xlu0 %5342
        %v5344 = vsel %vm2236, %v5323, 0.0
        %5345 = vadd.xlane.f32.xlu0 %v5344
        %v5346 = vpop.xlane.xlu0 %5345
        %v5347 = vsel %vm2236, %v5325, 0.0
        %5348 = vadd.xlane.f32.xlu0 %v5347
        %v5349 = vpop.xlane.xlu0 %5348
        %v5350 = vrcp.pop %v5328
        %v5351 = vrcp.pop %v5331
        %v5352 = vrcp.pop %v5334
        %v5353 = vrcp.pop %v5337
        %v5354 = vrcp.pop %v5340
        %v5355 = vrcp.pop %v5343
        %v5356 = vrcp.pop %v5346
        %v5357 = vrcp.pop %v5349
        %v5358 = vmul.f32 %v5311, %v5350
        %v5359 = vmul.f32 %v5313, %v5351
        %v5360 = vmul.f32 %v5315, %v5352
        %v5361 = vmul.f32 %v5317, %v5353
        %v5362 = vmul.f32 %v5319, %v5354
        %v5363 = vmul.f32 %v5321, %v5355
        %v5364 = vmul.f32 %v5323, %v5356
        %v5365 = vmul.f32 %v5325, %v5357
        %v5366 = vpack.c.bf16 %v5358, %v5358
        %v5367 = vpack.c.bf16 %v5359, %v5359
        %v5368 = vpack.c.bf16 %v5360, %v5360
        %v5369 = vpack.c.bf16 %v5361, %v5361
        %v5370 = vpack.c.bf16 %v5362, %v5362
        %v5371 = vpack.c.bf16 %v5363, %v5363
        %v5372 = vpack.c.bf16 %v5364, %v5364
        %v5373 = vpack.c.bf16 %v5365, %v5365
        %v5374 = vpack.c.bf16 %v4517, %v4517
        %v5375 = vpack.c.bf16 %v4569, %v4569
        %v5376 = vpack.c.bf16 %v4621, %v4621
        %v5377 = vpack.c.bf16 %v4673, %v4673
        %v5378 = vpack.c.bf16 %v4725, %v4725
        %v5379 = vpack.c.bf16 %v4777, %v4777
        %v5380 = vpack.c.bf16 %v4829, %v4829
        %v5381 = vpack.c.bf16 %v4881, %v4881
        %v5383 = vsel %vm2236, %v5366, 0
        %v5386 = vsel %vm2344, %v5374, 0
        %5388 = vmatprep.subr.bf16.mxu0 0
        %5389 = vmatpush1.bf16.msra.mxu0 %v5386
        %5390 = vmatprep.subr.bf16.mxu0 0
        %5391 = vmatpush1.bf16.msra.mxu0 0
        %5392 = vmatprep.subr.bf16.mxu0 0
        %5393 = vmatpush1.bf16.msra.mxu0 0
        %5394 = vmatprep.subr.bf16.mxu0 0
        %5395 = vmatpush1.bf16.msra.mxu0 0
        %5396 = vmatprep.subr.bf16.mxu0 0
        %5397 = vmatpush1.bf16.msra.mxu0 0
        %5398 = vmatprep.subr.bf16.mxu0 0
        %5399 = vmatpush1.bf16.msra.mxu0 0
        %5400 = vmatprep.subr.bf16.mxu0 0
        %5401 = vmatpush1.bf16.msra.mxu0 0
        %5402 = vmatprep.subr.bf16.mxu0 0
        %5403 = vmatpush1.bf16.msra.mxu0 0
        %5404 = vmatprep.subr.bf16.mxu0 0
        %5405 = vmatpush1.bf16.msra.mxu0 0
        %5406 = vmatprep.subr.bf16.mxu0 0
        %5407 = vmatpush1.bf16.msra.mxu0 0
        %5408 = vmatprep.subr.bf16.mxu0 0
        %5409 = vmatpush1.bf16.msra.mxu0 0
        %5410 = vmatprep.subr.bf16.mxu0 0
        %5411 = vmatpush1.bf16.msra.mxu0 0
        %5412 = vmatprep.subr.bf16.mxu0 0
        %5413 = vmatpush1.bf16.msra.mxu0 0
        %5414 = vmatprep.subr.bf16.mxu0 0
        %5415 = vmatpush1.bf16.msra.mxu0 0
        %5416 = vmatprep.subr.bf16.mxu0 0
        %5417 = vmatpush1.bf16.msra.mxu0 0
        %5418 = vmatprep.subr.bf16.mxu0 0
        %5419 = vmatpush1.bf16.msra.mxu0 0
        %5420 = vmatprep.mubr.bf16.mxu0 0
        %5421 = vmatmul.mubr.bf16.gmra.mrb[0].mxu0 %v5383
        %v5422 = vpop.f32.mrb[0].mxu0
        %v5423 = vadd.f32 0.0, %v5422
        %v5424 = vpop.f32.mrb[0].mxu0
        %v5425 = vpop.f32.mrb[0].mxu0
        %v5426 = vpop.f32.mrb[0].mxu0
        %5427 = vdwg.mxu0
        %v5429 = vsel %vm2236, %v5367, 0
        %v5432 = vsel %vm2344, %v5375, 0
        %5434 = vmatprep.subr.bf16.mxu0 0
        %5435 = vmatpush1.bf16.msra.mxu0 %v5432
        %5436 = vmatprep.subr.bf16.mxu0 0
        %5437 = vmatpush1.bf16.msra.mxu0 0
        %5438 = vmatprep.subr.bf16.mxu0 0
        %5439 = vmatpush1.bf16.msra.mxu0 0
        %5440 = vmatprep.subr.bf16.mxu0 0
        %5441 = vmatpush1.bf16.msra.mxu0 0
        %5442 = vmatprep.subr.bf16.mxu0 0
        %5443 = vmatpush1.bf16.msra.mxu0 0
        %5444 = vmatprep.subr.bf16.mxu0 0
        %5445 = vmatpush1.bf16.msra.mxu0 0
        %5446 = vmatprep.subr.bf16.mxu0 0
        %5447 = vmatpush1.bf16.msra.mxu0 0
        %5448 = vmatprep.subr.bf16.mxu0 0
        %5449 = vmatpush1.bf16.msra.mxu0 0
        %5450 = vmatprep.subr.bf16.mxu0 0
        %5451 = vmatpush1.bf16.msra.mxu0 0
        %5452 = vmatprep.subr.bf16.mxu0 0
        %5453 = vmatpush1.bf16.msra.mxu0 0
        %5454 = vmatprep.subr.bf16.mxu0 0
        %5455 = vmatpush1.bf16.msra.mxu0 0
        %5456 = vmatprep.subr.bf16.mxu0 0
        %5457 = vmatpush1.bf16.msra.mxu0 0
        %5458 = vmatprep.subr.bf16.mxu0 0
        %5459 = vmatpush1.bf16.msra.mxu0 0
        %5460 = vmatprep.subr.bf16.mxu0 0
        %5461 = vmatpush1.bf16.msra.mxu0 0
        %5462 = vmatprep.subr.bf16.mxu0 0
        %5463 = vmatpush1.bf16.msra.mxu0 0
        %5464 = vmatprep.subr.bf16.mxu0 0
        %5465 = vmatpush1.bf16.msra.mxu0 0
        %5466 = vmatprep.mubr.bf16.mxu0 0
        %5467 = vmatmul.mubr.bf16.gmra.mrb[0].mxu0 %v5429
        %v5468 = vpop.f32.mrb[0].mxu0
        %v5469 = vadd.f32 0.0, %v5468
        %v5470 = vpop.f32.mrb[0].mxu0
        %v5471 = vpop.f32.mrb[0].mxu0
        %v5472 = vpop.f32.mrb[0].mxu0
        %5473 = vdwg.mxu0
        %v5475 = vsel %vm2236, %v5368, 0
        %v5478 = vsel %vm2344, %v5376, 0
        %5480 = vmatprep.subr.bf16.mxu0 0
        %5481 = vmatpush1.bf16.msra.mxu0 %v5478
        %5482 = vmatprep.subr.bf16.mxu0 0
        %5483 = vmatpush1.bf16.msra.mxu0 0
        %5484 = vmatprep.subr.bf16.mxu0 0
        %5485 = vmatpush1.bf16.msra.mxu0 0
        %5486 = vmatprep.subr.bf16.mxu0 0
        %5487 = vmatpush1.bf16.msra.mxu0 0
        %5488 = vmatprep.subr.bf16.mxu0 0
        %5489 = vmatpush1.bf16.msra.mxu0 0
        %5490 = vmatprep.subr.bf16.mxu0 0
        %5491 = vmatpush1.bf16.msra.mxu0 0
        %5492 = vmatprep.subr.bf16.mxu0 0
        %5493 = vmatpush1.bf16.msra.mxu0 0
        %5494 = vmatprep.subr.bf16.mxu0 0
        %5495 = vmatpush1.bf16.msra.mxu0 0
        %5496 = vmatprep.subr.bf16.mxu0 0
        %5497 = vmatpush1.bf16.msra.mxu0 0
        %5498 = vmatprep.subr.bf16.mxu0 0
        %5499 = vmatpush1.bf16.msra.mxu0 0
        %5500 = vmatprep.subr.bf16.mxu0 0
        %5501 = vmatpush1.bf16.msra.mxu0 0
        %5502 = vmatprep.subr.bf16.mxu0 0
        %5503 = vmatpush1.bf16.msra.mxu0 0
        %5504 = vmatprep.subr.bf16.mxu0 0
        %5505 = vmatpush1.bf16.msra.mxu0 0
        %5506 = vmatprep.subr.bf16.mxu0 0
        %5507 = vmatpush1.bf16.msra.mxu0 0
        %5508 = vmatprep.subr.bf16.mxu0 0
        %5509 = vmatpush1.bf16.msra.mxu0 0
        %5510 = vmatprep.subr.bf16.mxu0 0
        %5511 = vmatpush1.bf16.msra.mxu0 0
        %5512 = vmatprep.mubr.bf16.mxu0 0
        %5513 = vmatmul.mubr.bf16.gmra.mrb[0].mxu0 %v5475
        %v5514 = vpop.f32.mrb[0].mxu0
        %v5515 = vadd.f32 0.0, %v5514
        %v5516 = vpop.f32.mrb[0].mxu0
        %v5517 = vpop.f32.mrb[0].mxu0
        %v5518 = vpop.f32.mrb[0].mxu0
        %5519 = vdwg.mxu0
        %v5521 = vsel %vm2236, %v5369, 0
        %v5524 = vsel %vm2344, %v5377, 0
        %5526 = vmatprep.subr.bf16.mxu0 0
        %5527 = vmatpush1.bf16.msra.mxu0 %v5524
        %5528 = vmatprep.subr.bf16.mxu0 0
        %5529 = vmatpush1.bf16.msra.mxu0 0
        %5530 = vmatprep.subr.bf16.mxu0 0
        %5531 = vmatpush1.bf16.msra.mxu0 0
        %5532 = vmatprep.subr.bf16.mxu0 0
        %5533 = vmatpush1.bf16.msra.mxu0 0
        %5534 = vmatprep.subr.bf16.mxu0 0
        %5535 = vmatpush1.bf16.msra.mxu0 0
        %5536 = vmatprep.subr.bf16.mxu0 0
        %5537 = vmatpush1.bf16.msra.mxu0 0
        %5538 = vmatprep.subr.bf16.mxu0 0
        %5539 = vmatpush1.bf16.msra.mxu0 0
        %5540 = vmatprep.subr.bf16.mxu0 0
        %5541 = vmatpush1.bf16.msra.mxu0 0
        %5542 = vmatprep.subr.bf16.mxu0 0
        %5543 = vmatpush1.bf16.msra.mxu0 0
        %5544 = vmatprep.subr.bf16.mxu0 0
        %5545 = vmatpush1.bf16.msra.mxu0 0
        %5546 = vmatprep.subr.bf16.mxu0 0
        %5547 = vmatpush1.bf16.msra.mxu0 0
        %5548 = vmatprep.subr.bf16.mxu0 0
        %5549 = vmatpush1.bf16.msra.mxu0 0
        %5550 = vmatprep.subr.bf16.mxu0 0
        %5551 = vmatpush1.bf16.msra.mxu0 0
        %5552 = vmatprep.subr.bf16.mxu0 0
        %5553 = vmatpush1.bf16.msra.mxu0 0
        %5554 = vmatprep.subr.bf16.mxu0 0
        %5555 = vmatpush1.bf16.msra.mxu0 0
        %5556 = vmatprep.subr.bf16.mxu0 0
        %5557 = vmatpush1.bf16.msra.mxu0 0
        %5558 = vmatprep.mubr.bf16.mxu0 0
        %5559 = vmatmul.mubr.bf16.gmra.mrb[0].mxu0 %v5521
        %v5560 = vpop.f32.mrb[0].mxu0
        %v5561 = vadd.f32 0.0, %v5560
        %v5562 = vpop.f32.mrb[0].mxu0
        %v5563 = vpop.f32.mrb[0].mxu0
        %v5564 = vpop.f32.mrb[0].mxu0
        %5565 = vdwg.mxu0
        %v5567 = vsel %vm2236, %v5370, 0
        %v5570 = vsel %vm2344, %v5378, 0
        %5572 = vmatprep.subr.bf16.mxu0 0
        %5573 = vmatpush1.bf16.msra.mxu0 %v5570
        %5574 = vmatprep.subr.bf16.mxu0 0
        %5575 = vmatpush1.bf16.msra.mxu0 0
        %5576 = vmatprep.subr.bf16.mxu0 0
        %5577 = vmatpush1.bf16.msra.mxu0 0
        %5578 = vmatprep.subr.bf16.mxu0 0
        %5579 = vmatpush1.bf16.msra.mxu0 0
        %5580 = vmatprep.subr.bf16.mxu0 0
        %5581 = vmatpush1.bf16.msra.mxu0 0
        %5582 = vmatprep.subr.bf16.mxu0 0
        %5583 = vmatpush1.bf16.msra.mxu0 0
        %5584 = vmatprep.subr.bf16.mxu0 0
        %5585 = vmatpush1.bf16.msra.mxu0 0
        %5586 = vmatprep.subr.bf16.mxu0 0
        %5587 = vmatpush1.bf16.msra.mxu0 0
        %5588 = vmatprep.subr.bf16.mxu0 0
        %5589 = vmatpush1.bf16.msra.mxu0 0
        %5590 = vmatprep.subr.bf16.mxu0 0
        %5591 = vmatpush1.bf16.msra.mxu0 0
        %5592 = vmatprep.subr.bf16.mxu0 0
        %5593 = vmatpush1.bf16.msra.mxu0 0
        %5594 = vmatprep.subr.bf16.mxu0 0
        %5595 = vmatpush1.bf16.msra.mxu0 0
        %5596 = vmatprep.subr.bf16.mxu0 0
        %5597 = vmatpush1.bf16.msra.mxu0 0
        %5598 = vmatprep.subr.bf16.mxu0 0
        %5599 = vmatpush1.bf16.msra.mxu0 0
        %5600 = vmatprep.subr.bf16.mxu0 0
        %5601 = vmatpush1.bf16.msra.mxu0 0
        %5602 = vmatprep.subr.bf16.mxu0 0
        %5603 = vmatpush1.bf16.msra.mxu0 0
        %5604 = vmatprep.mubr.bf16.mxu0 0
        %5605 = vmatmul.mubr.bf16.gmra.mrb[0].mxu0 %v5567
        %v5606 = vpop.f32.mrb[0].mxu0
        %v5607 = vadd.f32 0.0, %v5606
        %v5608 = vpop.f32.mrb[0].mxu0
        %v5609 = vpop.f32.mrb[0].mxu0
        %v5610 = vpop.f32.mrb[0].mxu0
        %5611 = vdwg.mxu0
        %v5613 = vsel %vm2236, %v5371, 0
        %v5616 = vsel %vm2344, %v5379, 0
        %5618 = vmatprep.subr.bf16.mxu0 0
        %5619 = vmatpush1.bf16.msra.mxu0 %v5616
        %5620 = vmatprep.subr.bf16.mxu0 0
        %5621 = vmatpush1.bf16.msra.mxu0 0
        %5622 = vmatprep.subr.bf16.mxu0 0
        %5623 = vmatpush1.bf16.msra.mxu0 0
        %5624 = vmatprep.subr.bf16.mxu0 0
        %5625 = vmatpush1.bf16.msra.mxu0 0
        %5626 = vmatprep.subr.bf16.mxu0 0
        %5627 = vmatpush1.bf16.msra.mxu0 0
        %5628 = vmatprep.subr.bf16.mxu0 0
        %5629 = vmatpush1.bf16.msra.mxu0 0
        %5630 = vmatprep.subr.bf16.mxu0 0
        %5631 = vmatpush1.bf16.msra.mxu0 0
        %5632 = vmatprep.subr.bf16.mxu0 0
        %5633 = vmatpush1.bf16.msra.mxu0 0
        %5634 = vmatprep.subr.bf16.mxu0 0
        %5635 = vmatpush1.bf16.msra.mxu0 0
        %5636 = vmatprep.subr.bf16.mxu0 0
        %5637 = vmatpush1.bf16.msra.mxu0 0
        %5638 = vmatprep.subr.bf16.mxu0 0
        %5639 = vmatpush1.bf16.msra.mxu0 0
        %5640 = vmatprep.subr.bf16.mxu0 0
        %5641 = vmatpush1.bf16.msra.mxu0 0
        %5642 = vmatprep.subr.bf16.mxu0 0
        %5643 = vmatpush1.bf16.msra.mxu0 0
        %5644 = vmatprep.subr.bf16.mxu0 0
        %5645 = vmatpush1.bf16.msra.mxu0 0
        %5646 = vmatprep.subr.bf16.mxu0 0
        %5647 = vmatpush1.bf16.msra.mxu0 0
        %5648 = vmatprep.subr.bf16.mxu0 0
        %5649 = vmatpush1.bf16.msra.mxu0 0
        %5650 = vmatprep.mubr.bf16.mxu0 0
        %5651 = vmatmul.mubr.bf16.gmra.mrb[0].mxu0 %v5613
        %v5652 = vpop.f32.mrb[0].mxu0
        %v5653 = vadd.f32 0.0, %v5652
        %v5654 = vpop.f32.mrb[0].mxu0
        %v5655 = vpop.f32.mrb[0].mxu0
        %v5656 = vpop.f32.mrb[0].mxu0
        %5657 = vdwg.mxu0
        %v5659 = vsel %vm2236, %v5372, 0
        %v5662 = vsel %vm2344, %v5380, 0
        %5664 = vmatprep.subr.bf16.mxu0 0
        %5665 = vmatpush1.bf16.msra.mxu0 %v5662
        %5666 = vmatprep.subr.bf16.mxu0 0
        %5667 = vmatpush1.bf16.msra.mxu0 0
        %5668 = vmatprep.subr.bf16.mxu0 0
        %5669 = vmatpush1.bf16.msra.mxu0 0
        %5670 = vmatprep.subr.bf16.mxu0 0
        %5671 = vmatpush1.bf16.msra.mxu0 0
        %5672 = vmatprep.subr.bf16.mxu0 0
        %5673 = vmatpush1.bf16.msra.mxu0 0
        %5674 = vmatprep.subr.bf16.mxu0 0
        %5675 = vmatpush1.bf16.msra.mxu0 0
        %5676 = vmatprep.subr.bf16.mxu0 0
        %5677 = vmatpush1.bf16.msra.mxu0 0
        %5678 = vmatprep.subr.bf16.mxu0 0
        %5679 = vmatpush1.bf16.msra.mxu0 0
        %5680 = vmatprep.subr.bf16.mxu0 0
        %5681 = vmatpush1.bf16.msra.mxu0 0
        %5682 = vmatprep.subr.bf16.mxu0 0
        %5683 = vmatpush1.bf16.msra.mxu0 0
        %5684 = vmatprep.subr.bf16.mxu0 0
        %5685 = vmatpush1.bf16.msra.mxu0 0
        %5686 = vmatprep.subr.bf16.mxu0 0
        %5687 = vmatpush1.bf16.msra.mxu0 0
        %5688 = vmatprep.subr.bf16.mxu0 0
        %5689 = vmatpush1.bf16.msra.mxu0 0
        %5690 = vmatprep.subr.bf16.mxu0 0
        %5691 = vmatpush1.bf16.msra.mxu0 0
        %5692 = vmatprep.subr.bf16.mxu0 0
        %5693 = vmatpush1.bf16.msra.mxu0 0
        %5694 = vmatprep.subr.bf16.mxu0 0
        %5695 = vmatpush1.bf16.msra.mxu0 0
        %5696 = vmatprep.mubr.bf16.mxu0 0
        %5697 = vmatmul.mubr.bf16.gmra.mrb[0].mxu0 %v5659
        %v5698 = vpop.f32.mrb[0].mxu0
        %v5699 = vadd.f32 0.0, %v5698
        %v5700 = vpop.f32.mrb[0].mxu0
        %v5701 = vpop.f32.mrb[0].mxu0
        %v5702 = vpop.f32.mrb[0].mxu0
        %5703 = vdwg.mxu0
        %v5705 = vsel %vm2236, %v5373, 0
        %v5708 = vsel %vm2344, %v5381, 0
        %5710 = vmatprep.subr.bf16.mxu0 0
        %5711 = vmatpush1.bf16.msra.mxu0 %v5708
        %5712 = vmatprep.subr.bf16.mxu0 0
        %5713 = vmatpush1.bf16.msra.mxu0 0
        %5714 = vmatprep.subr.bf16.mxu0 0
        %5715 = vmatpush1.bf16.msra.mxu0 0
        %5716 = vmatprep.subr.bf16.mxu0 0
        %5717 = vmatpush1.bf16.msra.mxu0 0
        %5718 = vmatprep.subr.bf16.mxu0 0
        %5719 = vmatpush1.bf16.msra.mxu0 0
        %5720 = vmatprep.subr.bf16.mxu0 0
        %5721 = vmatpush1.bf16.msra.mxu0 0
        %5722 = vmatprep.subr.bf16.mxu0 0
        %5723 = vmatpush1.bf16.msra.mxu0 0
        %5724 = vmatprep.subr.bf16.mxu0 0
        %5725 = vmatpush1.bf16.msra.mxu0 0
        %5726 = vmatprep.subr.bf16.mxu0 0
        %5727 = vmatpush1.bf16.msra.mxu0 0
        %5728 = vmatprep.subr.bf16.mxu0 0
        %5729 = vmatpush1.bf16.msra.mxu0 0
        %5730 = vmatprep.subr.bf16.mxu0 0
        %5731 = vmatpush1.bf16.msra.mxu0 0
        %5732 = vmatprep.subr.bf16.mxu0 0
        %5733 = vmatpush1.bf16.msra.mxu0 0
        %5734 = vmatprep.subr.bf16.mxu0 0
        %5735 = vmatpush1.bf16.msra.mxu0 0
        %5736 = vmatprep.subr.bf16.mxu0 0
        %5737 = vmatpush1.bf16.msra.mxu0 0
        %5738 = vmatprep.subr.bf16.mxu0 0
        %5739 = vmatpush1.bf16.msra.mxu0 0
        %5740 = vmatprep.subr.bf16.mxu0 0
        %5741 = vmatpush1.bf16.msra.mxu0 0
        %5742 = vmatprep.mubr.bf16.mxu0 0
        %5743 = vmatmul.mubr.bf16.gmra.mrb[0].mxu0 %v5705
        %v5744 = vpop.f32.mrb[0].mxu0
        %v5745 = vadd.f32 0.0, %v5744
        %v5746 = vpop.f32.mrb[0].mxu0
        %v5747 = vpop.f32.mrb[0].mxu0
        %v5748 = vpop.f32.mrb[0].mxu0
        %5749 = vdwg.mxu0
        %v5750 = vpack.c.bf16 %v5423, %v5423
        %v5751 = vpack.c.bf16 %v5469, %v5469
        %v5752 = vpack.c.bf16 %v5515, %v5515
        %v5753 = vpack.c.bf16 %v5561, %v5561
        %v5754 = vpack.c.bf16 %v5607, %v5607
        %v5755 = vpack.c.bf16 %v5653, %v5653
        %v5756 = vpack.c.bf16 %v5699, %v5699
        %v5757 = vpack.c.bf16 %v5745, %v5745
        %v5759 = vsel %vm1859, %v5750, 0
        %v5762 = vsel %vm2721, %v3622, 0
        %5764 = vmatprep.subr.bf16.mxu0 0
        %5765 = vmatpush1.bf16.msra.mxu0 %v5762
        %5766 = vmatprep.subr.bf16.mxu0 0
        %5767 = vmatpush1.bf16.msra.mxu0 0
        %5768 = vmatprep.subr.bf16.mxu0 0
        %5769 = vmatpush1.bf16.msra.mxu0 0
        %5770 = vmatprep.subr.bf16.mxu0 0
        %5771 = vmatpush1.bf16.msra.mxu0 0
        %5772 = vmatprep.subr.bf16.mxu0 0
        %5773 = vmatpush1.bf16.msra.mxu0 0
        %5774 = vmatprep.subr.bf16.mxu0 0
        %5775 = vmatpush1.bf16.msra.mxu0 0
        %5776 = vmatprep.subr.bf16.mxu0 0
        %5777 = vmatpush1.bf16.msra.mxu0 0
        %5778 = vmatprep.subr.bf16.mxu0 0
        %5779 = vmatpush1.bf16.msra.mxu0 0
        %5780 = vmatprep.subr.bf16.mxu0 0
        %5781 = vmatpush1.bf16.msra.mxu0 0
        %5782 = vmatprep.subr.bf16.mxu0 0
        %5783 = vmatpush1.bf16.msra.mxu0 0
        %5784 = vmatprep.subr.bf16.mxu0 0
        %5785 = vmatpush1.bf16.msra.mxu0 0
        %5786 = vmatprep.subr.bf16.mxu0 0
        %5787 = vmatpush1.bf16.msra.mxu0 0
        %5788 = vmatprep.subr.bf16.mxu0 0
        %5789 = vmatpush1.bf16.msra.mxu0 0
        %5790 = vmatprep.subr.bf16.mxu0 0
        %5791 = vmatpush1.bf16.msra.mxu0 0
        %5792 = vmatprep.subr.bf16.mxu0 0
        %5793 = vmatpush1.bf16.msra.mxu0 0
        %5794 = vmatprep.subr.bf16.mxu0 0
        %5795 = vmatpush1.bf16.msra.mxu0 0
        %5796 = vmatprep.mubr.bf16.mxu0 0
        %5797 = vmatmul.mubr.bf16.gmra.mrb[0].mxu0 %v5759
        %v5798 = vpop.f32.mrb[0].mxu0
        %v5799 = vadd.f32 0.0, %v5798
        %v5800 = vpop.f32.mrb[0].mxu0
        %v5801 = vpop.f32.mrb[0].mxu0
        %v5802 = vpop.f32.mrb[0].mxu0
        %5803 = vdwg.mxu0
        %v5805 = vsel %vm1859, %v5751, 0
        %v5808 = vsel %vm2721, %v3623, 0
        %5810 = vmatprep.subr.bf16.mxu0 0
        %5811 = vmatpush1.bf16.msra.mxu0 %v5808
        %5812 = vmatprep.subr.bf16.mxu0 0
        %5813 = vmatpush1.bf16.msra.mxu0 0
        %5814 = vmatprep.subr.bf16.mxu0 0
        %5815 = vmatpush1.bf16.msra.mxu0 0
        %5816 = vmatprep.subr.bf16.mxu0 0
        %5817 = vmatpush1.bf16.msra.mxu0 0
        %5818 = vmatprep.subr.bf16.mxu0 0
        %5819 = vmatpush1.bf16.msra.mxu0 0
        %5820 = vmatprep.subr.bf16.mxu0 0
        %5821 = vmatpush1.bf16.msra.mxu0 0
        %5822 = vmatprep.subr.bf16.mxu0 0
        %5823 = vmatpush1.bf16.msra.mxu0 0
        %5824 = vmatprep.subr.bf16.mxu0 0
        %5825 = vmatpush1.bf16.msra.mxu0 0
        %5826 = vmatprep.subr.bf16.mxu0 0
        %5827 = vmatpush1.bf16.msra.mxu0 0
        %5828 = vmatprep.subr.bf16.mxu0 0
        %5829 = vmatpush1.bf16.msra.mxu0 0
        %5830 = vmatprep.subr.bf16.mxu0 0
        %5831 = vmatpush1.bf16.msra.mxu0 0
        %5832 = vmatprep.subr.bf16.mxu0 0
        %5833 = vmatpush1.bf16.msra.mxu0 0
        %5834 = vmatprep.subr.bf16.mxu0 0
        %5835 = vmatpush1.bf16.msra.mxu0 0
        %5836 = vmatprep.subr.bf16.mxu0 0
        %5837 = vmatpush1.bf16.msra.mxu0 0
        %5838 = vmatprep.subr.bf16.mxu0 0
        %5839 = vmatpush1.bf16.msra.mxu0 0
        %5840 = vmatprep.subr.bf16.mxu0 0
        %5841 = vmatpush1.bf16.msra.mxu0 0
        %5842 = vmatprep.mubr.bf16.mxu0 0
        %5843 = vmatmul.mubr.bf16.gmra.mrb[0].mxu0 %v5805
        %v5844 = vpop.f32.mrb[0].mxu0
        %v5845 = vadd.f32 0.0, %v5844
        %v5846 = vpop.f32.mrb[0].mxu0
        %v5847 = vpop.f32.mrb[0].mxu0
        %v5848 = vpop.f32.mrb[0].mxu0
        %5849 = vdwg.mxu0
        %v5851 = vsel %vm1859, %v5752, 0
        %v5854 = vsel %vm2721, %v3624, 0
        %5856 = vmatprep.subr.bf16.mxu0 0
        %5857 = vmatpush1.bf16.msra.mxu0 %v5854
        %5858 = vmatprep.subr.bf16.mxu0 0
        %5859 = vmatpush1.bf16.msra.mxu0 0
        %5860 = vmatprep.subr.bf16.mxu0 0
        %5861 = vmatpush1.bf16.msra.mxu0 0
        %5862 = vmatprep.subr.bf16.mxu0 0
        %5863 = vmatpush1.bf16.msra.mxu0 0
        %5864 = vmatprep.subr.bf16.mxu0 0
        %5865 = vmatpush1.bf16.msra.mxu0 0
        %5866 = vmatprep.subr.bf16.mxu0 0
        %5867 = vmatpush1.bf16.msra.mxu0 0
        %5868 = vmatprep.subr.bf16.mxu0 0
        %5869 = vmatpush1.bf16.msra.mxu0 0
        %5870 = vmatprep.subr.bf16.mxu0 0
        %5871 = vmatpush1.bf16.msra.mxu0 0
        %5872 = vmatprep.subr.bf16.mxu0 0
        %5873 = vmatpush1.bf16.msra.mxu0 0
        %5874 = vmatprep.subr.bf16.mxu0 0
        %5875 = vmatpush1.bf16.msra.mxu0 0
        %5876 = vmatprep.subr.bf16.mxu0 0
        %5877 = vmatpush1.bf16.msra.mxu0 0
        %5878 = vmatprep.subr.bf16.mxu0 0
        %5879 = vmatpush1.bf16.msra.mxu0 0
        %5880 = vmatprep.subr.bf16.mxu0 0
        %5881 = vmatpush1.bf16.msra.mxu0 0
        %5882 = vmatprep.subr.bf16.mxu0 0
        %5883 = vmatpush1.bf16.msra.mxu0 0
        %5884 = vmatprep.subr.bf16.mxu0 0
        %5885 = vmatpush1.bf16.msra.mxu0 0
        %5886 = vmatprep.subr.bf16.mxu0 0
        %5887 = vmatpush1.bf16.msra.mxu0 0
        %5888 = vmatprep.mubr.bf16.mxu0 0
        %5889 = vmatmul.mubr.bf16.gmra.mrb[0].mxu0 %v5851
        %v5890 = vpop.f32.mrb[0].mxu0
        %v5891 = vadd.f32 0.0, %v5890
        %v5892 = vpop.f32.mrb[0].mxu0
        %v5893 = vpop.f32.mrb[0].mxu0
        %v5894 = vpop.f32.mrb[0].mxu0
        %5895 = vdwg.mxu0
        %v5897 = vsel %vm1859, %v5753, 0
        %v5900 = vsel %vm2721, %v3625, 0
        %5902 = vmatprep.subr.bf16.mxu0 0
        %5903 = vmatpush1.bf16.msra.mxu0 %v5900
        %5904 = vmatprep.subr.bf16.mxu0 0
        %5905 = vmatpush1.bf16.msra.mxu0 0
        %5906 = vmatprep.subr.bf16.mxu0 0
        %5907 = vmatpush1.bf16.msra.mxu0 0
        %5908 = vmatprep.subr.bf16.mxu0 0
        %5909 = vmatpush1.bf16.msra.mxu0 0
        %5910 = vmatprep.subr.bf16.mxu0 0
        %5911 = vmatpush1.bf16.msra.mxu0 0
        %5912 = vmatprep.subr.bf16.mxu0 0
        %5913 = vmatpush1.bf16.msra.mxu0 0
        %5914 = vmatprep.subr.bf16.mxu0 0
        %5915 = vmatpush1.bf16.msra.mxu0 0
        %5916 = vmatprep.subr.bf16.mxu0 0
        %5917 = vmatpush1.bf16.msra.mxu0 0
        %5918 = vmatprep.subr.bf16.mxu0 0
        %5919 = vmatpush1.bf16.msra.mxu0 0
        %5920 = vmatprep.subr.bf16.mxu0 0
        %5921 = vmatpush1.bf16.msra.mxu0 0
        %5922 = vmatprep.subr.bf16.mxu0 0
        %5923 = vmatpush1.bf16.msra.mxu0 0
        %5924 = vmatprep.subr.bf16.mxu0 0
        %5925 = vmatpush1.bf16.msra.mxu0 0
        %5926 = vmatprep.subr.bf16.mxu0 0
        %5927 = vmatpush1.bf16.msra.mxu0 0
        %5928 = vmatprep.subr.bf16.mxu0 0
        %5929 = vmatpush1.bf16.msra.mxu0 0
        %5930 = vmatprep.subr.bf16.mxu0 0
        %5931 = vmatpush1.bf16.msra.mxu0 0
        %5932 = vmatprep.subr.bf16.mxu0 0
        %5933 = vmatpush1.bf16.msra.mxu0 0
        %5934 = vmatprep.mubr.bf16.mxu0 0
        %5935 = vmatmul.mubr.bf16.gmra.mrb[0].mxu0 %v5897
        %v5936 = vpop.f32.mrb[0].mxu0
        %v5937 = vadd.f32 0.0, %v5936
        %v5938 = vpop.f32.mrb[0].mxu0
        %v5939 = vpop.f32.mrb[0].mxu0
        %v5940 = vpop.f32.mrb[0].mxu0
        %5941 = vdwg.mxu0
        %v5943 = vsel %vm1859, %v5754, 0
        %v5946 = vsel %vm2721, %v3626, 0
        %5948 = vmatprep.subr.bf16.mxu0 0
        %5949 = vmatpush1.bf16.msra.mxu0 %v5946
        %5950 = vmatprep.subr.bf16.mxu0 0
        %5951 = vmatpush1.bf16.msra.mxu0 0
        %5952 = vmatprep.subr.bf16.mxu0 0
        %5953 = vmatpush1.bf16.msra.mxu0 0
        %5954 = vmatprep.subr.bf16.mxu0 0
        %5955 = vmatpush1.bf16.msra.mxu0 0
        %5956 = vmatprep.subr.bf16.mxu0 0
        %5957 = vmatpush1.bf16.msra.mxu0 0
        %5958 = vmatprep.subr.bf16.mxu0 0
        %5959 = vmatpush1.bf16.msra.mxu0 0
        %5960 = vmatprep.subr.bf16.mxu0 0
        %5961 = vmatpush1.bf16.msra.mxu0 0
        %5962 = vmatprep.subr.bf16.mxu0 0
        %5963 = vmatpush1.bf16.msra.mxu0 0
        %5964 = vmatprep.subr.bf16.mxu0 0
        %5965 = vmatpush1.bf16.msra.mxu0 0
        %5966 = vmatprep.subr.bf16.mxu0 0
        %5967 = vmatpush1.bf16.msra.mxu0 0
        %5968 = vmatprep.subr.bf16.mxu0 0
        %5969 = vmatpush1.bf16.msra.mxu0 0
        %5970 = vmatprep.subr.bf16.mxu0 0
        %5971 = vmatpush1.bf16.msra.mxu0 0
        %5972 = vmatprep.subr.bf16.mxu0 0
        %5973 = vmatpush1.bf16.msra.mxu0 0
        %5974 = vmatprep.subr.bf16.mxu0 0
        %5975 = vmatpush1.bf16.msra.mxu0 0
        %5976 = vmatprep.subr.bf16.mxu0 0
        %5977 = vmatpush1.bf16.msra.mxu0 0
        %5978 = vmatprep.subr.bf16.mxu0 0
        %5979 = vmatpush1.bf16.msra.mxu0 0
        %5980 = vmatprep.mubr.bf16.mxu0 0
        %5981 = vmatmul.mubr.bf16.gmra.mrb[0].mxu0 %v5943
        %v5982 = vpop.f32.mrb[0].mxu0
        %v5983 = vadd.f32 0.0, %v5982
        %v5984 = vpop.f32.mrb[0].mxu0
        %v5985 = vpop.f32.mrb[0].mxu0
        %v5986 = vpop.f32.mrb[0].mxu0
        %5987 = vdwg.mxu0
        %v5989 = vsel %vm1859, %v5755, 0
        %v5992 = vsel %vm2721, %v3627, 0
        %5994 = vmatprep.subr.bf16.mxu0 0
        %5995 = vmatpush1.bf16.msra.mxu0 %v5992
        %5996 = vmatprep.subr.bf16.mxu0 0
        %5997 = vmatpush1.bf16.msra.mxu0 0
        %5998 = vmatprep.subr.bf16.mxu0 0
        %5999 = vmatpush1.bf16.msra.mxu0 0
        %6000 = vmatprep.subr.bf16.mxu0 0
        %6001 = vmatpush1.bf16.msra.mxu0 0
        %6002 = vmatprep.subr.bf16.mxu0 0
        %6003 = vmatpush1.bf16.msra.mxu0 0
        %6004 = vmatprep.subr.bf16.mxu0 0
        %6005 = vmatpush1.bf16.msra.mxu0 0
        %6006 = vmatprep.subr.bf16.mxu0 0
        %6007 = vmatpush1.bf16.msra.mxu0 0
        %6008 = vmatprep.subr.bf16.mxu0 0
        %6009 = vmatpush1.bf16.msra.mxu0 0
        %6010 = vmatprep.subr.bf16.mxu0 0
        %6011 = vmatpush1.bf16.msra.mxu0 0
        %6012 = vmatprep.subr.bf16.mxu0 0
        %6013 = vmatpush1.bf16.msra.mxu0 0
        %6014 = vmatprep.subr.bf16.mxu0 0
        %6015 = vmatpush1.bf16.msra.mxu0 0
        %6016 = vmatprep.subr.bf16.mxu0 0
        %6017 = vmatpush1.bf16.msra.mxu0 0
        %6018 = vmatprep.subr.bf16.mxu0 0
        %6019 = vmatpush1.bf16.msra.mxu0 0
        %6020 = vmatprep.subr.bf16.mxu0 0
        %6021 = vmatpush1.bf16.msra.mxu0 0
        %6022 = vmatprep.subr.bf16.mxu0 0
        %6023 = vmatpush1.bf16.msra.mxu0 0
        %6024 = vmatprep.subr.bf16.mxu0 0
        %6025 = vmatpush1.bf16.msra.mxu0 0
        %6026 = vmatprep.mubr.bf16.mxu0 0
        %6027 = vmatmul.mubr.bf16.gmra.mrb[0].mxu0 %v5989
        %v6028 = vpop.f32.mrb[0].mxu0
        %v6029 = vadd.f32 0.0, %v6028
        %v6030 = vpop.f32.mrb[0].mxu0
        %v6031 = vpop.f32.mrb[0].mxu0
        %v6032 = vpop.f32.mrb[0].mxu0
        %6033 = vdwg.mxu0
        %v6035 = vsel %vm1859, %v5756, 0
        %v6038 = vsel %vm2721, %v3628, 0
        %6040 = vmatprep.subr.bf16.mxu0 0
        %6041 = vmatpush1.bf16.msra.mxu0 %v6038
        %6042 = vmatprep.subr.bf16.mxu0 0
        %6043 = vmatpush1.bf16.msra.mxu0 0
        %6044 = vmatprep.subr.bf16.mxu0 0
        %6045 = vmatpush1.bf16.msra.mxu0 0
        %6046 = vmatprep.subr.bf16.mxu0 0
        %6047 = vmatpush1.bf16.msra.mxu0 0
        %6048 = vmatprep.subr.bf16.mxu0 0
        %6049 = vmatpush1.bf16.msra.mxu0 0
        %6050 = vmatprep.subr.bf16.mxu0 0
        %6051 = vmatpush1.bf16.msra.mxu0 0
        %6052 = vmatprep.subr.bf16.mxu0 0
        %6053 = vmatpush1.bf16.msra.mxu0 0
        %6054 = vmatprep.subr.bf16.mxu0 0
        %6055 = vmatpush1.bf16.msra.mxu0 0
        %6056 = vmatprep.subr.bf16.mxu0 0
        %6057 = vmatpush1.bf16.msra.mxu0 0
        %6058 = vmatprep.subr.bf16.mxu0 0
        %6059 = vmatpush1.bf16.msra.mxu0 0
        %6060 = vmatprep.subr.bf16.mxu0 0
        %6061 = vmatpush1.bf16.msra.mxu0 0
        %6062 = vmatprep.subr.bf16.mxu0 0
        %6063 = vmatpush1.bf16.msra.mxu0 0
        %6064 = vmatprep.subr.bf16.mxu0 0
        %6065 = vmatpush1.bf16.msra.mxu0 0
        %6066 = vmatprep.subr.bf16.mxu0 0
        %6067 = vmatpush1.bf16.msra.mxu0 0
        %6068 = vmatprep.subr.bf16.mxu0 0
        %6069 = vmatpush1.bf16.msra.mxu0 0
        %6070 = vmatprep.subr.bf16.mxu0 0
        %6071 = vmatpush1.bf16.msra.mxu0 0
        %6072 = vmatprep.mubr.bf16.mxu0 0
        %6073 = vmatmul.mubr.bf16.gmra.mrb[0].mxu0 %v6035
        %v6074 = vpop.f32.mrb[0].mxu0
        %v6075 = vadd.f32 0.0, %v6074
        %v6076 = vpop.f32.mrb[0].mxu0
        %v6077 = vpop.f32.mrb[0].mxu0
        %v6078 = vpop.f32.mrb[0].mxu0
        %6079 = vdwg.mxu0
        %v6081 = vsel %vm1859, %v5757, 0
        %v6084 = vsel %vm2721, %v3629, 0
        %6086 = vmatprep.subr.bf16.mxu0 0
        %6087 = vmatpush1.bf16.msra.mxu0 %v6084
        %6088 = vmatprep.subr.bf16.mxu0 0
        %6089 = vmatpush1.bf16.msra.mxu0 0
        %6090 = vmatprep.subr.bf16.mxu0 0
        %6091 = vmatpush1.bf16.msra.mxu0 0
        %6092 = vmatprep.subr.bf16.mxu0 0
        %6093 = vmatpush1.bf16.msra.mxu0 0
        %6094 = vmatprep.subr.bf16.mxu0 0
        %6095 = vmatpush1.bf16.msra.mxu0 0
        %6096 = vmatprep.subr.bf16.mxu0 0
        %6097 = vmatpush1.bf16.msra.mxu0 0
        %6098 = vmatprep.subr.bf16.mxu0 0
        %6099 = vmatpush1.bf16.msra.mxu0 0
        %6100 = vmatprep.subr.bf16.mxu0 0
        %6101 = vmatpush1.bf16.msra.mxu0 0
        %6102 = vmatprep.subr.bf16.mxu0 0
        %6103 = vmatpush1.bf16.msra.mxu0 0
        %6104 = vmatprep.subr.bf16.mxu0 0
        %6105 = vmatpush1.bf16.msra.mxu0 0
        %6106 = vmatprep.subr.bf16.mxu0 0
        %6107 = vmatpush1.bf16.msra.mxu0 0
        %6108 = vmatprep.subr.bf16.mxu0 0
        %6109 = vmatpush1.bf16.msra.mxu0 0
        %6110 = vmatprep.subr.bf16.mxu0 0
        %6111 = vmatpush1.bf16.msra.mxu0 0
        %6112 = vmatprep.subr.bf16.mxu0 0
        %6113 = vmatpush1.bf16.msra.mxu0 0
        %6114 = vmatprep.subr.bf16.mxu0 0
        %6115 = vmatpush1.bf16.msra.mxu0 0
        %6116 = vmatprep.subr.bf16.mxu0 0
        %6117 = vmatpush1.bf16.msra.mxu0 0
        %6118 = vmatprep.mubr.bf16.mxu0 0
        %6119 = vmatmul.mubr.bf16.gmra.mrb[0].mxu0 %v6081
        %v6120 = vpop.f32.mrb[0].mxu0
        %v6121 = vadd.f32 0.0, %v6120
        %v6122 = vpop.f32.mrb[0].mxu0
        %v6123 = vpop.f32.mrb[0].mxu0
        %v6124 = vpop.f32.mrb[0].mxu0
        %6125 = vdwg.mxu0
        %v6126 = vadd.f32 %v5799, %v5845
        %v6127 = vadd.f32 %v6126, %v5891
        %v6128 = vadd.f32 %v6127, %v5937
        %v6129 = vadd.f32 %v6128, %v5983
        %v6130 = vadd.f32 %v6129, %v6029
        %v6131 = vadd.f32 %v6130, %v6075
        %v6132 = vadd.f32 %v6131, %v6121
        %v6133 = vlaneseq
        %v6134 = vshrl.u32 %v6133, 7
        %v6135 = vsub.s32 3, %v6134
        %v6136 = vrot.slane %v459, %v6135
        %v6137 = vadd.f32 %v6132, %v6136
        %s6138 = scalar_lea.vmem %s6, 64
        %v6139 = vld [vmem:[%s6138] sm:$0xf]
        %v6140 = vld [vmem:[%s6138 + $0x4] sm:$0xf]
        %v6141 = vld [vmem:[%s6138 + $0x8] sm:$0xf]
        %v6142 = vld [vmem:[%s6138 + $0xc] sm:$0xf]
        %s6143 = scalar_lea.vmem %s6, 80
        %v6144 = vld [vmem:[%s6143] sm:$0xf]
        %v6145 = vld [vmem:[%s6143 + $0x4] sm:$0xf]
        %v6146 = vld [vmem:[%s6143 + $0x8] sm:$0xf]
        %v6147 = vld [vmem:[%s6143 + $0xc] sm:$0xf]
        %v6152 = vunpack.c.l.b16 %v6139
        %v6153 = vunpack.c.l.b16 %v6140
        %v6154 = vunpack.c.l.b16 %v6141
        %v6155 = vunpack.c.l.b16 %v6142
        %v6156 = vpack.c.b16 %v6153, %v6152
        %v6157 = vpack.c.b16 %v6155, %v6154
        %6160 = vmatprep.subr.bf16.mxu0 0
        %6161 = vmatpush1.bf16.msra.mxu0 %v6156
        %6162 = vmatprep.subr.bf16.mxu0 0
        %6163 = vmatpush1.bf16.msra.mxu0 %v6157
        %6164 = vmatprep.subr.bf16.mxu0 0
        %6165 = vmatpush1.bf16.msra.mxu0 0
        %6166 = vmatprep.subr.bf16.mxu0 0
        %6167 = vmatpush1.bf16.msra.mxu0 0
        %6168 = vmatprep.subr.bf16.mxu0 0
        %6169 = vmatpush1.bf16.msra.mxu0 0
        %6170 = vmatprep.subr.bf16.mxu0 0
        %6171 = vmatpush1.bf16.msra.mxu0 0
        %6172 = vmatprep.subr.bf16.mxu0 0
        %6173 = vmatpush1.bf16.msra.mxu0 0
        %6174 = vmatprep.subr.bf16.mxu0 0
        %6175 = vmatpush1.bf16.msra.mxu0 0
        %6176 = vmatprep.subr.bf16.mxu0 0
        %6177 = vmatpush1.bf16.msra.mxu0 0
        %6178 = vmatprep.subr.bf16.mxu0 0
        %6179 = vmatpush1.bf16.msra.mxu0 0
        %6180 = vmatprep.subr.bf16.mxu0 0
        %6181 = vmatpush1.bf16.msra.mxu0 0
        %6182 = vmatprep.subr.bf16.mxu0 0
        %6183 = vmatpush1.bf16.msra.mxu0 0
        %6184 = vmatprep.subr.bf16.mxu0 0
        %6185 = vmatpush1.bf16.msra.mxu0 0
        %6186 = vmatprep.subr.bf16.mxu0 0
        %6187 = vmatpush1.bf16.msra.mxu0 0
        %6188 = vmatprep.subr.bf16.mxu0 0
        %6189 = vmatpush1.bf16.msra.mxu0 0
        %6190 = vmatprep.subr.bf16.mxu0 0
        %6191 = vmatpush1.bf16.msra.mxu0 0
        %6192 = vmatprep.mubr.bf16.mxu0 0
        %6193 = vmatmul.mubr.bf16.gmra.mrb[0].mxu0 %v4064
        %v6194 = vpop.f32.mrb[0].mxu0
        %v6195 = vadd.f32 0.0, %v6194
        %v6196 = vpop.f32.mrb[0].mxu0
        %v6197 = vpop.f32.mrb[0].mxu0
        %v6198 = vpop.f32.mrb[0].mxu0
        %6199 = vdwg.mxu0
        %v6200 = vpack.c.bf16 %v6195, %v6195
        %v6209 = vunpack.c.l.b16 %v450
        %v6210 = vunpack.c.l.b16 %v451
        %v6211 = vunpack.c.l.b16 %v452
        %v6212 = vunpack.c.l.b16 %v453
        %v6213 = vunpack.c.l.b16 %v454
        %v6214 = vunpack.c.l.b16 %v455
        %v6215 = vunpack.c.l.b16 %v456
        %v6216 = vunpack.c.l.b16 %v457
        %v6217 = vpack.c.b16 %v6210, %v6209
        %v6218 = vpack.c.b16 %v6212, %v6211
        %v6219 = vpack.c.b16 %v6214, %v6213
        %v6220 = vpack.c.b16 %v6216, %v6215
        %v6222 = vsel %vm2236, %v6217, 0
        %v6225 = vsel %vm2236, %v6218, 0
        %v6228 = vsel %vm2236, %v6219, 0
        %v6231 = vsel %vm2236, %v6220, 0
        %v6234 = vsel %vm2344, %v6200, 0
        %6236 = vmatprep.subr.bf16.mxu0 0
        %6237 = vmatpush1.bf16.msra.mxu0 %v6234
        %6238 = vmatprep.subr.bf16.mxu0 0
        %6239 = vmatpush1.bf16.msra.mxu0 0
        %6240 = vmatprep.subr.bf16.mxu0 0
        %6241 = vmatpush1.bf16.msra.mxu0 0
        %6242 = vmatprep.subr.bf16.mxu0 0
        %6243 = vmatpush1.bf16.msra.mxu0 0
        %6244 = vmatprep.subr.bf16.mxu0 0
        %6245 = vmatpush1.bf16.msra.mxu0 0
        %6246 = vmatprep.subr.bf16.mxu0 0
        %6247 = vmatpush1.bf16.msra.mxu0 0
        %6248 = vmatprep.subr.bf16.mxu0 0
        %6249 = vmatpush1.bf16.msra.mxu0 0
        %6250 = vmatprep.subr.bf16.mxu0 0
        %6251 = vmatpush1.bf16.msra.mxu0 0
        %6252 = vmatprep.subr.bf16.mxu0 0
        %6253 = vmatpush1.bf16.msra.mxu0 0
        %6254 = vmatprep.subr.bf16.mxu0 0
        %6255 = vmatpush1.bf16.msra.mxu0 0
        %6256 = vmatprep.subr.bf16.mxu0 0
        %6257 = vmatpush1.bf16.msra.mxu0 0
        %6258 = vmatprep.subr.bf16.mxu0 0
        %6259 = vmatpush1.bf16.msra.mxu0 0
        %6260 = vmatprep.subr.bf16.mxu0 0
        %6261 = vmatpush1.bf16.msra.mxu0 0
        %6262 = vmatprep.subr.bf16.mxu0 0
        %6263 = vmatpush1.bf16.msra.mxu0 0
        %6264 = vmatprep.subr.bf16.mxu0 0
        %6265 = vmatpush1.bf16.msra.mxu0 0
        %6266 = vmatprep.subr.bf16.mxu0 0
        %6267 = vmatpush1.bf16.msra.mxu0 0
        %6268 = vmatprep.mubr.bf16.mxu0 0
        %6269 = vmatmul.mubr.bf16.gmra.mrb[0].mxu0 %v6222
        %v6270 = vpop.f32.mrb[0].mxu0
        %v6271 = vadd.f32 0.0, %v6270
        %v6272 = vpop.f32.mrb[0].mxu0
        %v6273 = vpop.f32.mrb[0].mxu0
        %v6274 = vadd.f32 0.0, %v6273
        %v6275 = vpop.f32.mrb[0].mxu0
        %6276 = vmatprep.mubr.bf16.mxu0 0
        %6277 = vmatmul.mubr.bf16.gmra.mrb[0].mxu0 %v6225
        %v6278 = vpop.f32.mrb[0].mxu0
        %v6279 = vadd.f32 0.0, %v6278
        %v6280 = vpop.f32.mrb[0].mxu0
        %v6281 = vpop.f32.mrb[0].mxu0
        %v6282 = vadd.f32 0.0, %v6281
        %v6283 = vpop.f32.mrb[0].mxu0
        %6284 = vmatprep.mubr.bf16.mxu0 0
        %6285 = vmatmul.mubr.bf16.gmra.mrb[0].mxu0 %v6228
        %v6286 = vpop.f32.mrb[0].mxu0
        %v6287 = vadd.f32 0.0, %v6286
        %v6288 = vpop.f32.mrb[0].mxu0
        %v6289 = vpop.f32.mrb[0].mxu0
        %v6290 = vadd.f32 0.0, %v6289
        %v6291 = vpop.f32.mrb[0].mxu0
        %6292 = vmatprep.mubr.bf16.mxu0 0
        %6293 = vmatmul.mubr.bf16.gmra.mrb[0].mxu0 %v6231
        %v6294 = vpop.f32.mrb[0].mxu0
        %v6295 = vadd.f32 0.0, %v6294
        %v6296 = vpop.f32.mrb[0].mxu0
        %v6297 = vpop.f32.mrb[0].mxu0
        %v6298 = vadd.f32 0.0, %v6297
        %v6299 = vpop.f32.mrb[0].mxu0
        %6300 = vdwg.mxu0
        %v6301 = vlaneseq
        %v6302 = vshrl.u32 %v6301, 7
        %v6303 = vsub.s32 4, %v6302
        %v6304 = vrot.slane %v459, %v6303
        %v6309 = vunpack.c.l.b16 %v6144
        %v6310 = vunpack.c.l.b16 %v6145
        %v6311 = vunpack.c.l.b16 %v6146
        %v6312 = vunpack.c.l.b16 %v6147
        %v6313 = vpack.c.b16 %v6310, %v6309
        %v6314 = vpack.c.b16 %v6312, %v6311
        %6317 = vmatprep.subr.bf16.mxu0 0
        %6318 = vmatpush1.bf16.msra.mxu0 %v6313
        %6319 = vmatprep.subr.bf16.mxu0 0
        %6320 = vmatpush1.bf16.msra.mxu0 %v6314
        %6321 = vmatprep.subr.bf16.mxu0 0
        %6322 = vmatpush1.bf16.msra.mxu0 0
        %6323 = vmatprep.subr.bf16.mxu0 0
        %6324 = vmatpush1.bf16.msra.mxu0 0
        %6325 = vmatprep.subr.bf16.mxu0 0
        %6326 = vmatpush1.bf16.msra.mxu0 0
        %6327 = vmatprep.subr.bf16.mxu0 0
        %6328 = vmatpush1.bf16.msra.mxu0 0
        %6329 = vmatprep.subr.bf16.mxu0 0
        %6330 = vmatpush1.bf16.msra.mxu0 0
        %6331 = vmatprep.subr.bf16.mxu0 0
        %6332 = vmatpush1.bf16.msra.mxu0 0
        %6333 = vmatprep.subr.bf16.mxu0 0
        %6334 = vmatpush1.bf16.msra.mxu0 0
        %6335 = vmatprep.subr.bf16.mxu0 0
        %6336 = vmatpush1.bf16.msra.mxu0 0
        %6337 = vmatprep.subr.bf16.mxu0 0
        %6338 = vmatpush1.bf16.msra.mxu0 0
        %6339 = vmatprep.subr.bf16.mxu0 0
        %6340 = vmatpush1.bf16.msra.mxu0 0
        %6341 = vmatprep.subr.bf16.mxu0 0
        %6342 = vmatpush1.bf16.msra.mxu0 0
        %6343 = vmatprep.subr.bf16.mxu0 0
        %6344 = vmatpush1.bf16.msra.mxu0 0
        %6345 = vmatprep.subr.bf16.mxu0 0
        %6346 = vmatpush1.bf16.msra.mxu0 0
        %6347 = vmatprep.subr.bf16.mxu0 0
        %6348 = vmatpush1.bf16.msra.mxu0 0
        %6349 = vmatprep.mubr.bf16.mxu0 0
        %6350 = vmatmul.mubr.bf16.gmra.mrb[0].mxu0 %v3645
        %v6351 = vpop.f32.mrb[0].mxu0
        %v6352 = vadd.f32 %v6304, %v6351
        %v6353 = vpop.f32.mrb[0].mxu0
        %v6354 = vpop.f32.mrb[0].mxu0
        %v6355 = vpop.f32.mrb[0].mxu0
        %6356 = vdwg.mxu0
        %v6357 = vadd.f32 %v6271, %v6352
        %v6358 = vadd.f32 %v6274, %v6352
        %v6359 = vadd.f32 %v6279, %v6352
        %v6360 = vadd.f32 %v6282, %v6352
        %v6361 = vadd.f32 %v6287, %v6352
        %v6362 = vadd.f32 %v6290, %v6352
        %v6363 = vadd.f32 %v6295, %v6352
        %v6364 = vadd.f32 %v6298, %v6352
        %v6365 = vmul.f32 %v6357, 0.2
        %v6366 = vmul.f32 %v6358, 0.2
        %v6367 = vmul.f32 %v6359, 0.2
        %v6368 = vmul.f32 %v6360, 0.2
        %v6369 = vmul.f32 %v6361, 0.2
        %v6370 = vmul.f32 %v6362, 0.2
        %v6371 = vmul.f32 %v6363, 0.2
        %v6372 = vmul.f32 %v6364, 0.2
        %v6373 = vmax.f32 %v6357, %v6365
        %v6374 = vmax.f32 %v6358, %v6366
        %v6375 = vmax.f32 %v6359, %v6367
        %v6376 = vmax.f32 %v6360, %v6368
        %v6377 = vmax.f32 %v6361, %v6369
        %v6378 = vmax.f32 %v6362, %v6370
        %v6379 = vmax.f32 %v6363, %v6371
        %v6380 = vmax.f32 %v6364, %v6372
        %v6381 = vmax.f32 %v6373, %v6374
        %v6382 = vmax.f32 %v6381, %v6375
        %v6383 = vmax.f32 %v6382, %v6376
        %v6384 = vmax.f32 %v6383, %v6377
        %v6385 = vmax.f32 %v6384, %v6378
        %v6386 = vmax.f32 %v6385, %v6379
        %v6387 = vmax.f32 %v6386, %v6380
        %v6388 = vpack.c.bf16 %v6137, %v6137
        %s6389 = scalar_lea.vmem %s6, 96
        %v6390 = vld [vmem:[%s6389] sm:$0xf]
        %v6391 = vld [vmem:[%s6389 + $0x4] sm:$0xf]
        %v6392 = vld [vmem:[%s6389 + $0x8] sm:$0xf]
        %v6393 = vld [vmem:[%s6389 + $0xc] sm:$0xf]
        %v6394 = vpack.c.bf16 %v6387, %v6387
        %s6395 = scalar_lea.vmem %s6, 112
        %v6396 = vld [vmem:[%s6395] sm:$0xf]
        %v6397 = vld [vmem:[%s6395 + $0x4] sm:$0xf]
        %v6398 = vld [vmem:[%s6395 + $0x8] sm:$0xf]
        %v6399 = vld [vmem:[%s6395 + $0xc] sm:$0xf]
        %v6404 = vunpack.c.l.b16 %v6396
        %v6405 = vunpack.c.l.b16 %v6397
        %v6406 = vunpack.c.l.b16 %v6398
        %v6407 = vunpack.c.l.b16 %v6399
        %v6408 = vpack.c.b16 %v6405, %v6404
        %v6409 = vpack.c.b16 %v6407, %v6406
        %v6413 = vsel %vm460, %v6394, 0
        %6415 = vmatprep.subr.bf16.mxu0 0
        %6416 = vmatpush1.bf16.msra.mxu0 %v6408
        %6417 = vmatprep.subr.bf16.mxu0 0
        %6418 = vmatpush1.bf16.msra.mxu0 %v6409
        %6419 = vmatprep.subr.bf16.mxu0 0
        %6420 = vmatpush1.bf16.msra.mxu0 0
        %6421 = vmatprep.subr.bf16.mxu0 0
        %6422 = vmatpush1.bf16.msra.mxu0 0
        %6423 = vmatprep.subr.bf16.mxu0 0
        %6424 = vmatpush1.bf16.msra.mxu0 0
        %6425 = vmatprep.subr.bf16.mxu0 0
        %6426 = vmatpush1.bf16.msra.mxu0 0
        %6427 = vmatprep.subr.bf16.mxu0 0
        %6428 = vmatpush1.bf16.msra.mxu0 0
        %6429 = vmatprep.subr.bf16.mxu0 0
        %6430 = vmatpush1.bf16.msra.mxu0 0
        %6431 = vmatprep.subr.bf16.mxu0 0
        %6432 = vmatpush1.bf16.msra.mxu0 0
        %6433 = vmatprep.subr.bf16.mxu0 0
        %6434 = vmatpush1.bf16.msra.mxu0 0
        %6435 = vmatprep.subr.bf16.mxu0 0
        %6436 = vmatpush1.bf16.msra.mxu0 0
        %6437 = vmatprep.subr.bf16.mxu0 0
        %6438 = vmatpush1.bf16.msra.mxu0 0
        %6439 = vmatprep.subr.bf16.mxu0 0
        %6440 = vmatpush1.bf16.msra.mxu0 0
        %6441 = vmatprep.subr.bf16.mxu0 0
        %6442 = vmatpush1.bf16.msra.mxu0 0
        %6443 = vmatprep.subr.bf16.mxu0 0
        %6444 = vmatpush1.bf16.msra.mxu0 0
        %6445 = vmatprep.subr.bf16.mxu0 0
        %6446 = vmatpush1.bf16.msra.mxu0 0
        %6447 = vmatprep.mubr.bf16.mxu0 0
        %6448 = vmatmul.mubr.bf16.gmra.mrb[0].mxu0 %v6413
        %v6449 = vpop.f32.mrb[0].mxu0
        %v6450 = vadd.f32 0.0, %v6449
        %v6451 = vpop.f32.mrb[0].mxu0
        %v6452 = vpop.f32.mrb[0].mxu0
        %v6453 = vpop.f32.mrb[0].mxu0
        %6454 = vdwg.mxu0
        %v6459 = vunpack.c.l.b16 %v6390
        %v6460 = vunpack.c.l.b16 %v6391
        %v6461 = vunpack.c.l.b16 %v6392
        %v6462 = vunpack.c.l.b16 %v6393
        %v6463 = vpack.c.b16 %v6460, %v6459
        %v6464 = vpack.c.b16 %v6462, %v6461
        %v6468 = vsel %vm460, %v6388, 0
        %6470 = vmatprep.subr.bf16.mxu0 0
        %6471 = vmatpush1.bf16.msra.mxu0 %v6463
        %6472 = vmatprep.subr.bf16.mxu0 0
        %6473 = vmatpush1.bf16.msra.mxu0 %v6464
        %6474 = vmatprep.subr.bf16.mxu0 0
        %6475 = vmatpush1.bf16.msra.mxu0 0
        %6476 = vmatprep.subr.bf16.mxu0 0
        %6477 = vmatpush1.bf16.msra.mxu0 0
        %6478 = vmatprep.subr.bf16.mxu0 0
        %6479 = vmatpush1.bf16.msra.mxu0 0
        %6480 = vmatprep.subr.bf16.mxu0 0
        %6481 = vmatpush1.bf16.msra.mxu0 0
        %6482 = vmatprep.subr.bf16.mxu0 0
        %6483 = vmatpush1.bf16.msra.mxu0 0
        %6484 = vmatprep.subr.bf16.mxu0 0
        %6485 = vmatpush1.bf16.msra.mxu0 0
        %6486 = vmatprep.subr.bf16.mxu0 0
        %6487 = vmatpush1.bf16.msra.mxu0 0
        %6488 = vmatprep.subr.bf16.mxu0 0
        %6489 = vmatpush1.bf16.msra.mxu0 0
        %6490 = vmatprep.subr.bf16.mxu0 0
        %6491 = vmatpush1.bf16.msra.mxu0 0
        %6492 = vmatprep.subr.bf16.mxu0 0
        %6493 = vmatpush1.bf16.msra.mxu0 0
        %6494 = vmatprep.subr.bf16.mxu0 0
        %6495 = vmatpush1.bf16.msra.mxu0 0
        %6496 = vmatprep.subr.bf16.mxu0 0
        %6497 = vmatpush1.bf16.msra.mxu0 0
        %6498 = vmatprep.subr.bf16.mxu0 0
        %6499 = vmatpush1.bf16.msra.mxu0 0
        %6500 = vmatprep.subr.bf16.mxu0 0
        %6501 = vmatpush1.bf16.msra.mxu0 0
        %6502 = vmatprep.mubr.bf16.mxu0 0
        %6503 = vmatmul.mubr.bf16.gmra.mrb[0].mxu0 %v6468
        %v6504 = vpop.f32.mrb[0].mxu0
        %v6505 = vadd.f32 %v6450, %v6504
        %v6506 = vpop.f32.mrb[0].mxu0
        %v6507 = vpop.f32.mrb[0].mxu0
        %v6508 = vpop.f32.mrb[0].mxu0
        %6509 = vdwg.mxu0
        %v6510 = vlaneseq
        %v6511 = vshrl.u32 %v6510, 7
        %v6512 = vsub.s32 5, %v6511
        %v6513 = vrot.slane %v459, %v6512
        %v6514 = vadd.f32 %v6505, %v6513
        %v6515 = vadd.f32 %v3475, %v6514
        %v6516 = vsel %vm460, %v6515, 0.0
        %6517 = vadd.xlane.f32.xlu0 %v6516
        %v6518 = vpop.xlane.xlu0 %6517
        %v6519 = vmul.f32 %v6518, %v464
        %v6520 = vsub.f32 %v6515, %v6519
        %v6521 = vmul.f32 %v6520, %v6520
        %v6522 = vsel %vm460, %v6521, 0.0
        %6523 = vadd.xlane.f32.xlu0 %v6522
        %v6524 = vpop.xlane.xlu0 %6523
        %v6525 = vmul.f32 %v6524, %v464
        %v6526 = vadd.f32 %v6525, 1e-05
        %v6527 = vrsqrt.pop %v6526
        %v6528 = vmul.f32 %v6520, %v6527
        %v6529 = vlaneseq
        %v6530 = vshrl.u32 %v6529, 7
        %v6531 = vsub.s32 6, %v6530
        %v6532 = vrot.slane %v458, %v6531
        %v6533 = vmul.f32 %v6528, %v6532
        %v6534 = vlaneseq
        %v6535 = vshrl.u32 %v6534, 7
        %v6536 = vsub.s32 7, %v6535
        %v6537 = vrot.slane %v458, %v6536
        %v6538 = vadd.f32 %v6533, %v6537
        %v6539 = vpack.c.bf16 %v6538, %v6538
        %v6540 = vld [vmem:[%s7] sm:$0xf]
        %v6541 = vld [vmem:[%s7 + $0x4] sm:$0xf]
        %v6542 = vld [vmem:[%s7 + $0x8] sm:$0xf]
        %v6543 = vld [vmem:[%s7 + $0xc] sm:$0xf]
        %v6544 = vld [vmem:[%s10] sm:$0x1]
        %v6546 = vlaneseq
        %v6547 = vshrl.u32 %v6546, 7
        %v6548 = vsub.s32 0, %v6547
        %v6549 = vrot.slane %v6544, %v6548
        %v6555 = vunpack.c.l.b16 %v6540
        %v6556 = vunpack.c.l.b16 %v6541
        %v6557 = vunpack.c.l.b16 %v6542
        %v6558 = vunpack.c.l.b16 %v6543
        %v6559 = vpack.c.b16 %v6556, %v6555
        %v6560 = vpack.c.b16 %v6558, %v6557
        %v6564 = vsel %vm460, %v6539, 0
        %6566 = vmatprep.subr.bf16.mxu0 0
        %6567 = vmatpush1.bf16.msra.mxu0 %v6559
        %6568 = vmatprep.subr.bf16.mxu0 0
        %6569 = vmatpush1.bf16.msra.mxu0 %v6560
        %6570 = vmatprep.subr.bf16.mxu0 0
        %6571 = vmatpush1.bf16.msra.mxu0 0
        %6572 = vmatprep.subr.bf16.mxu0 0
        %6573 = vmatpush1.bf16.msra.mxu0 0
        %6574 = vmatprep.subr.bf16.mxu0 0
        %6575 = vmatpush1.bf16.msra.mxu0 0
        %6576 = vmatprep.subr.bf16.mxu0 0
        %6577 = vmatpush1.bf16.msra.mxu0 0
        %6578 = vmatprep.subr.bf16.mxu0 0
        %6579 = vmatpush1.bf16.msra.mxu0 0
        %6580 = vmatprep.subr.bf16.mxu0 0
        %6581 = vmatpush1.bf16.msra.mxu0 0
        %6582 = vmatprep.subr.bf16.mxu0 0
        %6583 = vmatpush1.bf16.msra.mxu0 0
        %6584 = vmatprep.subr.bf16.mxu0 0
        %6585 = vmatpush1.bf16.msra.mxu0 0
        %6586 = vmatprep.subr.bf16.mxu0 0
        %6587 = vmatpush1.bf16.msra.mxu0 0
        %6588 = vmatprep.subr.bf16.mxu0 0
        %6589 = vmatpush1.bf16.msra.mxu0 0
        %6590 = vmatprep.subr.bf16.mxu0 0
        %6591 = vmatpush1.bf16.msra.mxu0 0
        %6592 = vmatprep.subr.bf16.mxu0 0
        %6593 = vmatpush1.bf16.msra.mxu0 0
        %6594 = vmatprep.subr.bf16.mxu0 0
        %6595 = vmatpush1.bf16.msra.mxu0 0
        %6596 = vmatprep.subr.bf16.mxu0 0
        %6597 = vmatpush1.bf16.msra.mxu0 0
        %6598 = vmatprep.mubr.bf16.mxu0 0
        %6599 = vmatmul.mubr.bf16.gmra.mrb[0].mxu0 %v6564
        %v6600 = vpop.f32.mrb[0].mxu0
        %v6601 = vadd.f32 %v6549, %v6600
        %v6602 = vpop.f32.mrb[0].mxu0
        %v6603 = vpop.f32.mrb[0].mxu0
        %v6604 = vpop.f32.mrb[0].mxu0
        %6605 = vdwg.mxu0
        %v6606 = vmul.f32 %v6601, 0.5
        %v6607 = vmul.f32 %v6601, 0.044715
        %v6608 = vmul.f32 %v6607, %v6601
        %v6609 = vmul.f32 %v6608, %v6601
        %v6610 = vadd.f32 %v6601, %v6609
        %v6611 = vmul.f32 %v6610, 0.7978846
        %v6612 = vtanh.pop %v6611
        %v6613 = vadd.f32 %v6612, 1.0
        %v6614 = vmul.f32 %v6606, %v6613
        %v6615 = vpack.c.bf16 %v6614, %v6614
        %v6616 = vld [vmem:[%s8] sm:$0xf]
        %v6617 = vld [vmem:[%s8 + $0x4] sm:$0xf]
        %v6618 = vld [vmem:[%s8 + $0x8] sm:$0xf]
        %v6619 = vld [vmem:[%s8 + $0xc] sm:$0xf]
        %v6620 = vld [vmem:[%s8 + $0x10] sm:$0xf]
        %v6621 = vld [vmem:[%s8 + $0x14] sm:$0xf]
        %v6622 = vld [vmem:[%s8 + $0x18] sm:$0xf]
        %v6623 = vld [vmem:[%s8 + $0x1c] sm:$0xf]
        %v6624 = vld [vmem:[%s8 + $0x20] sm:$0xf]
        %v6625 = vld [vmem:[%s8 + $0x24] sm:$0xf]
        %v6626 = vld [vmem:[%s8 + $0x28] sm:$0xf]
        %v6627 = vld [vmem:[%s8 + $0x2c] sm:$0xf]
        %v6628 = vld [vmem:[%s8 + $0x30] sm:$0xf]
        %v6629 = vld [vmem:[%s8 + $0x34] sm:$0xf]
        %v6630 = vld [vmem:[%s8 + $0x38] sm:$0xf]
        %v6631 = vld [vmem:[%s8 + $0x3c] sm:$0xf]
        %v6632 = vlaneseq
        %v6633 = vshrl.u32 %v6632, 7
        %v6634 = vsub.s32 6, %v6633
        %v6635 = vrot.slane %v459, %v6634
        %v6652 = vunpack.c.l.b16 %v6616
        %v6653 = vunpack.c.l.b16 %v6617
        %v6654 = vunpack.c.l.b16 %v6618
        %v6655 = vunpack.c.l.b16 %v6619
        %v6656 = vunpack.c.l.b16 %v6620
        %v6657 = vunpack.c.l.b16 %v6621
        %v6658 = vunpack.c.l.b16 %v6622
        %v6659 = vunpack.c.l.b16 %v6623
        %v6660 = vunpack.c.l.b16 %v6624
        %v6661 = vunpack.c.l.b16 %v6625
        %v6662 = vunpack.c.l.b16 %v6626
        %v6663 = vunpack.c.l.b16 %v6627
        %v6664 = vunpack.c.l.b16 %v6628
        %v6665 = vunpack.c.l.b16 %v6629
        %v6666 = vunpack.c.l.b16 %v6630
        %v6667 = vunpack.c.l.b16 %v6631
        %v6668 = vpack.c.b16 %v6653, %v6652
        %v6669 = vpack.c.b16 %v6655, %v6654
        %v6670 = vpack.c.b16 %v6657, %v6656
        %v6671 = vpack.c.b16 %v6659, %v6658
        %v6672 = vpack.c.b16 %v6661, %v6660
        %v6673 = vpack.c.b16 %v6663, %v6662
        %v6674 = vpack.c.b16 %v6665, %v6664
        %v6675 = vpack.c.b16 %v6667, %v6666
        %6684 = vmatprep.subr.bf16.mxu0 0
        %6685 = vmatpush1.bf16.msra.mxu0 %v6668
        %6686 = vmatprep.subr.bf16.mxu0 0
        %6687 = vmatpush1.bf16.msra.mxu0 %v6669
        %6688 = vmatprep.subr.bf16.mxu0 0
        %6689 = vmatpush1.bf16.msra.mxu0 %v6670
        %6690 = vmatprep.subr.bf16.mxu0 0
        %6691 = vmatpush1.bf16.msra.mxu0 %v6671
        %6692 = vmatprep.subr.bf16.mxu0 0
        %6693 = vmatpush1.bf16.msra.mxu0 %v6672
        %6694 = vmatprep.subr.bf16.mxu0 0
        %6695 = vmatpush1.bf16.msra.mxu0 %v6673
        %6696 = vmatprep.subr.bf16.mxu0 0
        %6697 = vmatpush1.bf16.msra.mxu0 %v6674
        %6698 = vmatprep.subr.bf16.mxu0 0
        %6699 = vmatpush1.bf16.msra.mxu0 %v6675
        %6700 = vmatprep.subr.bf16.mxu0 0
        %6701 = vmatpush1.bf16.msra.mxu0 0
        %6702 = vmatprep.subr.bf16.mxu0 0
        %6703 = vmatpush1.bf16.msra.mxu0 0
        %6704 = vmatprep.subr.bf16.mxu0 0
        %6705 = vmatpush1.bf16.msra.mxu0 0
        %6706 = vmatprep.subr.bf16.mxu0 0
        %6707 = vmatpush1.bf16.msra.mxu0 0
        %6708 = vmatprep.subr.bf16.mxu0 0
        %6709 = vmatpush1.bf16.msra.mxu0 0
        %6710 = vmatprep.subr.bf16.mxu0 0
        %6711 = vmatpush1.bf16.msra.mxu0 0
        %6712 = vmatprep.subr.bf16.mxu0 0
        %6713 = vmatpush1.bf16.msra.mxu0 0
        %6714 = vmatprep.subr.bf16.mxu0 0
        %6715 = vmatpush1.bf16.msra.mxu0 0
        %6716 = vmatprep.mubr.bf16.mxu0 0
        %6717 = vmatmul.mubr.bf16.gmra.mrb[0].mxu0 %v6615
        %v6718 = vpop.f32.mrb[0].mxu0
        %v6719 = vadd.f32 %v6635, %v6718
        %v6720 = vpop.f32.mrb[0].mxu0
        %v6721 = vpop.f32.mrb[0].mxu0
        %v6722 = vpop.f32.mrb[0].mxu0
        %6723 = vdwg.mxu0
        %v6724 = vadd.f32 %v6515, %v6719
        %6725 = vst.msk [vmem:[%s420] sm:$0xff] %vm460, %v6724
        %s6726 = sand.u32 %s284, 1
        %s6727 = scalar_lea.sflag [#allocation3], %s6726
        %s6728 = sand.u32 %s284, 1
        %s6729 = smul.addr %s6728, 8
        %s6730 = scalar_lea.vmem [#allocation2], %s6729
        // Predicated region
        $region65: #{tpu_custom_call.1} parent=63 // pred_check
          %p6731 = pneg %p294
        $region66: #{tpu_custom_call.1} parent=63 // pred_check_branch
          %6733 = sbr.rel (%p6731) target = $region68
        $region67: #{tpu_custom_call.1} parent=63 // pred_region
          %s6735 = ssub.s32 128, 128
          %6736 = vsyncadd %s6727, %s6735
          %s6737 = smul.addr %s25, 128
          %s6738 = scalar_lea.hbm %s11, %s6737
          %s6740 = sshll.u32 %s6730, 4
          %s6741 = int_to_ptr.vmem [resolvable:$true] %s6740
          %6743 = dma.vmem_to_hbm [thread:$0]  %s6741, 128, %s6738, %s6727
        $region68: #{tpu_custom_call.1} parent=63 // pred_fallthru
          _
      $region64: #{tpu_custom_call.1} parent=5 // pred_fallthru
        _
      %p6744 = scmp.le.s32.totalorder 2, %s20
      // Predicated region
      $region69: #{tpu_custom_call.1} parent=5 // pred_check
        %p6745 = pneg %p6744
      $region70: #{tpu_custom_call.1} parent=5 // pred_check_branch
        %6747 = sbr.rel (%p6745) target = $region72
      $region71: #{tpu_custom_call.1} parent=5 // pred_region
        %s6748 = ssub.s32 %s20, 2
        // Predicated region
        $region73: #{tpu_custom_call.1} parent=71 // pred_check
          %p6749 = pneg %p300
        $region74: #{tpu_custom_call.1} parent=71 // pred_check_branch
          %6751 = sbr.rel (%p6749) target = $region76
        $region75: #{tpu_custom_call.1} parent=71 // pred_region
          %s6752 = sand.u32 %s285, 1
          %s6753 = scalar_lea.sflag [#allocation3], %s6752
          %s6754 = sand.u32 %s285, 1
          %s6755 = smul.addr %s6754, 8
          %s6756 = scalar_lea.vmem [#allocation2], %s6755
          %6757 = dma.done %s6753, 128
        $region76: #{tpu_custom_call.1} parent=71 // pred_fallthru
          _
      $region72: #{tpu_custom_call.1} parent=5 // pred_fallthru
        _
    $region6: #{tpu_custom_call.1} parent=1 // loop_footer
      %s24 = sadd.s32 1, %s20
    $region7: #{tpu_custom_call.1} parent=1 // loop_footer_branch
      %19 = sbr.rel target = $region3
    $region8: #{tpu_custom_call.1} parent=1 // loop_exit
      _
    %6758 = vsyncpa [#allocation3], 1
    %s6759 = scalar_lea.sflag [#allocation3], 1
    %6760 = vsyncpa %s6759, 1

</llo_original>
